<compile_context>
chip_gen: v5e
topology: v5e:2x2
jax: 0.10.0
libtpu: 0.0.40
codegen_flags: <defaults>
</compile_context>

<pallas_src>
import math
from functools import partial

import numpy as np
import jax
import jax.numpy as jnp
from jax.experimental import pallas as pl
from jax.experimental.pallas import tpu as pltpu


# -------------------- sin/cos positional embedding (numpy, as in reference) --
def get_1d_sincos_pos_embed_from_grid(embed_dim, pos):
    assert embed_dim % 2 == 0
    omega = np.arange(embed_dim // 2, dtype=np.float32)
    omega /= embed_dim / 2.0
    omega = 1.0 / 10000 ** omega
    pos = pos.reshape(-1)
    out = np.einsum("m,d->md", pos, omega)
    emb_sin = np.sin(out)
    emb_cos = np.cos(out)
    return np.concatenate([emb_sin, emb_cos], axis=1)


def get_2d_sincos_pos_embed_from_grid(embed_dim, grid):
    assert embed_dim % 2 == 0
    emb_h = get_1d_sincos_pos_embed_from_grid(embed_dim // 2, grid[0])
    emb_w = get_1d_sincos_pos_embed_from_grid(embed_dim // 2, grid[1])
    return np.concatenate([emb_h, emb_w], axis=1)


def get_2d_sincos_pos_embed(embed_dim, grid_size, cls_token=False):
    grid_h = np.arange(grid_size, dtype=np.float32)
    grid_w = np.arange(grid_size, dtype=np.float32)
    grid = np.meshgrid(grid_w, grid_h)
    grid = np.stack(grid, axis=0)
    grid = grid.reshape([2, 1, grid_size, grid_size])
    pos_embed = get_2d_sincos_pos_embed_from_grid(embed_dim, grid)
    if cls_token:
        pos_embed = np.concatenate([np.zeros([1, embed_dim]), pos_embed], axis=0)
    return pos_embed


# -------------------------------------------------------------- configuration
IMG = 16          # image size (small-shape version of img_size=224)
P = 4             # patch size
C = 3             # in_chans
D = 64            # embed_dim
DEPTH = 6         # only the first 6 blocks are used by forward_encoder
HEADS = 4
MLP_RATIO = 4.0
L = (IMG // P) ** 2          # num_patches = 16
HID = int(D * MLP_RATIO)     # MLP hidden = 256
LN_EPS = 1e-5                # nn.LayerNorm default
NEG_BIG = -1e30              # additive attention-mask value


# ------------------------------------------------------------- math helpers
def _erf_approx(x):
    # Abramowitz & Stegun 7.1.26, |err| <= 1.5e-7 (~f32 precision).
    a1, a2, a3, a4, a5 = 0.254829592, -0.284496736, 1.421413741, -1.453152027, 1.061405429
    p = 0.3275911
    ax = jnp.abs(x)
    t = 1.0 / (1.0 + p * ax)
    poly = ((((a5 * t + a4) * t + a3) * t + a2) * t + a1) * t
    y = 1.0 - poly * jnp.exp(-ax * ax)
    return jnp.where(x >= 0.0, y, -y)


def _gelu_exact(x):
    return 0.5 * x * (1.0 + _erf_approx(x * (1.0 / math.sqrt(2.0))))


def _layernorm(v, w, b):
    mu = jnp.mean(v, axis=-1, keepdims=True)
    var = jnp.mean((v - mu) ** 2, axis=-1, keepdims=True)
    return (v - mu) * jax.lax.rsqrt(var + LN_EPS) * w + b


def _round_up(v, m):
    return ((v + m - 1) // m) * m


def _pick_batch_tile(nb):
    # keep >= 2 grid steps when possible (v7x megacore), else one sample per step
    if nb >= 4 and nb % 2 == 0:
        return nb // 2
    return 1


# --------------------------------------------------------------- Pallas kernels
def patch_embed_kernel(patches_ref, w_ref, b_ref, pos_ref, o_ref):
    """Conv(stride=kernel=P) as matmul over flattened patch rows."""
    x = patches_ref[...]                                  # (rows, C*P*P)
    y = jnp.dot(x, w_ref[...], preferred_element_type=jnp.float32)
    o_ref[...] = y + b_ref[...] + pos_ref[...]


def vit_blocks_fused_kernel(x_ref, mask_ref,
                            ln1w_ref, ln1b_ref,
                            wqkv_ref, bqkv_ref, wproj_ref, bproj_ref,
                            ln2w_ref, ln2b_ref,
                            wfc1_ref, bfc1_ref, wfc2_ref, bfc2_ref,
                            o_ref, *, num_heads, depth):
    """All DEPTH blocks, fused.  x_ref is a 2-D (rows, D) tile holding several
    padded sequences; `mask_ref` is the additive block-diagonal attention mask
    that keeps samples independent and hides padded key rows.  Per-layer
    activations are written into column slabs of a lane-dense (rows, DEPTH*D)
    output buffer."""
    x = x_ref[...]                                        # (R, D) f32
    mask = mask_ref[...]                                  # (R, R)
    d = x.shape[-1]
    hd = d // num_heads

    for l in range(depth):
        # --- attention branch (pre-LN) ---
        xn = _layernorm(x, ln1w_ref[l], ln1b_ref[l])
        qkv = jnp.dot(xn, wqkv_ref[l],
                      preferred_element_type=jnp.float32) + bqkv_ref[l]
        wp = wproj_ref[l]                                 # (D, D)
        attn = jnp.zeros_like(x)
        for h in range(num_heads):
            lo = h * hd
            qh = qkv[:, lo:lo + hd]                       # scale folded into wqkv/bqkv
            kh = qkv[:, d + lo:d + lo + hd]
            vh = qkv[:, 2 * d + lo:2 * d + lo + hd]
            s = jnp.dot(qh, kh.T, preferred_element_type=jnp.float32) + mask
            s = s - jnp.max(s, axis=-1, keepdims=True)
            p = jnp.exp(s)
            p = p * pl.reciprocal(jnp.sum(p, axis=-1, keepdims=True), approx=True)
            oh = jnp.dot(p, vh, preferred_element_type=jnp.float32)       # (R, hd)
            attn = attn + jnp.dot(oh, wp[lo:lo + hd, :],
                                  preferred_element_type=jnp.float32)
        x = x + attn + bproj_ref[l]

        # --- MLP branch (pre-LN) ---
        xn2 = _layernorm(x, ln2w_ref[l], ln2b_ref[l])
        h1 = jnp.dot(xn2, wfc1_ref[l], preferred_element_type=jnp.float32) + bfc1_ref[l]
        h1 = _gelu_exact(h1)
        x = x + jnp.dot(h1, wfc2_ref[l], preferred_element_type=jnp.float32) + bfc2_ref[l]

        # per-layer activation -> column slab l of the packed output
        o_ref[:, l * d:(l + 1) * d] = x


# ------------------------------------------------------------- kernel wrappers
def _const_spec(shape):
    ndim = len(shape)
    return pl.BlockSpec(shape, lambda b, _n=ndim: (0,) * _n)


def patch_embed_pallas(patches_flat, w, b, pos_tiled, rows_per_step):
    rows_tot, K = patches_flat.shape
    Dm = w.shape[1]
    return pl.pallas_call(
        patch_embed_kernel,
        out_shape=jax.ShapeDtypeStruct((rows_tot, Dm), jnp.float32),
        grid=(rows_tot // rows_per_step,),
        in_specs=[
            pl.BlockSpec((rows_per_step, K), lambda n: (n, 0)),
            _const_spec((K, Dm)),
            _const_spec((1, Dm)),
            _const_spec((rows_per_step, Dm)),
        ],
        out_specs=pl.BlockSpec((rows_per_step, Dm), lambda n: (n, 0)),
        compiler_params=pltpu.CompilerParams(dimension_semantics=("parallel",)),
    )(patches_flat, w, b, pos_tiled)


def vit_blocks_fused_pallas(x_flat, attn_mask, sp, rows_per_step, num_heads):
    rows_tot, Dm = x_flat.shape
    depth, _, Hp = sp["wfc1"].shape
    R = rows_per_step
    kernel = partial(vit_blocks_fused_kernel, num_heads=num_heads, depth=depth)
    return pl.pallas_call(
        kernel,
        # lane-dense packed output: (rows, DEPTH*D), last dim multiple of 128
        out_shape=jax.ShapeDtypeStruct((rows_tot, depth * Dm), jnp.float32),
        grid=(rows_tot // R,),
        in_specs=[
            pl.BlockSpec((R, Dm), lambda b: (b, 0)),
            _const_spec((R, R)),
            _const_spec((depth, 1, Dm)), _const_spec((depth, 1, Dm)),
            _const_spec((depth, Dm, 3 * Dm)), _const_spec((depth, 1, 3 * Dm)),
            _const_spec((depth, Dm, Dm)), _const_spec((depth, 1, Dm)),
            _const_spec((depth, 1, Dm)), _const_spec((depth, 1, Dm)),
            _const_spec((depth, Dm, Hp)), _const_spec((depth, 1, Hp)),
            _const_spec((depth, Hp, Dm)), _const_spec((depth, 1, Dm)),
        ],
        out_specs=pl.BlockSpec((R, depth * Dm), lambda b: (b, 0)),
        compiler_params=pltpu.CompilerParams(dimension_semantics=("parallel",)),
    )(x_flat, attn_mask, sp["ln1_w"], sp["ln1_b"], sp["wqkv"], sp["bqkv"],
      sp["wproj"], sp["bproj"], sp["ln2_w"], sp["ln2_b"],
      sp["wfc1"], sp["bfc1"], sp["wfc2"], sp["bfc2"])


# ------------------------------------------------------------- params / glue
def _xavier_uniform(key, shape, fan_in, fan_out):
    lim = math.sqrt(6.0 / (fan_in + fan_out))
    return jax.random.uniform(key, shape, jnp.float32, -lim, lim)


def init_params(key):
    keys = iter(jax.random.split(key, 4 * DEPTH + 4))
    K = C * P * P
    params = {
        "pe_w": _xavier_uniform(next(keys), (K, D), K, D),   # (C*P*P, D)
        "pe_b": jnp.zeros((1, D), jnp.float32),
        "cls": 0.02 * jax.random.normal(next(keys), (1, 1, D), jnp.float32),
        "pos": jnp.asarray(get_2d_sincos_pos_embed(D, IMG // P, cls_token=True),
                           jnp.float32),                      # (L+1, D)
    }
    blocks = []
    for _ in range(DEPTH):
        blocks.append({
            "ln1_w": jnp.ones((1, D), jnp.float32),
            "ln1_b": jnp.zeros((1, D), jnp.float32),
            "wqkv": _xavier_uniform(next(keys), (D, 3 * D), D, 3 * D),
            "bqkv": jnp.zeros((1, 3 * D), jnp.float32),
            "wproj": _xavier_uniform(next(keys), (D, D), D, D),
            "bproj": jnp.zeros((1, D), jnp.float32),
            "ln2_w": jnp.ones((1, D), jnp.float32),
            "ln2_b": jnp.zeros((1, D), jnp.float32),
            "wfc1": _xavier_uniform(next(keys), (D, HID), D, HID),
            "bfc1": jnp.zeros((1, HID), jnp.float32),
            "wfc2": _xavier_uniform(next(keys), (HID, D), HID, D),
            "bfc2": jnp.zeros((1, D), jnp.float32),
        })
    params["blocks"] = blocks
    return params


def _stack_blocks(blocks, num_heads):
    """Stack per-block params along a depth axis and fold 1/sqrt(head_dim)
    into the Q columns of the QKV projection (mathematically identical)."""
    stacked = {k: jnp.stack([blk[k] for blk in blocks], axis=0) for k in blocks[0]}
    dm = stacked["wqkv"].shape[1]
    scale = (dm // num_heads) ** -0.5
    stacked["wqkv"] = stacked["wqkv"].at[:, :, :dm].multiply(scale)
    stacked["bqkv"] = stacked["bqkv"].at[:, :, :dm].multiply(scale)
    return stacked


def _build_attn_mask(b_tile, s_pad, s_real):
    """Additive mask for a (b_tile*s_pad, b_tile*s_pad) score matrix:
    0 where query/key belong to the same sample AND the key row is a real
    (non-padding) token, NEG_BIG otherwise."""
    r = b_tile * s_pad
    idx = np.arange(r)
    same = (idx[:, None] // s_pad) == (idx[None, :] // s_pad)
    valid_key = (idx[None, :] % s_pad) < s_real
    m = np.where(same & valid_key, 0.0, NEG_BIG).astype(np.float32)
    return jnp.asarray(m)


def extract_patches(imgs, p):
    """NCHW -> (N, L, C*p*p), flattened in (C, ph, pw) order to match conv weight."""
    N, Cc, H, W = imgs.shape
    h, w = H // p, W // p
    x = imgs.reshape(N, Cc, h, p, w, p)
    x = jnp.transpose(x, (0, 2, 4, 1, 3, 5))             # N, h, w, C, p, p
    return x.reshape(N, h * w, Cc * p * p)


@partial(jax.jit, static_argnums=(3,))
def forward_encoder(params, pimgs, gtimgs, mask_ratio, mask_key):
    """Mirrors MaskedAutoencoderViT.forward (== forward_encoder)."""
    N = pimgs.shape[0]
    NB = 2 * N
    b_tile = _pick_batch_tile(NB)

    # ---- patch embed + pos (both streams fused into one pallas_call) ----
    xp = extract_patches(pimgs, P)                        # (N, L, K)
    yp = extract_patches(gtimgs, P)
    patches = jnp.concatenate([xp, yp], axis=0)           # (NB, L, K)
    K = patches.shape[-1]
    patches_flat = patches.reshape(NB * L, K)
    pos_patch = params["pos"][1:, :]                      # (L, D)
    pos_tiled = jnp.tile(pos_patch, (b_tile, 1))          # (b_tile*L, D)
    emb_flat = patch_embed_pallas(patches_flat, params["pe_w"], params["pe_b"],
                                  pos_tiled, b_tile * L)
    emb = emb_flat.reshape(NB, L, D)
    x, y = emb[:N], emb[N:]

    # random_masking: argsort of random noise + gather (index-op glue in plain JAX)
    # TODO(synk): per-sample argsort/gather has no clean Pallas equivalent at this size.
    len_keep = int(L * (1.0 - mask_ratio))
    noise = jax.random.uniform(mask_key, (N, L), jnp.float32)
    ids_shuffle = jnp.argsort(noise, axis=1)
    ids_keep = ids_shuffle[:, :len_keep]
    gidx = jnp.broadcast_to(ids_keep[:, :, None], (N, len_keep, D))
    x = jnp.take_along_axis(x, gidx, axis=1)
    y = jnp.take_along_axis(y, gidx, axis=1)

    # ---- prepend cls token ----
    cls = params["cls"] + params["pos"][None, :1, :]      # (1, 1, D)
    cls = jnp.broadcast_to(cls, (N, 1, D))
    x = jnp.concatenate([cls, x], axis=1)                 # (N, S, D)
    y = jnp.concatenate([cls, y], axis=1)
    S = 1 + len_keep

    # ---- fuse both streams and all DEPTH blocks into one pallas_call ----
    S_pad = _round_up(S, 8)                               # sublane-aligned sequences
    xy = jnp.concatenate([x, y], axis=0)                  # (NB, S, D)
    xy = jnp.pad(xy, ((0, 0), (0, S_pad - S), (0, 0)))
    xy_flat = xy.reshape(NB * S_pad, D)

    sp = _stack_blocks(params["blocks"], HEADS)
    attn_mask = _build_attn_mask(b_tile, S_pad, S)

    outs_cols = vit_blocks_fused_pallas(xy_flat, attn_mask, sp,
                                        rows_per_step=b_tile * S_pad,
                                        num_heads=HEADS)  # (NB*S_pad, DEPTH*D)
    # layout plumbing back to per-layer tensors (wrapper-side, not in kernel)
    outs = outs_cols.reshape(NB, S_pad, DEPTH, D)
    outs = jnp.transpose(outs, (2, 0, 1, 3))[:, :, :S, :]  # (DEPTH, NB, S, D)
    x_out = [outs[d, :N] for d in range(DEPTH)]
    y_out = [outs[d, N:] for d in range(DEPTH)]
    return x_out, y_out, ids_keep


# ---------------------------------------------------------------------- main
if __name__ == "__main__":
    key = jax.random.PRNGKey(0)
    pk, xk, yk, mk = jax.random.split(key, 4)
    params = init_params(pk)

    pimgs = jax.random.normal(xk, (2, C, IMG, IMG), jnp.float32)
    gtimgs = jax.random.normal(yk, (2, C, IMG, IMG), jnp.float32)

    platent, glatent, ids = forward_encoder(params, pimgs, gtimgs, 0.75, mk)
    jax.block_until_ready((platent, glatent, ids))

    assert len(platent) == DEPTH and len(glatent) == DEPTH
    assert platent[0].shape == (2, 1 + int(L * 0.25), D)
    assert ids.shape == (2, int(L * 0.25))
    print("KERNEL_OK")
</pallas_src>

<mosaic_0001>
module attributes {stable_mosaic.version = 11 : i64} {
  func.func @patch_embed_kernel(%arg0: i32, %arg1: memref<32x48xf32, #tpu.memory_space<vmem>>, %arg2: memref<48x64xf32, #tpu.memory_space<vmem>>, %arg3: memref<1x64xf32, #tpu.memory_space<vmem>>, %arg4: memref<32x64xf32, #tpu.memory_space<vmem>>, %arg5: memref<32x64xf32, #tpu.memory_space<vmem>>) attributes {dimension_semantics = [#tpu.dimension_semantics<parallel>], iteration_bounds = array<i64: 2>, scalar_prefetch = 0 : i64, scratch_operands = 0 : i64, tpu.core_type = #tpu.core_type<tc>, window_params = [{transform_indices = @transform_0, window_bounds = array<i64: 32, 48>}, {pipeline_mode = #tpu.pipeline_mode<synchronous>, transform_indices = @transform_1, window_bounds = array<i64: 48, 64>}, {pipeline_mode = #tpu.pipeline_mode<synchronous>, transform_indices = @transform_2, window_bounds = array<i64: 1, 64>}, {pipeline_mode = #tpu.pipeline_mode<synchronous>, transform_indices = @transform_3, window_bounds = array<i64: 32, 64>}, {transform_indices = @transform_4, window_bounds = array<i64: 32, 64>}]} {
    %c0 = arith.constant 0 : index
    %c0_0 = arith.constant 0 : index
    %0 = vector.load %arg1[%c0, %c0_0] : memref<32x48xf32, #tpu.memory_space<vmem>>, vector<32x48xf32>
    %c0_1 = arith.constant 0 : index
    %c0_2 = arith.constant 0 : index
    %1 = vector.load %arg2[%c0_1, %c0_2] : memref<48x64xf32, #tpu.memory_space<vmem>>, vector<48x64xf32>
    %cst = arith.constant dense<0.000000e+00> : vector<32x64xf32>
    %2 = tpu.matmul %0, %1, %cst {dimension_numbers = #tpu.dot_dimension_numbers<[1], [0], [0], [1], [0, 0, 1, 1], [], []>} : vector<32x48xf32>, vector<48x64xf32>, vector<32x64xf32> -> vector<32x64xf32>
    %c0_3 = arith.constant 0 : index
    %c0_4 = arith.constant 0 : index
    %3 = vector.load %arg3[%c0_3, %c0_4] : memref<1x64xf32, #tpu.memory_space<vmem>>, vector<1x64xf32>
    %4 = vector.broadcast %3 : vector<1x64xf32> to vector<32x64xf32>
    %5 = arith.addf %2, %4 : vector<32x64xf32>
    %c0_5 = arith.constant 0 : index
    %c0_6 = arith.constant 0 : index
    %6 = vector.load %arg4[%c0_5, %c0_6] : memref<32x64xf32, #tpu.memory_space<vmem>>, vector<32x64xf32>
    %7 = arith.addf %5, %6 : vector<32x64xf32>
    %c0_7 = arith.constant 0 : index
    %c0_8 = arith.constant 0 : index
    %8 = vector.load %arg5[%c0_7, %c0_8] : memref<32x64xf32, #tpu.memory_space<vmem>>, vector<32x64xf32>
    tpu.vector_store %arg5[%c0_7, %c0_8], %7 {strides = array<i32>} : memref<32x64xf32, #tpu.memory_space<vmem>>, vector<32x64xf32>,
    return
  }
  func.func @transform_0(%arg0: i32) -> (i32, i32) {
    %c0_i32 = arith.constant 0 : i32
    %c0_i32_0 = arith.constant 0 : i32
    return %arg0, %c0_i32 : i32, i32
  }
  func.func @transform_1(%arg0: i32) -> (i32, i32) {
    %c0_i32 = arith.constant 0 : i32
    %c0_i32_0 = arith.constant 0 : i32
    %c0_i32_1 = arith.constant 0 : i32
    return %c0_i32, %c0_i32_0 : i32, i32
  }
  func.func @transform_2(%arg0: i32) -> (i32, i32) {
    %c0_i32 = arith.constant 0 : i32
    %c0_i32_0 = arith.constant 0 : i32
    %c0_i32_1 = arith.constant 0 : i32
    return %c0_i32, %c0_i32_0 : i32, i32
  }
  func.func @transform_3(%arg0: i32) -> (i32, i32) {
    %c0_i32 = arith.constant 0 : i32
    %c0_i32_0 = arith.constant 0 : i32
    %c0_i32_1 = arith.constant 0 : i32
    return %c0_i32, %c0_i32_0 : i32, i32
  }
  func.func @transform_4(%arg0: i32) -> (i32, i32) {
    %c0_i32 = arith.constant 0 : i32
    %c0_i32_0 = arith.constant 0 : i32
    return %arg0, %c0_i32 : i32, i32
  }
}

module attributes {stable_mosaic.version = 11 : i64} {
  func.func @vit_blocks_fused_kernel(%arg0: i32, %arg1: memref<16x64xf32, #tpu.memory_space<vmem>>, %arg2: memref<16x16xf32, #tpu.memory_space<vmem>>, %arg3: memref<6x1x64xf32, #tpu.memory_space<vmem>>, %arg4: memref<6x1x64xf32, #tpu.memory_space<vmem>>, %arg5: memref<6x64x192xf32, #tpu.memory_space<vmem>>, %arg6: memref<6x1x192xf32, #tpu.memory_space<vmem>>, %arg7: memref<6x64x64xf32, #tpu.memory_space<vmem>>, %arg8: memref<6x1x64xf32, #tpu.memory_space<vmem>>, %arg9: memref<6x1x64xf32, #tpu.memory_space<vmem>>, %arg10: memref<6x1x64xf32, #tpu.memory_space<vmem>>, %arg11: memref<6x64x256xf32, #tpu.memory_space<vmem>>, %arg12: memref<6x1x256xf32, #tpu.memory_space<vmem>>, %arg13: memref<6x256x64xf32, #tpu.memory_space<vmem>>, %arg14: memref<6x1x64xf32, #tpu.memory_space<vmem>>, %arg15: memref<16x384xf32, #tpu.memory_space<vmem>>) attributes {dimension_semantics = [#tpu.dimension_semantics<parallel>], iteration_bounds = array<i64: 2>, scalar_prefetch = 0 : i64, scratch_operands = 0 : i64, tpu.core_type = #tpu.core_type<tc>, window_params = [{transform_indices = @transform_0, window_bounds = array<i64: 16, 64>}, {pipeline_mode = #tpu.pipeline_mode<synchronous>, transform_indices = @transform_1, window_bounds = array<i64: 16, 16>}, {pipeline_mode = #tpu.pipeline_mode<synchronous>, transform_indices = @transform_2, window_bounds = array<i64: 6, 1, 64>}, {pipeline_mode = #tpu.pipeline_mode<synchronous>, transform_indices = @transform_3, window_bounds = array<i64: 6, 1, 64>}, {pipeline_mode = #tpu.pipeline_mode<synchronous>, transform_indices = @transform_4, window_bounds = array<i64: 6, 64, 192>}, {pipeline_mode = #tpu.pipeline_mode<synchronous>, transform_indices = @transform_5, window_bounds = array<i64: 6, 1, 192>}, {pipeline_mode = #tpu.pipeline_mode<synchronous>, transform_indices = @transform_6, window_bounds = array<i64: 6, 64, 64>}, {pipeline_mode = #tpu.pipeline_mode<synchronous>, transform_indices = @transform_7, window_bounds = array<i64: 6, 1, 64>}, {pipeline_mode = #tpu.pipeline_mode<synchronous>, transform_indices = @transform_8, window_bounds = array<i64: 6, 1, 64>}, {pipeline_mode = #tpu.pipeline_mode<synchronous>, transform_indices = @transform_9, window_bounds = array<i64: 6, 1, 64>}, {pipeline_mode = #tpu.pipeline_mode<synchronous>, transform_indices = @transform_10, window_bounds = array<i64: 6, 64, 256>}, {pipeline_mode = #tpu.pipeline_mode<synchronous>, transform_indices = @transform_11, window_bounds = array<i64: 6, 1, 256>}, {pipeline_mode = #tpu.pipeline_mode<synchronous>, transform_indices = @transform_12, window_bounds = array<i64: 6, 256, 64>}, {pipeline_mode = #tpu.pipeline_mode<synchronous>, transform_indices = @transform_13, window_bounds = array<i64: 6, 1, 64>}, {transform_indices = @transform_14, window_bounds = array<i64: 16, 384>}]} {
    %c0 = arith.constant 0 : index
    %c0_0 = arith.constant 0 : index
    %0 = vector.load %arg1[%c0, %c0_0] : memref<16x64xf32, #tpu.memory_space<vmem>>, vector<16x64xf32>
    %c0_1 = arith.constant 0 : index
    %c0_2 = arith.constant 0 : index
    %1 = vector.load %arg2[%c0_1, %c0_2] : memref<16x16xf32, #tpu.memory_space<vmem>>, vector<16x16xf32>
    %c0_3 = arith.constant 0 : index
    %c0_4 = arith.constant 0 : index
    %c0_5 = arith.constant 0 : index
    %2 = vector.load %arg3[%c0_3, %c0_4, %c0_5] : memref<6x1x64xf32, #tpu.memory_space<vmem>>, vector<1x1x64xf32>
    %3 = vector.shape_cast %2 : vector<1x1x64xf32> to vector<1x64xf32>
    %c0_6 = arith.constant 0 : index
    %c0_7 = arith.constant 0 : index
    %c0_8 = arith.constant 0 : index
    %4 = vector.load %arg4[%c0_6, %c0_7, %c0_8] : memref<6x1x64xf32, #tpu.memory_space<vmem>>, vector<1x1x64xf32>
    %5 = vector.shape_cast %4 : vector<1x1x64xf32> to vector<1x64xf32>
    %cst = arith.constant dense<0.000000e+00> : vector<16xf32>
    %6 = vector.multi_reduction <add>, %0, %cst [1] : vector<16x64xf32> to vector<16xf32>
    %7 = vector.shape_cast %6 : vector<16xf32> to vector<16x1xf32>
    %cst_9 = arith.constant 6.400000e+01 : f32
    %8 = vector.broadcast %cst_9 : f32 to vector<16x1xf32>
    %9 = arith.divf %7, %8 : vector<16x1xf32>
    %10 = vector.broadcast %9 : vector<16x1xf32> to vector<16x64xf32>
    %11 = arith.subf %0, %10 : vector<16x64xf32>
    %12 = arith.mulf %11, %11 : vector<16x64xf32>
    %cst_10 = arith.constant dense<0.000000e+00> : vector<16xf32>
    %13 = vector.multi_reduction <add>, %12, %cst_10 [1] : vector<16x64xf32> to vector<16xf32>
    %14 = vector.shape_cast %13 : vector<16xf32> to vector<16x1xf32>
    %cst_11 = arith.constant 6.400000e+01 : f32
    %15 = vector.broadcast %cst_11 : f32 to vector<16x1xf32>
    %16 = arith.divf %14, %15 : vector<16x1xf32>
    %17 = vector.broadcast %9 : vector<16x1xf32> to vector<16x64xf32>
    %18 = arith.subf %0, %17 : vector<16x64xf32>
    %cst_12 = arith.constant 9.99999974E-6 : f32
    %19 = vector.broadcast %cst_12 : f32 to vector<16x1xf32>
    %20 = arith.addf %16, %19 : vector<16x1xf32>
    %21 = math.rsqrt %20 : vector<16x1xf32>
    %22 = vector.broadcast %21 : vector<16x1xf32> to vector<16x64xf32>
    %23 = arith.mulf %18, %22 : vector<16x64xf32>
    %24 = vector.broadcast %3 : vector<1x64xf32> to vector<16x64xf32>
    %25 = arith.mulf %23, %24 : vector<16x64xf32>
    %26 = vector.broadcast %5 : vector<1x64xf32> to vector<16x64xf32>
    %27 = arith.addf %25, %26 : vector<16x64xf32>
    %c0_13 = arith.constant 0 : index
    %c0_14 = arith.constant 0 : index
    %c0_15 = arith.constant 0 : index
    %28 = vector.load %arg5[%c0_13, %c0_14, %c0_15] : memref<6x64x192xf32, #tpu.memory_space<vmem>>, vector<1x64x192xf32>
    %29 = vector.shape_cast %28 : vector<1x64x192xf32> to vector<64x192xf32>
    %cst_16 = arith.constant dense<0.000000e+00> : vector<16x192xf32>
    %30 = tpu.matmul %27, %29, %cst_16 {dimension_numbers = #tpu.dot_dimension_numbers<[1], [0], [0], [1], [0, 0, 1, 1], [], []>} : vector<16x64xf32>, vector<64x192xf32>, vector<16x192xf32> -> vector<16x192xf32>
    %c0_17 = arith.constant 0 : index
    %c0_18 = arith.constant 0 : index
    %c0_19 = arith.constant 0 : index
    %31 = vector.load %arg6[%c0_17, %c0_18, %c0_19] : memref<6x1x192xf32, #tpu.memory_space<vmem>>, vector<1x1x192xf32>
    %32 = vector.shape_cast %31 : vector<1x1x192xf32> to vector<1x192xf32>
    %33 = vector.broadcast %32 : vector<1x192xf32> to vector<16x192xf32>
    %34 = arith.addf %30, %33 : vector<16x192xf32>
    %c0_20 = arith.constant 0 : index
    %c0_21 = arith.constant 0 : index
    %c0_22 = arith.constant 0 : index
    %35 = vector.load %arg7[%c0_20, %c0_21, %c0_22] : memref<6x64x64xf32, #tpu.memory_space<vmem>>, vector<1x64x64xf32>
    %36 = vector.shape_cast %35 : vector<1x64x64xf32> to vector<64x64xf32>
    %cst_23 = arith.constant 0.000000e+00 : f32
    %37 = vector.broadcast %cst_23 : f32 to vector<16x64xf32>
    %38 = vector.extract_strided_slice %34 {offsets = [0, 0], sizes = [16, 16], strides = [1, 1]} : vector<16x192xf32> to vector<16x16xf32>
    %39 = vector.extract_strided_slice %34 {offsets = [0, 64], sizes = [16, 16], strides = [1, 1]} : vector<16x192xf32> to vector<16x16xf32>
    %40 = vector.extract_strided_slice %34 {offsets = [0, 128], sizes = [16, 16], strides = [1, 1]} : vector<16x192xf32> to vector<16x16xf32>
    %41 = tpu.transpose %39, [1, 0] : vector<16x16xf32> -> vector<16x16xf32>
    %cst_24 = arith.constant dense<0.000000e+00> : vector<16x16xf32>
    %42 = tpu.matmul %38, %41, %cst_24 {dimension_numbers = #tpu.dot_dimension_numbers<[1], [0], [0], [1], [0, 0, 1, 1], [], []>} : vector<16x16xf32>, vector<16x16xf32>, vector<16x16xf32> -> vector<16x16xf32>
    %43 = arith.addf %42, %1 : vector<16x16xf32>
    %cst_25 = arith.constant dense<0xFF800000> : vector<16xf32>
    %44 = vector.multi_reduction <maximumf>, %43, %cst_25 [1] : vector<16x16xf32> to vector<16xf32>
    %45 = vector.shape_cast %44 : vector<16xf32> to vector<16x1xf32>
    %46 = vector.broadcast %45 : vector<16x1xf32> to vector<16x16xf32>
    %47 = arith.subf %43, %46 : vector<16x16xf32>
    %48 = math.exp %47 : vector<16x16xf32>
    %cst_26 = arith.constant dense<0.000000e+00> : vector<16xf32>
    %49 = vector.multi_reduction <add>, %48, %cst_26 [1] : vector<16x16xf32> to vector<16xf32>
    %50 = vector.shape_cast %49 : vector<16xf32> to vector<16x1xf32>
    %51 = tpu.reciprocal %50 {approx = true} : vector<16x1xf32> -> vector<16x1xf32>
    %52 = vector.broadcast %51 : vector<16x1xf32> to vector<16x16xf32>
    %53 = arith.mulf %48, %52 : vector<16x16xf32>
    %cst_27 = arith.constant dense<0.000000e+00> : vector<16x16xf32>
    %54 = tpu.matmul %53, %40, %cst_27 {dimension_numbers = #tpu.dot_dimension_numbers<[1], [0], [0], [1], [0, 0, 1, 1], [], []>} : vector<16x16xf32>, vector<16x16xf32>, vector<16x16xf32> -> vector<16x16xf32>
    %55 = vector.extract_strided_slice %36 {offsets = [0, 0], sizes = [16, 64], strides = [1, 1]} : vector<64x64xf32> to vector<16x64xf32>
    %cst_28 = arith.constant dense<0.000000e+00> : vector<16x64xf32>
    %56 = tpu.matmul %54, %55, %cst_28 {dimension_numbers = #tpu.dot_dimension_numbers<[1], [0], [0], [1], [0, 0, 1, 1], [], []>} : vector<16x16xf32>, vector<16x64xf32>, vector<16x64xf32> -> vector<16x64xf32>
    %57 = arith.addf %37, %56 : vector<16x64xf32>
    %58 = vector.extract_strided_slice %34 {offsets = [0, 16], sizes = [16, 16], strides = [1, 1]} : vector<16x192xf32> to vector<16x16xf32>
    %59 = vector.extract_strided_slice %34 {offsets = [0, 80], sizes = [16, 16], strides = [1, 1]} : vector<16x192xf32> to vector<16x16xf32>
    %60 = vector.extract_strided_slice %34 {offsets = [0, 144], sizes = [16, 16], strides = [1, 1]} : vector<16x192xf32> to vector<16x16xf32>
    %61 = tpu.transpose %59, [1, 0] : vector<16x16xf32> -> vector<16x16xf32>
    %cst_29 = arith.constant dense<0.000000e+00> : vector<16x16xf32>
    %62 = tpu.matmul %58, %61, %cst_29 {dimension_numbers = #tpu.dot_dimension_numbers<[1], [0], [0], [1], [0, 0, 1, 1], [], []>} : vector<16x16xf32>, vector<16x16xf32>, vector<16x16xf32> -> vector<16x16xf32>
    %63 = arith.addf %62, %1 : vector<16x16xf32>
    %cst_30 = arith.constant dense<0xFF800000> : vector<16xf32>
    %64 = vector.multi_reduction <maximumf>, %63, %cst_30 [1] : vector<16x16xf32> to vector<16xf32>
    %65 = vector.shape_cast %64 : vector<16xf32> to vector<16x1xf32>
    %66 = vector.broadcast %65 : vector<16x1xf32> to vector<16x16xf32>
    %67 = arith.subf %63, %66 : vector<16x16xf32>
    %68 = math.exp %67 : vector<16x16xf32>
    %cst_31 = arith.constant dense<0.000000e+00> : vector<16xf32>
    %69 = vector.multi_reduction <add>, %68, %cst_31 [1] : vector<16x16xf32> to vector<16xf32>
    %70 = vector.shape_cast %69 : vector<16xf32> to vector<16x1xf32>
    %71 = tpu.reciprocal %70 {approx = true} : vector<16x1xf32> -> vector<16x1xf32>
    %72 = vector.broadcast %71 : vector<16x1xf32> to vector<16x16xf32>
    %73 = arith.mulf %68, %72 : vector<16x16xf32>
    %cst_32 = arith.constant dense<0.000000e+00> : vector<16x16xf32>
    %74 = tpu.matmul %73, %60, %cst_32 {dimension_numbers = #tpu.dot_dimension_numbers<[1], [0], [0], [1], [0, 0, 1, 1], [], []>} : vector<16x16xf32>, vector<16x16xf32>, vector<16x16xf32> -> vector<16x16xf32>
    %75 = vector.extract_strided_slice %36 {offsets = [16, 0], sizes = [16, 64], strides = [1, 1]} : vector<64x64xf32> to vector<16x64xf32>
    %cst_33 = arith.constant dense<0.000000e+00> : vector<16x64xf32>
    %76 = tpu.matmul %74, %75, %cst_33 {dimension_numbers = #tpu.dot_dimension_numbers<[1], [0], [0], [1], [0, 0, 1, 1], [], []>} : vector<16x16xf32>, vector<16x64xf32>, vector<16x64xf32> -> vector<16x64xf32>
    %77 = arith.addf %57, %76 : vector<16x64xf32>
    %78 = vector.extract_strided_slice %34 {offsets = [0, 32], sizes = [16, 16], strides = [1, 1]} : vector<16x192xf32> to vector<16x16xf32>
    %79 = vector.extract_strided_slice %34 {offsets = [0, 96], sizes = [16, 16], strides = [1, 1]} : vector<16x192xf32> to vector<16x16xf32>
    %80 = vector.extract_strided_slice %34 {offsets = [0, 160], sizes = [16, 16], strides = [1, 1]} : vector<16x192xf32> to vector<16x16xf32>
    %81 = tpu.transpose %79, [1, 0] : vector<16x16xf32> -> vector<16x16xf32>
    %cst_34 = arith.constant dense<0.000000e+00> : vector<16x16xf32>
    %82 = tpu.matmul %78, %81, %cst_34 {dimension_numbers = #tpu.dot_dimension_numbers<[1], [0], [0], [1], [0, 0, 1, 1], [], []>} : vector<16x16xf32>, vector<16x16xf32>, vector<16x16xf32> -> vector<16x16xf32>
    %83 = arith.addf %82, %1 : vector<16x16xf32>
    %cst_35 = arith.constant dense<0xFF800000> : vector<16xf32>
    %84 = vector.multi_reduction <maximumf>, %83, %cst_35 [1] : vector<16x16xf32> to vector<16xf32>
    %85 = vector.shape_cast %84 : vector<16xf32> to vector<16x1xf32>
    %86 = vector.broadcast %85 : vector<16x1xf32> to vector<16x16xf32>
    %87 = arith.subf %83, %86 : vector<16x16xf32>
    %88 = math.exp %87 : vector<16x16xf32>
    %cst_36 = arith.constant dense<0.000000e+00> : vector<16xf32>
    %89 = vector.multi_reduction <add>, %88, %cst_36 [1] : vector<16x16xf32> to vector<16xf32>
    %90 = vector.shape_cast %89 : vector<16xf32> to vector<16x1xf32>
    %91 = tpu.reciprocal %90 {approx = true} : vector<16x1xf32> -> vector<16x1xf32>
    %92 = vector.broadcast %91 : vector<16x1xf32> to vector<16x16xf32>
    %93 = arith.mulf %88, %92 : vector<16x16xf32>
    %cst_37 = arith.constant dense<0.000000e+00> : vector<16x16xf32>
    %94 = tpu.matmul %93, %80, %cst_37 {dimension_numbers = #tpu.dot_dimension_numbers<[1], [0], [0], [1], [0, 0, 1, 1], [], []>} : vector<16x16xf32>, vector<16x16xf32>, vector<16x16xf32> -> vector<16x16xf32>
    %95 = vector.extract_strided_slice %36 {offsets = [32, 0], sizes = [16, 64], strides = [1, 1]} : vector<64x64xf32> to vector<16x64xf32>
    %cst_38 = arith.constant dense<0.000000e+00> : vector<16x64xf32>
    %96 = tpu.matmul %94, %95, %cst_38 {dimension_numbers = #tpu.dot_dimension_numbers<[1], [0], [0], [1], [0, 0, 1, 1], [], []>} : vector<16x16xf32>, vector<16x64xf32>, vector<16x64xf32> -> vector<16x64xf32>
    %97 = arith.addf %77, %96 : vector<16x64xf32>
    %98 = vector.extract_strided_slice %34 {offsets = [0, 48], sizes = [16, 16], strides = [1, 1]} : vector<16x192xf32> to vector<16x16xf32>
    %99 = vector.extract_strided_slice %34 {offsets = [0, 112], sizes = [16, 16], strides = [1, 1]} : vector<16x192xf32> to vector<16x16xf32>
    %100 = vector.extract_strided_slice %34 {offsets = [0, 176], sizes = [16, 16], strides = [1, 1]} : vector<16x192xf32> to vector<16x16xf32>
    %101 = tpu.transpose %99, [1, 0] : vector<16x16xf32> -> vector<16x16xf32>
    %cst_39 = arith.constant dense<0.000000e+00> : vector<16x16xf32>
    %102 = tpu.matmul %98, %101, %cst_39 {dimension_numbers = #tpu.dot_dimension_numbers<[1], [0], [0], [1], [0, 0, 1, 1], [], []>} : vector<16x16xf32>, vector<16x16xf32>, vector<16x16xf32> -> vector<16x16xf32>
    %103 = arith.addf %102, %1 : vector<16x16xf32>
    %cst_40 = arith.constant dense<0xFF800000> : vector<16xf32>
    %104 = vector.multi_reduction <maximumf>, %103, %cst_40 [1] : vector<16x16xf32> to vector<16xf32>
    %105 = vector.shape_cast %104 : vector<16xf32> to vector<16x1xf32>
    %106 = vector.broadcast %105 : vector<16x1xf32> to vector<16x16xf32>
    %107 = arith.subf %103, %106 : vector<16x16xf32>
    %108 = math.exp %107 : vector<16x16xf32>
    %cst_41 = arith.constant dense<0.000000e+00> : vector<16xf32>
    %109 = vector.multi_reduction <add>, %108, %cst_41 [1] : vector<16x16xf32> to vector<16xf32>
    %110 = vector.shape_cast %109 : vector<16xf32> to vector<16x1xf32>
    %111 = tpu.reciprocal %110 {approx = true} : vector<16x1xf32> -> vector<16x1xf32>
    %112 = vector.broadcast %111 : vector<16x1xf32> to vector<16x16xf32>
    %113 = arith.mulf %108, %112 : vector<16x16xf32>
    %cst_42 = arith.constant dense<0.000000e+00> : vector<16x16xf32>
    %114 = tpu.matmul %113, %100, %cst_42 {dimension_numbers = #tpu.dot_dimension_numbers<[1], [0], [0], [1], [0, 0, 1, 1], [], []>} : vector<16x16xf32>, vector<16x16xf32>, vector<16x16xf32> -> vector<16x16xf32>
    %115 = vector.extract_strided_slice %36 {offsets = [48, 0], sizes = [16, 64], strides = [1, 1]} : vector<64x64xf32> to vector<16x64xf32>
    %cst_43 = arith.constant dense<0.000000e+00> : vector<16x64xf32>
    %116 = tpu.matmul %114, %115, %cst_43 {dimension_numbers = #tpu.dot_dimension_numbers<[1], [0], [0], [1], [0, 0, 1, 1], [], []>} : vector<16x16xf32>, vector<16x64xf32>, vector<16x64xf32> -> vector<16x64xf32>
    %117 = arith.addf %97, %116 : vector<16x64xf32>
    %118 = arith.addf %0, %117 : vector<16x64xf32>
    %c0_44 = arith.constant 0 : index
    %c0_45 = arith.constant 0 : index
    %c0_46 = arith.constant 0 : index
    %119 = vector.load %arg8[%c0_44, %c0_45, %c0_46] : memref<6x1x64xf32, #tpu.memory_space<vmem>>, vector<1x1x64xf32>
    %120 = vector.shape_cast %119 : vector<1x1x64xf32> to vector<1x64xf32>
    %121 = vector.broadcast %120 : vector<1x64xf32> to vector<16x64xf32>
    %122 = arith.addf %118, %121 : vector<16x64xf32>
    %c0_47 = arith.constant 0 : index
    %c0_48 = arith.constant 0 : index
    %c0_49 = arith.constant 0 : index
    %123 = vector.load %arg9[%c0_47, %c0_48, %c0_49] : memref<6x1x64xf32, #tpu.memory_space<vmem>>, vector<1x1x64xf32>
    %124 = vector.shape_cast %123 : vector<1x1x64xf32> to vector<1x64xf32>
    %c0_50 = arith.constant 0 : index
    %c0_51 = arith.constant 0 : index
    %c0_52 = arith.constant 0 : index
    %125 = vector.load %arg10[%c0_50, %c0_51, %c0_52] : memref<6x1x64xf32, #tpu.memory_space<vmem>>, vector<1x1x64xf32>
    %126 = vector.shape_cast %125 : vector<1x1x64xf32> to vector<1x64xf32>
    %cst_53 = arith.constant dense<0.000000e+00> : vector<16xf32>
    %127 = vector.multi_reduction <add>, %122, %cst_53 [1] : vector<16x64xf32> to vector<16xf32>
    %128 = vector.shape_cast %127 : vector<16xf32> to vector<16x1xf32>
    %cst_54 = arith.constant 6.400000e+01 : f32
    %129 = vector.broadcast %cst_54 : f32 to vector<16x1xf32>
    %130 = arith.divf %128, %129 : vector<16x1xf32>
    %131 = vector.broadcast %130 : vector<16x1xf32> to vector<16x64xf32>
    %132 = arith.subf %122, %131 : vector<16x64xf32>
    %133 = arith.mulf %132, %132 : vector<16x64xf32>
    %cst_55 = arith.constant dense<0.000000e+00> : vector<16xf32>
    %134 = vector.multi_reduction <add>, %133, %cst_55 [1] : vector<16x64xf32> to vector<16xf32>
    %135 = vector.shape_cast %134 : vector<16xf32> to vector<16x1xf32>
    %cst_56 = arith.constant 6.400000e+01 : f32
    %136 = vector.broadcast %cst_56 : f32 to vector<16x1xf32>
    %137 = arith.divf %135, %136 : vector<16x1xf32>
    %138 = vector.broadcast %130 : vector<16x1xf32> to vector<16x64xf32>
    %139 = arith.subf %122, %138 : vector<16x64xf32>
    %cst_57 = arith.constant 9.99999974E-6 : f32
    %140 = vector.broadcast %cst_57 : f32 to vector<16x1xf32>
    %141 = arith.addf %137, %140 : vector<16x1xf32>
    %142 = math.rsqrt %141 : vector<16x1xf32>
    %143 = vector.broadcast %142 : vector<16x1xf32> to vector<16x64xf32>
    %144 = arith.mulf %139, %143 : vector<16x64xf32>
    %145 = vector.broadcast %124 : vector<1x64xf32> to vector<16x64xf32>
    %146 = arith.mulf %144, %145 : vector<16x64xf32>
    %147 = vector.broadcast %126 : vector<1x64xf32> to vector<16x64xf32>
    %148 = arith.addf %146, %147 : vector<16x64xf32>
    %c0_58 = arith.constant 0 : index
    %c0_59 = arith.constant 0 : index
    %c0_60 = arith.constant 0 : index
    %149 = vector.load %arg11[%c0_58, %c0_59, %c0_60] : memref<6x64x256xf32, #tpu.memory_space<vmem>>, vector<1x64x256xf32>
    %150 = vector.shape_cast %149 : vector<1x64x256xf32> to vector<64x256xf32>
    %cst_61 = arith.constant dense<0.000000e+00> : vector<16x256xf32>
    %151 = tpu.matmul %148, %150, %cst_61 {dimension_numbers = #tpu.dot_dimension_numbers<[1], [0], [0], [1], [0, 0, 1, 1], [], []>} : vector<16x64xf32>, vector<64x256xf32>, vector<16x256xf32> -> vector<16x256xf32>
    %c0_62 = arith.constant 0 : index
    %c0_63 = arith.constant 0 : index
    %c0_64 = arith.constant 0 : index
    %152 = vector.load %arg12[%c0_62, %c0_63, %c0_64] : memref<6x1x256xf32, #tpu.memory_space<vmem>>, vector<1x1x256xf32>
    %153 = vector.shape_cast %152 : vector<1x1x256xf32> to vector<1x256xf32>
    %154 = vector.broadcast %153 : vector<1x256xf32> to vector<16x256xf32>
    %155 = arith.addf %151, %154 : vector<16x256xf32>
    %cst_65 = arith.constant 5.000000e-01 : f32
    %156 = vector.broadcast %cst_65 : f32 to vector<16x256xf32>
    %157 = arith.mulf %156, %155 : vector<16x256xf32>
    %cst_66 = arith.constant 0.707106769 : f32
    %158 = vector.broadcast %cst_66 : f32 to vector<16x256xf32>
    %159 = arith.mulf %155, %158 : vector<16x256xf32>
    %160 = math.absf %159 : vector<16x256xf32>
    %cst_67 = arith.constant 0.327591091 : f32
    %161 = vector.broadcast %cst_67 : f32 to vector<16x256xf32>
    %162 = arith.mulf %161, %160 : vector<16x256xf32>
    %cst_68 = arith.constant 1.000000e+00 : f32
    %163 = vector.broadcast %cst_68 : f32 to vector<16x256xf32>
    %164 = arith.addf %163, %162 : vector<16x256xf32>
    %cst_69 = arith.constant 1.000000e+00 : f32
    %165 = vector.broadcast %cst_69 : f32 to vector<16x256xf32>
    %166 = arith.divf %165, %164 : vector<16x256xf32>
    %cst_70 = arith.constant 1.06140542 : f32
    %167 = vector.broadcast %cst_70 : f32 to vector<16x256xf32>
    %168 = arith.mulf %167, %166 : vector<16x256xf32>
    %cst_71 = arith.constant -1.45315206 : f32
    %169 = vector.broadcast %cst_71 : f32 to vector<16x256xf32>
    %170 = arith.addf %168, %169 : vector<16x256xf32>
    %171 = arith.mulf %170, %166 : vector<16x256xf32>
    %cst_72 = arith.constant 1.42141378 : f32
    %172 = vector.broadcast %cst_72 : f32 to vector<16x256xf32>
    %173 = arith.addf %171, %172 : vector<16x256xf32>
    %174 = arith.mulf %173, %166 : vector<16x256xf32>
    %cst_73 = arith.constant -0.284496725 : f32
    %175 = vector.broadcast %cst_73 : f32 to vector<16x256xf32>
    %176 = arith.addf %174, %175 : vector<16x256xf32>
    %177 = arith.mulf %176, %166 : vector<16x256xf32>
    %cst_74 = arith.constant 0.254829586 : f32
    %178 = vector.broadcast %cst_74 : f32 to vector<16x256xf32>
    %179 = arith.addf %177, %178 : vector<16x256xf32>
    %180 = arith.mulf %179, %166 : vector<16x256xf32>
    %cst_75 = arith.constant 0.000000e+00 : f32
    %181 = vector.broadcast %cst_75 : f32 to vector<16x256xf32>
    %182 = arith.subf %181, %160 : vector<16x256xf32>
    %183 = arith.mulf %182, %160 : vector<16x256xf32>
    %184 = math.exp %183 : vector<16x256xf32>
    %185 = arith.mulf %180, %184 : vector<16x256xf32>
    %cst_76 = arith.constant 1.000000e+00 : f32
    %186 = vector.broadcast %cst_76 : f32 to vector<16x256xf32>
    %187 = arith.subf %186, %185 : vector<16x256xf32>
    %cst_77 = arith.constant 0.000000e+00 : f32
    %188 = vector.broadcast %cst_77 : f32 to vector<16x256xf32>
    %189 = arith.cmpf oge, %159, %188 : vector<16x256xf32>
    %cst_78 = arith.constant 0.000000e+00 : f32
    %190 = vector.broadcast %cst_78 : f32 to vector<16x256xf32>
    %191 = arith.subf %190, %187 : vector<16x256xf32>
    %192 = arith.select %189, %187, %191 : vector<16x256xi1>, vector<16x256xf32>
    %cst_79 = arith.constant 1.000000e+00 : f32
    %193 = vector.broadcast %cst_79 : f32 to vector<16x256xf32>
    %194 = arith.addf %193, %192 : vector<16x256xf32>
    %195 = arith.mulf %157, %194 : vector<16x256xf32>
    %c0_80 = arith.constant 0 : index
    %c0_81 = arith.constant 0 : index
    %c0_82 = arith.constant 0 : index
    %196 = vector.load %arg13[%c0_80, %c0_81, %c0_82] : memref<6x256x64xf32, #tpu.memory_space<vmem>>, vector<1x256x64xf32>
    %197 = vector.shape_cast %196 : vector<1x256x64xf32> to vector<256x64xf32>
    %cst_83 = arith.constant dense<0.000000e+00> : vector<16x64xf32>
    %198 = tpu.matmul %195, %197, %cst_83 {dimension_numbers = #tpu.dot_dimension_numbers<[1], [0], [0], [1], [0, 0, 1, 1], [], []>} : vector<16x256xf32>, vector<256x64xf32>, vector<16x64xf32> -> vector<16x64xf32>
    %199 = arith.addf %122, %198 : vector<16x64xf32>
    %c0_84 = arith.constant 0 : index
    %c0_85 = arith.constant 0 : index
    %c0_86 = arith.constant 0 : index
    %200 = vector.load %arg14[%c0_84, %c0_85, %c0_86] : memref<6x1x64xf32, #tpu.memory_space<vmem>>, vector<1x1x64xf32>
    %201 = vector.shape_cast %200 : vector<1x1x64xf32> to vector<1x64xf32>
    %202 = vector.broadcast %201 : vector<1x64xf32> to vector<16x64xf32>
    %203 = arith.addf %199, %202 : vector<16x64xf32>
    %c0_87 = arith.constant 0 : index
    %c0_88 = arith.constant 0 : index
    %204 = vector.load %arg15[%c0_87, %c0_88] : memref<16x384xf32, #tpu.memory_space<vmem>>, vector<16x64xf32>
    tpu.vector_store %arg15[%c0_87, %c0_88], %203 {strides = array<i32>} : memref<16x384xf32, #tpu.memory_space<vmem>>, vector<16x64xf32>,
    %c1 = arith.constant 1 : index
    %c0_89 = arith.constant 0 : index
    %c0_90 = arith.constant 0 : index
    %205 = vector.load %arg3[%c1, %c0_89, %c0_90] : memref<6x1x64xf32, #tpu.memory_space<vmem>>, vector<1x1x64xf32>
    %206 = vector.shape_cast %205 : vector<1x1x64xf32> to vector<1x64xf32>
    %c1_91 = arith.constant 1 : index
    %c0_92 = arith.constant 0 : index
    %c0_93 = arith.constant 0 : index
    %207 = vector.load %arg4[%c1_91, %c0_92, %c0_93] : memref<6x1x64xf32, #tpu.memory_space<vmem>>, vector<1x1x64xf32>
    %208 = vector.shape_cast %207 : vector<1x1x64xf32> to vector<1x64xf32>
    %cst_94 = arith.constant dense<0.000000e+00> : vector<16xf32>
    %209 = vector.multi_reduction <add>, %203, %cst_94 [1] : vector<16x64xf32> to vector<16xf32>
    %210 = vector.shape_cast %209 : vector<16xf32> to vector<16x1xf32>
    %cst_95 = arith.constant 6.400000e+01 : f32
    %211 = vector.broadcast %cst_95 : f32 to vector<16x1xf32>
    %212 = arith.divf %210, %211 : vector<16x1xf32>
    %213 = vector.broadcast %212 : vector<16x1xf32> to vector<16x64xf32>
    %214 = arith.subf %203, %213 : vector<16x64xf32>
    %215 = arith.mulf %214, %214 : vector<16x64xf32>
    %cst_96 = arith.constant dense<0.000000e+00> : vector<16xf32>
    %216 = vector.multi_reduction <add>, %215, %cst_96 [1] : vector<16x64xf32> to vector<16xf32>
    %217 = vector.shape_cast %216 : vector<16xf32> to vector<16x1xf32>
    %cst_97 = arith.constant 6.400000e+01 : f32
    %218 = vector.broadcast %cst_97 : f32 to vector<16x1xf32>
    %219 = arith.divf %217, %218 : vector<16x1xf32>
    %220 = vector.broadcast %212 : vector<16x1xf32> to vector<16x64xf32>
    %221 = arith.subf %203, %220 : vector<16x64xf32>
    %cst_98 = arith.constant 9.99999974E-6 : f32
    %222 = vector.broadcast %cst_98 : f32 to vector<16x1xf32>
    %223 = arith.addf %219, %222 : vector<16x1xf32>
    %224 = math.rsqrt %223 : vector<16x1xf32>
    %225 = vector.broadcast %224 : vector<16x1xf32> to vector<16x64xf32>
    %226 = arith.mulf %221, %225 : vector<16x64xf32>
    %227 = vector.broadcast %206 : vector<1x64xf32> to vector<16x64xf32>
    %228 = arith.mulf %226, %227 : vector<16x64xf32>
    %229 = vector.broadcast %208 : vector<1x64xf32> to vector<16x64xf32>
    %230 = arith.addf %228, %229 : vector<16x64xf32>
    %c1_99 = arith.constant 1 : index
    %c0_100 = arith.constant 0 : index
    %c0_101 = arith.constant 0 : index
    %231 = vector.load %arg5[%c1_99, %c0_100, %c0_101] : memref<6x64x192xf32, #tpu.memory_space<vmem>>, vector<1x64x192xf32>
    %232 = vector.shape_cast %231 : vector<1x64x192xf32> to vector<64x192xf32>
    %cst_102 = arith.constant dense<0.000000e+00> : vector<16x192xf32>
    %233 = tpu.matmul %230, %232, %cst_102 {dimension_numbers = #tpu.dot_dimension_numbers<[1], [0], [0], [1], [0, 0, 1, 1], [], []>} : vector<16x64xf32>, vector<64x192xf32>, vector<16x192xf32> -> vector<16x192xf32>
    %c1_103 = arith.constant 1 : index
    %c0_104 = arith.constant 0 : index
    %c0_105 = arith.constant 0 : index
    %234 = vector.load %arg6[%c1_103, %c0_104, %c0_105] : memref<6x1x192xf32, #tpu.memory_space<vmem>>, vector<1x1x192xf32>
    %235 = vector.shape_cast %234 : vector<1x1x192xf32> to vector<1x192xf32>
    %236 = vector.broadcast %235 : vector<1x192xf32> to vector<16x192xf32>
    %237 = arith.addf %233, %236 : vector<16x192xf32>
    %c1_106 = arith.constant 1 : index
    %c0_107 = arith.constant 0 : index
    %c0_108 = arith.constant 0 : index
    %238 = vector.load %arg7[%c1_106, %c0_107, %c0_108] : memref<6x64x64xf32, #tpu.memory_space<vmem>>, vector<1x64x64xf32>
    %239 = vector.shape_cast %238 : vector<1x64x64xf32> to vector<64x64xf32>
    %cst_109 = arith.constant 0.000000e+00 : f32
    %240 = vector.broadcast %cst_109 : f32 to vector<16x64xf32>
    %241 = vector.extract_strided_slice %237 {offsets = [0, 0], sizes = [16, 16], strides = [1, 1]} : vector<16x192xf32> to vector<16x16xf32>
    %242 = vector.extract_strided_slice %237 {offsets = [0, 64], sizes = [16, 16], strides = [1, 1]} : vector<16x192xf32> to vector<16x16xf32>
    %243 = vector.extract_strided_slice %237 {offsets = [0, 128], sizes = [16, 16], strides = [1, 1]} : vector<16x192xf32> to vector<16x16xf32>
    %244 = tpu.transpose %242, [1, 0] : vector<16x16xf32> -> vector<16x16xf32>
    %cst_110 = arith.constant dense<0.000000e+00> : vector<16x16xf32>
    %245 = tpu.matmul %241, %244, %cst_110 {dimension_numbers = #tpu.dot_dimension_numbers<[1], [0], [0], [1], [0, 0, 1, 1], [], []>} : vector<16x16xf32>, vector<16x16xf32>, vector<16x16xf32> -> vector<16x16xf32>
    %246 = arith.addf %245, %1 : vector<16x16xf32>
    %cst_111 = arith.constant dense<0xFF800000> : vector<16xf32>
    %247 = vector.multi_reduction <maximumf>, %246, %cst_111 [1] : vector<16x16xf32> to vector<16xf32>
    %248 = vector.shape_cast %247 : vector<16xf32> to vector<16x1xf32>
    %249 = vector.broadcast %248 : vector<16x1xf32> to vector<16x16xf32>
    %250 = arith.subf %246, %249 : vector<16x16xf32>
    %251 = math.exp %250 : vector<16x16xf32>
    %cst_112 = arith.constant dense<0.000000e+00> : vector<16xf32>
    %252 = vector.multi_reduction <add>, %251, %cst_112 [1] : vector<16x16xf32> to vector<16xf32>
    %253 = vector.shape_cast %252 : vector<16xf32> to vector<16x1xf32>
    %254 = tpu.reciprocal %253 {approx = true} : vector<16x1xf32> -> vector<16x1xf32>
    %255 = vector.broadcast %254 : vector<16x1xf32> to vector<16x16xf32>
    %256 = arith.mulf %251, %255 : vector<16x16xf32>
    %cst_113 = arith.constant dense<0.000000e+00> : vector<16x16xf32>
    %257 = tpu.matmul %256, %243, %cst_113 {dimension_numbers = #tpu.dot_dimension_numbers<[1], [0], [0], [1], [0, 0, 1, 1], [], []>} : vector<16x16xf32>, vector<16x16xf32>, vector<16x16xf32> -> vector<16x16xf32>
    %258 = vector.extract_strided_slice %239 {offsets = [0, 0], sizes = [16, 64], strides = [1, 1]} : vector<64x64xf32> to vector<16x64xf32>
    %cst_114 = arith.constant dense<0.000000e+00> : vector<16x64xf32>
    %259 = tpu.matmul %257, %258, %cst_114 {dimension_numbers = #tpu.dot_dimension_numbers<[1], [0], [0], [1], [0, 0, 1, 1], [], []>} : vector<16x16xf32>, vector<16x64xf32>, vector<16x64xf32> -> vector<16x64xf32>
    %260 = arith.addf %240, %259 : vector<16x64xf32>
    %261 = vector.extract_strided_slice %237 {offsets = [0, 16], sizes = [16, 16], strides = [1, 1]} : vector<16x192xf32> to vector<16x16xf32>
    %262 = vector.extract_strided_slice %237 {offsets = [0, 80], sizes = [16, 16], strides = [1, 1]} : vector<16x192xf32> to vector<16x16xf32>
    %263 = vector.extract_strided_slice %237 {offsets = [0, 144], sizes = [16, 16], strides = [1, 1]} : vector<16x192xf32> to vector<16x16xf32>
    %264 = tpu.transpose %262, [1, 0] : vector<16x16xf32> -> vector<16x16xf32>
    %cst_115 = arith.constant dense<0.000000e+00> : vector<16x16xf32>
    %265 = tpu.matmul %261, %264, %cst_115 {dimension_numbers = #tpu.dot_dimension_numbers<[1], [0], [0], [1], [0, 0, 1, 1], [], []>} : vector<16x16xf32>, vector<16x16xf32>, vector<16x16xf32> -> vector<16x16xf32>
    %266 = arith.addf %265, %1 : vector<16x16xf32>
    %cst_116 = arith.constant dense<0xFF800000> : vector<16xf32>
    %267 = vector.multi_reduction <maximumf>, %266, %cst_116 [1] : vector<16x16xf32> to vector<16xf32>
    %268 = vector.shape_cast %267 : vector<16xf32> to vector<16x1xf32>
    %269 = vector.broadcast %268 : vector<16x1xf32> to vector<16x16xf32>
    %270 = arith.subf %266, %269 : vector<16x16xf32>
    %271 = math.exp %270 : vector<16x16xf32>
    %cst_117 = arith.constant dense<0.000000e+00> : vector<16xf32>
    %272 = vector.multi_reduction <add>, %271, %cst_117 [1] : vector<16x16xf32> to vector<16xf32>
    %273 = vector.shape_cast %272 : vector<16xf32> to vector<16x1xf32>
    %274 = tpu.reciprocal %273 {approx = true} : vector<16x1xf32> -> vector<16x1xf32>
    %275 = vector.broadcast %274 : vector<16x1xf32> to vector<16x16xf32>
    %276 = arith.mulf %271, %275 : vector<16x16xf32>
    %cst_118 = arith.constant dense<0.000000e+00> : vector<16x16xf32>
    %277 = tpu.matmul %276, %263, %cst_118 {dimension_numbers = #tpu.dot_dimension_numbers<[1], [0], [0], [1], [0, 0, 1, 1], [], []>} : vector<16x16xf32>, vector<16x16xf32>, vector<16x16xf32> -> vector<16x16xf32>
    %278 = vector.extract_strided_slice %239 {offsets = [16, 0], sizes = [16, 64], strides = [1, 1]} : vector<64x64xf32> to vector<16x64xf32>
    %cst_119 = arith.constant dense<0.000000e+00> : vector<16x64xf32>
    %279 = tpu.matmul %277, %278, %cst_119 {dimension_numbers = #tpu.dot_dimension_numbers<[1], [0], [0], [1], [0, 0, 1, 1], [], []>} : vector<16x16xf32>, vector<16x64xf32>, vector<16x64xf32> -> vector<16x64xf32>
    %280 = arith.addf %260, %279 : vector<16x64xf32>
    %281 = vector.extract_strided_slice %237 {offsets = [0, 32], sizes = [16, 16], strides = [1, 1]} : vector<16x192xf32> to vector<16x16xf32>
    %282 = vector.extract_strided_slice %237 {offsets = [0, 96], sizes = [16, 16], strides = [1, 1]} : vector<16x192xf32> to vector<16x16xf32>
    %283 = vector.extract_strided_slice %237 {offsets = [0, 160], sizes = [16, 16], strides = [1, 1]} : vector<16x192xf32> to vector<16x16xf32>
    %284 = tpu.transpose %282, [1, 0] : vector<16x16xf32> -> vector<16x16xf32>
    %cst_120 = arith.constant dense<0.000000e+00> : vector<16x16xf32>
    %285 = tpu.matmul %281, %284, %cst_120 {dimension_numbers = #tpu.dot_dimension_numbers<[1], [0], [0], [1], [0, 0, 1, 1], [], []>} : vector<16x16xf32>, vector<16x16xf32>, vector<16x16xf32> -> vector<16x16xf32>
    %286 = arith.addf %285, %1 : vector<16x16xf32>
    %cst_121 = arith.constant dense<0xFF800000> : vector<16xf32>
    %287 = vector.multi_reduction <maximumf>, %286, %cst_121 [1] : vector<16x16xf32> to vector<16xf32>
    %288 = vector.shape_cast %287 : vector<16xf32> to vector<16x1xf32>
    %289 = vector.broadcast %288 : vector<16x1xf32> to vector<16x16xf32>
    %290 = arith.subf %286, %289 : vector<16x16xf32>
    %291 = math.exp %290 : vector<16x16xf32>
    %cst_122 = arith.constant dense<0.000000e+00> : vector<16xf32>
    %292 = vector.multi_reduction <add>, %291, %cst_122 [1] : vector<16x16xf32> to vector<16xf32>
    %293 = vector.shape_cast %292 : vector<16xf32> to vector<16x1xf32>
    %294 = tpu.reciprocal %293 {approx = true} : vector<16x1xf32> -> vector<16x1xf32>
    %295 = vector.broadcast %294 : vector<16x1xf32> to vector<16x16xf32>
    %296 = arith.mulf %291, %295 : vector<16x16xf32>
    %cst_123 = arith.constant dense<0.000000e+00> : vector<16x16xf32>
    %297 = tpu.matmul %296, %283, %cst_123 {dimension_numbers = #tpu.dot_dimension_numbers<[1], [0], [0], [1], [0, 0, 1, 1], [], []>} : vector<16x16xf32>, vector<16x16xf32>, vector<16x16xf32> -> vector<16x16xf32>
    %298 = vector.extract_strided_slice %239 {offsets = [32, 0], sizes = [16, 64], strides = [1, 1]} : vector<64x64xf32> to vector<16x64xf32>
    %cst_124 = arith.constant dense<0.000000e+00> : vector<16x64xf32>
    %299 = tpu.matmul %297, %298, %cst_124 {dimension_numbers = #tpu.dot_dimension_numbers<[1], [0], [0], [1], [0, 0, 1, 1], [], []>} : vector<16x16xf32>, vector<16x64xf32>, vector<16x64xf32> -> vector<16x64xf32>
    %300 = arith.addf %280, %299 : vector<16x64xf32>
    %301 = vector.extract_strided_slice %237 {offsets = [0, 48], sizes = [16, 16], strides = [1, 1]} : vector<16x192xf32> to vector<16x16xf32>
    %302 = vector.extract_strided_slice %237 {offsets = [0, 112], sizes = [16, 16], strides = [1, 1]} : vector<16x192xf32> to vector<16x16xf32>
    %303 = vector.extract_strided_slice %237 {offsets = [0, 176], sizes = [16, 16], strides = [1, 1]} : vector<16x192xf32> to vector<16x16xf32>
    %304 = tpu.transpose %302, [1, 0] : vector<16x16xf32> -> vector<16x16xf32>
    %cst_125 = arith.constant dense<0.000000e+00> : vector<16x16xf32>
    %305 = tpu.matmul %301, %304, %cst_125 {dimension_numbers = #tpu.dot_dimension_numbers<[1], [0], [0], [1], [0, 0, 1, 1], [], []>} : vector<16x16xf32>, vector<16x16xf32>, vector<16x16xf32> -> vector<16x16xf32>
    %306 = arith.addf %305, %1 : vector<16x16xf32>
    %cst_126 = arith.constant dense<0xFF800000> : vector<16xf32>
    %307 = vector.multi_reduction <maximumf>, %306, %cst_126 [1] : vector<16x16xf32> to vector<16xf32>
    %308 = vector.shape_cast %307 : vector<16xf32> to vector<16x1xf32>
    %309 = vector.broadcast %308 : vector<16x1xf32> to vector<16x16xf32>
    %310 = arith.subf %306, %309 : vector<16x16xf32>
    %311 = math.exp %310 : vector<16x16xf32>
    %cst_127 = arith.constant dense<0.000000e+00> : vector<16xf32>
    %312 = vector.multi_reduction <add>, %311, %cst_127 [1] : vector<16x16xf32> to vector<16xf32>
    %313 = vector.shape_cast %312 : vector<16xf32> to vector<16x1xf32>
    %314 = tpu.reciprocal %313 {approx = true} : vector<16x1xf32> -> vector<16x1xf32>
    %315 = vector.broadcast %314 : vector<16x1xf32> to vector<16x16xf32>
    %316 = arith.mulf %311, %315 : vector<16x16xf32>
    %cst_128 = arith.constant dense<0.000000e+00> : vector<16x16xf32>
    %317 = tpu.matmul %316, %303, %cst_128 {dimension_numbers = #tpu.dot_dimension_numbers<[1], [0], [0], [1], [0, 0, 1, 1], [], []>} : vector<16x16xf32>, vector<16x16xf32>, vector<16x16xf32> -> vector<16x16xf32>
    %318 = vector.extract_strided_slice %239 {offsets = [48, 0], sizes = [16, 64], strides = [1, 1]} : vector<64x64xf32> to vector<16x64xf32>
    %cst_129 = arith.constant dense<0.000000e+00> : vector<16x64xf32>
    %319 = tpu.matmul %317, %318, %cst_129 {dimension_numbers = #tpu.dot_dimension_numbers<[1], [0], [0], [1], [0, 0, 1, 1], [], []>} : vector<16x16xf32>, vector<16x64xf32>, vector<16x64xf32> -> vector<16x64xf32>
    %320 = arith.addf %300, %319 : vector<16x64xf32>
    %321 = arith.addf %203, %320 : vector<16x64xf32>
    %c1_130 = arith.constant 1 : index
    %c0_131 = arith.constant 0 : index
    %c0_132 = arith.constant 0 : index
    %322 = vector.load %arg8[%c1_130, %c0_131, %c0_132] : memref<6x1x64xf32, #tpu.memory_space<vmem>>, vector<1x1x64xf32>
    %323 = vector.shape_cast %322 : vector<1x1x64xf32> to vector<1x64xf32>
    %324 = vector.broadcast %323 : vector<1x64xf32> to vector<16x64xf32>
    %325 = arith.addf %321, %324 : vector<16x64xf32>
    %c1_133 = arith.constant 1 : index
    %c0_134 = arith.constant 0 : index
    %c0_135 = arith.constant 0 : index
    %326 = vector.load %arg9[%c1_133, %c0_134, %c0_135] : memref<6x1x64xf32, #tpu.memory_space<vmem>>, vector<1x1x64xf32>
    %327 = vector.shape_cast %326 : vector<1x1x64xf32> to vector<1x64xf32>
    %c1_136 = arith.constant 1 : index
    %c0_137 = arith.constant 0 : index
    %c0_138 = arith.constant 0 : index
    %328 = vector.load %arg10[%c1_136, %c0_137, %c0_138] : memref<6x1x64xf32, #tpu.memory_space<vmem>>, vector<1x1x64xf32>
    %329 = vector.shape_cast %328 : vector<1x1x64xf32> to vector<1x64xf32>
    %cst_139 = arith.constant dense<0.000000e+00> : vector<16xf32>
    %330 = vector.multi_reduction <add>, %325, %cst_139 [1] : vector<16x64xf32> to vector<16xf32>
    %331 = vector.shape_cast %330 : vector<16xf32> to vector<16x1xf32>
    %cst_140 = arith.constant 6.400000e+01 : f32
    %332 = vector.broadcast %cst_140 : f32 to vector<16x1xf32>
    %333 = arith.divf %331, %332 : vector<16x1xf32>
    %334 = vector.broadcast %333 : vector<16x1xf32> to vector<16x64xf32>
    %335 = arith.subf %325, %334 : vector<16x64xf32>
    %336 = arith.mulf %335, %335 : vector<16x64xf32>
    %cst_141 = arith.constant dense<0.000000e+00> : vector<16xf32>
    %337 = vector.multi_reduction <add>, %336, %cst_141 [1] : vector<16x64xf32> to vector<16xf32>
    %338 = vector.shape_cast %337 : vector<16xf32> to vector<16x1xf32>
    %cst_142 = arith.constant 6.400000e+01 : f32
    %339 = vector.broadcast %cst_142 : f32 to vector<16x1xf32>
    %340 = arith.divf %338, %339 : vector<16x1xf32>
    %341 = vector.broadcast %333 : vector<16x1xf32> to vector<16x64xf32>
    %342 = arith.subf %325, %341 : vector<16x64xf32>
    %cst_143 = arith.constant 9.99999974E-6 : f32
    %343 = vector.broadcast %cst_143 : f32 to vector<16x1xf32>
    %344 = arith.addf %340, %343 : vector<16x1xf32>
    %345 = math.rsqrt %344 : vector<16x1xf32>
    %346 = vector.broadcast %345 : vector<16x1xf32> to vector<16x64xf32>
    %347 = arith.mulf %342, %346 : vector<16x64xf32>
    %348 = vector.broadcast %327 : vector<1x64xf32> to vector<16x64xf32>
    %349 = arith.mulf %347, %348 : vector<16x64xf32>
    %350 = vector.broadcast %329 : vector<1x64xf32> to vector<16x64xf32>
    %351 = arith.addf %349, %350 : vector<16x64xf32>
    %c1_144 = arith.constant 1 : index
    %c0_145 = arith.constant 0 : index
    %c0_146 = arith.constant 0 : index
    %352 = vector.load %arg11[%c1_144, %c0_145, %c0_146] : memref<6x64x256xf32, #tpu.memory_space<vmem>>, vector<1x64x256xf32>
    %353 = vector.shape_cast %352 : vector<1x64x256xf32> to vector<64x256xf32>
    %cst_147 = arith.constant dense<0.000000e+00> : vector<16x256xf32>
    %354 = tpu.matmul %351, %353, %cst_147 {dimension_numbers = #tpu.dot_dimension_numbers<[1], [0], [0], [1], [0, 0, 1, 1], [], []>} : vector<16x64xf32>, vector<64x256xf32>, vector<16x256xf32> -> vector<16x256xf32>
    %c1_148 = arith.constant 1 : index
    %c0_149 = arith.constant 0 : index
    %c0_150 = arith.constant 0 : index
    %355 = vector.load %arg12[%c1_148, %c0_149, %c0_150] : memref<6x1x256xf32, #tpu.memory_space<vmem>>, vector<1x1x256xf32>
    %356 = vector.shape_cast %355 : vector<1x1x256xf32> to vector<1x256xf32>
    %357 = vector.broadcast %356 : vector<1x256xf32> to vector<16x256xf32>
    %358 = arith.addf %354, %357 : vector<16x256xf32>
    %cst_151 = arith.constant 5.000000e-01 : f32
    %359 = vector.broadcast %cst_151 : f32 to vector<16x256xf32>
    %360 = arith.mulf %359, %358 : vector<16x256xf32>
    %cst_152 = arith.constant 0.707106769 : f32
    %361 = vector.broadcast %cst_152 : f32 to vector<16x256xf32>
    %362 = arith.mulf %358, %361 : vector<16x256xf32>
    %363 = math.absf %362 : vector<16x256xf32>
    %cst_153 = arith.constant 0.327591091 : f32
    %364 = vector.broadcast %cst_153 : f32 to vector<16x256xf32>
    %365 = arith.mulf %364, %363 : vector<16x256xf32>
    %cst_154 = arith.constant 1.000000e+00 : f32
    %366 = vector.broadcast %cst_154 : f32 to vector<16x256xf32>
    %367 = arith.addf %366, %365 : vector<16x256xf32>
    %cst_155 = arith.constant 1.000000e+00 : f32
    %368 = vector.broadcast %cst_155 : f32 to vector<16x256xf32>
    %369 = arith.divf %368, %367 : vector<16x256xf32>
    %cst_156 = arith.constant 1.06140542 : f32
    %370 = vector.broadcast %cst_156 : f32 to vector<16x256xf32>
    %371 = arith.mulf %370, %369 : vector<16x256xf32>
    %cst_157 = arith.constant -1.45315206 : f32
    %372 = vector.broadcast %cst_157 : f32 to vector<16x256xf32>
    %373 = arith.addf %371, %372 : vector<16x256xf32>
    %374 = arith.mulf %373, %369 : vector<16x256xf32>
    %cst_158 = arith.constant 1.42141378 : f32
    %375 = vector.broadcast %cst_158 : f32 to vector<16x256xf32>
    %376 = arith.addf %374, %375 : vector<16x256xf32>
    %377 = arith.mulf %376, %369 : vector<16x256xf32>
    %cst_159 = arith.constant -0.284496725 : f32
    %378 = vector.broadcast %cst_159 : f32 to vector<16x256xf32>
    %379 = arith.addf %377, %378 : vector<16x256xf32>
    %380 = arith.mulf %379, %369 : vector<16x256xf32>
    %cst_160 = arith.constant 0.254829586 : f32
    %381 = vector.broadcast %cst_160 : f32 to vector<16x256xf32>
    %382 = arith.addf %380, %381 : vector<16x256xf32>
    %383 = arith.mulf %382, %369 : vector<16x256xf32>
    %cst_161 = arith.constant 0.000000e+00 : f32
    %384 = vector.broadcast %cst_161 : f32 to vector<16x256xf32>
    %385 = arith.subf %384, %363 : vector<16x256xf32>
    %386 = arith.mulf %385, %363 : vector<16x256xf32>
    %387 = math.exp %386 : vector<16x256xf32>
    %388 = arith.mulf %383, %387 : vector<16x256xf32>
    %cst_162 = arith.constant 1.000000e+00 : f32
    %389 = vector.broadcast %cst_162 : f32 to vector<16x256xf32>
    %390 = arith.subf %389, %388 : vector<16x256xf32>
    %cst_163 = arith.constant 0.000000e+00 : f32
    %391 = vector.broadcast %cst_163 : f32 to vector<16x256xf32>
    %392 = arith.cmpf oge, %362, %391 : vector<16x256xf32>
    %cst_164 = arith.constant 0.000000e+00 : f32
    %393 = vector.broadcast %cst_164 : f32 to vector<16x256xf32>
    %394 = arith.subf %393, %390 : vector<16x256xf32>
    %395 = arith.select %392, %390, %394 : vector<16x256xi1>, vector<16x256xf32>
    %cst_165 = arith.constant 1.000000e+00 : f32
    %396 = vector.broadcast %cst_165 : f32 to vector<16x256xf32>
    %397 = arith.addf %396, %395 : vector<16x256xf32>
    %398 = arith.mulf %360, %397 : vector<16x256xf32>
    %c1_166 = arith.constant 1 : index
    %c0_167 = arith.constant 0 : index
    %c0_168 = arith.constant 0 : index
    %399 = vector.load %arg13[%c1_166, %c0_167, %c0_168] : memref<6x256x64xf32, #tpu.memory_space<vmem>>, vector<1x256x64xf32>
    %400 = vector.shape_cast %399 : vector<1x256x64xf32> to vector<256x64xf32>
    %cst_169 = arith.constant dense<0.000000e+00> : vector<16x64xf32>
    %401 = tpu.matmul %398, %400, %cst_169 {dimension_numbers = #tpu.dot_dimension_numbers<[1], [0], [0], [1], [0, 0, 1, 1], [], []>} : vector<16x256xf32>, vector<256x64xf32>, vector<16x64xf32> -> vector<16x64xf32>
    %402 = arith.addf %325, %401 : vector<16x64xf32>
    %c1_170 = arith.constant 1 : index
    %c0_171 = arith.constant 0 : index
    %c0_172 = arith.constant 0 : index
    %403 = vector.load %arg14[%c1_170, %c0_171, %c0_172] : memref<6x1x64xf32, #tpu.memory_space<vmem>>, vector<1x1x64xf32>
    %404 = vector.shape_cast %403 : vector<1x1x64xf32> to vector<1x64xf32>
    %405 = vector.broadcast %404 : vector<1x64xf32> to vector<16x64xf32>
    %406 = arith.addf %402, %405 : vector<16x64xf32>
    %c0_173 = arith.constant 0 : index
    %c64 = arith.constant 64 : index
    %407 = vector.load %arg15[%c0_173, %c64] : memref<16x384xf32, #tpu.memory_space<vmem>>, vector<16x64xf32>
    tpu.vector_store %arg15[%c0_173, %c64], %406 {strides = array<i32>} : memref<16x384xf32, #tpu.memory_space<vmem>>, vector<16x64xf32>,
    %c2 = arith.constant 2 : index
    %c0_174 = arith.constant 0 : index
    %c0_175 = arith.constant 0 : index
    %408 = vector.load %arg3[%c2, %c0_174, %c0_175] : memref<6x1x64xf32, #tpu.memory_space<vmem>>, vector<1x1x64xf32>
    %409 = vector.shape_cast %408 : vector<1x1x64xf32> to vector<1x64xf32>
    %c2_176 = arith.constant 2 : index
    %c0_177 = arith.constant 0 : index
    %c0_178 = arith.constant 0 : index
    %410 = vector.load %arg4[%c2_176, %c0_177, %c0_178] : memref<6x1x64xf32, #tpu.memory_space<vmem>>, vector<1x1x64xf32>
    %411 = vector.shape_cast %410 : vector<1x1x64xf32> to vector<1x64xf32>
    %cst_179 = arith.constant dense<0.000000e+00> : vector<16xf32>
    %412 = vector.multi_reduction <add>, %406, %cst_179 [1] : vector<16x64xf32> to vector<16xf32>
    %413 = vector.shape_cast %412 : vector<16xf32> to vector<16x1xf32>
    %cst_180 = arith.constant 6.400000e+01 : f32
    %414 = vector.broadcast %cst_180 : f32 to vector<16x1xf32>
    %415 = arith.divf %413, %414 : vector<16x1xf32>
    %416 = vector.broadcast %415 : vector<16x1xf32> to vector<16x64xf32>
    %417 = arith.subf %406, %416 : vector<16x64xf32>
    %418 = arith.mulf %417, %417 : vector<16x64xf32>
    %cst_181 = arith.constant dense<0.000000e+00> : vector<16xf32>
    %419 = vector.multi_reduction <add>, %418, %cst_181 [1] : vector<16x64xf32> to vector<16xf32>
    %420 = vector.shape_cast %419 : vector<16xf32> to vector<16x1xf32>
    %cst_182 = arith.constant 6.400000e+01 : f32
    %421 = vector.broadcast %cst_182 : f32 to vector<16x1xf32>
    %422 = arith.divf %420, %421 : vector<16x1xf32>
    %423 = vector.broadcast %415 : vector<16x1xf32> to vector<16x64xf32>
    %424 = arith.subf %406, %423 : vector<16x64xf32>
    %cst_183 = arith.constant 9.99999974E-6 : f32
    %425 = vector.broadcast %cst_183 : f32 to vector<16x1xf32>
    %426 = arith.addf %422, %425 : vector<16x1xf32>
    %427 = math.rsqrt %426 : vector<16x1xf32>
    %428 = vector.broadcast %427 : vector<16x1xf32> to vector<16x64xf32>
    %429 = arith.mulf %424, %428 : vector<16x64xf32>
    %430 = vector.broadcast %409 : vector<1x64xf32> to vector<16x64xf32>
    %431 = arith.mulf %429, %430 : vector<16x64xf32>
    %432 = vector.broadcast %411 : vector<1x64xf32> to vector<16x64xf32>
    %433 = arith.addf %431, %432 : vector<16x64xf32>
    %c2_184 = arith.constant 2 : index
    %c0_185 = arith.constant 0 : index
    %c0_186 = arith.constant 0 : index
    %434 = vector.load %arg5[%c2_184, %c0_185, %c0_186] : memref<6x64x192xf32, #tpu.memory_space<vmem>>, vector<1x64x192xf32>
    %435 = vector.shape_cast %434 : vector<1x64x192xf32> to vector<64x192xf32>
    %cst_187 = arith.constant dense<0.000000e+00> : vector<16x192xf32>
    %436 = tpu.matmul %433, %435, %cst_187 {dimension_numbers = #tpu.dot_dimension_numbers<[1], [0], [0], [1], [0, 0, 1, 1], [], []>} : vector<16x64xf32>, vector<64x192xf32>, vector<16x192xf32> -> vector<16x192xf32>
    %c2_188 = arith.constant 2 : index
    %c0_189 = arith.constant 0 : index
    %c0_190 = arith.constant 0 : index
    %437 = vector.load %arg6[%c2_188, %c0_189, %c0_190] : memref<6x1x192xf32, #tpu.memory_space<vmem>>, vector<1x1x192xf32>
    %438 = vector.shape_cast %437 : vector<1x1x192xf32> to vector<1x192xf32>
    %439 = vector.broadcast %438 : vector<1x192xf32> to vector<16x192xf32>
    %440 = arith.addf %436, %439 : vector<16x192xf32>
    %c2_191 = arith.constant 2 : index
    %c0_192 = arith.constant 0 : index
    %c0_193 = arith.constant 0 : index
    %441 = vector.load %arg7[%c2_191, %c0_192, %c0_193] : memref<6x64x64xf32, #tpu.memory_space<vmem>>, vector<1x64x64xf32>
    %442 = vector.shape_cast %441 : vector<1x64x64xf32> to vector<64x64xf32>
    %cst_194 = arith.constant 0.000000e+00 : f32
    %443 = vector.broadcast %cst_194 : f32 to vector<16x64xf32>
    %444 = vector.extract_strided_slice %440 {offsets = [0, 0], sizes = [16, 16], strides = [1, 1]} : vector<16x192xf32> to vector<16x16xf32>
    %445 = vector.extract_strided_slice %440 {offsets = [0, 64], sizes = [16, 16], strides = [1, 1]} : vector<16x192xf32> to vector<16x16xf32>
    %446 = vector.extract_strided_slice %440 {offsets = [0, 128], sizes = [16, 16], strides = [1, 1]} : vector<16x192xf32> to vector<16x16xf32>
    %447 = tpu.transpose %445, [1, 0] : vector<16x16xf32> -> vector<16x16xf32>
    %cst_195 = arith.constant dense<0.000000e+00> : vector<16x16xf32>
    %448 = tpu.matmul %444, %447, %cst_195 {dimension_numbers = #tpu.dot_dimension_numbers<[1], [0], [0], [1], [0, 0, 1, 1], [], []>} : vector<16x16xf32>, vector<16x16xf32>, vector<16x16xf32> -> vector<16x16xf32>
    %449 = arith.addf %448, %1 : vector<16x16xf32>
    %cst_196 = arith.constant dense<0xFF800000> : vector<16xf32>
    %450 = vector.multi_reduction <maximumf>, %449, %cst_196 [1] : vector<16x16xf32> to vector<16xf32>
    %451 = vector.shape_cast %450 : vector<16xf32> to vector<16x1xf32>
    %452 = vector.broadcast %451 : vector<16x1xf32> to vector<16x16xf32>
    %453 = arith.subf %449, %452 : vector<16x16xf32>
    %454 = math.exp %453 : vector<16x16xf32>
    %cst_197 = arith.constant dense<0.000000e+00> : vector<16xf32>
    %455 = vector.multi_reduction <add>, %454, %cst_197 [1] : vector<16x16xf32> to vector<16xf32>
    %456 = vector.shape_cast %455 : vector<16xf32> to vector<16x1xf32>
    %457 = tpu.reciprocal %456 {approx = true} : vector<16x1xf32> -> vector<16x1xf32>
    %458 = vector.broadcast %457 : vector<16x1xf32> to vector<16x16xf32>
    %459 = arith.mulf %454, %458 : vector<16x16xf32>
    %cst_198 = arith.constant dense<0.000000e+00> : vector<16x16xf32>
    %460 = tpu.matmul %459, %446, %cst_198 {dimension_numbers = #tpu.dot_dimension_numbers<[1], [0], [0], [1], [0, 0, 1, 1], [], []>} : vector<16x16xf32>, vector<16x16xf32>, vector<16x16xf32> -> vector<16x16xf32>
    %461 = vector.extract_strided_slice %442 {offsets = [0, 0], sizes = [16, 64], strides = [1, 1]} : vector<64x64xf32> to vector<16x64xf32>
    %cst_199 = arith.constant dense<0.000000e+00> : vector<16x64xf32>
    %462 = tpu.matmul %460, %461, %cst_199 {dimension_numbers = #tpu.dot_dimension_numbers<[1], [0], [0], [1], [0, 0, 1, 1], [], []>} : vector<16x16xf32>, vector<16x64xf32>, vector<16x64xf32> -> vector<16x64xf32>
    %463 = arith.addf %443, %462 : vector<16x64xf32>
    %464 = vector.extract_strided_slice %440 {offsets = [0, 16], sizes = [16, 16], strides = [1, 1]} : vector<16x192xf32> to vector<16x16xf32>
    %465 = vector.extract_strided_slice %440 {offsets = [0, 80], sizes = [16, 16], strides = [1, 1]} : vector<16x192xf32> to vector<16x16xf32>
    %466 = vector.extract_strided_slice %440 {offsets = [0, 144], sizes = [16, 16], strides = [1, 1]} : vector<16x192xf32> to vector<16x16xf32>
    %467 = tpu.transpose %465, [1, 0] : vector<16x16xf32> -> vector<16x16xf32>
    %cst_200 = arith.constant dense<0.000000e+00> : vector<16x16xf32>
    %468 = tpu.matmul %464, %467, %cst_200 {dimension_numbers = #tpu.dot_dimension_numbers<[1], [0], [0], [1], [0, 0, 1, 1], [], []>} : vector<16x16xf32>, vector<16x16xf32>, vector<16x16xf32> -> vector<16x16xf32>
    %469 = arith.addf %468, %1 : vector<16x16xf32>
    %cst_201 = arith.constant dense<0xFF800000> : vector<16xf32>
    %470 = vector.multi_reduction <maximumf>, %469, %cst_201 [1] : vector<16x16xf32> to vector<16xf32>
    %471 = vector.shape_cast %470 : vector<16xf32> to vector<16x1xf32>
    %472 = vector.broadcast %471 : vector<16x1xf32> to vector<16x16xf32>
    %473 = arith.subf %469, %472 : vector<16x16xf32>
    %474 = math.exp %473 : vector<16x16xf32>
    %cst_202 = arith.constant dense<0.000000e+00> : vector<16xf32>
    %475 = vector.multi_reduction <add>, %474, %cst_202 [1] : vector<16x16xf32> to vector<16xf32>
    %476 = vector.shape_cast %475 : vector<16xf32> to vector<16x1xf32>
    %477 = tpu.reciprocal %476 {approx = true} : vector<16x1xf32> -> vector<16x1xf32>
    %478 = vector.broadcast %477 : vector<16x1xf32> to vector<16x16xf32>
    %479 = arith.mulf %474, %478 : vector<16x16xf32>
    %cst_203 = arith.constant dense<0.000000e+00> : vector<16x16xf32>
    %480 = tpu.matmul %479, %466, %cst_203 {dimension_numbers = #tpu.dot_dimension_numbers<[1], [0], [0], [1], [0, 0, 1, 1], [], []>} : vector<16x16xf32>, vector<16x16xf32>, vector<16x16xf32> -> vector<16x16xf32>
    %481 = vector.extract_strided_slice %442 {offsets = [16, 0], sizes = [16, 64], strides = [1, 1]} : vector<64x64xf32> to vector<16x64xf32>
    %cst_204 = arith.constant dense<0.000000e+00> : vector<16x64xf32>
    %482 = tpu.matmul %480, %481, %cst_204 {dimension_numbers = #tpu.dot_dimension_numbers<[1], [0], [0], [1], [0, 0, 1, 1], [], []>} : vector<16x16xf32>, vector<16x64xf32>, vector<16x64xf32> -> vector<16x64xf32>
    %483 = arith.addf %463, %482 : vector<16x64xf32>
    %484 = vector.extract_strided_slice %440 {offsets = [0, 32], sizes = [16, 16], strides = [1, 1]} : vector<16x192xf32> to vector<16x16xf32>
    %485 = vector.extract_strided_slice %440 {offsets = [0, 96], sizes = [16, 16], strides = [1, 1]} : vector<16x192xf32> to vector<16x16xf32>
    %486 = vector.extract_strided_slice %440 {offsets = [0, 160], sizes = [16, 16], strides = [1, 1]} : vector<16x192xf32> to vector<16x16xf32>
    %487 = tpu.transpose %485, [1, 0] : vector<16x16xf32> -> vector<16x16xf32>
    %cst_205 = arith.constant dense<0.000000e+00> : vector<16x16xf32>
    %488 = tpu.matmul %484, %487, %cst_205 {dimension_numbers = #tpu.dot_dimension_numbers<[1], [0], [0], [1], [0, 0, 1, 1], [], []>} : vector<16x16xf32>, vector<16x16xf32>, vector<16x16xf32> -> vector<16x16xf32>
    %489 = arith.addf %488, %1 : vector<16x16xf32>
    %cst_206 = arith.constant dense<0xFF800000> : vector<16xf32>
    %490 = vector.multi_reduction <maximumf>, %489, %cst_206 [1] : vector<16x16xf32> to vector<16xf32>
    %491 = vector.shape_cast %490 : vector<16xf32> to vector<16x1xf32>
    %492 = vector.broadcast %491 : vector<16x1xf32> to vector<16x16xf32>
    %493 = arith.subf %489, %492 : vector<16x16xf32>
    %494 = math.exp %493 : vector<16x16xf32>
    %cst_207 = arith.constant dense<0.000000e+00> : vector<16xf32>
    %495 = vector.multi_reduction <add>, %494, %cst_207 [1] : vector<16x16xf32> to vector<16xf32>
    %496 = vector.shape_cast %495 : vector<16xf32> to vector<16x1xf32>
    %497 = tpu.reciprocal %496 {approx = true} : vector<16x1xf32> -> vector<16x1xf32>
    %498 = vector.broadcast %497 : vector<16x1xf32> to vector<16x16xf32>
    %499 = arith.mulf %494, %498 : vector<16x16xf32>
    %cst_208 = arith.constant dense<0.000000e+00> : vector<16x16xf32>
    %500 = tpu.matmul %499, %486, %cst_208 {dimension_numbers = #tpu.dot_dimension_numbers<[1], [0], [0], [1], [0, 0, 1, 1], [], []>} : vector<16x16xf32>, vector<16x16xf32>, vector<16x16xf32> -> vector<16x16xf32>
    %501 = vector.extract_strided_slice %442 {offsets = [32, 0], sizes = [16, 64], strides = [1, 1]} : vector<64x64xf32> to vector<16x64xf32>
    %cst_209 = arith.constant dense<0.000000e+00> : vector<16x64xf32>
    %502 = tpu.matmul %500, %501, %cst_209 {dimension_numbers = #tpu.dot_dimension_numbers<[1], [0], [0], [1], [0, 0, 1, 1], [], []>} : vector<16x16xf32>, vector<16x64xf32>, vector<16x64xf32> -> vector<16x64xf32>
    %503 = arith.addf %483, %502 : vector<16x64xf32>
    %504 = vector.extract_strided_slice %440 {offsets = [0, 48], sizes = [16, 16], strides = [1, 1]} : vector<16x192xf32> to vector<16x16xf32>
    %505 = vector.extract_strided_slice %440 {offsets = [0, 112], sizes = [16, 16], strides = [1, 1]} : vector<16x192xf32> to vector<16x16xf32>
    %506 = vector.extract_strided_slice %440 {offsets = [0, 176], sizes = [16, 16], strides = [1, 1]} : vector<16x192xf32> to vector<16x16xf32>
    %507 = tpu.transpose %505, [1, 0] : vector<16x16xf32> -> vector<16x16xf32>
    %cst_210 = arith.constant dense<0.000000e+00> : vector<16x16xf32>
    %508 = tpu.matmul %504, %507, %cst_210 {dimension_numbers = #tpu.dot_dimension_numbers<[1], [0], [0], [1], [0, 0, 1, 1], [], []>} : vector<16x16xf32>, vector<16x16xf32>, vector<16x16xf32> -> vector<16x16xf32>
    %509 = arith.addf %508, %1 : vector<16x16xf32>
    %cst_211 = arith.constant dense<0xFF800000> : vector<16xf32>
    %510 = vector.multi_reduction <maximumf>, %509, %cst_211 [1] : vector<16x16xf32> to vector<16xf32>
    %511 = vector.shape_cast %510 : vector<16xf32> to vector<16x1xf32>
    %512 = vector.broadcast %511 : vector<16x1xf32> to vector<16x16xf32>
    %513 = arith.subf %509, %512 : vector<16x16xf32>
    %514 = math.exp %513 : vector<16x16xf32>
    %cst_212 = arith.constant dense<0.000000e+00> : vector<16xf32>
    %515 = vector.multi_reduction <add>, %514, %cst_212 [1] : vector<16x16xf32> to vector<16xf32>
    %516 = vector.shape_cast %515 : vector<16xf32> to vector<16x1xf32>
    %517 = tpu.reciprocal %516 {approx = true} : vector<16x1xf32> -> vector<16x1xf32>
    %518 = vector.broadcast %517 : vector<16x1xf32> to vector<16x16xf32>
    %519 = arith.mulf %514, %518 : vector<16x16xf32>
    %cst_213 = arith.constant dense<0.000000e+00> : vector<16x16xf32>
    %520 = tpu.matmul %519, %506, %cst_213 {dimension_numbers = #tpu.dot_dimension_numbers<[1], [0], [0], [1], [0, 0, 1, 1], [], []>} : vector<16x16xf32>, vector<16x16xf32>, vector<16x16xf32> -> vector<16x16xf32>
    %521 = vector.extract_strided_slice %442 {offsets = [48, 0], sizes = [16, 64], strides = [1, 1]} : vector<64x64xf32> to vector<16x64xf32>
    %cst_214 = arith.constant dense<0.000000e+00> : vector<16x64xf32>
    %522 = tpu.matmul %520, %521, %cst_214 {dimension_numbers = #tpu.dot_dimension_numbers<[1], [0], [0], [1], [0, 0, 1, 1], [], []>} : vector<16x16xf32>, vector<16x64xf32>, vector<16x64xf32> -> vector<16x64xf32>
    %523 = arith.addf %503, %522 : vector<16x64xf32>
    %524 = arith.addf %406, %523 : vector<16x64xf32>
    %c2_215 = arith.constant 2 : index
    %c0_216 = arith.constant 0 : index
    %c0_217 = arith.constant 0 : index
    %525 = vector.load %arg8[%c2_215, %c0_216, %c0_217] : memref<6x1x64xf32, #tpu.memory_space<vmem>>, vector<1x1x64xf32>
    %526 = vector.shape_cast %525 : vector<1x1x64xf32> to vector<1x64xf32>
    %527 = vector.broadcast %526 : vector<1x64xf32> to vector<16x64xf32>
    %528 = arith.addf %524, %527 : vector<16x64xf32>
    %c2_218 = arith.constant 2 : index
    %c0_219 = arith.constant 0 : index
    %c0_220 = arith.constant 0 : index
    %529 = vector.load %arg9[%c2_218, %c0_219, %c0_220] : memref<6x1x64xf32, #tpu.memory_space<vmem>>, vector<1x1x64xf32>
    %530 = vector.shape_cast %529 : vector<1x1x64xf32> to vector<1x64xf32>
    %c2_221 = arith.constant 2 : index
    %c0_222 = arith.constant 0 : index
    %c0_223 = arith.constant 0 : index
    %531 = vector.load %arg10[%c2_221, %c0_222, %c0_223] : memref<6x1x64xf32, #tpu.memory_space<vmem>>, vector<1x1x64xf32>
    %532 = vector.shape_cast %531 : vector<1x1x64xf32> to vector<1x64xf32>
    %cst_224 = arith.constant dense<0.000000e+00> : vector<16xf32>
    %533 = vector.multi_reduction <add>, %528, %cst_224 [1] : vector<16x64xf32> to vector<16xf32>
    %534 = vector.shape_cast %533 : vector<16xf32> to vector<16x1xf32>
    %cst_225 = arith.constant 6.400000e+01 : f32
    %535 = vector.broadcast %cst_225 : f32 to vector<16x1xf32>
    %536 = arith.divf %534, %535 : vector<16x1xf32>
    %537 = vector.broadcast %536 : vector<16x1xf32> to vector<16x64xf32>
    %538 = arith.subf %528, %537 : vector<16x64xf32>
    %539 = arith.mulf %538, %538 : vector<16x64xf32>
    %cst_226 = arith.constant dense<0.000000e+00> : vector<16xf32>
    %540 = vector.multi_reduction <add>, %539, %cst_226 [1] : vector<16x64xf32> to vector<16xf32>
    %541 = vector.shape_cast %540 : vector<16xf32> to vector<16x1xf32>
    %cst_227 = arith.constant 6.400000e+01 : f32
    %542 = vector.broadcast %cst_227 : f32 to vector<16x1xf32>
    %543 = arith.divf %541, %542 : vector<16x1xf32>
    %544 = vector.broadcast %536 : vector<16x1xf32> to vector<16x64xf32>
    %545 = arith.subf %528, %544 : vector<16x64xf32>
    %cst_228 = arith.constant 9.99999974E-6 : f32
    %546 = vector.broadcast %cst_228 : f32 to vector<16x1xf32>
    %547 = arith.addf %543, %546 : vector<16x1xf32>
    %548 = math.rsqrt %547 : vector<16x1xf32>
    %549 = vector.broadcast %548 : vector<16x1xf32> to vector<16x64xf32>
    %550 = arith.mulf %545, %549 : vector<16x64xf32>
    %551 = vector.broadcast %530 : vector<1x64xf32> to vector<16x64xf32>
    %552 = arith.mulf %550, %551 : vector<16x64xf32>
    %553 = vector.broadcast %532 : vector<1x64xf32> to vector<16x64xf32>
    %554 = arith.addf %552, %553 : vector<16x64xf32>
    %c2_229 = arith.constant 2 : index
    %c0_230 = arith.constant 0 : index
    %c0_231 = arith.constant 0 : index
    %555 = vector.load %arg11[%c2_229, %c0_230, %c0_231] : memref<6x64x256xf32, #tpu.memory_space<vmem>>, vector<1x64x256xf32>
    %556 = vector.shape_cast %555 : vector<1x64x256xf32> to vector<64x256xf32>
    %cst_232 = arith.constant dense<0.000000e+00> : vector<16x256xf32>
    %557 = tpu.matmul %554, %556, %cst_232 {dimension_numbers = #tpu.dot_dimension_numbers<[1], [0], [0], [1], [0, 0, 1, 1], [], []>} : vector<16x64xf32>, vector<64x256xf32>, vector<16x256xf32> -> vector<16x256xf32>
    %c2_233 = arith.constant 2 : index
    %c0_234 = arith.constant 0 : index
    %c0_235 = arith.constant 0 : index
    %558 = vector.load %arg12[%c2_233, %c0_234, %c0_235] : memref<6x1x256xf32, #tpu.memory_space<vmem>>, vector<1x1x256xf32>
    %559 = vector.shape_cast %558 : vector<1x1x256xf32> to vector<1x256xf32>
    %560 = vector.broadcast %559 : vector<1x256xf32> to vector<16x256xf32>
    %561 = arith.addf %557, %560 : vector<16x256xf32>
    %cst_236 = arith.constant 5.000000e-01 : f32
    %562 = vector.broadcast %cst_236 : f32 to vector<16x256xf32>
    %563 = arith.mulf %562, %561 : vector<16x256xf32>
    %cst_237 = arith.constant 0.707106769 : f32
    %564 = vector.broadcast %cst_237 : f32 to vector<16x256xf32>
    %565 = arith.mulf %561, %564 : vector<16x256xf32>
    %566 = math.absf %565 : vector<16x256xf32>
    %cst_238 = arith.constant 0.327591091 : f32
    %567 = vector.broadcast %cst_238 : f32 to vector<16x256xf32>
    %568 = arith.mulf %567, %566 : vector<16x256xf32>
    %cst_239 = arith.constant 1.000000e+00 : f32
    %569 = vector.broadcast %cst_239 : f32 to vector<16x256xf32>
    %570 = arith.addf %569, %568 : vector<16x256xf32>
    %cst_240 = arith.constant 1.000000e+00 : f32
    %571 = vector.broadcast %cst_240 : f32 to vector<16x256xf32>
    %572 = arith.divf %571, %570 : vector<16x256xf32>
    %cst_241 = arith.constant 1.06140542 : f32
    %573 = vector.broadcast %cst_241 : f32 to vector<16x256xf32>
    %574 = arith.mulf %573, %572 : vector<16x256xf32>
    %cst_242 = arith.constant -1.45315206 : f32
    %575 = vector.broadcast %cst_242 : f32 to vector<16x256xf32>
    %576 = arith.addf %574, %575 : vector<16x256xf32>
    %577 = arith.mulf %576, %572 : vector<16x256xf32>
    %cst_243 = arith.constant 1.42141378 : f32
    %578 = vector.broadcast %cst_243 : f32 to vector<16x256xf32>
    %579 = arith.addf %577, %578 : vector<16x256xf32>
    %580 = arith.mulf %579, %572 : vector<16x256xf32>
    %cst_244 = arith.constant -0.284496725 : f32
    %581 = vector.broadcast %cst_244 : f32 to vector<16x256xf32>
    %582 = arith.addf %580, %581 : vector<16x256xf32>
    %583 = arith.mulf %582, %572 : vector<16x256xf32>
    %cst_245 = arith.constant 0.254829586 : f32
    %584 = vector.broadcast %cst_245 : f32 to vector<16x256xf32>
    %585 = arith.addf %583, %584 : vector<16x256xf32>
    %586 = arith.mulf %585, %572 : vector<16x256xf32>
    %cst_246 = arith.constant 0.000000e+00 : f32
    %587 = vector.broadcast %cst_246 : f32 to vector<16x256xf32>
    %588 = arith.subf %587, %566 : vector<16x256xf32>
    %589 = arith.mulf %588, %566 : vector<16x256xf32>
    %590 = math.exp %589 : vector<16x256xf32>
    %591 = arith.mulf %586, %590 : vector<16x256xf32>
    %cst_247 = arith.constant 1.000000e+00 : f32
    %592 = vector.broadcast %cst_247 : f32 to vector<16x256xf32>
    %593 = arith.subf %592, %591 : vector<16x256xf32>
    %cst_248 = arith.constant 0.000000e+00 : f32
    %594 = vector.broadcast %cst_248 : f32 to vector<16x256xf32>
    %595 = arith.cmpf oge, %565, %594 : vector<16x256xf32>
    %cst_249 = arith.constant 0.000000e+00 : f32
    %596 = vector.broadcast %cst_249 : f32 to vector<16x256xf32>
    %597 = arith.subf %596, %593 : vector<16x256xf32>
    %598 = arith.select %595, %593, %597 : vector<16x256xi1>, vector<16x256xf32>
    %cst_250 = arith.constant 1.000000e+00 : f32
    %599 = vector.broadcast %cst_250 : f32 to vector<16x256xf32>
    %600 = arith.addf %599, %598 : vector<16x256xf32>
    %601 = arith.mulf %563, %600 : vector<16x256xf32>
    %c2_251 = arith.constant 2 : index
    %c0_252 = arith.constant 0 : index
    %c0_253 = arith.constant 0 : index
    %602 = vector.load %arg13[%c2_251, %c0_252, %c0_253] : memref<6x256x64xf32, #tpu.memory_space<vmem>>, vector<1x256x64xf32>
    %603 = vector.shape_cast %602 : vector<1x256x64xf32> to vector<256x64xf32>
    %cst_254 = arith.constant dense<0.000000e+00> : vector<16x64xf32>
    %604 = tpu.matmul %601, %603, %cst_254 {dimension_numbers = #tpu.dot_dimension_numbers<[1], [0], [0], [1], [0, 0, 1, 1], [], []>} : vector<16x256xf32>, vector<256x64xf32>, vector<16x64xf32> -> vector<16x64xf32>
    %605 = arith.addf %528, %604 : vector<16x64xf32>
    %c2_255 = arith.constant 2 : index
    %c0_256 = arith.constant 0 : index
    %c0_257 = arith.constant 0 : index
    %606 = vector.load %arg14[%c2_255, %c0_256, %c0_257] : memref<6x1x64xf32, #tpu.memory_space<vmem>>, vector<1x1x64xf32>
    %607 = vector.shape_cast %606 : vector<1x1x64xf32> to vector<1x64xf32>
    %608 = vector.broadcast %607 : vector<1x64xf32> to vector<16x64xf32>
    %609 = arith.addf %605, %608 : vector<16x64xf32>
    %c0_258 = arith.constant 0 : index
    %c128 = arith.constant 128 : index
    %610 = vector.load %arg15[%c0_258, %c128] : memref<16x384xf32, #tpu.memory_space<vmem>>, vector<16x64xf32>
    tpu.vector_store %arg15[%c0_258, %c128], %609 {strides = array<i32>} : memref<16x384xf32, #tpu.memory_space<vmem>>, vector<16x64xf32>,
    %c3 = arith.constant 3 : index
    %c0_259 = arith.constant 0 : index
    %c0_260 = arith.constant 0 : index
    %611 = vector.load %arg3[%c3, %c0_259, %c0_260] : memref<6x1x64xf32, #tpu.memory_space<vmem>>, vector<1x1x64xf32>
    %612 = vector.shape_cast %611 : vector<1x1x64xf32> to vector<1x64xf32>
    %c3_261 = arith.constant 3 : index
    %c0_262 = arith.constant 0 : index
    %c0_263 = arith.constant 0 : index
    %613 = vector.load %arg4[%c3_261, %c0_262, %c0_263] : memref<6x1x64xf32, #tpu.memory_space<vmem>>, vector<1x1x64xf32>
    %614 = vector.shape_cast %613 : vector<1x1x64xf32> to vector<1x64xf32>
    %cst_264 = arith.constant dense<0.000000e+00> : vector<16xf32>
    %615 = vector.multi_reduction <add>, %609, %cst_264 [1] : vector<16x64xf32> to vector<16xf32>
    %616 = vector.shape_cast %615 : vector<16xf32> to vector<16x1xf32>
    %cst_265 = arith.constant 6.400000e+01 : f32
    %617 = vector.broadcast %cst_265 : f32 to vector<16x1xf32>
    %618 = arith.divf %616, %617 : vector<16x1xf32>
    %619 = vector.broadcast %618 : vector<16x1xf32> to vector<16x64xf32>
    %620 = arith.subf %609, %619 : vector<16x64xf32>
    %621 = arith.mulf %620, %620 : vector<16x64xf32>
    %cst_266 = arith.constant dense<0.000000e+00> : vector<16xf32>
    %622 = vector.multi_reduction <add>, %621, %cst_266 [1] : vector<16x64xf32> to vector<16xf32>
    %623 = vector.shape_cast %622 : vector<16xf32> to vector<16x1xf32>
    %cst_267 = arith.constant 6.400000e+01 : f32
    %624 = vector.broadcast %cst_267 : f32 to vector<16x1xf32>
    %625 = arith.divf %623, %624 : vector<16x1xf32>
    %626 = vector.broadcast %618 : vector<16x1xf32> to vector<16x64xf32>
    %627 = arith.subf %609, %626 : vector<16x64xf32>
    %cst_268 = arith.constant 9.99999974E-6 : f32
    %628 = vector.broadcast %cst_268 : f32 to vector<16x1xf32>
    %629 = arith.addf %625, %628 : vector<16x1xf32>
    %630 = math.rsqrt %629 : vector<16x1xf32>
    %631 = vector.broadcast %630 : vector<16x1xf32> to vector<16x64xf32>
    %632 = arith.mulf %627, %631 : vector<16x64xf32>
    %633 = vector.broadcast %612 : vector<1x64xf32> to vector<16x64xf32>
    %634 = arith.mulf %632, %633 : vector<16x64xf32>
    %635 = vector.broadcast %614 : vector<1x64xf32> to vector<16x64xf32>
    %636 = arith.addf %634, %635 : vector<16x64xf32>
    %c3_269 = arith.constant 3 : index
    %c0_270 = arith.constant 0 : index
    %c0_271 = arith.constant 0 : index
    %637 = vector.load %arg5[%c3_269, %c0_270, %c0_271] : memref<6x64x192xf32, #tpu.memory_space<vmem>>, vector<1x64x192xf32>
    %638 = vector.shape_cast %637 : vector<1x64x192xf32> to vector<64x192xf32>
    %cst_272 = arith.constant dense<0.000000e+00> : vector<16x192xf32>
    %639 = tpu.matmul %636, %638, %cst_272 {dimension_numbers = #tpu.dot_dimension_numbers<[1], [0], [0], [1], [0, 0, 1, 1], [], []>} : vector<16x64xf32>, vector<64x192xf32>, vector<16x192xf32> -> vector<16x192xf32>
    %c3_273 = arith.constant 3 : index
    %c0_274 = arith.constant 0 : index
    %c0_275 = arith.constant 0 : index
    %640 = vector.load %arg6[%c3_273, %c0_274, %c0_275] : memref<6x1x192xf32, #tpu.memory_space<vmem>>, vector<1x1x192xf32>
    %641 = vector.shape_cast %640 : vector<1x1x192xf32> to vector<1x192xf32>
    %642 = vector.broadcast %641 : vector<1x192xf32> to vector<16x192xf32>
    %643 = arith.addf %639, %642 : vector<16x192xf32>
    %c3_276 = arith.constant 3 : index
    %c0_277 = arith.constant 0 : index
    %c0_278 = arith.constant 0 : index
    %644 = vector.load %arg7[%c3_276, %c0_277, %c0_278] : memref<6x64x64xf32, #tpu.memory_space<vmem>>, vector<1x64x64xf32>
    %645 = vector.shape_cast %644 : vector<1x64x64xf32> to vector<64x64xf32>
    %cst_279 = arith.constant 0.000000e+00 : f32
    %646 = vector.broadcast %cst_279 : f32 to vector<16x64xf32>
    %647 = vector.extract_strided_slice %643 {offsets = [0, 0], sizes = [16, 16], strides = [1, 1]} : vector<16x192xf32> to vector<16x16xf32>
    %648 = vector.extract_strided_slice %643 {offsets = [0, 64], sizes = [16, 16], strides = [1, 1]} : vector<16x192xf32> to vector<16x16xf32>
    %649 = vector.extract_strided_slice %643 {offsets = [0, 128], sizes = [16, 16], strides = [1, 1]} : vector<16x192xf32> to vector<16x16xf32>
    %650 = tpu.transpose %648, [1, 0] : vector<16x16xf32> -> vector<16x16xf32>
    %cst_280 = arith.constant dense<0.000000e+00> : vector<16x16xf32>
    %651 = tpu.matmul %647, %650, %cst_280 {dimension_numbers = #tpu.dot_dimension_numbers<[1], [0], [0], [1], [0, 0, 1, 1], [], []>} : vector<16x16xf32>, vector<16x16xf32>, vector<16x16xf32> -> vector<16x16xf32>
    %652 = arith.addf %651, %1 : vector<16x16xf32>
    %cst_281 = arith.constant dense<0xFF800000> : vector<16xf32>
    %653 = vector.multi_reduction <maximumf>, %652, %cst_281 [1] : vector<16x16xf32> to vector<16xf32>
    %654 = vector.shape_cast %653 : vector<16xf32> to vector<16x1xf32>
    %655 = vector.broadcast %654 : vector<16x1xf32> to vector<16x16xf32>
    %656 = arith.subf %652, %655 : vector<16x16xf32>
    %657 = math.exp %656 : vector<16x16xf32>
    %cst_282 = arith.constant dense<0.000000e+00> : vector<16xf32>
    %658 = vector.multi_reduction <add>, %657, %cst_282 [1] : vector<16x16xf32> to vector<16xf32>
    %659 = vector.shape_cast %658 : vector<16xf32> to vector<16x1xf32>
    %660 = tpu.reciprocal %659 {approx = true} : vector<16x1xf32> -> vector<16x1xf32>
    %661 = vector.broadcast %660 : vector<16x1xf32> to vector<16x16xf32>
    %662 = arith.mulf %657, %661 : vector<16x16xf32>
    %cst_283 = arith.constant dense<0.000000e+00> : vector<16x16xf32>
    %663 = tpu.matmul %662, %649, %cst_283 {dimension_numbers = #tpu.dot_dimension_numbers<[1], [0], [0], [1], [0, 0, 1, 1], [], []>} : vector<16x16xf32>, vector<16x16xf32>, vector<16x16xf32> -> vector<16x16xf32>
    %664 = vector.extract_strided_slice %645 {offsets = [0, 0], sizes = [16, 64], strides = [1, 1]} : vector<64x64xf32> to vector<16x64xf32>
    %cst_284 = arith.constant dense<0.000000e+00> : vector<16x64xf32>
    %665 = tpu.matmul %663, %664, %cst_284 {dimension_numbers = #tpu.dot_dimension_numbers<[1], [0], [0], [1], [0, 0, 1, 1], [], []>} : vector<16x16xf32>, vector<16x64xf32>, vector<16x64xf32> -> vector<16x64xf32>
    %666 = arith.addf %646, %665 : vector<16x64xf32>
    %667 = vector.extract_strided_slice %643 {offsets = [0, 16], sizes = [16, 16], strides = [1, 1]} : vector<16x192xf32> to vector<16x16xf32>
    %668 = vector.extract_strided_slice %643 {offsets = [0, 80], sizes = [16, 16], strides = [1, 1]} : vector<16x192xf32> to vector<16x16xf32>
    %669 = vector.extract_strided_slice %643 {offsets = [0, 144], sizes = [16, 16], strides = [1, 1]} : vector<16x192xf32> to vector<16x16xf32>
    %670 = tpu.transpose %668, [1, 0] : vector<16x16xf32> -> vector<16x16xf32>
    %cst_285 = arith.constant dense<0.000000e+00> : vector<16x16xf32>
    %671 = tpu.matmul %667, %670, %cst_285 {dimension_numbers = #tpu.dot_dimension_numbers<[1], [0], [0], [1], [0, 0, 1, 1], [], []>} : vector<16x16xf32>, vector<16x16xf32>, vector<16x16xf32> -> vector<16x16xf32>
    %672 = arith.addf %671, %1 : vector<16x16xf32>
    %cst_286 = arith.constant dense<0xFF800000> : vector<16xf32>
    %673 = vector.multi_reduction <maximumf>, %672, %cst_286 [1] : vector<16x16xf32> to vector<16xf32>
    %674 = vector.shape_cast %673 : vector<16xf32> to vector<16x1xf32>
    %675 = vector.broadcast %674 : vector<16x1xf32> to vector<16x16xf32>
    %676 = arith.subf %672, %675 : vector<16x16xf32>
    %677 = math.exp %676 : vector<16x16xf32>
    %cst_287 = arith.constant dense<0.000000e+00> : vector<16xf32>
    %678 = vector.multi_reduction <add>, %677, %cst_287 [1] : vector<16x16xf32> to vector<16xf32>
    %679 = vector.shape_cast %678 : vector<16xf32> to vector<16x1xf32>
    %680 = tpu.reciprocal %679 {approx = true} : vector<16x1xf32> -> vector<16x1xf32>
    %681 = vector.broadcast %680 : vector<16x1xf32> to vector<16x16xf32>
    %682 = arith.mulf %677, %681 : vector<16x16xf32>
    %cst_288 = arith.constant dense<0.000000e+00> : vector<16x16xf32>
    %683 = tpu.matmul %682, %669, %cst_288 {dimension_numbers = #tpu.dot_dimension_numbers<[1], [0], [0], [1], [0, 0, 1, 1], [], []>} : vector<16x16xf32>, vector<16x16xf32>, vector<16x16xf32> -> vector<16x16xf32>
    %684 = vector.extract_strided_slice %645 {offsets = [16, 0], sizes = [16, 64], strides = [1, 1]} : vector<64x64xf32> to vector<16x64xf32>
    %cst_289 = arith.constant dense<0.000000e+00> : vector<16x64xf32>
    %685 = tpu.matmul %683, %684, %cst_289 {dimension_numbers = #tpu.dot_dimension_numbers<[1], [0], [0], [1], [0, 0, 1, 1], [], []>} : vector<16x16xf32>, vector<16x64xf32>, vector<16x64xf32> -> vector<16x64xf32>
    %686 = arith.addf %666, %685 : vector<16x64xf32>
    %687 = vector.extract_strided_slice %643 {offsets = [0, 32], sizes = [16, 16], strides = [1, 1]} : vector<16x192xf32> to vector<16x16xf32>
    %688 = vector.extract_strided_slice %643 {offsets = [0, 96], sizes = [16, 16], strides = [1, 1]} : vector<16x192xf32> to vector<16x16xf32>
    %689 = vector.extract_strided_slice %643 {offsets = [0, 160], sizes = [16, 16], strides = [1, 1]} : vector<16x192xf32> to vector<16x16xf32>
    %690 = tpu.transpose %688, [1, 0] : vector<16x16xf32> -> vector<16x16xf32>
    %cst_290 = arith.constant dense<0.000000e+00> : vector<16x16xf32>
    %691 = tpu.matmul %687, %690, %cst_290 {dimension_numbers = #tpu.dot_dimension_numbers<[1], [0], [0], [1], [0, 0, 1, 1], [], []>} : vector<16x16xf32>, vector<16x16xf32>, vector<16x16xf32> -> vector<16x16xf32>
    %692 = arith.addf %691, %1 : vector<16x16xf32>
    %cst_291 = arith.constant dense<0xFF800000> : vector<16xf32>
    %693 = vector.multi_reduction <maximumf>, %692, %cst_291 [1] : vector<16x16xf32> to vector<16xf32>
    %694 = vector.shape_cast %693 : vector<16xf32> to vector<16x1xf32>
    %695 = vector.broadcast %694 : vector<16x1xf32> to vector<16x16xf32>
    %696 = arith.subf %692, %695 : vector<16x16xf32>
    %697 = math.exp %696 : vector<16x16xf32>
    %cst_292 = arith.constant dense<0.000000e+00> : vector<16xf32>
    %698 = vector.multi_reduction <add>, %697, %cst_292 [1] : vector<16x16xf32> to vector<16xf32>
    %699 = vector.shape_cast %698 : vector<16xf32> to vector<16x1xf32>
    %700 = tpu.reciprocal %699 {approx = true} : vector<16x1xf32> -> vector<16x1xf32>
    %701 = vector.broadcast %700 : vector<16x1xf32> to vector<16x16xf32>
    %702 = arith.mulf %697, %701 : vector<16x16xf32>
    %cst_293 = arith.constant dense<0.000000e+00> : vector<16x16xf32>
    %703 = tpu.matmul %702, %689, %cst_293 {dimension_numbers = #tpu.dot_dimension_numbers<[1], [0], [0], [1], [0, 0, 1, 1], [], []>} : vector<16x16xf32>, vector<16x16xf32>, vector<16x16xf32> -> vector<16x16xf32>
    %704 = vector.extract_strided_slice %645 {offsets = [32, 0], sizes = [16, 64], strides = [1, 1]} : vector<64x64xf32> to vector<16x64xf32>
    %cst_294 = arith.constant dense<0.000000e+00> : vector<16x64xf32>
    %705 = tpu.matmul %703, %704, %cst_294 {dimension_numbers = #tpu.dot_dimension_numbers<[1], [0], [0], [1], [0, 0, 1, 1], [], []>} : vector<16x16xf32>, vector<16x64xf32>, vector<16x64xf32> -> vector<16x64xf32>
    %706 = arith.addf %686, %705 : vector<16x64xf32>
    %707 = vector.extract_strided_slice %643 {offsets = [0, 48], sizes = [16, 16], strides = [1, 1]} : vector<16x192xf32> to vector<16x16xf32>
    %708 = vector.extract_strided_slice %643 {offsets = [0, 112], sizes = [16, 16], strides = [1, 1]} : vector<16x192xf32> to vector<16x16xf32>
    %709 = vector.extract_strided_slice %643 {offsets = [0, 176], sizes = [16, 16], strides = [1, 1]} : vector<16x192xf32> to vector<16x16xf32>
    %710 = tpu.transpose %708, [1, 0] : vector<16x16xf32> -> vector<16x16xf32>
    %cst_295 = arith.constant dense<0.000000e+00> : vector<16x16xf32>
    %711 = tpu.matmul %707, %710, %cst_295 {dimension_numbers = #tpu.dot_dimension_numbers<[1], [0], [0], [1], [0, 0, 1, 1], [], []>} : vector<16x16xf32>, vector<16x16xf32>, vector<16x16xf32> -> vector<16x16xf32>
    %712 = arith.addf %711, %1 : vector<16x16xf32>
    %cst_296 = arith.constant dense<0xFF800000> : vector<16xf32>
    %713 = vector.multi_reduction <maximumf>, %712, %cst_296 [1] : vector<16x16xf32> to vector<16xf32>
    %714 = vector.shape_cast %713 : vector<16xf32> to vector<16x1xf32>
    %715 = vector.broadcast %714 : vector<16x1xf32> to vector<16x16xf32>
    %716 = arith.subf %712, %715 : vector<16x16xf32>
    %717 = math.exp %716 : vector<16x16xf32>
    %cst_297 = arith.constant dense<0.000000e+00> : vector<16xf32>
    %718 = vector.multi_reduction <add>, %717, %cst_297 [1] : vector<16x16xf32> to vector<16xf32>
    %719 = vector.shape_cast %718 : vector<16xf32> to vector<16x1xf32>
    %720 = tpu.reciprocal %719 {approx = true} : vector<16x1xf32> -> vector<16x1xf32>
    %721 = vector.broadcast %720 : vector<16x1xf32> to vector<16x16xf32>
    %722 = arith.mulf %717, %721 : vector<16x16xf32>
    %cst_298 = arith.constant dense<0.000000e+00> : vector<16x16xf32>
    %723 = tpu.matmul %722, %709, %cst_298 {dimension_numbers = #tpu.dot_dimension_numbers<[1], [0], [0], [1], [0, 0, 1, 1], [], []>} : vector<16x16xf32>, vector<16x16xf32>, vector<16x16xf32> -> vector<16x16xf32>
    %724 = vector.extract_strided_slice %645 {offsets = [48, 0], sizes = [16, 64], strides = [1, 1]} : vector<64x64xf32> to vector<16x64xf32>
    %cst_299 = arith.constant dense<0.000000e+00> : vector<16x64xf32>
    %725 = tpu.matmul %723, %724, %cst_299 {dimension_numbers = #tpu.dot_dimension_numbers<[1], [0], [0], [1], [0, 0, 1, 1], [], []>} : vector<16x16xf32>, vector<16x64xf32>, vector<16x64xf32> -> vector<16x64xf32>
    %726 = arith.addf %706, %725 : vector<16x64xf32>
    %727 = arith.addf %609, %726 : vector<16x64xf32>
    %c3_300 = arith.constant 3 : index
    %c0_301 = arith.constant 0 : index
    %c0_302 = arith.constant 0 : index
    %728 = vector.load %arg8[%c3_300, %c0_301, %c0_302] : memref<6x1x64xf32, #tpu.memory_space<vmem>>, vector<1x1x64xf32>
    %729 = vector.shape_cast %728 : vector<1x1x64xf32> to vector<1x64xf32>
    %730 = vector.broadcast %729 : vector<1x64xf32> to vector<16x64xf32>
    %731 = arith.addf %727, %730 : vector<16x64xf32>
    %c3_303 = arith.constant 3 : index
    %c0_304 = arith.constant 0 : index
    %c0_305 = arith.constant 0 : index
    %732 = vector.load %arg9[%c3_303, %c0_304, %c0_305] : memref<6x1x64xf32, #tpu.memory_space<vmem>>, vector<1x1x64xf32>
    %733 = vector.shape_cast %732 : vector<1x1x64xf32> to vector<1x64xf32>
    %c3_306 = arith.constant 3 : index
    %c0_307 = arith.constant 0 : index
    %c0_308 = arith.constant 0 : index
    %734 = vector.load %arg10[%c3_306, %c0_307, %c0_308] : memref<6x1x64xf32, #tpu.memory_space<vmem>>, vector<1x1x64xf32>
    %735 = vector.shape_cast %734 : vector<1x1x64xf32> to vector<1x64xf32>
    %cst_309 = arith.constant dense<0.000000e+00> : vector<16xf32>
    %736 = vector.multi_reduction <add>, %731, %cst_309 [1] : vector<16x64xf32> to vector<16xf32>
    %737 = vector.shape_cast %736 : vector<16xf32> to vector<16x1xf32>
    %cst_310 = arith.constant 6.400000e+01 : f32
    %738 = vector.broadcast %cst_310 : f32 to vector<16x1xf32>
    %739 = arith.divf %737, %738 : vector<16x1xf32>
    %740 = vector.broadcast %739 : vector<16x1xf32> to vector<16x64xf32>
    %741 = arith.subf %731, %740 : vector<16x64xf32>
    %742 = arith.mulf %741, %741 : vector<16x64xf32>
    %cst_311 = arith.constant dense<0.000000e+00> : vector<16xf32>
    %743 = vector.multi_reduction <add>, %742, %cst_311 [1] : vector<16x64xf32> to vector<16xf32>
    %744 = vector.shape_cast %743 : vector<16xf32> to vector<16x1xf32>
    %cst_312 = arith.constant 6.400000e+01 : f32
    %745 = vector.broadcast %cst_312 : f32 to vector<16x1xf32>
    %746 = arith.divf %744, %745 : vector<16x1xf32>
    %747 = vector.broadcast %739 : vector<16x1xf32> to vector<16x64xf32>
    %748 = arith.subf %731, %747 : vector<16x64xf32>
    %cst_313 = arith.constant 9.99999974E-6 : f32
    %749 = vector.broadcast %cst_313 : f32 to vector<16x1xf32>
    %750 = arith.addf %746, %749 : vector<16x1xf32>
    %751 = math.rsqrt %750 : vector<16x1xf32>
    %752 = vector.broadcast %751 : vector<16x1xf32> to vector<16x64xf32>
    %753 = arith.mulf %748, %752 : vector<16x64xf32>
    %754 = vector.broadcast %733 : vector<1x64xf32> to vector<16x64xf32>
    %755 = arith.mulf %753, %754 : vector<16x64xf32>
    %756 = vector.broadcast %735 : vector<1x64xf32> to vector<16x64xf32>
    %757 = arith.addf %755, %756 : vector<16x64xf32>
    %c3_314 = arith.constant 3 : index
    %c0_315 = arith.constant 0 : index
    %c0_316 = arith.constant 0 : index
    %758 = vector.load %arg11[%c3_314, %c0_315, %c0_316] : memref<6x64x256xf32, #tpu.memory_space<vmem>>, vector<1x64x256xf32>
    %759 = vector.shape_cast %758 : vector<1x64x256xf32> to vector<64x256xf32>
    %cst_317 = arith.constant dense<0.000000e+00> : vector<16x256xf32>
    %760 = tpu.matmul %757, %759, %cst_317 {dimension_numbers = #tpu.dot_dimension_numbers<[1], [0], [0], [1], [0, 0, 1, 1], [], []>} : vector<16x64xf32>, vector<64x256xf32>, vector<16x256xf32> -> vector<16x256xf32>
    %c3_318 = arith.constant 3 : index
    %c0_319 = arith.constant 0 : index
    %c0_320 = arith.constant 0 : index
    %761 = vector.load %arg12[%c3_318, %c0_319, %c0_320] : memref<6x1x256xf32, #tpu.memory_space<vmem>>, vector<1x1x256xf32>
    %762 = vector.shape_cast %761 : vector<1x1x256xf32> to vector<1x256xf32>
    %763 = vector.broadcast %762 : vector<1x256xf32> to vector<16x256xf32>
    %764 = arith.addf %760, %763 : vector<16x256xf32>
    %cst_321 = arith.constant 5.000000e-01 : f32
    %765 = vector.broadcast %cst_321 : f32 to vector<16x256xf32>
    %766 = arith.mulf %765, %764 : vector<16x256xf32>
    %cst_322 = arith.constant 0.707106769 : f32
    %767 = vector.broadcast %cst_322 : f32 to vector<16x256xf32>
    %768 = arith.mulf %764, %767 : vector<16x256xf32>
    %769 = math.absf %768 : vector<16x256xf32>
    %cst_323 = arith.constant 0.327591091 : f32
    %770 = vector.broadcast %cst_323 : f32 to vector<16x256xf32>
    %771 = arith.mulf %770, %769 : vector<16x256xf32>
    %cst_324 = arith.constant 1.000000e+00 : f32
    %772 = vector.broadcast %cst_324 : f32 to vector<16x256xf32>
    %773 = arith.addf %772, %771 : vector<16x256xf32>
    %cst_325 = arith.constant 1.000000e+00 : f32
    %774 = vector.broadcast %cst_325 : f32 to vector<16x256xf32>
    %775 = arith.divf %774, %773 : vector<16x256xf32>
    %cst_326 = arith.constant 1.06140542 : f32
    %776 = vector.broadcast %cst_326 : f32 to vector<16x256xf32>
    %777 = arith.mulf %776, %775 : vector<16x256xf32>
    %cst_327 = arith.constant -1.45315206 : f32
    %778 = vector.broadcast %cst_327 : f32 to vector<16x256xf32>
    %779 = arith.addf %777, %778 : vector<16x256xf32>
    %780 = arith.mulf %779, %775 : vector<16x256xf32>
    %cst_328 = arith.constant 1.42141378 : f32
    %781 = vector.broadcast %cst_328 : f32 to vector<16x256xf32>
    %782 = arith.addf %780, %781 : vector<16x256xf32>
    %783 = arith.mulf %782, %775 : vector<16x256xf32>
    %cst_329 = arith.constant -0.284496725 : f32
    %784 = vector.broadcast %cst_329 : f32 to vector<16x256xf32>
    %785 = arith.addf %783, %784 : vector<16x256xf32>
    %786 = arith.mulf %785, %775 : vector<16x256xf32>
    %cst_330 = arith.constant 0.254829586 : f32
    %787 = vector.broadcast %cst_330 : f32 to vector<16x256xf32>
    %788 = arith.addf %786, %787 : vector<16x256xf32>
    %789 = arith.mulf %788, %775 : vector<16x256xf32>
    %cst_331 = arith.constant 0.000000e+00 : f32
    %790 = vector.broadcast %cst_331 : f32 to vector<16x256xf32>
    %791 = arith.subf %790, %769 : vector<16x256xf32>
    %792 = arith.mulf %791, %769 : vector<16x256xf32>
    %793 = math.exp %792 : vector<16x256xf32>
    %794 = arith.mulf %789, %793 : vector<16x256xf32>
    %cst_332 = arith.constant 1.000000e+00 : f32
    %795 = vector.broadcast %cst_332 : f32 to vector<16x256xf32>
    %796 = arith.subf %795, %794 : vector<16x256xf32>
    %cst_333 = arith.constant 0.000000e+00 : f32
    %797 = vector.broadcast %cst_333 : f32 to vector<16x256xf32>
    %798 = arith.cmpf oge, %768, %797 : vector<16x256xf32>
    %cst_334 = arith.constant 0.000000e+00 : f32
    %799 = vector.broadcast %cst_334 : f32 to vector<16x256xf32>
    %800 = arith.subf %799, %796 : vector<16x256xf32>
    %801 = arith.select %798, %796, %800 : vector<16x256xi1>, vector<16x256xf32>
    %cst_335 = arith.constant 1.000000e+00 : f32
    %802 = vector.broadcast %cst_335 : f32 to vector<16x256xf32>
    %803 = arith.addf %802, %801 : vector<16x256xf32>
    %804 = arith.mulf %766, %803 : vector<16x256xf32>
    %c3_336 = arith.constant 3 : index
    %c0_337 = arith.constant 0 : index
    %c0_338 = arith.constant 0 : index
    %805 = vector.load %arg13[%c3_336, %c0_337, %c0_338] : memref<6x256x64xf32, #tpu.memory_space<vmem>>, vector<1x256x64xf32>
    %806 = vector.shape_cast %805 : vector<1x256x64xf32> to vector<256x64xf32>
    %cst_339 = arith.constant dense<0.000000e+00> : vector<16x64xf32>
    %807 = tpu.matmul %804, %806, %cst_339 {dimension_numbers = #tpu.dot_dimension_numbers<[1], [0], [0], [1], [0, 0, 1, 1], [], []>} : vector<16x256xf32>, vector<256x64xf32>, vector<16x64xf32> -> vector<16x64xf32>
    %808 = arith.addf %731, %807 : vector<16x64xf32>
    %c3_340 = arith.constant 3 : index
    %c0_341 = arith.constant 0 : index
    %c0_342 = arith.constant 0 : index
    %809 = vector.load %arg14[%c3_340, %c0_341, %c0_342] : memref<6x1x64xf32, #tpu.memory_space<vmem>>, vector<1x1x64xf32>
    %810 = vector.shape_cast %809 : vector<1x1x64xf32> to vector<1x64xf32>
    %811 = vector.broadcast %810 : vector<1x64xf32> to vector<16x64xf32>
    %812 = arith.addf %808, %811 : vector<16x64xf32>
    %c0_343 = arith.constant 0 : index
    %c192 = arith.constant 192 : index
    %813 = vector.load %arg15[%c0_343, %c192] : memref<16x384xf32, #tpu.memory_space<vmem>>, vector<16x64xf32>
    tpu.vector_store %arg15[%c0_343, %c192], %812 {strides = array<i32>} : memref<16x384xf32, #tpu.memory_space<vmem>>, vector<16x64xf32>,
    %c4 = arith.constant 4 : index
    %c0_344 = arith.constant 0 : index
    %c0_345 = arith.constant 0 : index
    %814 = vector.load %arg3[%c4, %c0_344, %c0_345] : memref<6x1x64xf32, #tpu.memory_space<vmem>>, vector<1x1x64xf32>
    %815 = vector.shape_cast %814 : vector<1x1x64xf32> to vector<1x64xf32>
    %c4_346 = arith.constant 4 : index
    %c0_347 = arith.constant 0 : index
    %c0_348 = arith.constant 0 : index
    %816 = vector.load %arg4[%c4_346, %c0_347, %c0_348] : memref<6x1x64xf32, #tpu.memory_space<vmem>>, vector<1x1x64xf32>
    %817 = vector.shape_cast %816 : vector<1x1x64xf32> to vector<1x64xf32>
    %cst_349 = arith.constant dense<0.000000e+00> : vector<16xf32>
    %818 = vector.multi_reduction <add>, %812, %cst_349 [1] : vector<16x64xf32> to vector<16xf32>
    %819 = vector.shape_cast %818 : vector<16xf32> to vector<16x1xf32>
    %cst_350 = arith.constant 6.400000e+01 : f32
    %820 = vector.broadcast %cst_350 : f32 to vector<16x1xf32>
    %821 = arith.divf %819, %820 : vector<16x1xf32>
    %822 = vector.broadcast %821 : vector<16x1xf32> to vector<16x64xf32>
    %823 = arith.subf %812, %822 : vector<16x64xf32>
    %824 = arith.mulf %823, %823 : vector<16x64xf32>
    %cst_351 = arith.constant dense<0.000000e+00> : vector<16xf32>
    %825 = vector.multi_reduction <add>, %824, %cst_351 [1] : vector<16x64xf32> to vector<16xf32>
    %826 = vector.shape_cast %825 : vector<16xf32> to vector<16x1xf32>
    %cst_352 = arith.constant 6.400000e+01 : f32
    %827 = vector.broadcast %cst_352 : f32 to vector<16x1xf32>
    %828 = arith.divf %826, %827 : vector<16x1xf32>
    %829 = vector.broadcast %821 : vector<16x1xf32> to vector<16x64xf32>
    %830 = arith.subf %812, %829 : vector<16x64xf32>
    %cst_353 = arith.constant 9.99999974E-6 : f32
    %831 = vector.broadcast %cst_353 : f32 to vector<16x1xf32>
    %832 = arith.addf %828, %831 : vector<16x1xf32>
    %833 = math.rsqrt %832 : vector<16x1xf32>
    %834 = vector.broadcast %833 : vector<16x1xf32> to vector<16x64xf32>
    %835 = arith.mulf %830, %834 : vector<16x64xf32>
    %836 = vector.broadcast %815 : vector<1x64xf32> to vector<16x64xf32>
    %837 = arith.mulf %835, %836 : vector<16x64xf32>
    %838 = vector.broadcast %817 : vector<1x64xf32> to vector<16x64xf32>
    %839 = arith.addf %837, %838 : vector<16x64xf32>
    %c4_354 = arith.constant 4 : index
    %c0_355 = arith.constant 0 : index
    %c0_356 = arith.constant 0 : index
    %840 = vector.load %arg5[%c4_354, %c0_355, %c0_356] : memref<6x64x192xf32, #tpu.memory_space<vmem>>, vector<1x64x192xf32>
    %841 = vector.shape_cast %840 : vector<1x64x192xf32> to vector<64x192xf32>
    %cst_357 = arith.constant dense<0.000000e+00> : vector<16x192xf32>
    %842 = tpu.matmul %839, %841, %cst_357 {dimension_numbers = #tpu.dot_dimension_numbers<[1], [0], [0], [1], [0, 0, 1, 1], [], []>} : vector<16x64xf32>, vector<64x192xf32>, vector<16x192xf32> -> vector<16x192xf32>
    %c4_358 = arith.constant 4 : index
    %c0_359 = arith.constant 0 : index
    %c0_360 = arith.constant 0 : index
    %843 = vector.load %arg6[%c4_358, %c0_359, %c0_360] : memref<6x1x192xf32, #tpu.memory_space<vmem>>, vector<1x1x192xf32>
    %844 = vector.shape_cast %843 : vector<1x1x192xf32> to vector<1x192xf32>
    %845 = vector.broadcast %844 : vector<1x192xf32> to vector<16x192xf32>
    %846 = arith.addf %842, %845 : vector<16x192xf32>
    %c4_361 = arith.constant 4 : index
    %c0_362 = arith.constant 0 : index
    %c0_363 = arith.constant 0 : index
    %847 = vector.load %arg7[%c4_361, %c0_362, %c0_363] : memref<6x64x64xf32, #tpu.memory_space<vmem>>, vector<1x64x64xf32>
    %848 = vector.shape_cast %847 : vector<1x64x64xf32> to vector<64x64xf32>
    %cst_364 = arith.constant 0.000000e+00 : f32
    %849 = vector.broadcast %cst_364 : f32 to vector<16x64xf32>
    %850 = vector.extract_strided_slice %846 {offsets = [0, 0], sizes = [16, 16], strides = [1, 1]} : vector<16x192xf32> to vector<16x16xf32>
    %851 = vector.extract_strided_slice %846 {offsets = [0, 64], sizes = [16, 16], strides = [1, 1]} : vector<16x192xf32> to vector<16x16xf32>
    %852 = vector.extract_strided_slice %846 {offsets = [0, 128], sizes = [16, 16], strides = [1, 1]} : vector<16x192xf32> to vector<16x16xf32>
    %853 = tpu.transpose %851, [1, 0] : vector<16x16xf32> -> vector<16x16xf32>
    %cst_365 = arith.constant dense<0.000000e+00> : vector<16x16xf32>
    %854 = tpu.matmul %850, %853, %cst_365 {dimension_numbers = #tpu.dot_dimension_numbers<[1], [0], [0], [1], [0, 0, 1, 1], [], []>} : vector<16x16xf32>, vector<16x16xf32>, vector<16x16xf32> -> vector<16x16xf32>
    %855 = arith.addf %854, %1 : vector<16x16xf32>
    %cst_366 = arith.constant dense<0xFF800000> : vector<16xf32>
    %856 = vector.multi_reduction <maximumf>, %855, %cst_366 [1] : vector<16x16xf32> to vector<16xf32>
    %857 = vector.shape_cast %856 : vector<16xf32> to vector<16x1xf32>
    %858 = vector.broadcast %857 : vector<16x1xf32> to vector<16x16xf32>
    %859 = arith.subf %855, %858 : vector<16x16xf32>
    %860 = math.exp %859 : vector<16x16xf32>
    %cst_367 = arith.constant dense<0.000000e+00> : vector<16xf32>
    %861 = vector.multi_reduction <add>, %860, %cst_367 [1] : vector<16x16xf32> to vector<16xf32>
    %862 = vector.shape_cast %861 : vector<16xf32> to vector<16x1xf32>
    %863 = tpu.reciprocal %862 {approx = true} : vector<16x1xf32> -> vector<16x1xf32>
    %864 = vector.broadcast %863 : vector<16x1xf32> to vector<16x16xf32>
    %865 = arith.mulf %860, %864 : vector<16x16xf32>
    %cst_368 = arith.constant dense<0.000000e+00> : vector<16x16xf32>
    %866 = tpu.matmul %865, %852, %cst_368 {dimension_numbers = #tpu.dot_dimension_numbers<[1], [0], [0], [1], [0, 0, 1, 1], [], []>} : vector<16x16xf32>, vector<16x16xf32>, vector<16x16xf32> -> vector<16x16xf32>
    %867 = vector.extract_strided_slice %848 {offsets = [0, 0], sizes = [16, 64], strides = [1, 1]} : vector<64x64xf32> to vector<16x64xf32>
    %cst_369 = arith.constant dense<0.000000e+00> : vector<16x64xf32>
    %868 = tpu.matmul %866, %867, %cst_369 {dimension_numbers = #tpu.dot_dimension_numbers<[1], [0], [0], [1], [0, 0, 1, 1], [], []>} : vector<16x16xf32>, vector<16x64xf32>, vector<16x64xf32> -> vector<16x64xf32>
    %869 = arith.addf %849, %868 : vector<16x64xf32>
    %870 = vector.extract_strided_slice %846 {offsets = [0, 16], sizes = [16, 16], strides = [1, 1]} : vector<16x192xf32> to vector<16x16xf32>
    %871 = vector.extract_strided_slice %846 {offsets = [0, 80], sizes = [16, 16], strides = [1, 1]} : vector<16x192xf32> to vector<16x16xf32>
    %872 = vector.extract_strided_slice %846 {offsets = [0, 144], sizes = [16, 16], strides = [1, 1]} : vector<16x192xf32> to vector<16x16xf32>
    %873 = tpu.transpose %871, [1, 0] : vector<16x16xf32> -> vector<16x16xf32>
    %cst_370 = arith.constant dense<0.000000e+00> : vector<16x16xf32>
    %874 = tpu.matmul %870, %873, %cst_370 {dimension_numbers = #tpu.dot_dimension_numbers<[1], [0], [0], [1], [0, 0, 1, 1], [], []>} : vector<16x16xf32>, vector<16x16xf32>, vector<16x16xf32> -> vector<16x16xf32>
    %875 = arith.addf %874, %1 : vector<16x16xf32>
    %cst_371 = arith.constant dense<0xFF800000> : vector<16xf32>
    %876 = vector.multi_reduction <maximumf>, %875, %cst_371 [1] : vector<16x16xf32> to vector<16xf32>
    %877 = vector.shape_cast %876 : vector<16xf32> to vector<16x1xf32>
    %878 = vector.broadcast %877 : vector<16x1xf32> to vector<16x16xf32>
    %879 = arith.subf %875, %878 : vector<16x16xf32>
    %880 = math.exp %879 : vector<16x16xf32>
    %cst_372 = arith.constant dense<0.000000e+00> : vector<16xf32>
    %881 = vector.multi_reduction <add>, %880, %cst_372 [1] : vector<16x16xf32> to vector<16xf32>
    %882 = vector.shape_cast %881 : vector<16xf32> to vector<16x1xf32>
    %883 = tpu.reciprocal %882 {approx = true} : vector<16x1xf32> -> vector<16x1xf32>
    %884 = vector.broadcast %883 : vector<16x1xf32> to vector<16x16xf32>
    %885 = arith.mulf %880, %884 : vector<16x16xf32>
    %cst_373 = arith.constant dense<0.000000e+00> : vector<16x16xf32>
    %886 = tpu.matmul %885, %872, %cst_373 {dimension_numbers = #tpu.dot_dimension_numbers<[1], [0], [0], [1], [0, 0, 1, 1], [], []>} : vector<16x16xf32>, vector<16x16xf32>, vector<16x16xf32> -> vector<16x16xf32>
    %887 = vector.extract_strided_slice %848 {offsets = [16, 0], sizes = [16, 64], strides = [1, 1]} : vector<64x64xf32> to vector<16x64xf32>
    %cst_374 = arith.constant dense<0.000000e+00> : vector<16x64xf32>
    %888 = tpu.matmul %886, %887, %cst_374 {dimension_numbers = #tpu.dot_dimension_numbers<[1], [0], [0], [1], [0, 0, 1, 1], [], []>} : vector<16x16xf32>, vector<16x64xf32>, vector<16x64xf32> -> vector<16x64xf32>
    %889 = arith.addf %869, %888 : vector<16x64xf32>
    %890 = vector.extract_strided_slice %846 {offsets = [0, 32], sizes = [16, 16], strides = [1, 1]} : vector<16x192xf32> to vector<16x16xf32>
    %891 = vector.extract_strided_slice %846 {offsets = [0, 96], sizes = [16, 16], strides = [1, 1]} : vector<16x192xf32> to vector<16x16xf32>
    %892 = vector.extract_strided_slice %846 {offsets = [0, 160], sizes = [16, 16], strides = [1, 1]} : vector<16x192xf32> to vector<16x16xf32>
    %893 = tpu.transpose %891, [1, 0] : vector<16x16xf32> -> vector<16x16xf32>
    %cst_375 = arith.constant dense<0.000000e+00> : vector<16x16xf32>
    %894 = tpu.matmul %890, %893, %cst_375 {dimension_numbers = #tpu.dot_dimension_numbers<[1], [0], [0], [1], [0, 0, 1, 1], [], []>} : vector<16x16xf32>, vector<16x16xf32>, vector<16x16xf32> -> vector<16x16xf32>
    %895 = arith.addf %894, %1 : vector<16x16xf32>
    %cst_376 = arith.constant dense<0xFF800000> : vector<16xf32>
    %896 = vector.multi_reduction <maximumf>, %895, %cst_376 [1] : vector<16x16xf32> to vector<16xf32>
    %897 = vector.shape_cast %896 : vector<16xf32> to vector<16x1xf32>
    %898 = vector.broadcast %897 : vector<16x1xf32> to vector<16x16xf32>
    %899 = arith.subf %895, %898 : vector<16x16xf32>
    %900 = math.exp %899 : vector<16x16xf32>
    %cst_377 = arith.constant dense<0.000000e+00> : vector<16xf32>
    %901 = vector.multi_reduction <add>, %900, %cst_377 [1] : vector<16x16xf32> to vector<16xf32>
    %902 = vector.shape_cast %901 : vector<16xf32> to vector<16x1xf32>
    %903 = tpu.reciprocal %902 {approx = true} : vector<16x1xf32> -> vector<16x1xf32>
    %904 = vector.broadcast %903 : vector<16x1xf32> to vector<16x16xf32>
    %905 = arith.mulf %900, %904 : vector<16x16xf32>
    %cst_378 = arith.constant dense<0.000000e+00> : vector<16x16xf32>
    %906 = tpu.matmul %905, %892, %cst_378 {dimension_numbers = #tpu.dot_dimension_numbers<[1], [0], [0], [1], [0, 0, 1, 1], [], []>} : vector<16x16xf32>, vector<16x16xf32>, vector<16x16xf32> -> vector<16x16xf32>
    %907 = vector.extract_strided_slice %848 {offsets = [32, 0], sizes = [16, 64], strides = [1, 1]} : vector<64x64xf32> to vector<16x64xf32>
    %cst_379 = arith.constant dense<0.000000e+00> : vector<16x64xf32>
    %908 = tpu.matmul %906, %907, %cst_379 {dimension_numbers = #tpu.dot_dimension_numbers<[1], [0], [0], [1], [0, 0, 1, 1], [], []>} : vector<16x16xf32>, vector<16x64xf32>, vector<16x64xf32> -> vector<16x64xf32>
    %909 = arith.addf %889, %908 : vector<16x64xf32>
    %910 = vector.extract_strided_slice %846 {offsets = [0, 48], sizes = [16, 16], strides = [1, 1]} : vector<16x192xf32> to vector<16x16xf32>
    %911 = vector.extract_strided_slice %846 {offsets = [0, 112], sizes = [16, 16], strides = [1, 1]} : vector<16x192xf32> to vector<16x16xf32>
    %912 = vector.extract_strided_slice %846 {offsets = [0, 176], sizes = [16, 16], strides = [1, 1]} : vector<16x192xf32> to vector<16x16xf32>
    %913 = tpu.transpose %911, [1, 0] : vector<16x16xf32> -> vector<16x16xf32>
    %cst_380 = arith.constant dense<0.000000e+00> : vector<16x16xf32>
    %914 = tpu.matmul %910, %913, %cst_380 {dimension_numbers = #tpu.dot_dimension_numbers<[1], [0], [0], [1], [0, 0, 1, 1], [], []>} : vector<16x16xf32>, vector<16x16xf32>, vector<16x16xf32> -> vector<16x16xf32>
    %915 = arith.addf %914, %1 : vector<16x16xf32>
    %cst_381 = arith.constant dense<0xFF800000> : vector<16xf32>
    %916 = vector.multi_reduction <maximumf>, %915, %cst_381 [1] : vector<16x16xf32> to vector<16xf32>
    %917 = vector.shape_cast %916 : vector<16xf32> to vector<16x1xf32>
    %918 = vector.broadcast %917 : vector<16x1xf32> to vector<16x16xf32>
    %919 = arith.subf %915, %918 : vector<16x16xf32>
    %920 = math.exp %919 : vector<16x16xf32>
    %cst_382 = arith.constant dense<0.000000e+00> : vector<16xf32>
    %921 = vector.multi_reduction <add>, %920, %cst_382 [1] : vector<16x16xf32> to vector<16xf32>
    %922 = vector.shape_cast %921 : vector<16xf32> to vector<16x1xf32>
    %923 = tpu.reciprocal %922 {approx = true} : vector<16x1xf32> -> vector<16x1xf32>
    %924 = vector.broadcast %923 : vector<16x1xf32> to vector<16x16xf32>
    %925 = arith.mulf %920, %924 : vector<16x16xf32>
    %cst_383 = arith.constant dense<0.000000e+00> : vector<16x16xf32>
    %926 = tpu.matmul %925, %912, %cst_383 {dimension_numbers = #tpu.dot_dimension_numbers<[1], [0], [0], [1], [0, 0, 1, 1], [], []>} : vector<16x16xf32>, vector<16x16xf32>, vector<16x16xf32> -> vector<16x16xf32>
    %927 = vector.extract_strided_slice %848 {offsets = [48, 0], sizes = [16, 64], strides = [1, 1]} : vector<64x64xf32> to vector<16x64xf32>
    %cst_384 = arith.constant dense<0.000000e+00> : vector<16x64xf32>
    %928 = tpu.matmul %926, %927, %cst_384 {dimension_numbers = #tpu.dot_dimension_numbers<[1], [0], [0], [1], [0, 0, 1, 1], [], []>} : vector<16x16xf32>, vector<16x64xf32>, vector<16x64xf32> -> vector<16x64xf32>
    %929 = arith.addf %909, %928 : vector<16x64xf32>
    %930 = arith.addf %812, %929 : vector<16x64xf32>
    %c4_385 = arith.constant 4 : index
    %c0_386 = arith.constant 0 : index
    %c0_387 = arith.constant 0 : index
    %931 = vector.load %arg8[%c4_385, %c0_386, %c0_387] : memref<6x1x64xf32, #tpu.memory_space<vmem>>, vector<1x1x64xf32>
    %932 = vector.shape_cast %931 : vector<1x1x64xf32> to vector<1x64xf32>
    %933 = vector.broadcast %932 : vector<1x64xf32> to vector<16x64xf32>
    %934 = arith.addf %930, %933 : vector<16x64xf32>
    %c4_388 = arith.constant 4 : index
    %c0_389 = arith.constant 0 : index
    %c0_390 = arith.constant 0 : index
    %935 = vector.load %arg9[%c4_388, %c0_389, %c0_390] : memref<6x1x64xf32, #tpu.memory_space<vmem>>, vector<1x1x64xf32>
    %936 = vector.shape_cast %935 : vector<1x1x64xf32> to vector<1x64xf32>
    %c4_391 = arith.constant 4 : index
    %c0_392 = arith.constant 0 : index
    %c0_393 = arith.constant 0 : index
    %937 = vector.load %arg10[%c4_391, %c0_392, %c0_393] : memref<6x1x64xf32, #tpu.memory_space<vmem>>, vector<1x1x64xf32>
    %938 = vector.shape_cast %937 : vector<1x1x64xf32> to vector<1x64xf32>
    %cst_394 = arith.constant dense<0.000000e+00> : vector<16xf32>
    %939 = vector.multi_reduction <add>, %934, %cst_394 [1] : vector<16x64xf32> to vector<16xf32>
    %940 = vector.shape_cast %939 : vector<16xf32> to vector<16x1xf32>
    %cst_395 = arith.constant 6.400000e+01 : f32
    %941 = vector.broadcast %cst_395 : f32 to vector<16x1xf32>
    %942 = arith.divf %940, %941 : vector<16x1xf32>
    %943 = vector.broadcast %942 : vector<16x1xf32> to vector<16x64xf32>
    %944 = arith.subf %934, %943 : vector<16x64xf32>
    %945 = arith.mulf %944, %944 : vector<16x64xf32>
    %cst_396 = arith.constant dense<0.000000e+00> : vector<16xf32>
    %946 = vector.multi_reduction <add>, %945, %cst_396 [1] : vector<16x64xf32> to vector<16xf32>
    %947 = vector.shape_cast %946 : vector<16xf32> to vector<16x1xf32>
    %cst_397 = arith.constant 6.400000e+01 : f32
    %948 = vector.broadcast %cst_397 : f32 to vector<16x1xf32>
    %949 = arith.divf %947, %948 : vector<16x1xf32>
    %950 = vector.broadcast %942 : vector<16x1xf32> to vector<16x64xf32>
    %951 = arith.subf %934, %950 : vector<16x64xf32>
    %cst_398 = arith.constant 9.99999974E-6 : f32
    %952 = vector.broadcast %cst_398 : f32 to vector<16x1xf32>
    %953 = arith.addf %949, %952 : vector<16x1xf32>
    %954 = math.rsqrt %953 : vector<16x1xf32>
    %955 = vector.broadcast %954 : vector<16x1xf32> to vector<16x64xf32>
    %956 = arith.mulf %951, %955 : vector<16x64xf32>
    %957 = vector.broadcast %936 : vector<1x64xf32> to vector<16x64xf32>
    %958 = arith.mulf %956, %957 : vector<16x64xf32>
    %959 = vector.broadcast %938 : vector<1x64xf32> to vector<16x64xf32>
    %960 = arith.addf %958, %959 : vector<16x64xf32>
    %c4_399 = arith.constant 4 : index
    %c0_400 = arith.constant 0 : index
    %c0_401 = arith.constant 0 : index
    %961 = vector.load %arg11[%c4_399, %c0_400, %c0_401] : memref<6x64x256xf32, #tpu.memory_space<vmem>>, vector<1x64x256xf32>
    %962 = vector.shape_cast %961 : vector<1x64x256xf32> to vector<64x256xf32>
    %cst_402 = arith.constant dense<0.000000e+00> : vector<16x256xf32>
    %963 = tpu.matmul %960, %962, %cst_402 {dimension_numbers = #tpu.dot_dimension_numbers<[1], [0], [0], [1], [0, 0, 1, 1], [], []>} : vector<16x64xf32>, vector<64x256xf32>, vector<16x256xf32> -> vector<16x256xf32>
    %c4_403 = arith.constant 4 : index
    %c0_404 = arith.constant 0 : index
    %c0_405 = arith.constant 0 : index
    %964 = vector.load %arg12[%c4_403, %c0_404, %c0_405] : memref<6x1x256xf32, #tpu.memory_space<vmem>>, vector<1x1x256xf32>
    %965 = vector.shape_cast %964 : vector<1x1x256xf32> to vector<1x256xf32>
    %966 = vector.broadcast %965 : vector<1x256xf32> to vector<16x256xf32>
    %967 = arith.addf %963, %966 : vector<16x256xf32>
    %cst_406 = arith.constant 5.000000e-01 : f32
    %968 = vector.broadcast %cst_406 : f32 to vector<16x256xf32>
    %969 = arith.mulf %968, %967 : vector<16x256xf32>
    %cst_407 = arith.constant 0.707106769 : f32
    %970 = vector.broadcast %cst_407 : f32 to vector<16x256xf32>
    %971 = arith.mulf %967, %970 : vector<16x256xf32>
    %972 = math.absf %971 : vector<16x256xf32>
    %cst_408 = arith.constant 0.327591091 : f32
    %973 = vector.broadcast %cst_408 : f32 to vector<16x256xf32>
    %974 = arith.mulf %973, %972 : vector<16x256xf32>
    %cst_409 = arith.constant 1.000000e+00 : f32
    %975 = vector.broadcast %cst_409 : f32 to vector<16x256xf32>
    %976 = arith.addf %975, %974 : vector<16x256xf32>
    %cst_410 = arith.constant 1.000000e+00 : f32
    %977 = vector.broadcast %cst_410 : f32 to vector<16x256xf32>
    %978 = arith.divf %977, %976 : vector<16x256xf32>
    %cst_411 = arith.constant 1.06140542 : f32
    %979 = vector.broadcast %cst_411 : f32 to vector<16x256xf32>
    %980 = arith.mulf %979, %978 : vector<16x256xf32>
    %cst_412 = arith.constant -1.45315206 : f32
    %981 = vector.broadcast %cst_412 : f32 to vector<16x256xf32>
    %982 = arith.addf %980, %981 : vector<16x256xf32>
    %983 = arith.mulf %982, %978 : vector<16x256xf32>
    %cst_413 = arith.constant 1.42141378 : f32
    %984 = vector.broadcast %cst_413 : f32 to vector<16x256xf32>
    %985 = arith.addf %983, %984 : vector<16x256xf32>
    %986 = arith.mulf %985, %978 : vector<16x256xf32>
    %cst_414 = arith.constant -0.284496725 : f32
    %987 = vector.broadcast %cst_414 : f32 to vector<16x256xf32>
    %988 = arith.addf %986, %987 : vector<16x256xf32>
    %989 = arith.mulf %988, %978 : vector<16x256xf32>
    %cst_415 = arith.constant 0.254829586 : f32
    %990 = vector.broadcast %cst_415 : f32 to vector<16x256xf32>
    %991 = arith.addf %989, %990 : vector<16x256xf32>
    %992 = arith.mulf %991, %978 : vector<16x256xf32>
    %cst_416 = arith.constant 0.000000e+00 : f32
    %993 = vector.broadcast %cst_416 : f32 to vector<16x256xf32>
    %994 = arith.subf %993, %972 : vector<16x256xf32>
    %995 = arith.mulf %994, %972 : vector<16x256xf32>
    %996 = math.exp %995 : vector<16x256xf32>
    %997 = arith.mulf %992, %996 : vector<16x256xf32>
    %cst_417 = arith.constant 1.000000e+00 : f32
    %998 = vector.broadcast %cst_417 : f32 to vector<16x256xf32>
    %999 = arith.subf %998, %997 : vector<16x256xf32>
    %cst_418 = arith.constant 0.000000e+00 : f32
    %1000 = vector.broadcast %cst_418 : f32 to vector<16x256xf32>
    %1001 = arith.cmpf oge, %971, %1000 : vector<16x256xf32>
    %cst_419 = arith.constant 0.000000e+00 : f32
    %1002 = vector.broadcast %cst_419 : f32 to vector<16x256xf32>
    %1003 = arith.subf %1002, %999 : vector<16x256xf32>
    %1004 = arith.select %1001, %999, %1003 : vector<16x256xi1>, vector<16x256xf32>
    %cst_420 = arith.constant 1.000000e+00 : f32
    %1005 = vector.broadcast %cst_420 : f32 to vector<16x256xf32>
    %1006 = arith.addf %1005, %1004 : vector<16x256xf32>
    %1007 = arith.mulf %969, %1006 : vector<16x256xf32>
    %c4_421 = arith.constant 4 : index
    %c0_422 = arith.constant 0 : index
    %c0_423 = arith.constant 0 : index
    %1008 = vector.load %arg13[%c4_421, %c0_422, %c0_423] : memref<6x256x64xf32, #tpu.memory_space<vmem>>, vector<1x256x64xf32>
    %1009 = vector.shape_cast %1008 : vector<1x256x64xf32> to vector<256x64xf32>
    %cst_424 = arith.constant dense<0.000000e+00> : vector<16x64xf32>
    %1010 = tpu.matmul %1007, %1009, %cst_424 {dimension_numbers = #tpu.dot_dimension_numbers<[1], [0], [0], [1], [0, 0, 1, 1], [], []>} : vector<16x256xf32>, vector<256x64xf32>, vector<16x64xf32> -> vector<16x64xf32>
    %1011 = arith.addf %934, %1010 : vector<16x64xf32>
    %c4_425 = arith.constant 4 : index
    %c0_426 = arith.constant 0 : index
    %c0_427 = arith.constant 0 : index
    %1012 = vector.load %arg14[%c4_425, %c0_426, %c0_427] : memref<6x1x64xf32, #tpu.memory_space<vmem>>, vector<1x1x64xf32>
    %1013 = vector.shape_cast %1012 : vector<1x1x64xf32> to vector<1x64xf32>
    %1014 = vector.broadcast %1013 : vector<1x64xf32> to vector<16x64xf32>
    %1015 = arith.addf %1011, %1014 : vector<16x64xf32>
    %c0_428 = arith.constant 0 : index
    %c256 = arith.constant 256 : index
    %1016 = vector.load %arg15[%c0_428, %c256] : memref<16x384xf32, #tpu.memory_space<vmem>>, vector<16x64xf32>
    tpu.vector_store %arg15[%c0_428, %c256], %1015 {strides = array<i32>} : memref<16x384xf32, #tpu.memory_space<vmem>>, vector<16x64xf32>,
    %c5 = arith.constant 5 : index
    %c0_429 = arith.constant 0 : index
    %c0_430 = arith.constant 0 : index
    %1017 = vector.load %arg3[%c5, %c0_429, %c0_430] : memref<6x1x64xf32, #tpu.memory_space<vmem>>, vector<1x1x64xf32>
    %1018 = vector.shape_cast %1017 : vector<1x1x64xf32> to vector<1x64xf32>
    %c5_431 = arith.constant 5 : index
    %c0_432 = arith.constant 0 : index
    %c0_433 = arith.constant 0 : index
    %1019 = vector.load %arg4[%c5_431, %c0_432, %c0_433] : memref<6x1x64xf32, #tpu.memory_space<vmem>>, vector<1x1x64xf32>
    %1020 = vector.shape_cast %1019 : vector<1x1x64xf32> to vector<1x64xf32>
    %cst_434 = arith.constant dense<0.000000e+00> : vector<16xf32>
    %1021 = vector.multi_reduction <add>, %1015, %cst_434 [1] : vector<16x64xf32> to vector<16xf32>
    %1022 = vector.shape_cast %1021 : vector<16xf32> to vector<16x1xf32>
    %cst_435 = arith.constant 6.400000e+01 : f32
    %1023 = vector.broadcast %cst_435 : f32 to vector<16x1xf32>
    %1024 = arith.divf %1022, %1023 : vector<16x1xf32>
    %1025 = vector.broadcast %1024 : vector<16x1xf32> to vector<16x64xf32>
    %1026 = arith.subf %1015, %1025 : vector<16x64xf32>
    %1027 = arith.mulf %1026, %1026 : vector<16x64xf32>
    %cst_436 = arith.constant dense<0.000000e+00> : vector<16xf32>
    %1028 = vector.multi_reduction <add>, %1027, %cst_436 [1] : vector<16x64xf32> to vector<16xf32>
    %1029 = vector.shape_cast %1028 : vector<16xf32> to vector<16x1xf32>
    %cst_437 = arith.constant 6.400000e+01 : f32
    %1030 = vector.broadcast %cst_437 : f32 to vector<16x1xf32>
    %1031 = arith.divf %1029, %1030 : vector<16x1xf32>
    %1032 = vector.broadcast %1024 : vector<16x1xf32> to vector<16x64xf32>
    %1033 = arith.subf %1015, %1032 : vector<16x64xf32>
    %cst_438 = arith.constant 9.99999974E-6 : f32
    %1034 = vector.broadcast %cst_438 : f32 to vector<16x1xf32>
    %1035 = arith.addf %1031, %1034 : vector<16x1xf32>
    %1036 = math.rsqrt %1035 : vector<16x1xf32>
    %1037 = vector.broadcast %1036 : vector<16x1xf32> to vector<16x64xf32>
    %1038 = arith.mulf %1033, %1037 : vector<16x64xf32>
    %1039 = vector.broadcast %1018 : vector<1x64xf32> to vector<16x64xf32>
    %1040 = arith.mulf %1038, %1039 : vector<16x64xf32>
    %1041 = vector.broadcast %1020 : vector<1x64xf32> to vector<16x64xf32>
    %1042 = arith.addf %1040, %1041 : vector<16x64xf32>
    %c5_439 = arith.constant 5 : index
    %c0_440 = arith.constant 0 : index
    %c0_441 = arith.constant 0 : index
    %1043 = vector.load %arg5[%c5_439, %c0_440, %c0_441] : memref<6x64x192xf32, #tpu.memory_space<vmem>>, vector<1x64x192xf32>
    %1044 = vector.shape_cast %1043 : vector<1x64x192xf32> to vector<64x192xf32>
    %cst_442 = arith.constant dense<0.000000e+00> : vector<16x192xf32>
    %1045 = tpu.matmul %1042, %1044, %cst_442 {dimension_numbers = #tpu.dot_dimension_numbers<[1], [0], [0], [1], [0, 0, 1, 1], [], []>} : vector<16x64xf32>, vector<64x192xf32>, vector<16x192xf32> -> vector<16x192xf32>
    %c5_443 = arith.constant 5 : index
    %c0_444 = arith.constant 0 : index
    %c0_445 = arith.constant 0 : index
    %1046 = vector.load %arg6[%c5_443, %c0_444, %c0_445] : memref<6x1x192xf32, #tpu.memory_space<vmem>>, vector<1x1x192xf32>
    %1047 = vector.shape_cast %1046 : vector<1x1x192xf32> to vector<1x192xf32>
    %1048 = vector.broadcast %1047 : vector<1x192xf32> to vector<16x192xf32>
    %1049 = arith.addf %1045, %1048 : vector<16x192xf32>
    %c5_446 = arith.constant 5 : index
    %c0_447 = arith.constant 0 : index
    %c0_448 = arith.constant 0 : index
    %1050 = vector.load %arg7[%c5_446, %c0_447, %c0_448] : memref<6x64x64xf32, #tpu.memory_space<vmem>>, vector<1x64x64xf32>
    %1051 = vector.shape_cast %1050 : vector<1x64x64xf32> to vector<64x64xf32>
    %cst_449 = arith.constant 0.000000e+00 : f32
    %1052 = vector.broadcast %cst_449 : f32 to vector<16x64xf32>
    %1053 = vector.extract_strided_slice %1049 {offsets = [0, 0], sizes = [16, 16], strides = [1, 1]} : vector<16x192xf32> to vector<16x16xf32>
    %1054 = vector.extract_strided_slice %1049 {offsets = [0, 64], sizes = [16, 16], strides = [1, 1]} : vector<16x192xf32> to vector<16x16xf32>
    %1055 = vector.extract_strided_slice %1049 {offsets = [0, 128], sizes = [16, 16], strides = [1, 1]} : vector<16x192xf32> to vector<16x16xf32>
    %1056 = tpu.transpose %1054, [1, 0] : vector<16x16xf32> -> vector<16x16xf32>
    %cst_450 = arith.constant dense<0.000000e+00> : vector<16x16xf32>
    %1057 = tpu.matmul %1053, %1056, %cst_450 {dimension_numbers = #tpu.dot_dimension_numbers<[1], [0], [0], [1], [0, 0, 1, 1], [], []>} : vector<16x16xf32>, vector<16x16xf32>, vector<16x16xf32> -> vector<16x16xf32>
    %1058 = arith.addf %1057, %1 : vector<16x16xf32>
    %cst_451 = arith.constant dense<0xFF800000> : vector<16xf32>
    %1059 = vector.multi_reduction <maximumf>, %1058, %cst_451 [1] : vector<16x16xf32> to vector<16xf32>
    %1060 = vector.shape_cast %1059 : vector<16xf32> to vector<16x1xf32>
    %1061 = vector.broadcast %1060 : vector<16x1xf32> to vector<16x16xf32>
    %1062 = arith.subf %1058, %1061 : vector<16x16xf32>
    %1063 = math.exp %1062 : vector<16x16xf32>
    %cst_452 = arith.constant dense<0.000000e+00> : vector<16xf32>
    %1064 = vector.multi_reduction <add>, %1063, %cst_452 [1] : vector<16x16xf32> to vector<16xf32>
    %1065 = vector.shape_cast %1064 : vector<16xf32> to vector<16x1xf32>
    %1066 = tpu.reciprocal %1065 {approx = true} : vector<16x1xf32> -> vector<16x1xf32>
    %1067 = vector.broadcast %1066 : vector<16x1xf32> to vector<16x16xf32>
    %1068 = arith.mulf %1063, %1067 : vector<16x16xf32>
    %cst_453 = arith.constant dense<0.000000e+00> : vector<16x16xf32>
    %1069 = tpu.matmul %1068, %1055, %cst_453 {dimension_numbers = #tpu.dot_dimension_numbers<[1], [0], [0], [1], [0, 0, 1, 1], [], []>} : vector<16x16xf32>, vector<16x16xf32>, vector<16x16xf32> -> vector<16x16xf32>
    %1070 = vector.extract_strided_slice %1051 {offsets = [0, 0], sizes = [16, 64], strides = [1, 1]} : vector<64x64xf32> to vector<16x64xf32>
    %cst_454 = arith.constant dense<0.000000e+00> : vector<16x64xf32>
    %1071 = tpu.matmul %1069, %1070, %cst_454 {dimension_numbers = #tpu.dot_dimension_numbers<[1], [0], [0], [1], [0, 0, 1, 1], [], []>} : vector<16x16xf32>, vector<16x64xf32>, vector<16x64xf32> -> vector<16x64xf32>
    %1072 = arith.addf %1052, %1071 : vector<16x64xf32>
    %1073 = vector.extract_strided_slice %1049 {offsets = [0, 16], sizes = [16, 16], strides = [1, 1]} : vector<16x192xf32> to vector<16x16xf32>
    %1074 = vector.extract_strided_slice %1049 {offsets = [0, 80], sizes = [16, 16], strides = [1, 1]} : vector<16x192xf32> to vector<16x16xf32>
    %1075 = vector.extract_strided_slice %1049 {offsets = [0, 144], sizes = [16, 16], strides = [1, 1]} : vector<16x192xf32> to vector<16x16xf32>
    %1076 = tpu.transpose %1074, [1, 0] : vector<16x16xf32> -> vector<16x16xf32>
    %cst_455 = arith.constant dense<0.000000e+00> : vector<16x16xf32>
    %1077 = tpu.matmul %1073, %1076, %cst_455 {dimension_numbers = #tpu.dot_dimension_numbers<[1], [0], [0], [1], [0, 0, 1, 1], [], []>} : vector<16x16xf32>, vector<16x16xf32>, vector<16x16xf32> -> vector<16x16xf32>
    %1078 = arith.addf %1077, %1 : vector<16x16xf32>
    %cst_456 = arith.constant dense<0xFF800000> : vector<16xf32>
    %1079 = vector.multi_reduction <maximumf>, %1078, %cst_456 [1] : vector<16x16xf32> to vector<16xf32>
    %1080 = vector.shape_cast %1079 : vector<16xf32> to vector<16x1xf32>
    %1081 = vector.broadcast %1080 : vector<16x1xf32> to vector<16x16xf32>
    %1082 = arith.subf %1078, %1081 : vector<16x16xf32>
    %1083 = math.exp %1082 : vector<16x16xf32>
    %cst_457 = arith.constant dense<0.000000e+00> : vector<16xf32>
    %1084 = vector.multi_reduction <add>, %1083, %cst_457 [1] : vector<16x16xf32> to vector<16xf32>
    %1085 = vector.shape_cast %1084 : vector<16xf32> to vector<16x1xf32>
    %1086 = tpu.reciprocal %1085 {approx = true} : vector<16x1xf32> -> vector<16x1xf32>
    %1087 = vector.broadcast %1086 : vector<16x1xf32> to vector<16x16xf32>
    %1088 = arith.mulf %1083, %1087 : vector<16x16xf32>
    %cst_458 = arith.constant dense<0.000000e+00> : vector<16x16xf32>
    %1089 = tpu.matmul %1088, %1075, %cst_458 {dimension_numbers = #tpu.dot_dimension_numbers<[1], [0], [0], [1], [0, 0, 1, 1], [], []>} : vector<16x16xf32>, vector<16x16xf32>, vector<16x16xf32> -> vector<16x16xf32>
    %1090 = vector.extract_strided_slice %1051 {offsets = [16, 0], sizes = [16, 64], strides = [1, 1]} : vector<64x64xf32> to vector<16x64xf32>
    %cst_459 = arith.constant dense<0.000000e+00> : vector<16x64xf32>
    %1091 = tpu.matmul %1089, %1090, %cst_459 {dimension_numbers = #tpu.dot_dimension_numbers<[1], [0], [0], [1], [0, 0, 1, 1], [], []>} : vector<16x16xf32>, vector<16x64xf32>, vector<16x64xf32> -> vector<16x64xf32>
    %1092 = arith.addf %1072, %1091 : vector<16x64xf32>
    %1093 = vector.extract_strided_slice %1049 {offsets = [0, 32], sizes = [16, 16], strides = [1, 1]} : vector<16x192xf32> to vector<16x16xf32>
    %1094 = vector.extract_strided_slice %1049 {offsets = [0, 96], sizes = [16, 16], strides = [1, 1]} : vector<16x192xf32> to vector<16x16xf32>
    %1095 = vector.extract_strided_slice %1049 {offsets = [0, 160], sizes = [16, 16], strides = [1, 1]} : vector<16x192xf32> to vector<16x16xf32>
    %1096 = tpu.transpose %1094, [1, 0] : vector<16x16xf32> -> vector<16x16xf32>
    %cst_460 = arith.constant dense<0.000000e+00> : vector<16x16xf32>
    %1097 = tpu.matmul %1093, %1096, %cst_460 {dimension_numbers = #tpu.dot_dimension_numbers<[1], [0], [0], [1], [0, 0, 1, 1], [], []>} : vector<16x16xf32>, vector<16x16xf32>, vector<16x16xf32> -> vector<16x16xf32>
    %1098 = arith.addf %1097, %1 : vector<16x16xf32>
    %cst_461 = arith.constant dense<0xFF800000> : vector<16xf32>
    %1099 = vector.multi_reduction <maximumf>, %1098, %cst_461 [1] : vector<16x16xf32> to vector<16xf32>
    %1100 = vector.shape_cast %1099 : vector<16xf32> to vector<16x1xf32>
    %1101 = vector.broadcast %1100 : vector<16x1xf32> to vector<16x16xf32>
    %1102 = arith.subf %1098, %1101 : vector<16x16xf32>
    %1103 = math.exp %1102 : vector<16x16xf32>
    %cst_462 = arith.constant dense<0.000000e+00> : vector<16xf32>
    %1104 = vector.multi_reduction <add>, %1103, %cst_462 [1] : vector<16x16xf32> to vector<16xf32>
    %1105 = vector.shape_cast %1104 : vector<16xf32> to vector<16x1xf32>
    %1106 = tpu.reciprocal %1105 {approx = true} : vector<16x1xf32> -> vector<16x1xf32>
    %1107 = vector.broadcast %1106 : vector<16x1xf32> to vector<16x16xf32>
    %1108 = arith.mulf %1103, %1107 : vector<16x16xf32>
    %cst_463 = arith.constant dense<0.000000e+00> : vector<16x16xf32>
    %1109 = tpu.matmul %1108, %1095, %cst_463 {dimension_numbers = #tpu.dot_dimension_numbers<[1], [0], [0], [1], [0, 0, 1, 1], [], []>} : vector<16x16xf32>, vector<16x16xf32>, vector<16x16xf32> -> vector<16x16xf32>
    %1110 = vector.extract_strided_slice %1051 {offsets = [32, 0], sizes = [16, 64], strides = [1, 1]} : vector<64x64xf32> to vector<16x64xf32>
    %cst_464 = arith.constant dense<0.000000e+00> : vector<16x64xf32>
    %1111 = tpu.matmul %1109, %1110, %cst_464 {dimension_numbers = #tpu.dot_dimension_numbers<[1], [0], [0], [1], [0, 0, 1, 1], [], []>} : vector<16x16xf32>, vector<16x64xf32>, vector<16x64xf32> -> vector<16x64xf32>
    %1112 = arith.addf %1092, %1111 : vector<16x64xf32>
    %1113 = vector.extract_strided_slice %1049 {offsets = [0, 48], sizes = [16, 16], strides = [1, 1]} : vector<16x192xf32> to vector<16x16xf32>
    %1114 = vector.extract_strided_slice %1049 {offsets = [0, 112], sizes = [16, 16], strides = [1, 1]} : vector<16x192xf32> to vector<16x16xf32>
    %1115 = vector.extract_strided_slice %1049 {offsets = [0, 176], sizes = [16, 16], strides = [1, 1]} : vector<16x192xf32> to vector<16x16xf32>
    %1116 = tpu.transpose %1114, [1, 0] : vector<16x16xf32> -> vector<16x16xf32>
    %cst_465 = arith.constant dense<0.000000e+00> : vector<16x16xf32>
    %1117 = tpu.matmul %1113, %1116, %cst_465 {dimension_numbers = #tpu.dot_dimension_numbers<[1], [0], [0], [1], [0, 0, 1, 1], [], []>} : vector<16x16xf32>, vector<16x16xf32>, vector<16x16xf32> -> vector<16x16xf32>
    %1118 = arith.addf %1117, %1 : vector<16x16xf32>
    %cst_466 = arith.constant dense<0xFF800000> : vector<16xf32>
    %1119 = vector.multi_reduction <maximumf>, %1118, %cst_466 [1] : vector<16x16xf32> to vector<16xf32>
    %1120 = vector.shape_cast %1119 : vector<16xf32> to vector<16x1xf32>
    %1121 = vector.broadcast %1120 : vector<16x1xf32> to vector<16x16xf32>
    %1122 = arith.subf %1118, %1121 : vector<16x16xf32>
    %1123 = math.exp %1122 : vector<16x16xf32>
    %cst_467 = arith.constant dense<0.000000e+00> : vector<16xf32>
    %1124 = vector.multi_reduction <add>, %1123, %cst_467 [1] : vector<16x16xf32> to vector<16xf32>
    %1125 = vector.shape_cast %1124 : vector<16xf32> to vector<16x1xf32>
    %1126 = tpu.reciprocal %1125 {approx = true} : vector<16x1xf32> -> vector<16x1xf32>
    %1127 = vector.broadcast %1126 : vector<16x1xf32> to vector<16x16xf32>
    %1128 = arith.mulf %1123, %1127 : vector<16x16xf32>
    %cst_468 = arith.constant dense<0.000000e+00> : vector<16x16xf32>
    %1129 = tpu.matmul %1128, %1115, %cst_468 {dimension_numbers = #tpu.dot_dimension_numbers<[1], [0], [0], [1], [0, 0, 1, 1], [], []>} : vector<16x16xf32>, vector<16x16xf32>, vector<16x16xf32> -> vector<16x16xf32>
    %1130 = vector.extract_strided_slice %1051 {offsets = [48, 0], sizes = [16, 64], strides = [1, 1]} : vector<64x64xf32> to vector<16x64xf32>
    %cst_469 = arith.constant dense<0.000000e+00> : vector<16x64xf32>
    %1131 = tpu.matmul %1129, %1130, %cst_469 {dimension_numbers = #tpu.dot_dimension_numbers<[1], [0], [0], [1], [0, 0, 1, 1], [], []>} : vector<16x16xf32>, vector<16x64xf32>, vector<16x64xf32> -> vector<16x64xf32>
    %1132 = arith.addf %1112, %1131 : vector<16x64xf32>
    %1133 = arith.addf %1015, %1132 : vector<16x64xf32>
    %c5_470 = arith.constant 5 : index
    %c0_471 = arith.constant 0 : index
    %c0_472 = arith.constant 0 : index
    %1134 = vector.load %arg8[%c5_470, %c0_471, %c0_472] : memref<6x1x64xf32, #tpu.memory_space<vmem>>, vector<1x1x64xf32>
    %1135 = vector.shape_cast %1134 : vector<1x1x64xf32> to vector<1x64xf32>
    %1136 = vector.broadcast %1135 : vector<1x64xf32> to vector<16x64xf32>
    %1137 = arith.addf %1133, %1136 : vector<16x64xf32>
    %c5_473 = arith.constant 5 : index
    %c0_474 = arith.constant 0 : index
    %c0_475 = arith.constant 0 : index
    %1138 = vector.load %arg9[%c5_473, %c0_474, %c0_475] : memref<6x1x64xf32, #tpu.memory_space<vmem>>, vector<1x1x64xf32>
    %1139 = vector.shape_cast %1138 : vector<1x1x64xf32> to vector<1x64xf32>
    %c5_476 = arith.constant 5 : index
    %c0_477 = arith.constant 0 : index
    %c0_478 = arith.constant 0 : index
    %1140 = vector.load %arg10[%c5_476, %c0_477, %c0_478] : memref<6x1x64xf32, #tpu.memory_space<vmem>>, vector<1x1x64xf32>
    %1141 = vector.shape_cast %1140 : vector<1x1x64xf32> to vector<1x64xf32>
    %cst_479 = arith.constant dense<0.000000e+00> : vector<16xf32>
    %1142 = vector.multi_reduction <add>, %1137, %cst_479 [1] : vector<16x64xf32> to vector<16xf32>
    %1143 = vector.shape_cast %1142 : vector<16xf32> to vector<16x1xf32>
    %cst_480 = arith.constant 6.400000e+01 : f32
    %1144 = vector.broadcast %cst_480 : f32 to vector<16x1xf32>
    %1145 = arith.divf %1143, %1144 : vector<16x1xf32>
    %1146 = vector.broadcast %1145 : vector<16x1xf32> to vector<16x64xf32>
    %1147 = arith.subf %1137, %1146 : vector<16x64xf32>
    %1148 = arith.mulf %1147, %1147 : vector<16x64xf32>
    %cst_481 = arith.constant dense<0.000000e+00> : vector<16xf32>
    %1149 = vector.multi_reduction <add>, %1148, %cst_481 [1] : vector<16x64xf32> to vector<16xf32>
    %1150 = vector.shape_cast %1149 : vector<16xf32> to vector<16x1xf32>
    %cst_482 = arith.constant 6.400000e+01 : f32
    %1151 = vector.broadcast %cst_482 : f32 to vector<16x1xf32>
    %1152 = arith.divf %1150, %1151 : vector<16x1xf32>
    %1153 = vector.broadcast %1145 : vector<16x1xf32> to vector<16x64xf32>
    %1154 = arith.subf %1137, %1153 : vector<16x64xf32>
    %cst_483 = arith.constant 9.99999974E-6 : f32
    %1155 = vector.broadcast %cst_483 : f32 to vector<16x1xf32>
    %1156 = arith.addf %1152, %1155 : vector<16x1xf32>
    %1157 = math.rsqrt %1156 : vector<16x1xf32>
    %1158 = vector.broadcast %1157 : vector<16x1xf32> to vector<16x64xf32>
    %1159 = arith.mulf %1154, %1158 : vector<16x64xf32>
    %1160 = vector.broadcast %1139 : vector<1x64xf32> to vector<16x64xf32>
    %1161 = arith.mulf %1159, %1160 : vector<16x64xf32>
    %1162 = vector.broadcast %1141 : vector<1x64xf32> to vector<16x64xf32>
    %1163 = arith.addf %1161, %1162 : vector<16x64xf32>
    %c5_484 = arith.constant 5 : index
    %c0_485 = arith.constant 0 : index
    %c0_486 = arith.constant 0 : index
    %1164 = vector.load %arg11[%c5_484, %c0_485, %c0_486] : memref<6x64x256xf32, #tpu.memory_space<vmem>>, vector<1x64x256xf32>
    %1165 = vector.shape_cast %1164 : vector<1x64x256xf32> to vector<64x256xf32>
    %cst_487 = arith.constant dense<0.000000e+00> : vector<16x256xf32>
    %1166 = tpu.matmul %1163, %1165, %cst_487 {dimension_numbers = #tpu.dot_dimension_numbers<[1], [0], [0], [1], [0, 0, 1, 1], [], []>} : vector<16x64xf32>, vector<64x256xf32>, vector<16x256xf32> -> vector<16x256xf32>
    %c5_488 = arith.constant 5 : index
    %c0_489 = arith.constant 0 : index
    %c0_490 = arith.constant 0 : index
    %1167 = vector.load %arg12[%c5_488, %c0_489, %c0_490] : memref<6x1x256xf32, #tpu.memory_space<vmem>>, vector<1x1x256xf32>
    %1168 = vector.shape_cast %1167 : vector<1x1x256xf32> to vector<1x256xf32>
    %1169 = vector.broadcast %1168 : vector<1x256xf32> to vector<16x256xf32>
    %1170 = arith.addf %1166, %1169 : vector<16x256xf32>
    %cst_491 = arith.constant 5.000000e-01 : f32
    %1171 = vector.broadcast %cst_491 : f32 to vector<16x256xf32>
    %1172 = arith.mulf %1171, %1170 : vector<16x256xf32>
    %cst_492 = arith.constant 0.707106769 : f32
    %1173 = vector.broadcast %cst_492 : f32 to vector<16x256xf32>
    %1174 = arith.mulf %1170, %1173 : vector<16x256xf32>
    %1175 = math.absf %1174 : vector<16x256xf32>
    %cst_493 = arith.constant 0.327591091 : f32
    %1176 = vector.broadcast %cst_493 : f32 to vector<16x256xf32>
    %1177 = arith.mulf %1176, %1175 : vector<16x256xf32>
    %cst_494 = arith.constant 1.000000e+00 : f32
    %1178 = vector.broadcast %cst_494 : f32 to vector<16x256xf32>
    %1179 = arith.addf %1178, %1177 : vector<16x256xf32>
    %cst_495 = arith.constant 1.000000e+00 : f32
    %1180 = vector.broadcast %cst_495 : f32 to vector<16x256xf32>
    %1181 = arith.divf %1180, %1179 : vector<16x256xf32>
    %cst_496 = arith.constant 1.06140542 : f32
    %1182 = vector.broadcast %cst_496 : f32 to vector<16x256xf32>
    %1183 = arith.mulf %1182, %1181 : vector<16x256xf32>
    %cst_497 = arith.constant -1.45315206 : f32
    %1184 = vector.broadcast %cst_497 : f32 to vector<16x256xf32>
    %1185 = arith.addf %1183, %1184 : vector<16x256xf32>
    %1186 = arith.mulf %1185, %1181 : vector<16x256xf32>
    %cst_498 = arith.constant 1.42141378 : f32
    %1187 = vector.broadcast %cst_498 : f32 to vector<16x256xf32>
    %1188 = arith.addf %1186, %1187 : vector<16x256xf32>
    %1189 = arith.mulf %1188, %1181 : vector<16x256xf32>
    %cst_499 = arith.constant -0.284496725 : f32
    %1190 = vector.broadcast %cst_499 : f32 to vector<16x256xf32>
    %1191 = arith.addf %1189, %1190 : vector<16x256xf32>
    %1192 = arith.mulf %1191, %1181 : vector<16x256xf32>
    %cst_500 = arith.constant 0.254829586 : f32
    %1193 = vector.broadcast %cst_500 : f32 to vector<16x256xf32>
    %1194 = arith.addf %1192, %1193 : vector<16x256xf32>
    %1195 = arith.mulf %1194, %1181 : vector<16x256xf32>
    %cst_501 = arith.constant 0.000000e+00 : f32
    %1196 = vector.broadcast %cst_501 : f32 to vector<16x256xf32>
    %1197 = arith.subf %1196, %1175 : vector<16x256xf32>
    %1198 = arith.mulf %1197, %1175 : vector<16x256xf32>
    %1199 = math.exp %1198 : vector<16x256xf32>
    %1200 = arith.mulf %1195, %1199 : vector<16x256xf32>
    %cst_502 = arith.constant 1.000000e+00 : f32
    %1201 = vector.broadcast %cst_502 : f32 to vector<16x256xf32>
    %1202 = arith.subf %1201, %1200 : vector<16x256xf32>
    %cst_503 = arith.constant 0.000000e+00 : f32
    %1203 = vector.broadcast %cst_503 : f32 to vector<16x256xf32>
    %1204 = arith.cmpf oge, %1174, %1203 : vector<16x256xf32>
    %cst_504 = arith.constant 0.000000e+00 : f32
    %1205 = vector.broadcast %cst_504 : f32 to vector<16x256xf32>
    %1206 = arith.subf %1205, %1202 : vector<16x256xf32>
    %1207 = arith.select %1204, %1202, %1206 : vector<16x256xi1>, vector<16x256xf32>
    %cst_505 = arith.constant 1.000000e+00 : f32
    %1208 = vector.broadcast %cst_505 : f32 to vector<16x256xf32>
    %1209 = arith.addf %1208, %1207 : vector<16x256xf32>
    %1210 = arith.mulf %1172, %1209 : vector<16x256xf32>
    %c5_506 = arith.constant 5 : index
    %c0_507 = arith.constant 0 : index
    %c0_508 = arith.constant 0 : index
    %1211 = vector.load %arg13[%c5_506, %c0_507, %c0_508] : memref<6x256x64xf32, #tpu.memory_space<vmem>>, vector<1x256x64xf32>
    %1212 = vector.shape_cast %1211 : vector<1x256x64xf32> to vector<256x64xf32>
    %cst_509 = arith.constant dense<0.000000e+00> : vector<16x64xf32>
    %1213 = tpu.matmul %1210, %1212, %cst_509 {dimension_numbers = #tpu.dot_dimension_numbers<[1], [0], [0], [1], [0, 0, 1, 1], [], []>} : vector<16x256xf32>, vector<256x64xf32>, vector<16x64xf32> -> vector<16x64xf32>
    %1214 = arith.addf %1137, %1213 : vector<16x64xf32>
    %c5_510 = arith.constant 5 : index
    %c0_511 = arith.constant 0 : index
    %c0_512 = arith.constant 0 : index
    %1215 = vector.load %arg14[%c5_510, %c0_511, %c0_512] : memref<6x1x64xf32, #tpu.memory_space<vmem>>, vector<1x1x64xf32>
    %1216 = vector.shape_cast %1215 : vector<1x1x64xf32> to vector<1x64xf32>
    %1217 = vector.broadcast %1216 : vector<1x64xf32> to vector<16x64xf32>
    %1218 = arith.addf %1214, %1217 : vector<16x64xf32>
    %c0_513 = arith.constant 0 : index
    %c320 = arith.constant 320 : index
    %1219 = vector.load %arg15[%c0_513, %c320] : memref<16x384xf32, #tpu.memory_space<vmem>>, vector<16x64xf32>
    tpu.vector_store %arg15[%c0_513, %c320], %1218 {strides = array<i32>} : memref<16x384xf32, #tpu.memory_space<vmem>>, vector<16x64xf32>,
    return
  }
  func.func @transform_0(%arg0: i32) -> (i32, i32) {
    %c0_i32 = arith.constant 0 : i32
    %c0_i32_0 = arith.constant 0 : i32
    return %arg0, %c0_i32 : i32, i32
  }
  func.func @transform_1(%arg0: i32) -> (i32, i32) {
    %c0_i32 = arith.constant 0 : i32
    %c0_i32_0 = arith.constant 0 : i32
    %c0_i32_1 = arith.constant 0 : i32
    return %c0_i32, %c0_i32_0 : i32, i32
  }
  func.func @transform_2(%arg0: i32) -> (i32, i32, i32) {
    %c0_i32 = arith.constant 0 : i32
    %c0_i32_0 = arith.constant 0 : i32
    %c0_i32_1 = arith.constant 0 : i32
    %c0_i32_2 = arith.constant 0 : i32
    return %c0_i32, %c0_i32_0, %c0_i32_1 : i32, i32, i32
  }
  func.func @transform_3(%arg0: i32) -> (i32, i32, i32) {
    %c0_i32 = arith.constant 0 : i32
    %c0_i32_0 = arith.constant 0 : i32
    %c0_i32_1 = arith.constant 0 : i32
    %c0_i32_2 = arith.constant 0 : i32
    return %c0_i32, %c0_i32_0, %c0_i32_1 : i32, i32, i32
  }
  func.func @transform_4(%arg0: i32) -> (i32, i32, i32) {
    %c0_i32 = arith.constant 0 : i32
    %c0_i32_0 = arith.constant 0 : i32
    %c0_i32_1 = arith.constant 0 : i32
    %c0_i32_2 = arith.constant 0 : i32
    return %c0_i32, %c0_i32_0, %c0_i32_1 : i32, i32, i32
  }
  func.func @transform_5(%arg0: i32) -> (i32, i32, i32) {
    %c0_i32 = arith.constant 0 : i32
    %c0_i32_0 = arith.constant 0 : i32
    %c0_i32_1 = arith.constant 0 : i32
    %c0_i32_2 = arith.constant 0 : i32
    return %c0_i32, %c0_i32_0, %c0_i32_1 : i32, i32, i32
  }
  func.func @transform_6(%arg0: i32) -> (i32, i32, i32) {
    %c0_i32 = arith.constant 0 : i32
    %c0_i32_0 = arith.constant 0 : i32
    %c0_i32_1 = arith.constant 0 : i32
    %c0_i32_2 = arith.constant 0 : i32
    return %c0_i32, %c0_i32_0, %c0_i32_1 : i32, i32, i32
  }
  func.func @transform_7(%arg0: i32) -> (i32, i32, i32) {
    %c0_i32 = arith.constant 0 : i32
    %c0_i32_0 = arith.constant 0 : i32
    %c0_i32_1 = arith.constant 0 : i32
    %c0_i32_2 = arith.constant 0 : i32
    return %c0_i32, %c0_i32_0, %c0_i32_1 : i32, i32, i32
  }
  func.func @transform_8(%arg0: i32) -> (i32, i32, i32) {
    %c0_i32 = arith.constant 0 : i32
    %c0_i32_0 = arith.constant 0 : i32
    %c0_i32_1 = arith.constant 0 : i32
    %c0_i32_2 = arith.constant 0 : i32
    return %c0_i32, %c0_i32_0, %c0_i32_1 : i32, i32, i32
  }
  func.func @transform_9(%arg0: i32) -> (i32, i32, i32) {
    %c0_i32 = arith.constant 0 : i32
    %c0_i32_0 = arith.constant 0 : i32
    %c0_i32_1 = arith.constant 0 : i32
    %c0_i32_2 = arith.constant 0 : i32
    return %c0_i32, %c0_i32_0, %c0_i32_1 : i32, i32, i32
  }
  func.func @transform_10(%arg0: i32) -> (i32, i32, i32) {
    %c0_i32 = arith.constant 0 : i32
    %c0_i32_0 = arith.constant 0 : i32
    %c0_i32_1 = arith.constant 0 : i32
    %c0_i32_2 = arith.constant 0 : i32
    return %c0_i32, %c0_i32_0, %c0_i32_1 : i32, i32, i32
  }
  func.func @transform_11(%arg0: i32) -> (i32, i32, i32) {
    %c0_i32 = arith.constant 0 : i32
    %c0_i32_0 = arith.constant 0 : i32
    %c0_i32_1 = arith.constant 0 : i32
    %c0_i32_2 = arith.constant 0 : i32
    return %c0_i32, %c0_i32_0, %c0_i32_1 : i32, i32, i32
  }
  func.func @transform_12(%arg0: i32) -> (i32, i32, i32) {
    %c0_i32 = arith.constant 0 : i32
    %c0_i32_0 = arith.constant 0 : i32
    %c0_i32_1 = arith.constant 0 : i32
    %c0_i32_2 = arith.constant 0 : i32
    return %c0_i32, %c0_i32_0, %c0_i32_1 : i32, i32, i32
  }
  func.func @transform_13(%arg0: i32) -> (i32, i32, i32) {
    %c0_i32 = arith.constant 0 : i32
    %c0_i32_0 = arith.constant 0 : i32
    %c0_i32_1 = arith.constant 0 : i32
    %c0_i32_2 = arith.constant 0 : i32
    return %c0_i32, %c0_i32_0, %c0_i32_1 : i32, i32, i32
  }
  func.func @transform_14(%arg0: i32) -> (i32, i32) {
    %c0_i32 = arith.constant 0 : i32
    %c0_i32_0 = arith.constant 0 : i32
    return %arg0, %c0_i32 : i32, i32
  }
}

</mosaic_0001>

<llo_original>
// kernel: forward_encoder.2
$region0: #{forward_encoder.2}
  #allocation0 [shape = 'u32[]', space=smem, size = 0x4, offset = 0x4, fixed_abs, tag = 'smem constant byte address 0x4 - core index']
  #allocation1 [shape = 'u32[72,128]{1,0:T(1,128)}', space=vmem, size = 0x9000, scoped, tag = 'internal scratch']
  %s0 = inlined_call_operand.vmem [shape: f32[64,48], index: 0, kind: input, shape index: {}]
  %s1 = inlined_call_operand.vmem [shape: f32[48,64], index: 1, kind: input, shape index: {}]
  %s2 = inlined_call_operand.vmem [shape: f32[1,64], index: 2, kind: input, shape index: {}]
  %s3 = inlined_call_operand.vmem [shape: f32[32,64], index: 3, kind: input, shape index: {}]
  %s4 = inlined_call_operand.vmem [shape: f32[64,64], index: 4, kind: output, shape index: {}]
  %s5 = sld [smem:[#allocation0]]
  $region49: #{forward_encoder.2} parent=0
    _
  %s7 = ssub.s32 1, %s5
  %s8 = scalar_select 0, %s7, %s5
  loop: start=0, step=1, limit=4
  $region2: #{forward_encoder.2} parent=0 // loop_pre_header
    _
  $region3: #{forward_encoder.2} parent=0 // loop_header
    %s10 = sphi 0, %s14
    %p11 = scmp.ge.s32.totalorder %s10, 4
    %s20 = sphi 0, %s22
    %s23 = sphi 0, %s20
    %s24 = sphi 0, %s23
    %s40 = sphi 0, %s24
    %s44 = sphi 0, %s44
    %s46 = sphi 0, %s44
    %s47 = sphi 0, %s46
    %s61 = sphi 0, %s47
    %s65 = sphi 0, %s65
    %s67 = sphi 0, %s65
    %s68 = sphi 0, %s67
    %s82 = sphi 0, %s68
    %s86 = sphi 0, %s86
    %s88 = sphi 0, %s86
    %s89 = sphi 0, %s88
    %s103 = sphi 0, %s89
    %s109 = sphi 0, %s111
    %s112 = sphi 0, %s109
    %s113 = sphi 0, %s112
    %s129 = sphi 0, %s113
  $region4: #{forward_encoder.2} parent=0 // loop_header_branch
    %13 = sbr.rel (%p11) target = $region8
  $region5: #{forward_encoder.2} parent=0 // loop_body
    %s15 = ssub.s32 %s10, 1
    %s16 = ssub.s32 %s10, 2
    %s17 = sadd.s32 %s10, 1
    %s18 = ssub.s32 %s10, %s17
    %p19 = scmp.eq.s32.totalorder %s18, 0
    %s21 = sadd.s32 %s20, 1
    %s22 = scalar_select %p19, %s20, %s21
    %p25 = pneg %p19
    %p26 = scmp.eq.s32.totalorder %s10, 1
    %p27 = por %p25, %p26
    %p28 = scmp.ne.s32.totalorder %s20, %s23
    %p29 = scmp.eq.s32.totalorder %s10, 0
    %p30 = por %p28, %p29
    %p31 = scmp.ne.s32.totalorder %s20, %s23
    %p32 = scmp.eq.s32.totalorder %s15, 1
    %p33 = por %p31, %p32
    %p34 = scmp.ne.s32.totalorder %s23, %s24
    %p35 = scmp.eq.s32.totalorder %s15, 0
    %p36 = por %p34, %p35
    %p37 = scmp.ne.s32.totalorder %s23, %s24
    %p38 = scmp.eq.s32.totalorder %s16, 1
    %p39 = por %p37, %p38
    %p41 = scmp.ne.s32.totalorder %s24, %s40
    %p42 = scmp.eq.s32.totalorder %s16, 0
    %p43 = por %p41, %p42
    %s45 = sadd.s32 %s44, 1
    %p48 = scmp.eq.s32.totalorder %s10, 1
    %p49 = scmp.ne.s32.totalorder %s44, %s46
    %p50 = scmp.eq.s32.totalorder %s10, 0
    %p51 = por %p49, %p50
    %p52 = scmp.ne.s32.totalorder %s44, %s46
    %p53 = scmp.eq.s32.totalorder %s15, 1
    %p54 = por %p52, %p53
    %p55 = scmp.ne.s32.totalorder %s46, %s47
    %p56 = scmp.eq.s32.totalorder %s15, 0
    %p57 = por %p55, %p56
    %p58 = scmp.ne.s32.totalorder %s46, %s47
    %p59 = scmp.eq.s32.totalorder %s16, 1
    %p60 = por %p58, %p59
    %p62 = scmp.ne.s32.totalorder %s47, %s61
    %p63 = scmp.eq.s32.totalorder %s16, 0
    %p64 = por %p62, %p63
    %s66 = sadd.s32 %s65, 1
    %p69 = scmp.eq.s32.totalorder %s10, 1
    %p70 = scmp.ne.s32.totalorder %s65, %s67
    %p71 = scmp.eq.s32.totalorder %s10, 0
    %p72 = por %p70, %p71
    %p73 = scmp.ne.s32.totalorder %s65, %s67
    %p74 = scmp.eq.s32.totalorder %s15, 1
    %p75 = por %p73, %p74
    %p76 = scmp.ne.s32.totalorder %s67, %s68
    %p77 = scmp.eq.s32.totalorder %s15, 0
    %p78 = por %p76, %p77
    %p79 = scmp.ne.s32.totalorder %s67, %s68
    %p80 = scmp.eq.s32.totalorder %s16, 1
    %p81 = por %p79, %p80
    %p83 = scmp.ne.s32.totalorder %s68, %s82
    %p84 = scmp.eq.s32.totalorder %s16, 0
    %p85 = por %p83, %p84
    %s87 = sadd.s32 %s86, 1
    %p90 = scmp.eq.s32.totalorder %s10, 1
    %p91 = scmp.ne.s32.totalorder %s86, %s88
    %p92 = scmp.eq.s32.totalorder %s10, 0
    %p93 = por %p91, %p92
    %p94 = scmp.ne.s32.totalorder %s86, %s88
    %p95 = scmp.eq.s32.totalorder %s15, 1
    %p96 = por %p94, %p95
    %p97 = scmp.ne.s32.totalorder %s88, %s89
    %p98 = scmp.eq.s32.totalorder %s15, 0
    %p99 = por %p97, %p98
    %p100 = scmp.ne.s32.totalorder %s88, %s89
    %p101 = scmp.eq.s32.totalorder %s16, 1
    %p102 = por %p100, %p101
    %p104 = scmp.ne.s32.totalorder %s89, %s103
    %p105 = scmp.eq.s32.totalorder %s16, 0
    %p106 = por %p104, %p105
    %s107 = ssub.s32 %s10, %s17
    %p108 = scmp.eq.s32.totalorder %s107, 0
    %s110 = sadd.s32 %s109, 1
    %s111 = scalar_select %p108, %s109, %s110
    %p114 = pneg %p108
    %p115 = scmp.eq.s32.totalorder %s10, 1
    %p116 = por %p114, %p115
    %p117 = scmp.ne.s32.totalorder %s109, %s112
    %p118 = scmp.eq.s32.totalorder %s10, 0
    %p119 = por %p117, %p118
    %p120 = scmp.ne.s32.totalorder %s109, %s112
    %p121 = scmp.eq.s32.totalorder %s15, 1
    %p122 = por %p120, %p121
    %p123 = scmp.ne.s32.totalorder %s112, %s113
    %p124 = scmp.eq.s32.totalorder %s15, 0
    %p125 = por %p123, %p124
    %p126 = scmp.ne.s32.totalorder %s112, %s113
    %p127 = scmp.eq.s32.totalorder %s16, 1
    %p128 = por %p126, %p127
    %p130 = scmp.ne.s32.totalorder %s113, %s129
    %p131 = scmp.eq.s32.totalorder %s16, 0
    %p132 = por %p130, %p131
    %p133 = scmp.le.s32.totalorder 1, %s10
    %p134 = scmp.lt.s32.totalorder %s10, 3
    %p135 = pnand %p133, %p134
    %p136 = pneg %p135
    // Predicated region
    $region9: #{forward_encoder.2} parent=5 // pred_check
      _
    $region10: #{forward_encoder.2} parent=5 // pred_check_branch
      %138 = sbr.rel (%p135) target = $region12
    $region11: #{forward_encoder.2} parent=5 // pred_region
      %s139 = ssub.s32 %s10, 1
      // Predicated region
      $region13: #{forward_encoder.2} parent=11 // pred_check
        %p140 = pneg %p57
      $region14: #{forward_encoder.2} parent=11 // pred_check_branch
        %142 = sbr.rel (%p140) target = $region16
      $region15: #{forward_encoder.2} parent=11 // pred_region
        _
      $region16: #{forward_encoder.2} parent=11 // pred_fallthru
        _
      // Predicated region
      $region17: #{forward_encoder.2} parent=11 // pred_check
        %p143 = pneg %p78
      $region18: #{forward_encoder.2} parent=11 // pred_check_branch
        %145 = sbr.rel (%p143) target = $region20
      $region19: #{forward_encoder.2} parent=11 // pred_region
        _
      $region20: #{forward_encoder.2} parent=11 // pred_fallthru
        _
      // Predicated region
      $region21: #{forward_encoder.2} parent=11 // pred_check
        %p146 = pneg %p99
      $region22: #{forward_encoder.2} parent=11 // pred_check_branch
        %148 = sbr.rel (%p146) target = $region24
      $region23: #{forward_encoder.2} parent=11 // pred_region
        _
      $region24: #{forward_encoder.2} parent=11 // pred_fallthru
        _
    $region12: #{forward_encoder.2} parent=5 // pred_fallthru
      _
    %p149 = scmp.lt.s32.totalorder %s10, 2
    // Predicated region
    $region25: #{forward_encoder.2} parent=5 // pred_check
      %p150 = pneg %p149
    $region26: #{forward_encoder.2} parent=5 // pred_check_branch
      %152 = sbr.rel (%p150) target = $region28
    $region27: #{forward_encoder.2} parent=5 // pred_region
      // Predicated region
      $region29: #{forward_encoder.2} parent=27 // pred_check
        %p153 = pneg %p30
      $region30: #{forward_encoder.2} parent=27 // pred_check_branch
        %155 = sbr.rel (%p153) target = $region32
      $region31: #{forward_encoder.2} parent=27 // pred_region
        %s156 = smul.u32 4, %s10
        %p157 = scmp.lt.s32.totalorder %s156, 7
        %s158 = scalar_select %p157, %s156, 7
        %s159 = smul.addr %s158, 8
        %s160 = scalar_lea.vmem %s0, %s159
        %s161 = smul.u32 4, %s10
      $region32: #{forward_encoder.2} parent=27 // pred_fallthru
        _
    $region28: #{forward_encoder.2} parent=5 // pred_fallthru
      _
    %p162 = scmp.le.s32.totalorder 1, %s10
    %p163 = scmp.lt.s32.totalorder %s10, 3
    %p164 = pnand %p162, %p163
    %p165 = pneg %p164
    // Predicated region
    $region33: #{forward_encoder.2} parent=5 // pred_check
      _
    $region34: #{forward_encoder.2} parent=5 // pred_check_branch
      %167 = sbr.rel (%p164) target = $region36
    $region35: #{forward_encoder.2} parent=5 // pred_region
      %s168 = ssub.s32 %s10, 1
      %s169 = smul.u32 4, %s15
      %p170 = scmp.lt.s32.totalorder %s169, 7
      %s171 = scalar_select %p170, %s169, 7
      %s172 = smul.addr %s171, 8
      %s173 = scalar_lea.vmem %s0, %s172
      %p174 = pneg %p36
      %p175 = pneg %p33
      %p176 = pneg %p57
      %p177 = pneg %p54
      %p178 = pneg %p78
      %p179 = pneg %p75
      %p180 = pneg %p99
      %p181 = pneg %p96
      %p182 = pneg %p125
      %p183 = pneg %p122
      %s184 = smul.u32 4, %s15
      %p185 = scmp.lt.s32.totalorder %s184, 7
      %s186 = scalar_select %p185, %s184, 7
      %s187 = smul.addr %s186, 8
      %s188 = scalar_lea.vmem %s4, %s187
      %s189 = smul.u32 4, %s15
      %p190 = scmp.lt.s32.totalorder %s189, 7
      %s191 = scalar_select %p190, %s189, 7
      %s192 = smul.addr %s191, 8
      %s193 = scalar_lea.vmem %s0, %s192
      %s194 = smul.u32 4, %s15
      %s195 = smul.u32 4, %s15
      %p196 = scmp.lt.s32.totalorder %s195, 7
      %s197 = scalar_select %p196, %s195, 7
      %s198 = smul.addr %s197, 8
      %s199 = scalar_lea.vmem %s4, %s198
      %s200 = smul.u32 4, %s15
      %v201 = vld [vmem:[%s193] sm:$0xff]
      %v202 = vld [vmem:[%s193 + $0x8] sm:$0xff]
      %v203 = vld [vmem:[%s193 + $0x10] sm:$0xff]
      %v204 = vld [vmem:[%s193 + $0x18] sm:$0xff]
      %v205 = vld [vmem:[%s1] sm:$0xff]
      %v206 = vld [vmem:[%s1 + $0x8] sm:$0xff]
      %v207 = vld [vmem:[%s1 + $0x10] sm:$0xff]
      %v208 = vld [vmem:[%s1 + $0x18] sm:$0xff]
      %v209 = vld [vmem:[%s1 + $0x20] sm:$0xff]
      %v210 = vld [vmem:[%s1 + $0x28] sm:$0xff]
      %v211 = vld [vmem:[%s2] sm:$0x1]
      %v213 = vperm.slane %v211, 0
      %vm215 = vcmask 392192
      %v217 = vsel %vm215, %v201, 0
      %v220 = vsel %vm215, %v202, 0
      %v223 = vsel %vm215, %v203, 0
      %v226 = vsel %vm215, %v204, 0
      %228 = vmatpush.msra.mxu0 0.0
      %229 = vmatpush.msra.mxu0 0.0
      %230 = vmatpush.msra.mxu0 0.0
      %231 = vmatpush.msra.mxu0 0.0
      %232 = vmatpush.msra.mxu0 0.0
      %233 = vmatpush.msra.mxu0 0.0
      %234 = vmatpush.msra.mxu0 0.0
      %235 = vmatpush.msra.mxu0 0.0
      %236 = vmatpush.msra.mxu0 0.0
      %237 = vmatpush.msra.mxu0 0.0
      %238 = vmatpush.msra.mxu0 %v210
      %239 = vmatpush.msra.mxu0 %v209
      %240 = vmatpush.msra.mxu0 %v208
      %241 = vmatpush.msra.mxu0 %v207
      %242 = vmatpush.msra.mxu0 %v206
      %243 = vmatpush.msra.mxu0 %v205
      %244 = vmatmul.f32.gmra.mxu0 %v217
      %v245 = vpop.f32.mrf.mxu0
      %v246 = vadd.f32 %v213, %v245
      %247 = vmatmul.f32.gmra.mxu0 %v220
      %v248 = vpop.f32.mrf.mxu0
      %v249 = vadd.f32 %v213, %v248
      %250 = vmatmul.f32.gmra.mxu0 %v223
      %v251 = vpop.f32.mrf.mxu0
      %v252 = vadd.f32 %v213, %v251
      %253 = vmatmul.f32.gmra.mxu0 %v226
      %v254 = vpop.f32.mrf.mxu0
      %v255 = vadd.f32 %v213, %v254
      %256 = vdwg.mxu0
      %v257 = vld [vmem:[%s3] sm:$0xff]
      %v258 = vld [vmem:[%s3 + $0x8] sm:$0xff]
      %v259 = vld [vmem:[%s3 + $0x10] sm:$0xff]
      %v260 = vld [vmem:[%s3 + $0x18] sm:$0xff]
      %v261 = vadd.f32 %v246, %v257
      %v262 = vadd.f32 %v249, %v258
      %v263 = vadd.f32 %v252, %v259
      %v264 = vadd.f32 %v255, %v260
      %vm265 = vcmask 523264
      %266 = vst.msk [vmem:[%s199] sm:$0xff] %vm265, %v261
      %267 = vst.msk [vmem:[%s199 + $0x8] sm:$0xff] %vm265, %v262
      %268 = vst.msk [vmem:[%s199 + $0x10] sm:$0xff] %vm265, %v263
      %269 = vst.msk [vmem:[%s199 + $0x18] sm:$0xff] %vm265, %v264
      %s270 = smul.u32 4, %s15
      %p271 = scmp.lt.s32.totalorder %s270, 7
      %s272 = scalar_select %p271, %s270, 7
      %s273 = smul.addr %s272, 8
      %s274 = scalar_lea.vmem %s4, %s273
      // Predicated region
      $region37: #{forward_encoder.2} parent=35 // pred_check
        %p275 = pneg %p122
      $region38: #{forward_encoder.2} parent=35 // pred_check_branch
        %277 = sbr.rel (%p275) target = $region40
      $region39: #{forward_encoder.2} parent=35 // pred_region
        %s278 = smul.u32 4, %s15
      $region40: #{forward_encoder.2} parent=35 // pred_fallthru
        _
    $region36: #{forward_encoder.2} parent=5 // pred_fallthru
      _
    %p279 = scmp.le.s32.totalorder 2, %s10
    // Predicated region
    $region41: #{forward_encoder.2} parent=5 // pred_check
      %p280 = pneg %p279
    $region42: #{forward_encoder.2} parent=5 // pred_check_branch
      %282 = sbr.rel (%p280) target = $region44
    $region43: #{forward_encoder.2} parent=5 // pred_region
      %s283 = ssub.s32 %s10, 2
      // Predicated region
      $region45: #{forward_encoder.2} parent=43 // pred_check
        %p284 = pneg %p128
      $region46: #{forward_encoder.2} parent=43 // pred_check_branch
        %286 = sbr.rel (%p284) target = $region48
      $region47: #{forward_encoder.2} parent=43 // pred_region
        %s287 = smul.u32 4, %s16
        %p288 = scmp.lt.s32.totalorder %s287, 7
        %s289 = scalar_select %p288, %s287, 7
        %s290 = smul.addr %s289, 8
        %s291 = scalar_lea.vmem %s4, %s290
      $region48: #{forward_encoder.2} parent=43 // pred_fallthru
        _
    $region44: #{forward_encoder.2} parent=5 // pred_fallthru
      _
  $region6: #{forward_encoder.2} parent=0 // loop_footer
    %s14 = sadd.s32 1, %s10
  $region7: #{forward_encoder.2} parent=0 // loop_footer_branch
    %9 = sbr.rel target = $region3
  $region8: #{forward_encoder.2} parent=0 // loop_exit
    _

// kernel: forward_encoder.3
$region0: #{forward_encoder.3}
  #allocation0 [shape = 'u32[]', space=smem, size = 0x4, offset = 0x4, fixed_abs, tag = 'smem constant byte address 0x4 - core index']
  #allocation1 [shape = 'u32[72,128]{1,0:T(1,128)}', space=vmem, size = 0x9000, scoped, tag = 'internal scratch']
  %s0 = inlined_call_operand.vmem [shape: f32[32,64], index: 0, kind: input, shape index: {}]
  %s1 = inlined_call_operand.hbm [shape: f32[16,16], index: 1, kind: input, shape index: {}]
  %s2 = inlined_call_operand.vmem [shape: f32[6,1,64], index: 2, kind: input, shape index: {}]
  %s3 = inlined_call_operand.hbm [shape: f32[6,1,64], index: 3, kind: input, shape index: {}]
  %s4 = inlined_call_operand.vmem [shape: f32[6,64,192], index: 4, kind: input, shape index: {}]
  %s5 = inlined_call_operand.vmem [shape: f32[6,1,192], index: 5, kind: input, shape index: {}]
  %s6 = inlined_call_operand.vmem [shape: f32[6,64,64], index: 6, kind: input, shape index: {}]
  %s7 = inlined_call_operand.vmem [shape: f32[6,1,64], index: 7, kind: input, shape index: {}]
  %s8 = inlined_call_operand.vmem [shape: f32[6,1,64], index: 8, kind: input, shape index: {}]
  %s9 = inlined_call_operand.vmem [shape: f32[6,1,64], index: 9, kind: input, shape index: {}]
  %s10 = inlined_call_operand.vmem [shape: f32[6,64,256], index: 10, kind: input, shape index: {}]
  %s11 = inlined_call_operand.vmem [shape: f32[6,1,256], index: 11, kind: input, shape index: {}]
  %s12 = inlined_call_operand.vmem [shape: f32[6,256,64], index: 12, kind: input, shape index: {}]
  %s13 = inlined_call_operand.hbm [shape: f32[6,1,64], index: 13, kind: input, shape index: {}]
  %s14 = inlined_call_operand.vmem [shape: f32[32,384], index: 14, kind: output, shape index: {}]
  %s15 = sld [smem:[#allocation0]]
  $region101: #{forward_encoder.3} parent=0
    _
  %s17 = ssub.s32 1, %s15
  %s18 = scalar_select 0, %s17, %s15
  $region1: #{forward_encoder.3} parent=0
    #allocation2 [shape = 'u8[8192]{0}', space=vmem, size = 0x2000, scoped, tag = 'input window, operand 1, single buffered']
    #allocation3 [shape = 's32[2]{0}', space=sflag, size = 0x8, scoped, tag = 'scoped memory for forward_encoder.3']
    #allocation4 [shape = 'u8[3072]{0}', space=vmem, size = 0xc00, scoped, tag = 'input window, operand 3, single buffered']
    #allocation5 [shape = 's32[1]{0}', space=sflag, size = 0x4, scoped, tag = 'scoped memory for forward_encoder.3']
    #allocation6 [shape = 'u8[3072]{0}', space=vmem, size = 0xc00, scoped, tag = 'input window, operand 13, single buffered']
    %19 = vsyncpa [#allocation3], 0
    %20 = vsyncpa [#allocation5], 0
    loop: start=0, step=1, limit=4
    $region2: #{forward_encoder.3} parent=1 // loop_pre_header
      _
    $region3: #{forward_encoder.3} parent=1 // loop_header
      %s22 = sphi 0, %s26
      %p23 = scmp.ge.s32.totalorder %s22, 4
      %s32 = sphi 0, %s34
      %s35 = sphi 0, %s32
      %s36 = sphi 0, %s35
      %s52 = sphi 0, %s36
      %s56 = sphi 0, %s56
      %s58 = sphi 0, %s56
      %s59 = sphi 0, %s58
      %s73 = sphi 0, %s59
      %s77 = sphi 0, %s77
      %s79 = sphi 0, %s77
      %s80 = sphi 0, %s79
      %s94 = sphi 0, %s80
      %s98 = sphi 0, %s98
      %s100 = sphi 0, %s98
      %s101 = sphi 0, %s100
      %s115 = sphi 0, %s101
      %s119 = sphi 0, %s119
      %s121 = sphi 0, %s119
      %s122 = sphi 0, %s121
      %s136 = sphi 0, %s122
      %s140 = sphi 0, %s140
      %s142 = sphi 0, %s140
      %s143 = sphi 0, %s142
      %s157 = sphi 0, %s143
      %s161 = sphi 0, %s161
      %s163 = sphi 0, %s161
      %s164 = sphi 0, %s163
      %s178 = sphi 0, %s164
      %s182 = sphi 0, %s182
      %s184 = sphi 0, %s182
      %s185 = sphi 0, %s184
      %s199 = sphi 0, %s185
      %s203 = sphi 0, %s203
      %s205 = sphi 0, %s203
      %s206 = sphi 0, %s205
      %s220 = sphi 0, %s206
      %s224 = sphi 0, %s224
      %s226 = sphi 0, %s224
      %s227 = sphi 0, %s226
      %s241 = sphi 0, %s227
      %s245 = sphi 0, %s245
      %s247 = sphi 0, %s245
      %s248 = sphi 0, %s247
      %s262 = sphi 0, %s248
      %s266 = sphi 0, %s266
      %s268 = sphi 0, %s266
      %s269 = sphi 0, %s268
      %s283 = sphi 0, %s269
      %s287 = sphi 0, %s287
      %s289 = sphi 0, %s287
      %s290 = sphi 0, %s289
      %s304 = sphi 0, %s290
      %s308 = sphi 0, %s308
      %s310 = sphi 0, %s308
      %s311 = sphi 0, %s310
      %s325 = sphi 0, %s311
      %s331 = sphi 0, %s333
      %s334 = sphi 0, %s331
      %s335 = sphi 0, %s334
      %s351 = sphi 0, %s335
    $region4: #{forward_encoder.3} parent=1 // loop_header_branch
      %25 = sbr.rel (%p23) target = $region8
    $region5: #{forward_encoder.3} parent=1 // loop_body
      %s27 = ssub.s32 %s22, 1
      %s28 = ssub.s32 %s22, 2
      %s29 = sadd.s32 %s22, 1
      %s30 = ssub.s32 %s22, %s29
      %p31 = scmp.eq.s32.totalorder %s30, 0
      %s33 = sadd.s32 %s32, 1
      %s34 = scalar_select %p31, %s32, %s33
      %p37 = pneg %p31
      %p38 = scmp.eq.s32.totalorder %s22, 1
      %p39 = por %p37, %p38
      %p40 = scmp.ne.s32.totalorder %s32, %s35
      %p41 = scmp.eq.s32.totalorder %s22, 0
      %p42 = por %p40, %p41
      %p43 = scmp.ne.s32.totalorder %s32, %s35
      %p44 = scmp.eq.s32.totalorder %s27, 1
      %p45 = por %p43, %p44
      %p46 = scmp.ne.s32.totalorder %s35, %s36
      %p47 = scmp.eq.s32.totalorder %s27, 0
      %p48 = por %p46, %p47
      %p49 = scmp.ne.s32.totalorder %s35, %s36
      %p50 = scmp.eq.s32.totalorder %s28, 1
      %p51 = por %p49, %p50
      %p53 = scmp.ne.s32.totalorder %s36, %s52
      %p54 = scmp.eq.s32.totalorder %s28, 0
      %p55 = por %p53, %p54
      %s57 = sadd.s32 %s56, 1
      %p60 = scmp.eq.s32.totalorder %s22, 1
      %p61 = scmp.ne.s32.totalorder %s56, %s58
      %p62 = scmp.eq.s32.totalorder %s22, 0
      %p63 = por %p61, %p62
      %p64 = scmp.ne.s32.totalorder %s56, %s58
      %p65 = scmp.eq.s32.totalorder %s27, 1
      %p66 = por %p64, %p65
      %p67 = scmp.ne.s32.totalorder %s58, %s59
      %p68 = scmp.eq.s32.totalorder %s27, 0
      %p69 = por %p67, %p68
      %p70 = scmp.ne.s32.totalorder %s58, %s59
      %p71 = scmp.eq.s32.totalorder %s28, 1
      %p72 = por %p70, %p71
      %p74 = scmp.ne.s32.totalorder %s59, %s73
      %p75 = scmp.eq.s32.totalorder %s28, 0
      %p76 = por %p74, %p75
      %s78 = sadd.s32 %s77, 1
      %p81 = scmp.eq.s32.totalorder %s22, 1
      %p82 = scmp.ne.s32.totalorder %s77, %s79
      %p83 = scmp.eq.s32.totalorder %s22, 0
      %p84 = por %p82, %p83
      %p85 = scmp.ne.s32.totalorder %s77, %s79
      %p86 = scmp.eq.s32.totalorder %s27, 1
      %p87 = por %p85, %p86
      %p88 = scmp.ne.s32.totalorder %s79, %s80
      %p89 = scmp.eq.s32.totalorder %s27, 0
      %p90 = por %p88, %p89
      %p91 = scmp.ne.s32.totalorder %s79, %s80
      %p92 = scmp.eq.s32.totalorder %s28, 1
      %p93 = por %p91, %p92
      %p95 = scmp.ne.s32.totalorder %s80, %s94
      %p96 = scmp.eq.s32.totalorder %s28, 0
      %p97 = por %p95, %p96
      %s99 = sadd.s32 %s98, 1
      %p102 = scmp.eq.s32.totalorder %s22, 1
      %p103 = scmp.ne.s32.totalorder %s98, %s100
      %p104 = scmp.eq.s32.totalorder %s22, 0
      %p105 = por %p103, %p104
      %p106 = scmp.ne.s32.totalorder %s98, %s100
      %p107 = scmp.eq.s32.totalorder %s27, 1
      %p108 = por %p106, %p107
      %p109 = scmp.ne.s32.totalorder %s100, %s101
      %p110 = scmp.eq.s32.totalorder %s27, 0
      %p111 = por %p109, %p110
      %p112 = scmp.ne.s32.totalorder %s100, %s101
      %p113 = scmp.eq.s32.totalorder %s28, 1
      %p114 = por %p112, %p113
      %p116 = scmp.ne.s32.totalorder %s101, %s115
      %p117 = scmp.eq.s32.totalorder %s28, 0
      %p118 = por %p116, %p117
      %s120 = sadd.s32 %s119, 1
      %p123 = scmp.eq.s32.totalorder %s22, 1
      %p124 = scmp.ne.s32.totalorder %s119, %s121
      %p125 = scmp.eq.s32.totalorder %s22, 0
      %p126 = por %p124, %p125
      %p127 = scmp.ne.s32.totalorder %s119, %s121
      %p128 = scmp.eq.s32.totalorder %s27, 1
      %p129 = por %p127, %p128
      %p130 = scmp.ne.s32.totalorder %s121, %s122
      %p131 = scmp.eq.s32.totalorder %s27, 0
      %p132 = por %p130, %p131
      %p133 = scmp.ne.s32.totalorder %s121, %s122
      %p134 = scmp.eq.s32.totalorder %s28, 1
      %p135 = por %p133, %p134
      %p137 = scmp.ne.s32.totalorder %s122, %s136
      %p138 = scmp.eq.s32.totalorder %s28, 0
      %p139 = por %p137, %p138
      %s141 = sadd.s32 %s140, 1
      %p144 = scmp.eq.s32.totalorder %s22, 1
      %p145 = scmp.ne.s32.totalorder %s140, %s142
      %p146 = scmp.eq.s32.totalorder %s22, 0
      %p147 = por %p145, %p146
      %p148 = scmp.ne.s32.totalorder %s140, %s142
      %p149 = scmp.eq.s32.totalorder %s27, 1
      %p150 = por %p148, %p149
      %p151 = scmp.ne.s32.totalorder %s142, %s143
      %p152 = scmp.eq.s32.totalorder %s27, 0
      %p153 = por %p151, %p152
      %p154 = scmp.ne.s32.totalorder %s142, %s143
      %p155 = scmp.eq.s32.totalorder %s28, 1
      %p156 = por %p154, %p155
      %p158 = scmp.ne.s32.totalorder %s143, %s157
      %p159 = scmp.eq.s32.totalorder %s28, 0
      %p160 = por %p158, %p159
      %s162 = sadd.s32 %s161, 1
      %p165 = scmp.eq.s32.totalorder %s22, 1
      %p166 = scmp.ne.s32.totalorder %s161, %s163
      %p167 = scmp.eq.s32.totalorder %s22, 0
      %p168 = por %p166, %p167
      %p169 = scmp.ne.s32.totalorder %s161, %s163
      %p170 = scmp.eq.s32.totalorder %s27, 1
      %p171 = por %p169, %p170
      %p172 = scmp.ne.s32.totalorder %s163, %s164
      %p173 = scmp.eq.s32.totalorder %s27, 0
      %p174 = por %p172, %p173
      %p175 = scmp.ne.s32.totalorder %s163, %s164
      %p176 = scmp.eq.s32.totalorder %s28, 1
      %p177 = por %p175, %p176
      %p179 = scmp.ne.s32.totalorder %s164, %s178
      %p180 = scmp.eq.s32.totalorder %s28, 0
      %p181 = por %p179, %p180
      %s183 = sadd.s32 %s182, 1
      %p186 = scmp.eq.s32.totalorder %s22, 1
      %p187 = scmp.ne.s32.totalorder %s182, %s184
      %p188 = scmp.eq.s32.totalorder %s22, 0
      %p189 = por %p187, %p188
      %p190 = scmp.ne.s32.totalorder %s182, %s184
      %p191 = scmp.eq.s32.totalorder %s27, 1
      %p192 = por %p190, %p191
      %p193 = scmp.ne.s32.totalorder %s184, %s185
      %p194 = scmp.eq.s32.totalorder %s27, 0
      %p195 = por %p193, %p194
      %p196 = scmp.ne.s32.totalorder %s184, %s185
      %p197 = scmp.eq.s32.totalorder %s28, 1
      %p198 = por %p196, %p197
      %p200 = scmp.ne.s32.totalorder %s185, %s199
      %p201 = scmp.eq.s32.totalorder %s28, 0
      %p202 = por %p200, %p201
      %s204 = sadd.s32 %s203, 1
      %p207 = scmp.eq.s32.totalorder %s22, 1
      %p208 = scmp.ne.s32.totalorder %s203, %s205
      %p209 = scmp.eq.s32.totalorder %s22, 0
      %p210 = por %p208, %p209
      %p211 = scmp.ne.s32.totalorder %s203, %s205
      %p212 = scmp.eq.s32.totalorder %s27, 1
      %p213 = por %p211, %p212
      %p214 = scmp.ne.s32.totalorder %s205, %s206
      %p215 = scmp.eq.s32.totalorder %s27, 0
      %p216 = por %p214, %p215
      %p217 = scmp.ne.s32.totalorder %s205, %s206
      %p218 = scmp.eq.s32.totalorder %s28, 1
      %p219 = por %p217, %p218
      %p221 = scmp.ne.s32.totalorder %s206, %s220
      %p222 = scmp.eq.s32.totalorder %s28, 0
      %p223 = por %p221, %p222
      %s225 = sadd.s32 %s224, 1
      %p228 = scmp.eq.s32.totalorder %s22, 1
      %p229 = scmp.ne.s32.totalorder %s224, %s226
      %p230 = scmp.eq.s32.totalorder %s22, 0
      %p231 = por %p229, %p230
      %p232 = scmp.ne.s32.totalorder %s224, %s226
      %p233 = scmp.eq.s32.totalorder %s27, 1
      %p234 = por %p232, %p233
      %p235 = scmp.ne.s32.totalorder %s226, %s227
      %p236 = scmp.eq.s32.totalorder %s27, 0
      %p237 = por %p235, %p236
      %p238 = scmp.ne.s32.totalorder %s226, %s227
      %p239 = scmp.eq.s32.totalorder %s28, 1
      %p240 = por %p238, %p239
      %p242 = scmp.ne.s32.totalorder %s227, %s241
      %p243 = scmp.eq.s32.totalorder %s28, 0
      %p244 = por %p242, %p243
      %s246 = sadd.s32 %s245, 1
      %p249 = scmp.eq.s32.totalorder %s22, 1
      %p250 = scmp.ne.s32.totalorder %s245, %s247
      %p251 = scmp.eq.s32.totalorder %s22, 0
      %p252 = por %p250, %p251
      %p253 = scmp.ne.s32.totalorder %s245, %s247
      %p254 = scmp.eq.s32.totalorder %s27, 1
      %p255 = por %p253, %p254
      %p256 = scmp.ne.s32.totalorder %s247, %s248
      %p257 = scmp.eq.s32.totalorder %s27, 0
      %p258 = por %p256, %p257
      %p259 = scmp.ne.s32.totalorder %s247, %s248
      %p260 = scmp.eq.s32.totalorder %s28, 1
      %p261 = por %p259, %p260
      %p263 = scmp.ne.s32.totalorder %s248, %s262
      %p264 = scmp.eq.s32.totalorder %s28, 0
      %p265 = por %p263, %p264
      %s267 = sadd.s32 %s266, 1
      %p270 = scmp.eq.s32.totalorder %s22, 1
      %p271 = scmp.ne.s32.totalorder %s266, %s268
      %p272 = scmp.eq.s32.totalorder %s22, 0
      %p273 = por %p271, %p272
      %p274 = scmp.ne.s32.totalorder %s266, %s268
      %p275 = scmp.eq.s32.totalorder %s27, 1
      %p276 = por %p274, %p275
      %p277 = scmp.ne.s32.totalorder %s268, %s269
      %p278 = scmp.eq.s32.totalorder %s27, 0
      %p279 = por %p277, %p278
      %p280 = scmp.ne.s32.totalorder %s268, %s269
      %p281 = scmp.eq.s32.totalorder %s28, 1
      %p282 = por %p280, %p281
      %p284 = scmp.ne.s32.totalorder %s269, %s283
      %p285 = scmp.eq.s32.totalorder %s28, 0
      %p286 = por %p284, %p285
      %s288 = sadd.s32 %s287, 1
      %p291 = scmp.eq.s32.totalorder %s22, 1
      %p292 = scmp.ne.s32.totalorder %s287, %s289
      %p293 = scmp.eq.s32.totalorder %s22, 0
      %p294 = por %p292, %p293
      %p295 = scmp.ne.s32.totalorder %s287, %s289
      %p296 = scmp.eq.s32.totalorder %s27, 1
      %p297 = por %p295, %p296
      %p298 = scmp.ne.s32.totalorder %s289, %s290
      %p299 = scmp.eq.s32.totalorder %s27, 0
      %p300 = por %p298, %p299
      %p301 = scmp.ne.s32.totalorder %s289, %s290
      %p302 = scmp.eq.s32.totalorder %s28, 1
      %p303 = por %p301, %p302
      %p305 = scmp.ne.s32.totalorder %s290, %s304
      %p306 = scmp.eq.s32.totalorder %s28, 0
      %p307 = por %p305, %p306
      %s309 = sadd.s32 %s308, 1
      %p312 = scmp.eq.s32.totalorder %s22, 1
      %p313 = scmp.ne.s32.totalorder %s308, %s310
      %p314 = scmp.eq.s32.totalorder %s22, 0
      %p315 = por %p313, %p314
      %p316 = scmp.ne.s32.totalorder %s308, %s310
      %p317 = scmp.eq.s32.totalorder %s27, 1
      %p318 = por %p316, %p317
      %p319 = scmp.ne.s32.totalorder %s310, %s311
      %p320 = scmp.eq.s32.totalorder %s27, 0
      %p321 = por %p319, %p320
      %p322 = scmp.ne.s32.totalorder %s310, %s311
      %p323 = scmp.eq.s32.totalorder %s28, 1
      %p324 = por %p322, %p323
      %p326 = scmp.ne.s32.totalorder %s311, %s325
      %p327 = scmp.eq.s32.totalorder %s28, 0
      %p328 = por %p326, %p327
      %s329 = ssub.s32 %s22, %s29
      %p330 = scmp.eq.s32.totalorder %s329, 0
      %s332 = sadd.s32 %s331, 1
      %s333 = scalar_select %p330, %s331, %s332
      %p336 = pneg %p330
      %p337 = scmp.eq.s32.totalorder %s22, 1
      %p338 = por %p336, %p337
      %p339 = scmp.ne.s32.totalorder %s331, %s334
      %p340 = scmp.eq.s32.totalorder %s22, 0
      %p341 = por %p339, %p340
      %p342 = scmp.ne.s32.totalorder %s331, %s334
      %p343 = scmp.eq.s32.totalorder %s27, 1
      %p344 = por %p342, %p343
      %p345 = scmp.ne.s32.totalorder %s334, %s335
      %p346 = scmp.eq.s32.totalorder %s27, 0
      %p347 = por %p345, %p346
      %p348 = scmp.ne.s32.totalorder %s334, %s335
      %p349 = scmp.eq.s32.totalorder %s28, 1
      %p350 = por %p348, %p349
      %p352 = scmp.ne.s32.totalorder %s335, %s351
      %p353 = scmp.eq.s32.totalorder %s28, 0
      %p354 = por %p352, %p353
      %p355 = scmp.le.s32.totalorder 1, %s22
      %p356 = scmp.lt.s32.totalorder %s22, 3
      %p357 = pnand %p355, %p356
      %p358 = pneg %p357
      // Predicated region
      $region9: #{forward_encoder.3} parent=5 // pred_check
        _
      $region10: #{forward_encoder.3} parent=5 // pred_check_branch
        %360 = sbr.rel (%p357) target = $region12
      $region11: #{forward_encoder.3} parent=5 // pred_region
        %s361 = ssub.s32 %s22, 1
        // Predicated region
        $region13: #{forward_encoder.3} parent=11 // pred_check
          %p362 = pneg %p69
        $region14: #{forward_encoder.3} parent=11 // pred_check_branch
          %364 = sbr.rel (%p362) target = $region16
        $region15: #{forward_encoder.3} parent=11 // pred_region
          %366 = vsyncadd [#allocation3], 0
          %s367 = sshll.u32 %s1, 4
          %s368 = int_to_ptr.hbm [resolvable:$true] %s367
          %s369 = sshll.u32 [#allocation2], 4
          %s370 = int_to_ptr.vmem [resolvable:$true] %s369
          %375 = dma.hbm_to_vmem [thread:$0]  %s368, 256, %s370, [#allocation3], 128, 128, 8
        $region16: #{forward_encoder.3} parent=11 // pred_fallthru
          _
        // Predicated region
        $region17: #{forward_encoder.3} parent=11 // pred_check
          %p376 = pneg %p90
        $region18: #{forward_encoder.3} parent=11 // pred_check_branch
          %378 = sbr.rel (%p376) target = $region20
        $region19: #{forward_encoder.3} parent=11 // pred_region
          _
        $region20: #{forward_encoder.3} parent=11 // pred_fallthru
          _
        // Predicated region
        $region21: #{forward_encoder.3} parent=11 // pred_check
          %p379 = pneg %p111
        $region22: #{forward_encoder.3} parent=11 // pred_check_branch
          %381 = sbr.rel (%p379) target = $region24
        $region23: #{forward_encoder.3} parent=11 // pred_region
          %383 = vsyncadd [#allocation5], 0
          %s384 = sshll.u32 %s3, 4
          %s385 = int_to_ptr.hbm [resolvable:$true] %s384
          %s386 = sshll.u32 [#allocation4], 4
          %s387 = int_to_ptr.vmem [resolvable:$true] %s386
          %392 = dma.hbm_to_vmem [thread:$0]  %s385, 96, %s387, [#allocation5], 16, 16, 1
        $region24: #{forward_encoder.3} parent=11 // pred_fallthru
          _
        // Predicated region
        $region25: #{forward_encoder.3} parent=11 // pred_check
          %p393 = pneg %p132
        $region26: #{forward_encoder.3} parent=11 // pred_check_branch
          %395 = sbr.rel (%p393) target = $region28
        $region27: #{forward_encoder.3} parent=11 // pred_region
          _
        $region28: #{forward_encoder.3} parent=11 // pred_fallthru
          _
        // Predicated region
        $region29: #{forward_encoder.3} parent=11 // pred_check
          %p396 = pneg %p153
        $region30: #{forward_encoder.3} parent=11 // pred_check_branch
          %398 = sbr.rel (%p396) target = $region32
        $region31: #{forward_encoder.3} parent=11 // pred_region
          _
        $region32: #{forward_encoder.3} parent=11 // pred_fallthru
          _
        // Predicated region
        $region33: #{forward_encoder.3} parent=11 // pred_check
          %p399 = pneg %p174
        $region34: #{forward_encoder.3} parent=11 // pred_check_branch
          %401 = sbr.rel (%p399) target = $region36
        $region35: #{forward_encoder.3} parent=11 // pred_region
          _
        $region36: #{forward_encoder.3} parent=11 // pred_fallthru
          _
        // Predicated region
        $region37: #{forward_encoder.3} parent=11 // pred_check
          %p402 = pneg %p195
        $region38: #{forward_encoder.3} parent=11 // pred_check_branch
          %404 = sbr.rel (%p402) target = $region40
        $region39: #{forward_encoder.3} parent=11 // pred_region
          _
        $region40: #{forward_encoder.3} parent=11 // pred_fallthru
          _
        // Predicated region
        $region41: #{forward_encoder.3} parent=11 // pred_check
          %p405 = pneg %p216
        $region42: #{forward_encoder.3} parent=11 // pred_check_branch
          %407 = sbr.rel (%p405) target = $region44
        $region43: #{forward_encoder.3} parent=11 // pred_region
          _
        $region44: #{forward_encoder.3} parent=11 // pred_fallthru
          _
        // Predicated region
        $region45: #{forward_encoder.3} parent=11 // pred_check
          %p408 = pneg %p237
        $region46: #{forward_encoder.3} parent=11 // pred_check_branch
          %410 = sbr.rel (%p408) target = $region48
        $region47: #{forward_encoder.3} parent=11 // pred_region
          _
        $region48: #{forward_encoder.3} parent=11 // pred_fallthru
          _
        // Predicated region
        $region49: #{forward_encoder.3} parent=11 // pred_check
          %p411 = pneg %p258
        $region50: #{forward_encoder.3} parent=11 // pred_check_branch
          %413 = sbr.rel (%p411) target = $region52
        $region51: #{forward_encoder.3} parent=11 // pred_region
          _
        $region52: #{forward_encoder.3} parent=11 // pred_fallthru
          _
        // Predicated region
        $region53: #{forward_encoder.3} parent=11 // pred_check
          %p414 = pneg %p279
        $region54: #{forward_encoder.3} parent=11 // pred_check_branch
          %416 = sbr.rel (%p414) target = $region56
        $region55: #{forward_encoder.3} parent=11 // pred_region
          _
        $region56: #{forward_encoder.3} parent=11 // pred_fallthru
          _
        // Predicated region
        $region57: #{forward_encoder.3} parent=11 // pred_check
          %p417 = pneg %p300
        $region58: #{forward_encoder.3} parent=11 // pred_check_branch
          %419 = sbr.rel (%p417) target = $region60
        $region59: #{forward_encoder.3} parent=11 // pred_region
          _
        $region60: #{forward_encoder.3} parent=11 // pred_fallthru
          _
        // Predicated region
        $region61: #{forward_encoder.3} parent=11 // pred_check
          %p420 = pneg %p321
        $region62: #{forward_encoder.3} parent=11 // pred_check_branch
          %422 = sbr.rel (%p420) target = $region64
        $region63: #{forward_encoder.3} parent=11 // pred_region
          %424 = vsyncadd [#allocation5], 0
          %s425 = sshll.u32 %s13, 4
          %s426 = int_to_ptr.hbm [resolvable:$true] %s425
          %s427 = sshll.u32 [#allocation6], 4
          %s428 = int_to_ptr.vmem [resolvable:$true] %s427
          %433 = dma.hbm_to_vmem [thread:$0]  %s426, 96, %s428, [#allocation5], 16, 16, 1
        $region64: #{forward_encoder.3} parent=11 // pred_fallthru
          _
      $region12: #{forward_encoder.3} parent=5 // pred_fallthru
        _
      %p434 = scmp.lt.s32.totalorder %s22, 2
      // Predicated region
      $region65: #{forward_encoder.3} parent=5 // pred_check
        %p435 = pneg %p434
      $region66: #{forward_encoder.3} parent=5 // pred_check_branch
        %437 = sbr.rel (%p435) target = $region68
      $region67: #{forward_encoder.3} parent=5 // pred_region
        // Predicated region
        $region69: #{forward_encoder.3} parent=67 // pred_check
          %p438 = pneg %p42
        $region70: #{forward_encoder.3} parent=67 // pred_check_branch
          %440 = sbr.rel (%p438) target = $region72
        $region71: #{forward_encoder.3} parent=67 // pred_region
          %s441 = smul.u32 2, %s22
          %p442 = scmp.lt.s32.totalorder %s441, 3
          %s443 = scalar_select %p442, %s441, 3
          %s444 = smul.addr %s443, 8
          %s445 = scalar_lea.vmem %s0, %s444
          %s446 = smul.u32 2, %s22
        $region72: #{forward_encoder.3} parent=67 // pred_fallthru
          _
      $region68: #{forward_encoder.3} parent=5 // pred_fallthru
        _
      %p447 = scmp.le.s32.totalorder 1, %s22
      %p448 = scmp.lt.s32.totalorder %s22, 3
      %p449 = pnand %p447, %p448
      %p450 = pneg %p449
      // Predicated region
      $region73: #{forward_encoder.3} parent=5 // pred_check
        _
      $region74: #{forward_encoder.3} parent=5 // pred_check_branch
        %452 = sbr.rel (%p449) target = $region76
      $region75: #{forward_encoder.3} parent=5 // pred_region
        %s453 = ssub.s32 %s22, 1
        // Predicated region
        $region77: #{forward_encoder.3} parent=75 // pred_check
          %p454 = pneg %p69
        $region78: #{forward_encoder.3} parent=75 // pred_check_branch
          %456 = sbr.rel (%p454) target = $region80
        $region79: #{forward_encoder.3} parent=75 // pred_region
          %458 = dma.done [#allocation3], 256
        $region80: #{forward_encoder.3} parent=75 // pred_fallthru
          _
        // Predicated region
        $region81: #{forward_encoder.3} parent=75 // pred_check
          %p459 = pneg %p111
        $region82: #{forward_encoder.3} parent=75 // pred_check_branch
          %461 = sbr.rel (%p459) target = $region84
        $region83: #{forward_encoder.3} parent=75 // pred_region
          %463 = dma.done [#allocation5], 96
        $region84: #{forward_encoder.3} parent=75 // pred_fallthru
          _
        // Predicated region
        $region85: #{forward_encoder.3} parent=75 // pred_check
          %p464 = pneg %p321
        $region86: #{forward_encoder.3} parent=75 // pred_check_branch
          %466 = sbr.rel (%p464) target = $region88
        $region87: #{forward_encoder.3} parent=75 // pred_region
          %468 = dma.done [#allocation5], 96
        $region88: #{forward_encoder.3} parent=75 // pred_fallthru
          _
        %s469 = smul.u32 2, %s27
        %p470 = scmp.lt.s32.totalorder %s469, 3
        %s471 = scalar_select %p470, %s469, 3
        %s472 = smul.addr %s471, 8
        %s473 = scalar_lea.vmem %s0, %s472
        %p474 = pneg %p48
        %p475 = pneg %p45
        %p476 = pneg %p69
        %p477 = pneg %p66
        %p478 = pneg %p90
        %p479 = pneg %p87
        %p480 = pneg %p111
        %p481 = pneg %p108
        %p482 = pneg %p132
        %p483 = pneg %p129
        %p484 = pneg %p153
        %p485 = pneg %p150
        %p486 = pneg %p174
        %p487 = pneg %p171
        %p488 = pneg %p195
        %p489 = pneg %p192
        %p490 = pneg %p216
        %p491 = pneg %p213
        %p492 = pneg %p237
        %p493 = pneg %p234
        %p494 = pneg %p258
        %p495 = pneg %p255
        %p496 = pneg %p279
        %p497 = pneg %p276
        %p498 = pneg %p300
        %p499 = pneg %p297
        %p500 = pneg %p321
        %p501 = pneg %p318
        %p502 = pneg %p347
        %p503 = pneg %p344
        %s504 = smul.u32 2, %s27
        %p505 = scmp.lt.s32.totalorder %s504, 3
        %s506 = scalar_select %p505, %s504, 3
        %s507 = smul.addr %s506, 3
        %s508 = smul.addr %s507, 8
        %s509 = scalar_lea.vmem %s14, %s508
        %s510 = smul.u32 2, %s27
        %p511 = scmp.lt.s32.totalorder %s510, 3
        %s512 = scalar_select %p511, %s510, 3
        %s513 = smul.addr %s512, 8
        %s514 = scalar_lea.vmem %s0, %s513
        %s515 = smul.u32 2, %s27
        %s516 = smul.u32 2, %s27
        %p517 = scmp.lt.s32.totalorder %s516, 3
        %s518 = scalar_select %p517, %s516, 3
        %s519 = smul.addr %s518, 3
        %s520 = smul.addr %s519, 8
        %s521 = scalar_lea.vmem %s14, %s520
        %s522 = smul.u32 2, %s27
        %v523 = vld [vmem:[%s514] sm:$0xff]
        %v524 = vld [vmem:[%s514 + $0x8] sm:$0xff]
        %v525 = vld [vmem:[#allocation2] sm:$0xff]
        %v526 = vld [vmem:[#allocation2 + $0x8] sm:$0xff]
        %v527 = vld [vmem:[%s2] sm:$0x1]
        %v528 = vld [vmem:[#allocation4] sm:$0x1]
        %vm529 = vcmask 523264
        %v530 = vsel %vm529, %v523, 0.0
        %531 = vadd.xlane.f32.xlu0 %v530
        %v532 = vpop.xlane.xlu0 %531
        %v533 = vsel %vm529, %v524, 0.0
        %534 = vadd.xlane.f32.xlu0 %v533
        %v535 = vpop.xlane.xlu0 %534
        %v536 = vrcp.pop 64.0
        %v537 = vmul.f32 64.0, %v536
        %v538 = vsub.f32 1.0, %v537
        %v539 = vmul.f32 %v536, %v538
        %v540 = vadd.f32 %v536, %v539
        %vm541 = vweird.f32 %v536
        %v542 = vsel %vm541, %v536, %v540
        %v543 = vmul.f32 %v532, %v542
        %v544 = vmul.f32 %v535, %v542
        %v545 = vsub.f32 %v523, %v543
        %v546 = vsub.f32 %v524, %v544
        %v547 = vmul.f32 %v545, %v545
        %v548 = vmul.f32 %v546, %v546
        %v549 = vsel %vm529, %v547, 0.0
        %550 = vadd.xlane.f32.xlu0 %v549
        %v551 = vpop.xlane.xlu0 %550
        %v552 = vsel %vm529, %v548, 0.0
        %553 = vadd.xlane.f32.xlu0 %v552
        %v554 = vpop.xlane.xlu0 %553
        %v555 = vmul.f32 %v551, %v542
        %v556 = vmul.f32 %v554, %v542
        %v557 = vadd.f32 %v555, 1e-05
        %v558 = vadd.f32 %v556, 1e-05
        %v559 = vrsqrt.pop %v557
        %v560 = vmul.f32 %v559, %v557
        %v561 = vmul.f32 %v560, %v559
        %v562 = vmul.f32 0.5, %v561
        %v563 = vsub.f32 1.5, %v562
        %v564 = vmul.f32 %v559, %v563
        %vm565 = vweird.f32 %v557
        %vm566 = vweird.f32 %v559
        %vm567 = vmor %vm565, %vm566
        %v568 = vsel %vm567, %v559, %v564
        %v569 = vrsqrt.pop %v558
        %v570 = vmul.f32 %v569, %v558
        %v571 = vmul.f32 %v570, %v569
        %v572 = vmul.f32 0.5, %v571
        %v573 = vsub.f32 1.5, %v572
        %v574 = vmul.f32 %v569, %v573
        %vm575 = vweird.f32 %v558
        %vm576 = vweird.f32 %v569
        %vm577 = vmor %vm575, %vm576
        %v578 = vsel %vm577, %v569, %v574
        %v579 = vmul.f32 %v545, %v568
        %v580 = vmul.f32 %v546, %v578
        %v582 = vperm.slane %v527, 0
        %v584 = vmul.f32 %v579, %v582
        %v585 = vmul.f32 %v580, %v582
        %v587 = vperm.slane %v528, 0
        %v589 = vadd.f32 %v584, %v587
        %v590 = vadd.f32 %v585, %v587
        %v591 = vld [vmem:[%s4] sm:$0xff]
        %v592 = vld [vmem:[%s4 + $0x8] sm:$0xff]
        %v593 = vld [vmem:[%s4 + $0x10] sm:$0xff]
        %v594 = vld [vmem:[%s4 + $0x18] sm:$0xff]
        %v595 = vld [vmem:[%s4 + $0x20] sm:$0xff]
        %v596 = vld [vmem:[%s4 + $0x28] sm:$0xff]
        %v597 = vld [vmem:[%s4 + $0x30] sm:$0xff]
        %v598 = vld [vmem:[%s4 + $0x38] sm:$0xff]
        %v599 = vld [vmem:[%s4 + $0x40] sm:$0xff]
        %v600 = vld [vmem:[%s4 + $0x48] sm:$0xff]
        %v601 = vld [vmem:[%s4 + $0x50] sm:$0xff]
        %v602 = vld [vmem:[%s4 + $0x58] sm:$0xff]
        %v603 = vld [vmem:[%s4 + $0x60] sm:$0xff]
        %v604 = vld [vmem:[%s4 + $0x68] sm:$0xff]
        %v605 = vld [vmem:[%s4 + $0x70] sm:$0xff]
        %v606 = vld [vmem:[%s4 + $0x78] sm:$0xff]
        %v607 = vld [vmem:[%s5] sm:$0x3]
        %v609 = vperm.slane %v607, 0
        %v610 = vperm.slane %v607, 1
        %v614 = vsel %vm529, %v589, 0
        %v617 = vsel %vm529, %v590, 0
        %619 = vmatpush.msra.mxu0 0.0
        %620 = vmatpush.msra.mxu0 0.0
        %621 = vmatpush.msra.mxu0 0.0
        %622 = vmatpush.msra.mxu0 0.0
        %623 = vmatpush.msra.mxu0 0.0
        %624 = vmatpush.msra.mxu0 0.0
        %625 = vmatpush.msra.mxu0 0.0
        %626 = vmatpush.msra.mxu0 0.0
        %627 = vmatpush.msra.mxu0 %v605
        %628 = vmatpush.msra.mxu0 %v603
        %629 = vmatpush.msra.mxu0 %v601
        %630 = vmatpush.msra.mxu0 %v599
        %631 = vmatpush.msra.mxu0 %v597
        %632 = vmatpush.msra.mxu0 %v595
        %633 = vmatpush.msra.mxu0 %v593
        %634 = vmatpush.msra.mxu0 %v591
        %635 = vmatmul.f32.gmra.mxu0 %v614
        %v636 = vpop.f32.mrf.mxu0
        %v637 = vadd.f32 %v609, %v636
        %638 = vmatmul.f32.gmra.mxu0 %v617
        %v639 = vpop.f32.mrf.mxu0
        %v640 = vadd.f32 %v609, %v639
        %641 = vdwg.mxu0
        %642 = vmatpush.msra.mxu0 0.0
        %643 = vmatpush.msra.mxu0 0.0
        %644 = vmatpush.msra.mxu0 0.0
        %645 = vmatpush.msra.mxu0 0.0
        %646 = vmatpush.msra.mxu0 0.0
        %647 = vmatpush.msra.mxu0 0.0
        %648 = vmatpush.msra.mxu0 0.0
        %649 = vmatpush.msra.mxu0 0.0
        %650 = vmatpush.msra.mxu0 %v606
        %651 = vmatpush.msra.mxu0 %v604
        %652 = vmatpush.msra.mxu0 %v602
        %653 = vmatpush.msra.mxu0 %v600
        %654 = vmatpush.msra.mxu0 %v598
        %655 = vmatpush.msra.mxu0 %v596
        %656 = vmatpush.msra.mxu0 %v594
        %657 = vmatpush.msra.mxu0 %v592
        %658 = vmatmul.f32.gmra.mxu0 %v614
        %v659 = vpop.f32.mrf.mxu0
        %v660 = vadd.f32 %v610, %v659
        %661 = vmatmul.f32.gmra.mxu0 %v617
        %v662 = vpop.f32.mrf.mxu0
        %v663 = vadd.f32 %v610, %v662
        %664 = vdwg.mxu0
        %v665 = vld [vmem:[%s6] sm:$0xff]
        %v666 = vld [vmem:[%s6 + $0x8] sm:$0xff]
        %v667 = vld [vmem:[%s6 + $0x10] sm:$0xff]
        %v668 = vld [vmem:[%s6 + $0x18] sm:$0xff]
        %v669 = vld [vmem:[%s6 + $0x20] sm:$0xff]
        %v670 = vld [vmem:[%s6 + $0x28] sm:$0xff]
        %v671 = vld [vmem:[%s6 + $0x30] sm:$0xff]
        %v672 = vld [vmem:[%s6 + $0x38] sm:$0xff]
        %675 = vrot.lane.b32.xlu0 %v637, 64
        %v676 = vpop.permute.xlu0 %675
        %677 = vrot.lane.b32.xlu0 %v640, 64
        %v678 = vpop.permute.xlu0 %677
        %vm679 = vcmask 130048
        %v680 = vsel %vm679, %v637, 0
        %v682 = vsel %vm679, %v640, 0
        %v684 = vsel %vm679, %v676, 0
        %v686 = vsel %vm679, %v678, 0
        %688 = vmatpush.xpose.msra.mxu0 0.0
        %689 = vmatpush.xpose.msra.mxu0 0.0
        %690 = vmatpush.xpose.msra.mxu0 0.0
        %691 = vmatpush.xpose.msra.mxu0 0.0
        %692 = vmatpush.xpose.msra.mxu0 0.0
        %693 = vmatpush.xpose.msra.mxu0 0.0
        %694 = vmatpush.xpose.msra.mxu0 0.0
        %695 = vmatpush.xpose.msra.mxu0 0.0
        %696 = vmatpush.xpose.msra.mxu0 0.0
        %697 = vmatpush.xpose.msra.mxu0 0.0
        %698 = vmatpush.xpose.msra.mxu0 0.0
        %699 = vmatpush.xpose.msra.mxu0 0.0
        %700 = vmatpush.xpose.msra.mxu0 0.0
        %701 = vmatpush.xpose.msra.mxu0 0.0
        %702 = vmatpush.xpose.msra.mxu0 %v686
        %703 = vmatpush.xpose.msra.mxu0 %v684
        %704 = vmatmul.f32.gmra.mxu0 %v680
        %v705 = vpop.f32.mrf.mxu0
        %v706 = vadd.f32 %v525, %v705
        %707 = vmatmul.f32.gmra.mxu0 %v682
        %v708 = vpop.f32.mrf.mxu0
        %v709 = vadd.f32 %v526, %v708
        %710 = vdwg.mxu0
        %v711 = vsel %vm679, %v706, -inf
        %712 = vmax.xlane.f32.xlu0 %v711
        %v713 = vpop.xlane.xlu0 %712
        %v714 = vsel %vm679, %v709, -inf
        %715 = vmax.xlane.f32.xlu0 %v714
        %v716 = vpop.xlane.xlu0 %715
        %v717 = vsub.f32 %v706, %v713
        %v718 = vsub.f32 %v709, %v716
        %v719 = vmul.f32 %v717, 1.442695
        %v720 = vpow.pop %v719
        %v721 = vmul.f32 %v718, 1.442695
        %v722 = vpow.pop %v721
        %v723 = vsel %vm679, %v720, 0.0
        %724 = vadd.xlane.f32.xlu0 %v723
        %v725 = vpop.xlane.xlu0 %724
        %v726 = vsel %vm679, %v722, 0.0
        %727 = vadd.xlane.f32.xlu0 %v726
        %v728 = vpop.xlane.xlu0 %727
        %v729 = vrcp.pop %v725
        %v730 = vrcp.pop %v728
        %v731 = vmul.f32 %v720, %v729
        %v732 = vmul.f32 %v722, %v730
        %v734 = vsel %vm679, %v731, 0
        %v737 = vsel %vm679, %v732, 0
        %739 = vmatpush.msra.mxu0 0.0
        %740 = vmatpush.msra.mxu0 0.0
        %741 = vmatpush.msra.mxu0 0.0
        %742 = vmatpush.msra.mxu0 0.0
        %743 = vmatpush.msra.mxu0 0.0
        %744 = vmatpush.msra.mxu0 0.0
        %745 = vmatpush.msra.mxu0 0.0
        %746 = vmatpush.msra.mxu0 0.0
        %747 = vmatpush.msra.mxu0 0.0
        %748 = vmatpush.msra.mxu0 0.0
        %749 = vmatpush.msra.mxu0 0.0
        %750 = vmatpush.msra.mxu0 0.0
        %751 = vmatpush.msra.mxu0 0.0
        %752 = vmatpush.msra.mxu0 0.0
        %753 = vmatpush.msra.mxu0 %v663
        %754 = vmatpush.msra.mxu0 %v660
        %755 = vmatmul.f32.gmra.mxu0 %v734
        %v756 = vpop.f32.mrf.mxu0
        %v757 = vadd.f32 0.0, %v756
        %758 = vmatmul.f32.gmra.mxu0 %v737
        %v759 = vpop.f32.mrf.mxu0
        %v760 = vadd.f32 0.0, %v759
        %761 = vdwg.mxu0
        %762 = vrot.lane.b32.xlu0 %v637, 112
        %v763 = vpop.permute.xlu0 %762
        %764 = vrot.lane.b32.xlu0 %v640, 112
        %v765 = vpop.permute.xlu0 %764
        %766 = vrot.lane.b32.xlu0 %v637, 48
        %v767 = vpop.permute.xlu0 %766
        %768 = vrot.lane.b32.xlu0 %v640, 48
        %v769 = vpop.permute.xlu0 %768
        %v770 = vsel %vm679, %v763, 0
        %v772 = vsel %vm679, %v765, 0
        %v774 = vsel %vm679, %v767, 0
        %v776 = vsel %vm679, %v769, 0
        %778 = vmatpush.xpose.msra.mxu0 0.0
        %779 = vmatpush.xpose.msra.mxu0 0.0
        %780 = vmatpush.xpose.msra.mxu0 0.0
        %781 = vmatpush.xpose.msra.mxu0 0.0
        %782 = vmatpush.xpose.msra.mxu0 0.0
        %783 = vmatpush.xpose.msra.mxu0 0.0
        %784 = vmatpush.xpose.msra.mxu0 0.0
        %785 = vmatpush.xpose.msra.mxu0 0.0
        %786 = vmatpush.xpose.msra.mxu0 0.0
        %787 = vmatpush.xpose.msra.mxu0 0.0
        %788 = vmatpush.xpose.msra.mxu0 0.0
        %789 = vmatpush.xpose.msra.mxu0 0.0
        %790 = vmatpush.xpose.msra.mxu0 0.0
        %791 = vmatpush.xpose.msra.mxu0 0.0
        %792 = vmatpush.xpose.msra.mxu0 %v776
        %793 = vmatpush.xpose.msra.mxu0 %v774
        %794 = vmatmul.f32.gmra.mxu0 %v770
        %v795 = vpop.f32.mrf.mxu0
        %v796 = vadd.f32 %v525, %v795
        %797 = vmatmul.f32.gmra.mxu0 %v772
        %v798 = vpop.f32.mrf.mxu0
        %v799 = vadd.f32 %v526, %v798
        %800 = vdwg.mxu0
        %v801 = vsel %vm679, %v796, -inf
        %802 = vmax.xlane.f32.xlu0 %v801
        %v803 = vpop.xlane.xlu0 %802
        %v804 = vsel %vm679, %v799, -inf
        %805 = vmax.xlane.f32.xlu0 %v804
        %v806 = vpop.xlane.xlu0 %805
        %v807 = vsub.f32 %v796, %v803
        %v808 = vsub.f32 %v799, %v806
        %v809 = vmul.f32 %v807, 1.442695
        %v810 = vpow.pop %v809
        %v811 = vmul.f32 %v808, 1.442695
        %v812 = vpow.pop %v811
        %v813 = vsel %vm679, %v810, 0.0
        %814 = vadd.xlane.f32.xlu0 %v813
        %v815 = vpop.xlane.xlu0 %814
        %v816 = vsel %vm679, %v812, 0.0
        %817 = vadd.xlane.f32.xlu0 %v816
        %v818 = vpop.xlane.xlu0 %817
        %v819 = vrcp.pop %v815
        %v820 = vrcp.pop %v818
        %v821 = vmul.f32 %v810, %v819
        %v822 = vmul.f32 %v812, %v820
        %825 = vrot.lane.b32.xlu0 %v660, 112
        %v826 = vpop.permute.xlu0 %825
        %827 = vrot.lane.b32.xlu0 %v663, 112
        %v828 = vpop.permute.xlu0 %827
        %v832 = vsel %vm679, %v821, 0
        %v835 = vsel %vm679, %v822, 0
        %837 = vmatpush.msra.mxu0 0.0
        %838 = vmatpush.msra.mxu0 0.0
        %839 = vmatpush.msra.mxu0 0.0
        %840 = vmatpush.msra.mxu0 0.0
        %841 = vmatpush.msra.mxu0 0.0
        %842 = vmatpush.msra.mxu0 0.0
        %843 = vmatpush.msra.mxu0 0.0
        %844 = vmatpush.msra.mxu0 0.0
        %845 = vmatpush.msra.mxu0 0.0
        %846 = vmatpush.msra.mxu0 0.0
        %847 = vmatpush.msra.mxu0 0.0
        %848 = vmatpush.msra.mxu0 0.0
        %849 = vmatpush.msra.mxu0 0.0
        %850 = vmatpush.msra.mxu0 0.0
        %851 = vmatpush.msra.mxu0 %v828
        %852 = vmatpush.msra.mxu0 %v826
        %853 = vmatmul.f32.gmra.mxu0 %v832
        %v854 = vpop.f32.mrf.mxu0
        %v855 = vadd.f32 0.0, %v854
        %856 = vmatmul.f32.gmra.mxu0 %v835
        %v857 = vpop.f32.mrf.mxu0
        %v858 = vadd.f32 0.0, %v857
        %859 = vdwg.mxu0
        %v861 = vsel %vm679, %v855, 0
        %v864 = vsel %vm679, %v858, 0
        %866 = vmatpush.msra.mxu0 0.0
        %867 = vmatpush.msra.mxu0 0.0
        %868 = vmatpush.msra.mxu0 0.0
        %869 = vmatpush.msra.mxu0 0.0
        %870 = vmatpush.msra.mxu0 0.0
        %871 = vmatpush.msra.mxu0 0.0
        %872 = vmatpush.msra.mxu0 0.0
        %873 = vmatpush.msra.mxu0 0.0
        %874 = vmatpush.msra.mxu0 0.0
        %875 = vmatpush.msra.mxu0 0.0
        %876 = vmatpush.msra.mxu0 0.0
        %877 = vmatpush.msra.mxu0 0.0
        %878 = vmatpush.msra.mxu0 0.0
        %879 = vmatpush.msra.mxu0 0.0
        %880 = vmatpush.msra.mxu0 %v668
        %881 = vmatpush.msra.mxu0 %v667
        %882 = vmatmul.f32.gmra.mxu0 %v861
        %v883 = vpop.f32.mrf.mxu0
        %v884 = vadd.f32 0.0, %v883
        %885 = vmatmul.f32.gmra.mxu0 %v864
        %v886 = vpop.f32.mrf.mxu0
        %v887 = vadd.f32 0.0, %v886
        %888 = vdwg.mxu0
        %v890 = vsel %vm679, %v757, 0
        %v893 = vsel %vm679, %v760, 0
        %895 = vmatpush.msra.mxu0 0.0
        %896 = vmatpush.msra.mxu0 0.0
        %897 = vmatpush.msra.mxu0 0.0
        %898 = vmatpush.msra.mxu0 0.0
        %899 = vmatpush.msra.mxu0 0.0
        %900 = vmatpush.msra.mxu0 0.0
        %901 = vmatpush.msra.mxu0 0.0
        %902 = vmatpush.msra.mxu0 0.0
        %903 = vmatpush.msra.mxu0 0.0
        %904 = vmatpush.msra.mxu0 0.0
        %905 = vmatpush.msra.mxu0 0.0
        %906 = vmatpush.msra.mxu0 0.0
        %907 = vmatpush.msra.mxu0 0.0
        %908 = vmatpush.msra.mxu0 0.0
        %909 = vmatpush.msra.mxu0 %v666
        %910 = vmatpush.msra.mxu0 %v665
        %911 = vmatmul.f32.gmra.mxu0 %v890
        %v912 = vpop.f32.mrf.mxu0
        %v913 = vadd.f32 %v884, %v912
        %914 = vmatmul.f32.gmra.mxu0 %v893
        %v915 = vpop.f32.mrf.mxu0
        %v916 = vadd.f32 %v887, %v915
        %917 = vdwg.mxu0
        %918 = vrot.lane.b32.xlu0 %v637, 96
        %v919 = vpop.permute.xlu0 %918
        %920 = vrot.lane.b32.xlu0 %v640, 96
        %v921 = vpop.permute.xlu0 %920
        %922 = vrot.lane.b32.xlu0 %v637, 32
        %v923 = vpop.permute.xlu0 %922
        %924 = vrot.lane.b32.xlu0 %v640, 32
        %v925 = vpop.permute.xlu0 %924
        %v926 = vsel %vm679, %v919, 0
        %v928 = vsel %vm679, %v921, 0
        %v930 = vsel %vm679, %v923, 0
        %v932 = vsel %vm679, %v925, 0
        %934 = vmatpush.xpose.msra.mxu0 0.0
        %935 = vmatpush.xpose.msra.mxu0 0.0
        %936 = vmatpush.xpose.msra.mxu0 0.0
        %937 = vmatpush.xpose.msra.mxu0 0.0
        %938 = vmatpush.xpose.msra.mxu0 0.0
        %939 = vmatpush.xpose.msra.mxu0 0.0
        %940 = vmatpush.xpose.msra.mxu0 0.0
        %941 = vmatpush.xpose.msra.mxu0 0.0
        %942 = vmatpush.xpose.msra.mxu0 0.0
        %943 = vmatpush.xpose.msra.mxu0 0.0
        %944 = vmatpush.xpose.msra.mxu0 0.0
        %945 = vmatpush.xpose.msra.mxu0 0.0
        %946 = vmatpush.xpose.msra.mxu0 0.0
        %947 = vmatpush.xpose.msra.mxu0 0.0
        %948 = vmatpush.xpose.msra.mxu0 %v932
        %949 = vmatpush.xpose.msra.mxu0 %v930
        %950 = vmatmul.f32.gmra.mxu0 %v926
        %v951 = vpop.f32.mrf.mxu0
        %v952 = vadd.f32 %v525, %v951
        %953 = vmatmul.f32.gmra.mxu0 %v928
        %v954 = vpop.f32.mrf.mxu0
        %v955 = vadd.f32 %v526, %v954
        %956 = vdwg.mxu0
        %v957 = vsel %vm679, %v952, -inf
        %958 = vmax.xlane.f32.xlu0 %v957
        %v959 = vpop.xlane.xlu0 %958
        %v960 = vsel %vm679, %v955, -inf
        %961 = vmax.xlane.f32.xlu0 %v960
        %v962 = vpop.xlane.xlu0 %961
        %v963 = vsub.f32 %v952, %v959
        %v964 = vsub.f32 %v955, %v962
        %v965 = vmul.f32 %v963, 1.442695
        %v966 = vpow.pop %v965
        %v967 = vmul.f32 %v964, 1.442695
        %v968 = vpow.pop %v967
        %v969 = vsel %vm679, %v966, 0.0
        %970 = vadd.xlane.f32.xlu0 %v969
        %v971 = vpop.xlane.xlu0 %970
        %v972 = vsel %vm679, %v968, 0.0
        %973 = vadd.xlane.f32.xlu0 %v972
        %v974 = vpop.xlane.xlu0 %973
        %v975 = vrcp.pop %v971
        %v976 = vrcp.pop %v974
        %v977 = vmul.f32 %v966, %v975
        %v978 = vmul.f32 %v968, %v976
        %979 = vrot.lane.b32.xlu0 %v660, 96
        %v980 = vpop.permute.xlu0 %979
        %981 = vrot.lane.b32.xlu0 %v663, 96
        %v982 = vpop.permute.xlu0 %981
        %v986 = vsel %vm679, %v977, 0
        %v989 = vsel %vm679, %v978, 0
        %991 = vmatpush.msra.mxu0 0.0
        %992 = vmatpush.msra.mxu0 0.0
        %993 = vmatpush.msra.mxu0 0.0
        %994 = vmatpush.msra.mxu0 0.0
        %995 = vmatpush.msra.mxu0 0.0
        %996 = vmatpush.msra.mxu0 0.0
        %997 = vmatpush.msra.mxu0 0.0
        %998 = vmatpush.msra.mxu0 0.0
        %999 = vmatpush.msra.mxu0 0.0
        %1000 = vmatpush.msra.mxu0 0.0
        %1001 = vmatpush.msra.mxu0 0.0
        %1002 = vmatpush.msra.mxu0 0.0
        %1003 = vmatpush.msra.mxu0 0.0
        %1004 = vmatpush.msra.mxu0 0.0
        %1005 = vmatpush.msra.mxu0 %v982
        %1006 = vmatpush.msra.mxu0 %v980
        %1007 = vmatmul.f32.gmra.mxu0 %v986
        %v1008 = vpop.f32.mrf.mxu0
        %v1009 = vadd.f32 0.0, %v1008
        %1010 = vmatmul.f32.gmra.mxu0 %v989
        %v1011 = vpop.f32.mrf.mxu0
        %v1012 = vadd.f32 0.0, %v1011
        %1013 = vdwg.mxu0
        %v1015 = vsel %vm679, %v1009, 0
        %v1018 = vsel %vm679, %v1012, 0
        %1020 = vmatpush.msra.mxu0 0.0
        %1021 = vmatpush.msra.mxu0 0.0
        %1022 = vmatpush.msra.mxu0 0.0
        %1023 = vmatpush.msra.mxu0 0.0
        %1024 = vmatpush.msra.mxu0 0.0
        %1025 = vmatpush.msra.mxu0 0.0
        %1026 = vmatpush.msra.mxu0 0.0
        %1027 = vmatpush.msra.mxu0 0.0
        %1028 = vmatpush.msra.mxu0 0.0
        %1029 = vmatpush.msra.mxu0 0.0
        %1030 = vmatpush.msra.mxu0 0.0
        %1031 = vmatpush.msra.mxu0 0.0
        %1032 = vmatpush.msra.mxu0 0.0
        %1033 = vmatpush.msra.mxu0 0.0
        %1034 = vmatpush.msra.mxu0 %v670
        %1035 = vmatpush.msra.mxu0 %v669
        %1036 = vmatmul.f32.gmra.mxu0 %v1015
        %v1037 = vpop.f32.mrf.mxu0
        %v1038 = vadd.f32 0.0, %v1037
        %1039 = vmatmul.f32.gmra.mxu0 %v1018
        %v1040 = vpop.f32.mrf.mxu0
        %v1041 = vadd.f32 0.0, %v1040
        %1042 = vdwg.mxu0
        %v1043 = vadd.f32 %v913, %v1038
        %v1044 = vadd.f32 %v916, %v1041
        %1045 = vrot.lane.b32.xlu0 %v637, 80
        %v1046 = vpop.permute.xlu0 %1045
        %1047 = vrot.lane.b32.xlu0 %v640, 80
        %v1048 = vpop.permute.xlu0 %1047
        %1049 = vrot.lane.b32.xlu0 %v637, 16
        %v1050 = vpop.permute.xlu0 %1049
        %1051 = vrot.lane.b32.xlu0 %v640, 16
        %v1052 = vpop.permute.xlu0 %1051
        %v1053 = vsel %vm679, %v1046, 0
        %v1055 = vsel %vm679, %v1048, 0
        %v1057 = vsel %vm679, %v1050, 0
        %v1059 = vsel %vm679, %v1052, 0
        %1061 = vmatpush.xpose.msra.mxu0 0.0
        %1062 = vmatpush.xpose.msra.mxu0 0.0
        %1063 = vmatpush.xpose.msra.mxu0 0.0
        %1064 = vmatpush.xpose.msra.mxu0 0.0
        %1065 = vmatpush.xpose.msra.mxu0 0.0
        %1066 = vmatpush.xpose.msra.mxu0 0.0
        %1067 = vmatpush.xpose.msra.mxu0 0.0
        %1068 = vmatpush.xpose.msra.mxu0 0.0
        %1069 = vmatpush.xpose.msra.mxu0 0.0
        %1070 = vmatpush.xpose.msra.mxu0 0.0
        %1071 = vmatpush.xpose.msra.mxu0 0.0
        %1072 = vmatpush.xpose.msra.mxu0 0.0
        %1073 = vmatpush.xpose.msra.mxu0 0.0
        %1074 = vmatpush.xpose.msra.mxu0 0.0
        %1075 = vmatpush.xpose.msra.mxu0 %v1059
        %1076 = vmatpush.xpose.msra.mxu0 %v1057
        %1077 = vmatmul.f32.gmra.mxu0 %v1053
        %v1078 = vpop.f32.mrf.mxu0
        %v1079 = vadd.f32 %v525, %v1078
        %1080 = vmatmul.f32.gmra.mxu0 %v1055
        %v1081 = vpop.f32.mrf.mxu0
        %v1082 = vadd.f32 %v526, %v1081
        %1083 = vdwg.mxu0
        %v1084 = vsel %vm679, %v1079, -inf
        %1085 = vmax.xlane.f32.xlu0 %v1084
        %v1086 = vpop.xlane.xlu0 %1085
        %v1087 = vsel %vm679, %v1082, -inf
        %1088 = vmax.xlane.f32.xlu0 %v1087
        %v1089 = vpop.xlane.xlu0 %1088
        %v1090 = vsub.f32 %v1079, %v1086
        %v1091 = vsub.f32 %v1082, %v1089
        %v1092 = vmul.f32 %v1090, 1.442695
        %v1093 = vpow.pop %v1092
        %v1094 = vmul.f32 %v1091, 1.442695
        %v1095 = vpow.pop %v1094
        %v1096 = vsel %vm679, %v1093, 0.0
        %1097 = vadd.xlane.f32.xlu0 %v1096
        %v1098 = vpop.xlane.xlu0 %1097
        %v1099 = vsel %vm679, %v1095, 0.0
        %1100 = vadd.xlane.f32.xlu0 %v1099
        %v1101 = vpop.xlane.xlu0 %1100
        %v1102 = vrcp.pop %v1098
        %v1103 = vrcp.pop %v1101
        %v1104 = vmul.f32 %v1093, %v1102
        %v1105 = vmul.f32 %v1095, %v1103
        %1106 = vrot.lane.b32.xlu0 %v660, 80
        %v1107 = vpop.permute.xlu0 %1106
        %1108 = vrot.lane.b32.xlu0 %v663, 80
        %v1109 = vpop.permute.xlu0 %1108
        %v1113 = vsel %vm679, %v1104, 0
        %v1116 = vsel %vm679, %v1105, 0
        %1118 = vmatpush.msra.mxu0 0.0
        %1119 = vmatpush.msra.mxu0 0.0
        %1120 = vmatpush.msra.mxu0 0.0
        %1121 = vmatpush.msra.mxu0 0.0
        %1122 = vmatpush.msra.mxu0 0.0
        %1123 = vmatpush.msra.mxu0 0.0
        %1124 = vmatpush.msra.mxu0 0.0
        %1125 = vmatpush.msra.mxu0 0.0
        %1126 = vmatpush.msra.mxu0 0.0
        %1127 = vmatpush.msra.mxu0 0.0
        %1128 = vmatpush.msra.mxu0 0.0
        %1129 = vmatpush.msra.mxu0 0.0
        %1130 = vmatpush.msra.mxu0 0.0
        %1131 = vmatpush.msra.mxu0 0.0
        %1132 = vmatpush.msra.mxu0 %v1109
        %1133 = vmatpush.msra.mxu0 %v1107
        %1134 = vmatmul.f32.gmra.mxu0 %v1113
        %v1135 = vpop.f32.mrf.mxu0
        %v1136 = vadd.f32 0.0, %v1135
        %1137 = vmatmul.f32.gmra.mxu0 %v1116
        %v1138 = vpop.f32.mrf.mxu0
        %v1139 = vadd.f32 0.0, %v1138
        %1140 = vdwg.mxu0
        %v1142 = vsel %vm679, %v1136, 0
        %v1145 = vsel %vm679, %v1139, 0
        %1147 = vmatpush.msra.mxu0 0.0
        %1148 = vmatpush.msra.mxu0 0.0
        %1149 = vmatpush.msra.mxu0 0.0
        %1150 = vmatpush.msra.mxu0 0.0
        %1151 = vmatpush.msra.mxu0 0.0
        %1152 = vmatpush.msra.mxu0 0.0
        %1153 = vmatpush.msra.mxu0 0.0
        %1154 = vmatpush.msra.mxu0 0.0
        %1155 = vmatpush.msra.mxu0 0.0
        %1156 = vmatpush.msra.mxu0 0.0
        %1157 = vmatpush.msra.mxu0 0.0
        %1158 = vmatpush.msra.mxu0 0.0
        %1159 = vmatpush.msra.mxu0 0.0
        %1160 = vmatpush.msra.mxu0 0.0
        %1161 = vmatpush.msra.mxu0 %v672
        %1162 = vmatpush.msra.mxu0 %v671
        %1163 = vmatmul.f32.gmra.mxu0 %v1142
        %v1164 = vpop.f32.mrf.mxu0
        %v1165 = vadd.f32 0.0, %v1164
        %1166 = vmatmul.f32.gmra.mxu0 %v1145
        %v1167 = vpop.f32.mrf.mxu0
        %v1168 = vadd.f32 0.0, %v1167
        %1169 = vdwg.mxu0
        %v1170 = vadd.f32 %v1043, %v1165
        %v1171 = vadd.f32 %v1044, %v1168
        %v1172 = vadd.f32 %v523, %v1170
        %v1173 = vadd.f32 %v524, %v1171
        %v1174 = vld [vmem:[%s7] sm:$0x1]
        %v1176 = vperm.slane %v1174, 0
        %v1178 = vadd.f32 %v1172, %v1176
        %v1179 = vadd.f32 %v1173, %v1176
        %v1180 = vld [vmem:[%s8] sm:$0x1]
        %v1181 = vld [vmem:[%s9] sm:$0x1]
        %v1182 = vsel %vm529, %v1178, 0.0
        %1183 = vadd.xlane.f32.xlu0 %v1182
        %v1184 = vpop.xlane.xlu0 %1183
        %v1185 = vsel %vm529, %v1179, 0.0
        %1186 = vadd.xlane.f32.xlu0 %v1185
        %v1187 = vpop.xlane.xlu0 %1186
        %v1188 = vmul.f32 %v1184, %v542
        %v1189 = vmul.f32 %v1187, %v542
        %v1190 = vsub.f32 %v1178, %v1188
        %v1191 = vsub.f32 %v1179, %v1189
        %v1192 = vmul.f32 %v1190, %v1190
        %v1193 = vmul.f32 %v1191, %v1191
        %v1194 = vsel %vm529, %v1192, 0.0
        %1195 = vadd.xlane.f32.xlu0 %v1194
        %v1196 = vpop.xlane.xlu0 %1195
        %v1197 = vsel %vm529, %v1193, 0.0
        %1198 = vadd.xlane.f32.xlu0 %v1197
        %v1199 = vpop.xlane.xlu0 %1198
        %v1200 = vmul.f32 %v1196, %v542
        %v1201 = vmul.f32 %v1199, %v542
        %v1202 = vadd.f32 %v1200, 1e-05
        %v1203 = vadd.f32 %v1201, 1e-05
        %v1204 = vrsqrt.pop %v1202
        %v1205 = vmul.f32 %v1204, %v1202
        %v1206 = vmul.f32 %v1205, %v1204
        %v1207 = vmul.f32 0.5, %v1206
        %v1208 = vsub.f32 1.5, %v1207
        %v1209 = vmul.f32 %v1204, %v1208
        %vm1210 = vweird.f32 %v1202
        %vm1211 = vweird.f32 %v1204
        %vm1212 = vmor %vm1210, %vm1211
        %v1213 = vsel %vm1212, %v1204, %v1209
        %v1214 = vrsqrt.pop %v1203
        %v1215 = vmul.f32 %v1214, %v1203
        %v1216 = vmul.f32 %v1215, %v1214
        %v1217 = vmul.f32 0.5, %v1216
        %v1218 = vsub.f32 1.5, %v1217
        %v1219 = vmul.f32 %v1214, %v1218
        %vm1220 = vweird.f32 %v1203
        %vm1221 = vweird.f32 %v1214
        %vm1222 = vmor %vm1220, %vm1221
        %v1223 = vsel %vm1222, %v1214, %v1219
        %v1224 = vmul.f32 %v1190, %v1213
        %v1225 = vmul.f32 %v1191, %v1223
        %v1227 = vperm.slane %v1180, 0
        %v1229 = vmul.f32 %v1224, %v1227
        %v1230 = vmul.f32 %v1225, %v1227
        %v1232 = vperm.slane %v1181, 0
        %v1234 = vadd.f32 %v1229, %v1232
        %v1235 = vadd.f32 %v1230, %v1232
        %v1236 = vld [vmem:[%s10] sm:$0xff]
        %v1237 = vld [vmem:[%s10 + $0x8] sm:$0xff]
        %v1238 = vld [vmem:[%s10 + $0x10] sm:$0xff]
        %v1239 = vld [vmem:[%s10 + $0x18] sm:$0xff]
        %v1240 = vld [vmem:[%s10 + $0x20] sm:$0xff]
        %v1241 = vld [vmem:[%s10 + $0x28] sm:$0xff]
        %v1242 = vld [vmem:[%s10 + $0x30] sm:$0xff]
        %v1243 = vld [vmem:[%s10 + $0x38] sm:$0xff]
        %v1244 = vld [vmem:[%s10 + $0x40] sm:$0xff]
        %v1245 = vld [vmem:[%s10 + $0x48] sm:$0xff]
        %v1246 = vld [vmem:[%s10 + $0x50] sm:$0xff]
        %v1247 = vld [vmem:[%s10 + $0x58] sm:$0xff]
        %v1248 = vld [vmem:[%s10 + $0x60] sm:$0xff]
        %v1249 = vld [vmem:[%s10 + $0x68] sm:$0xff]
        %v1250 = vld [vmem:[%s10 + $0x70] sm:$0xff]
        %v1251 = vld [vmem:[%s10 + $0x78] sm:$0xff]
        %v1252 = vld [vmem:[%s11] sm:$0x3]
        %v1254 = vperm.slane %v1252, 0
        %v1255 = vperm.slane %v1252, 1
        %v1259 = vsel %vm529, %v1234, 0
        %v1262 = vsel %vm529, %v1235, 0
        %1264 = vmatpush.msra.mxu0 0.0
        %1265 = vmatpush.msra.mxu0 0.0
        %1266 = vmatpush.msra.mxu0 0.0
        %1267 = vmatpush.msra.mxu0 0.0
        %1268 = vmatpush.msra.mxu0 0.0
        %1269 = vmatpush.msra.mxu0 0.0
        %1270 = vmatpush.msra.mxu0 0.0
        %1271 = vmatpush.msra.mxu0 0.0
        %1272 = vmatpush.msra.mxu0 %v1250
        %1273 = vmatpush.msra.mxu0 %v1248
        %1274 = vmatpush.msra.mxu0 %v1246
        %1275 = vmatpush.msra.mxu0 %v1244
        %1276 = vmatpush.msra.mxu0 %v1242
        %1277 = vmatpush.msra.mxu0 %v1240
        %1278 = vmatpush.msra.mxu0 %v1238
        %1279 = vmatpush.msra.mxu0 %v1236
        %1280 = vmatmul.f32.gmra.mxu0 %v1259
        %v1281 = vpop.f32.mrf.mxu0
        %v1282 = vadd.f32 %v1254, %v1281
        %1283 = vmatmul.f32.gmra.mxu0 %v1262
        %v1284 = vpop.f32.mrf.mxu0
        %v1285 = vadd.f32 %v1254, %v1284
        %1286 = vdwg.mxu0
        %1287 = vmatpush.msra.mxu0 0.0
        %1288 = vmatpush.msra.mxu0 0.0
        %1289 = vmatpush.msra.mxu0 0.0
        %1290 = vmatpush.msra.mxu0 0.0
        %1291 = vmatpush.msra.mxu0 0.0
        %1292 = vmatpush.msra.mxu0 0.0
        %1293 = vmatpush.msra.mxu0 0.0
        %1294 = vmatpush.msra.mxu0 0.0
        %1295 = vmatpush.msra.mxu0 %v1251
        %1296 = vmatpush.msra.mxu0 %v1249
        %1297 = vmatpush.msra.mxu0 %v1247
        %1298 = vmatpush.msra.mxu0 %v1245
        %1299 = vmatpush.msra.mxu0 %v1243
        %1300 = vmatpush.msra.mxu0 %v1241
        %1301 = vmatpush.msra.mxu0 %v1239
        %1302 = vmatpush.msra.mxu0 %v1237
        %1303 = vmatmul.f32.gmra.mxu0 %v1259
        %v1304 = vpop.f32.mrf.mxu0
        %v1305 = vadd.f32 %v1255, %v1304
        %1306 = vmatmul.f32.gmra.mxu0 %v1262
        %v1307 = vpop.f32.mrf.mxu0
        %v1308 = vadd.f32 %v1255, %v1307
        %1309 = vdwg.mxu0
        %v1310 = vmul.f32 %v1282, 0.5
        %v1311 = vmul.f32 %v1305, 0.5
        %v1312 = vmul.f32 %v1285, 0.5
        %v1313 = vmul.f32 %v1308, 0.5
        %v1314 = vmul.f32 %v1282, 0.70710677
        %v1315 = vmul.f32 %v1305, 0.70710677
        %v1316 = vmul.f32 %v1285, 0.70710677
        %v1317 = vmul.f32 %v1308, 0.70710677
        %v1318 = vand.u32 2147483647, %v1314
        %v1319 = vand.u32 2147483647, %v1315
        %v1320 = vand.u32 2147483647, %v1316
        %v1321 = vand.u32 2147483647, %v1317
        %v1322 = vmul.f32 %v1318, 0.3275911
        %v1323 = vmul.f32 %v1319, 0.3275911
        %v1324 = vmul.f32 %v1320, 0.3275911
        %v1325 = vmul.f32 %v1321, 0.3275911
        %v1326 = vadd.f32 %v1322, 1.0
        %v1327 = vadd.f32 %v1323, 1.0
        %v1328 = vadd.f32 %v1324, 1.0
        %v1329 = vadd.f32 %v1325, 1.0
        %v1330 = vrcp.pop %v1326
        %v1331 = vmul.f32 %v1326, %v1330
        %v1332 = vsub.f32 1.0, %v1331
        %v1333 = vmul.f32 %v1330, %v1332
        %v1334 = vadd.f32 %v1330, %v1333
        %vm1335 = vweird.f32 %v1326
        %vm1336 = vweird.f32 %v1330
        %vm1337 = vmor %vm1335, %vm1336
        %v1338 = vsel %vm1337, %v1330, %v1334
        %v1339 = vand.u32 2147483647, %v1326
        %vm1340 = vcmp.eq.f32.partialorder %v1339, 8.507059e+37
        %v1341 = vand.u32 %v1326, 2147483648
        %v1342 = vor.u32 1.1754944e-38, %v1341
        %v1343 = vsel %vm1340, %v1342, %v1338
        %v1344 = vmul.f32 1.0, %v1343
        %v1345 = vrcp.pop %v1327
        %v1346 = vmul.f32 %v1327, %v1345
        %v1347 = vsub.f32 1.0, %v1346
        %v1348 = vmul.f32 %v1345, %v1347
        %v1349 = vadd.f32 %v1345, %v1348
        %vm1350 = vweird.f32 %v1327
        %vm1351 = vweird.f32 %v1345
        %vm1352 = vmor %vm1350, %vm1351
        %v1353 = vsel %vm1352, %v1345, %v1349
        %v1354 = vand.u32 2147483647, %v1327
        %vm1355 = vcmp.eq.f32.partialorder %v1354, 8.507059e+37
        %v1356 = vand.u32 %v1327, 2147483648
        %v1357 = vor.u32 1.1754944e-38, %v1356
        %v1358 = vsel %vm1355, %v1357, %v1353
        %v1359 = vmul.f32 1.0, %v1358
        %v1360 = vrcp.pop %v1328
        %v1361 = vmul.f32 %v1328, %v1360
        %v1362 = vsub.f32 1.0, %v1361
        %v1363 = vmul.f32 %v1360, %v1362
        %v1364 = vadd.f32 %v1360, %v1363
        %vm1365 = vweird.f32 %v1328
        %vm1366 = vweird.f32 %v1360
        %vm1367 = vmor %vm1365, %vm1366
        %v1368 = vsel %vm1367, %v1360, %v1364
        %v1369 = vand.u32 2147483647, %v1328
        %vm1370 = vcmp.eq.f32.partialorder %v1369, 8.507059e+37
        %v1371 = vand.u32 %v1328, 2147483648
        %v1372 = vor.u32 1.1754944e-38, %v1371
        %v1373 = vsel %vm1370, %v1372, %v1368
        %v1374 = vmul.f32 1.0, %v1373
        %v1375 = vrcp.pop %v1329
        %v1376 = vmul.f32 %v1329, %v1375
        %v1377 = vsub.f32 1.0, %v1376
        %v1378 = vmul.f32 %v1375, %v1377
        %v1379 = vadd.f32 %v1375, %v1378
        %vm1380 = vweird.f32 %v1329
        %vm1381 = vweird.f32 %v1375
        %vm1382 = vmor %vm1380, %vm1381
        %v1383 = vsel %vm1382, %v1375, %v1379
        %v1384 = vand.u32 2147483647, %v1329
        %vm1385 = vcmp.eq.f32.partialorder %v1384, 8.507059e+37
        %v1386 = vand.u32 %v1329, 2147483648
        %v1387 = vor.u32 1.1754944e-38, %v1386
        %v1388 = vsel %vm1385, %v1387, %v1383
        %v1389 = vmul.f32 1.0, %v1388
        %v1390 = vmul.f32 %v1344, 1.0614054
        %v1391 = vmul.f32 %v1359, 1.0614054
        %v1392 = vmul.f32 %v1374, 1.0614054
        %v1393 = vmul.f32 %v1389, 1.0614054
        %v1394 = vadd.f32 %v1390, -1.4531521
        %v1395 = vadd.f32 %v1391, -1.4531521
        %v1396 = vadd.f32 %v1392, -1.4531521
        %v1397 = vadd.f32 %v1393, -1.4531521
        %v1398 = vmul.f32 %v1394, %v1344
        %v1399 = vmul.f32 %v1395, %v1359
        %v1400 = vmul.f32 %v1396, %v1374
        %v1401 = vmul.f32 %v1397, %v1389
        %v1402 = vadd.f32 %v1398, 1.4214138
        %v1403 = vadd.f32 %v1399, 1.4214138
        %v1404 = vadd.f32 %v1400, 1.4214138
        %v1405 = vadd.f32 %v1401, 1.4214138
        %v1406 = vmul.f32 %v1402, %v1344
        %v1407 = vmul.f32 %v1403, %v1359
        %v1408 = vmul.f32 %v1404, %v1374
        %v1409 = vmul.f32 %v1405, %v1389
        %v1410 = vadd.f32 %v1406, -0.28449672
        %v1411 = vadd.f32 %v1407, -0.28449672
        %v1412 = vadd.f32 %v1408, -0.28449672
        %v1413 = vadd.f32 %v1409, -0.28449672
        %v1414 = vmul.f32 %v1410, %v1344
        %v1415 = vmul.f32 %v1411, %v1359
        %v1416 = vmul.f32 %v1412, %v1374
        %v1417 = vmul.f32 %v1413, %v1389
        %v1418 = vadd.f32 %v1414, 0.2548296
        %v1419 = vadd.f32 %v1415, 0.2548296
        %v1420 = vadd.f32 %v1416, 0.2548296
        %v1421 = vadd.f32 %v1417, 0.2548296
        %v1422 = vmul.f32 %v1418, %v1344
        %v1423 = vmul.f32 %v1419, %v1359
        %v1424 = vmul.f32 %v1420, %v1374
        %v1425 = vmul.f32 %v1421, %v1389
        %v1426 = vsub.f32 0.0, %v1318
        %v1427 = vsub.f32 0.0, %v1319
        %v1428 = vsub.f32 0.0, %v1320
        %v1429 = vsub.f32 0.0, %v1321
        %v1430 = vmul.f32 %v1426, %v1318
        %v1431 = vmul.f32 %v1427, %v1319
        %v1432 = vmul.f32 %v1428, %v1320
        %v1433 = vmul.f32 %v1429, %v1321
        %v1434 = vmul.f32 %v1430, 1.442695
        %v1435 = vpow.pop %v1434
        %v1436 = vmul.f32 %v1431, 1.442695
        %v1437 = vpow.pop %v1436
        %v1438 = vmul.f32 %v1432, 1.442695
        %v1439 = vpow.pop %v1438
        %v1440 = vmul.f32 %v1433, 1.442695
        %v1441 = vpow.pop %v1440
        %v1442 = vmul.f32 %v1422, %v1435
        %v1443 = vmul.f32 %v1423, %v1437
        %v1444 = vmul.f32 %v1424, %v1439
        %v1445 = vmul.f32 %v1425, %v1441
        %v1446 = vsub.f32 1.0, %v1442
        %v1447 = vsub.f32 1.0, %v1443
        %v1448 = vsub.f32 1.0, %v1444
        %v1449 = vsub.f32 1.0, %v1445
        %vm1450 = vcmp.ge.f32.partialorder %v1314, 0.0
        %vm1451 = vcmp.ge.f32.partialorder %v1315, 0.0
        %vm1452 = vcmp.ge.f32.partialorder %v1316, 0.0
        %vm1453 = vcmp.ge.f32.partialorder %v1317, 0.0
        %v1454 = vsub.f32 0.0, %v1446
        %v1455 = vsub.f32 0.0, %v1447
        %v1456 = vsub.f32 0.0, %v1448
        %v1457 = vsub.f32 0.0, %v1449
        %v1458 = vsel %vm1450, %v1446, %v1454
        %v1459 = vsel %vm1451, %v1447, %v1455
        %v1460 = vsel %vm1452, %v1448, %v1456
        %v1461 = vsel %vm1453, %v1449, %v1457
        %v1462 = vadd.f32 %v1458, 1.0
        %v1463 = vadd.f32 %v1459, 1.0
        %v1464 = vadd.f32 %v1460, 1.0
        %v1465 = vadd.f32 %v1461, 1.0
        %v1466 = vmul.f32 %v1310, %v1462
        %v1467 = vmul.f32 %v1311, %v1463
        %v1468 = vmul.f32 %v1312, %v1464
        %v1469 = vmul.f32 %v1313, %v1465
        %v1470 = vld [vmem:[%s12] sm:$0xff]
        %v1471 = vld [vmem:[%s12 + $0x8] sm:$0xff]
        %v1472 = vld [vmem:[%s12 + $0x10] sm:$0xff]
        %v1473 = vld [vmem:[%s12 + $0x18] sm:$0xff]
        %v1474 = vld [vmem:[%s12 + $0x20] sm:$0xff]
        %v1475 = vld [vmem:[%s12 + $0x28] sm:$0xff]
        %v1476 = vld [vmem:[%s12 + $0x30] sm:$0xff]
        %v1477 = vld [vmem:[%s12 + $0x38] sm:$0xff]
        %v1478 = vld [vmem:[%s12 + $0x40] sm:$0xff]
        %v1479 = vld [vmem:[%s12 + $0x48] sm:$0xff]
        %v1480 = vld [vmem:[%s12 + $0x50] sm:$0xff]
        %v1481 = vld [vmem:[%s12 + $0x58] sm:$0xff]
        %v1482 = vld [vmem:[%s12 + $0x60] sm:$0xff]
        %v1483 = vld [vmem:[%s12 + $0x68] sm:$0xff]
        %v1484 = vld [vmem:[%s12 + $0x70] sm:$0xff]
        %v1485 = vld [vmem:[%s12 + $0x78] sm:$0xff]
        %v1486 = vld [vmem:[%s12 + $0x80] sm:$0xff]
        %v1487 = vld [vmem:[%s12 + $0x88] sm:$0xff]
        %v1488 = vld [vmem:[%s12 + $0x90] sm:$0xff]
        %v1489 = vld [vmem:[%s12 + $0x98] sm:$0xff]
        %v1490 = vld [vmem:[%s12 + $0xa0] sm:$0xff]
        %v1491 = vld [vmem:[%s12 + $0xa8] sm:$0xff]
        %v1492 = vld [vmem:[%s12 + $0xb0] sm:$0xff]
        %v1493 = vld [vmem:[%s12 + $0xb8] sm:$0xff]
        %v1494 = vld [vmem:[%s12 + $0xc0] sm:$0xff]
        %v1495 = vld [vmem:[%s12 + $0xc8] sm:$0xff]
        %v1496 = vld [vmem:[%s12 + $0xd0] sm:$0xff]
        %v1497 = vld [vmem:[%s12 + $0xd8] sm:$0xff]
        %v1498 = vld [vmem:[%s12 + $0xe0] sm:$0xff]
        %v1499 = vld [vmem:[%s12 + $0xe8] sm:$0xff]
        %v1500 = vld [vmem:[%s12 + $0xf0] sm:$0xff]
        %v1501 = vld [vmem:[%s12 + $0xf8] sm:$0xff]
        %1502 = vmatpush.msra.mxu0 %v1485
        %1503 = vmatpush.msra.mxu0 %v1484
        %1504 = vmatpush.msra.mxu0 %v1483
        %1505 = vmatpush.msra.mxu0 %v1482
        %1506 = vmatpush.msra.mxu0 %v1481
        %1507 = vmatpush.msra.mxu0 %v1480
        %1508 = vmatpush.msra.mxu0 %v1479
        %1509 = vmatpush.msra.mxu0 %v1478
        %1510 = vmatpush.msra.mxu0 %v1477
        %1511 = vmatpush.msra.mxu0 %v1476
        %1512 = vmatpush.msra.mxu0 %v1475
        %1513 = vmatpush.msra.mxu0 %v1474
        %1514 = vmatpush.msra.mxu0 %v1473
        %1515 = vmatpush.msra.mxu0 %v1472
        %1516 = vmatpush.msra.mxu0 %v1471
        %1517 = vmatpush.msra.mxu0 %v1470
        %1518 = vmatmul.f32.gmra.mxu0 %v1466
        %v1519 = vpop.f32.mrf.mxu0
        %v1520 = vadd.f32 0.0, %v1519
        %1521 = vmatmul.f32.gmra.mxu0 %v1468
        %v1522 = vpop.f32.mrf.mxu0
        %v1523 = vadd.f32 0.0, %v1522
        %1524 = vdwg.mxu0
        %1525 = vmatpush.msra.mxu0 %v1501
        %1526 = vmatpush.msra.mxu0 %v1500
        %1527 = vmatpush.msra.mxu0 %v1499
        %1528 = vmatpush.msra.mxu0 %v1498
        %1529 = vmatpush.msra.mxu0 %v1497
        %1530 = vmatpush.msra.mxu0 %v1496
        %1531 = vmatpush.msra.mxu0 %v1495
        %1532 = vmatpush.msra.mxu0 %v1494
        %1533 = vmatpush.msra.mxu0 %v1493
        %1534 = vmatpush.msra.mxu0 %v1492
        %1535 = vmatpush.msra.mxu0 %v1491
        %1536 = vmatpush.msra.mxu0 %v1490
        %1537 = vmatpush.msra.mxu0 %v1489
        %1538 = vmatpush.msra.mxu0 %v1488
        %1539 = vmatpush.msra.mxu0 %v1487
        %1540 = vmatpush.msra.mxu0 %v1486
        %1541 = vmatmul.f32.gmra.mxu0 %v1467
        %v1542 = vpop.f32.mrf.mxu0
        %v1543 = vadd.f32 %v1520, %v1542
        %1544 = vmatmul.f32.gmra.mxu0 %v1469
        %v1545 = vpop.f32.mrf.mxu0
        %v1546 = vadd.f32 %v1523, %v1545
        %1547 = vdwg.mxu0
        %v1548 = vadd.f32 %v1178, %v1543
        %v1549 = vadd.f32 %v1179, %v1546
        %v1550 = vld [vmem:[#allocation6] sm:$0x1]
        %v1552 = vperm.slane %v1550, 0
        %v1554 = vadd.f32 %v1548, %v1552
        %v1555 = vadd.f32 %v1549, %v1552
        %1556 = vst.msk [vmem:[%s521] sm:$0xff] %vm529, %v1554
        %1557 = vst.msk [vmem:[%s521 + $0x18] sm:$0xff] %vm529, %v1555
        %s1558 = scalar_lea.vmem %s2, 1
        %v1559 = vld [vmem:[%s1558] sm:$0x1]
        %s1560 = scalar_lea.vmem [#allocation4], 1
        %v1561 = vld [vmem:[%s1560] sm:$0x1]
        %v1562 = vsel %vm529, %v1554, 0.0
        %1563 = vadd.xlane.f32.xlu0 %v1562
        %v1564 = vpop.xlane.xlu0 %1563
        %v1565 = vsel %vm529, %v1555, 0.0
        %1566 = vadd.xlane.f32.xlu0 %v1565
        %v1567 = vpop.xlane.xlu0 %1566
        %v1568 = vmul.f32 %v1564, %v542
        %v1569 = vmul.f32 %v1567, %v542
        %v1570 = vsub.f32 %v1554, %v1568
        %v1571 = vsub.f32 %v1555, %v1569
        %v1572 = vmul.f32 %v1570, %v1570
        %v1573 = vmul.f32 %v1571, %v1571
        %v1574 = vsel %vm529, %v1572, 0.0
        %1575 = vadd.xlane.f32.xlu0 %v1574
        %v1576 = vpop.xlane.xlu0 %1575
        %v1577 = vsel %vm529, %v1573, 0.0
        %1578 = vadd.xlane.f32.xlu0 %v1577
        %v1579 = vpop.xlane.xlu0 %1578
        %v1580 = vmul.f32 %v1576, %v542
        %v1581 = vmul.f32 %v1579, %v542
        %v1582 = vadd.f32 %v1580, 1e-05
        %v1583 = vadd.f32 %v1581, 1e-05
        %v1584 = vrsqrt.pop %v1582
        %v1585 = vmul.f32 %v1584, %v1582
        %v1586 = vmul.f32 %v1585, %v1584
        %v1587 = vmul.f32 0.5, %v1586
        %v1588 = vsub.f32 1.5, %v1587
        %v1589 = vmul.f32 %v1584, %v1588
        %vm1590 = vweird.f32 %v1582
        %vm1591 = vweird.f32 %v1584
        %vm1592 = vmor %vm1590, %vm1591
        %v1593 = vsel %vm1592, %v1584, %v1589
        %v1594 = vrsqrt.pop %v1583
        %v1595 = vmul.f32 %v1594, %v1583
        %v1596 = vmul.f32 %v1595, %v1594
        %v1597 = vmul.f32 0.5, %v1596
        %v1598 = vsub.f32 1.5, %v1597
        %v1599 = vmul.f32 %v1594, %v1598
        %vm1600 = vweird.f32 %v1583
        %vm1601 = vweird.f32 %v1594
        %vm1602 = vmor %vm1600, %vm1601
        %v1603 = vsel %vm1602, %v1594, %v1599
        %v1604 = vmul.f32 %v1570, %v1593
        %v1605 = vmul.f32 %v1571, %v1603
        %v1607 = vperm.slane %v1559, 0
        %v1609 = vmul.f32 %v1604, %v1607
        %v1610 = vmul.f32 %v1605, %v1607
        %v1612 = vperm.slane %v1561, 0
        %v1614 = vadd.f32 %v1609, %v1612
        %v1615 = vadd.f32 %v1610, %v1612
        %s1616 = scalar_lea.vmem %s4, 128
        %v1617 = vld [vmem:[%s1616] sm:$0xff]
        %v1618 = vld [vmem:[%s1616 + $0x8] sm:$0xff]
        %v1619 = vld [vmem:[%s1616 + $0x10] sm:$0xff]
        %v1620 = vld [vmem:[%s1616 + $0x18] sm:$0xff]
        %v1621 = vld [vmem:[%s1616 + $0x20] sm:$0xff]
        %v1622 = vld [vmem:[%s1616 + $0x28] sm:$0xff]
        %v1623 = vld [vmem:[%s1616 + $0x30] sm:$0xff]
        %v1624 = vld [vmem:[%s1616 + $0x38] sm:$0xff]
        %v1625 = vld [vmem:[%s1616 + $0x40] sm:$0xff]
        %v1626 = vld [vmem:[%s1616 + $0x48] sm:$0xff]
        %v1627 = vld [vmem:[%s1616 + $0x50] sm:$0xff]
        %v1628 = vld [vmem:[%s1616 + $0x58] sm:$0xff]
        %v1629 = vld [vmem:[%s1616 + $0x60] sm:$0xff]
        %v1630 = vld [vmem:[%s1616 + $0x68] sm:$0xff]
        %v1631 = vld [vmem:[%s1616 + $0x70] sm:$0xff]
        %v1632 = vld [vmem:[%s1616 + $0x78] sm:$0xff]
        %s1633 = scalar_lea.vmem %s5, 2
        %v1634 = vld [vmem:[%s1633] sm:$0x3]
        %v1636 = vperm.slane %v1634, 0
        %v1637 = vperm.slane %v1634, 1
        %v1641 = vsel %vm529, %v1614, 0
        %v1644 = vsel %vm529, %v1615, 0
        %1646 = vmatpush.msra.mxu0 0.0
        %1647 = vmatpush.msra.mxu0 0.0
        %1648 = vmatpush.msra.mxu0 0.0
        %1649 = vmatpush.msra.mxu0 0.0
        %1650 = vmatpush.msra.mxu0 0.0
        %1651 = vmatpush.msra.mxu0 0.0
        %1652 = vmatpush.msra.mxu0 0.0
        %1653 = vmatpush.msra.mxu0 0.0
        %1654 = vmatpush.msra.mxu0 %v1631
        %1655 = vmatpush.msra.mxu0 %v1629
        %1656 = vmatpush.msra.mxu0 %v1627
        %1657 = vmatpush.msra.mxu0 %v1625
        %1658 = vmatpush.msra.mxu0 %v1623
        %1659 = vmatpush.msra.mxu0 %v1621
        %1660 = vmatpush.msra.mxu0 %v1619
        %1661 = vmatpush.msra.mxu0 %v1617
        %1662 = vmatmul.f32.gmra.mxu0 %v1641
        %v1663 = vpop.f32.mrf.mxu0
        %v1664 = vadd.f32 %v1636, %v1663
        %1665 = vmatmul.f32.gmra.mxu0 %v1644
        %v1666 = vpop.f32.mrf.mxu0
        %v1667 = vadd.f32 %v1636, %v1666
        %1668 = vdwg.mxu0
        %1669 = vmatpush.msra.mxu0 0.0
        %1670 = vmatpush.msra.mxu0 0.0
        %1671 = vmatpush.msra.mxu0 0.0
        %1672 = vmatpush.msra.mxu0 0.0
        %1673 = vmatpush.msra.mxu0 0.0
        %1674 = vmatpush.msra.mxu0 0.0
        %1675 = vmatpush.msra.mxu0 0.0
        %1676 = vmatpush.msra.mxu0 0.0
        %1677 = vmatpush.msra.mxu0 %v1632
        %1678 = vmatpush.msra.mxu0 %v1630
        %1679 = vmatpush.msra.mxu0 %v1628
        %1680 = vmatpush.msra.mxu0 %v1626
        %1681 = vmatpush.msra.mxu0 %v1624
        %1682 = vmatpush.msra.mxu0 %v1622
        %1683 = vmatpush.msra.mxu0 %v1620
        %1684 = vmatpush.msra.mxu0 %v1618
        %1685 = vmatmul.f32.gmra.mxu0 %v1641
        %v1686 = vpop.f32.mrf.mxu0
        %v1687 = vadd.f32 %v1637, %v1686
        %1688 = vmatmul.f32.gmra.mxu0 %v1644
        %v1689 = vpop.f32.mrf.mxu0
        %v1690 = vadd.f32 %v1637, %v1689
        %1691 = vdwg.mxu0
        %s1692 = scalar_lea.vmem %s6, 64
        %v1693 = vld [vmem:[%s1692] sm:$0xff]
        %v1694 = vld [vmem:[%s1692 + $0x8] sm:$0xff]
        %v1695 = vld [vmem:[%s1692 + $0x10] sm:$0xff]
        %v1696 = vld [vmem:[%s1692 + $0x18] sm:$0xff]
        %v1697 = vld [vmem:[%s1692 + $0x20] sm:$0xff]
        %v1698 = vld [vmem:[%s1692 + $0x28] sm:$0xff]
        %v1699 = vld [vmem:[%s1692 + $0x30] sm:$0xff]
        %v1700 = vld [vmem:[%s1692 + $0x38] sm:$0xff]
        %1703 = vrot.lane.b32.xlu0 %v1664, 64
        %v1704 = vpop.permute.xlu0 %1703
        %1705 = vrot.lane.b32.xlu0 %v1667, 64
        %v1706 = vpop.permute.xlu0 %1705
        %v1707 = vsel %vm679, %v1664, 0
        %v1709 = vsel %vm679, %v1667, 0
        %v1711 = vsel %vm679, %v1704, 0
        %v1713 = vsel %vm679, %v1706, 0
        %1715 = vmatpush.xpose.msra.mxu0 0.0
        %1716 = vmatpush.xpose.msra.mxu0 0.0
        %1717 = vmatpush.xpose.msra.mxu0 0.0
        %1718 = vmatpush.xpose.msra.mxu0 0.0
        %1719 = vmatpush.xpose.msra.mxu0 0.0
        %1720 = vmatpush.xpose.msra.mxu0 0.0
        %1721 = vmatpush.xpose.msra.mxu0 0.0
        %1722 = vmatpush.xpose.msra.mxu0 0.0
        %1723 = vmatpush.xpose.msra.mxu0 0.0
        %1724 = vmatpush.xpose.msra.mxu0 0.0
        %1725 = vmatpush.xpose.msra.mxu0 0.0
        %1726 = vmatpush.xpose.msra.mxu0 0.0
        %1727 = vmatpush.xpose.msra.mxu0 0.0
        %1728 = vmatpush.xpose.msra.mxu0 0.0
        %1729 = vmatpush.xpose.msra.mxu0 %v1713
        %1730 = vmatpush.xpose.msra.mxu0 %v1711
        %1731 = vmatmul.f32.gmra.mxu0 %v1707
        %v1732 = vpop.f32.mrf.mxu0
        %v1733 = vadd.f32 %v525, %v1732
        %1734 = vmatmul.f32.gmra.mxu0 %v1709
        %v1735 = vpop.f32.mrf.mxu0
        %v1736 = vadd.f32 %v526, %v1735
        %1737 = vdwg.mxu0
        %v1738 = vsel %vm679, %v1733, -inf
        %1739 = vmax.xlane.f32.xlu0 %v1738
        %v1740 = vpop.xlane.xlu0 %1739
        %v1741 = vsel %vm679, %v1736, -inf
        %1742 = vmax.xlane.f32.xlu0 %v1741
        %v1743 = vpop.xlane.xlu0 %1742
        %v1744 = vsub.f32 %v1733, %v1740
        %v1745 = vsub.f32 %v1736, %v1743
        %v1746 = vmul.f32 %v1744, 1.442695
        %v1747 = vpow.pop %v1746
        %v1748 = vmul.f32 %v1745, 1.442695
        %v1749 = vpow.pop %v1748
        %v1750 = vsel %vm679, %v1747, 0.0
        %1751 = vadd.xlane.f32.xlu0 %v1750
        %v1752 = vpop.xlane.xlu0 %1751
        %v1753 = vsel %vm679, %v1749, 0.0
        %1754 = vadd.xlane.f32.xlu0 %v1753
        %v1755 = vpop.xlane.xlu0 %1754
        %v1756 = vrcp.pop %v1752
        %v1757 = vrcp.pop %v1755
        %v1758 = vmul.f32 %v1747, %v1756
        %v1759 = vmul.f32 %v1749, %v1757
        %v1761 = vsel %vm679, %v1758, 0
        %v1764 = vsel %vm679, %v1759, 0
        %1766 = vmatpush.msra.mxu0 0.0
        %1767 = vmatpush.msra.mxu0 0.0
        %1768 = vmatpush.msra.mxu0 0.0
        %1769 = vmatpush.msra.mxu0 0.0
        %1770 = vmatpush.msra.mxu0 0.0
        %1771 = vmatpush.msra.mxu0 0.0
        %1772 = vmatpush.msra.mxu0 0.0
        %1773 = vmatpush.msra.mxu0 0.0
        %1774 = vmatpush.msra.mxu0 0.0
        %1775 = vmatpush.msra.mxu0 0.0
        %1776 = vmatpush.msra.mxu0 0.0
        %1777 = vmatpush.msra.mxu0 0.0
        %1778 = vmatpush.msra.mxu0 0.0
        %1779 = vmatpush.msra.mxu0 0.0
        %1780 = vmatpush.msra.mxu0 %v1690
        %1781 = vmatpush.msra.mxu0 %v1687
        %1782 = vmatmul.f32.gmra.mxu0 %v1761
        %v1783 = vpop.f32.mrf.mxu0
        %v1784 = vadd.f32 0.0, %v1783
        %1785 = vmatmul.f32.gmra.mxu0 %v1764
        %v1786 = vpop.f32.mrf.mxu0
        %v1787 = vadd.f32 0.0, %v1786
        %1788 = vdwg.mxu0
        %1789 = vrot.lane.b32.xlu0 %v1664, 112
        %v1790 = vpop.permute.xlu0 %1789
        %1791 = vrot.lane.b32.xlu0 %v1667, 112
        %v1792 = vpop.permute.xlu0 %1791
        %1793 = vrot.lane.b32.xlu0 %v1664, 48
        %v1794 = vpop.permute.xlu0 %1793
        %1795 = vrot.lane.b32.xlu0 %v1667, 48
        %v1796 = vpop.permute.xlu0 %1795
        %v1797 = vsel %vm679, %v1790, 0
        %v1799 = vsel %vm679, %v1792, 0
        %v1801 = vsel %vm679, %v1794, 0
        %v1803 = vsel %vm679, %v1796, 0
        %1805 = vmatpush.xpose.msra.mxu0 0.0
        %1806 = vmatpush.xpose.msra.mxu0 0.0
        %1807 = vmatpush.xpose.msra.mxu0 0.0
        %1808 = vmatpush.xpose.msra.mxu0 0.0
        %1809 = vmatpush.xpose.msra.mxu0 0.0
        %1810 = vmatpush.xpose.msra.mxu0 0.0
        %1811 = vmatpush.xpose.msra.mxu0 0.0
        %1812 = vmatpush.xpose.msra.mxu0 0.0
        %1813 = vmatpush.xpose.msra.mxu0 0.0
        %1814 = vmatpush.xpose.msra.mxu0 0.0
        %1815 = vmatpush.xpose.msra.mxu0 0.0
        %1816 = vmatpush.xpose.msra.mxu0 0.0
        %1817 = vmatpush.xpose.msra.mxu0 0.0
        %1818 = vmatpush.xpose.msra.mxu0 0.0
        %1819 = vmatpush.xpose.msra.mxu0 %v1803
        %1820 = vmatpush.xpose.msra.mxu0 %v1801
        %1821 = vmatmul.f32.gmra.mxu0 %v1797
        %v1822 = vpop.f32.mrf.mxu0
        %v1823 = vadd.f32 %v525, %v1822
        %1824 = vmatmul.f32.gmra.mxu0 %v1799
        %v1825 = vpop.f32.mrf.mxu0
        %v1826 = vadd.f32 %v526, %v1825
        %1827 = vdwg.mxu0
        %v1828 = vsel %vm679, %v1823, -inf
        %1829 = vmax.xlane.f32.xlu0 %v1828
        %v1830 = vpop.xlane.xlu0 %1829
        %v1831 = vsel %vm679, %v1826, -inf
        %1832 = vmax.xlane.f32.xlu0 %v1831
        %v1833 = vpop.xlane.xlu0 %1832
        %v1834 = vsub.f32 %v1823, %v1830
        %v1835 = vsub.f32 %v1826, %v1833
        %v1836 = vmul.f32 %v1834, 1.442695
        %v1837 = vpow.pop %v1836
        %v1838 = vmul.f32 %v1835, 1.442695
        %v1839 = vpow.pop %v1838
        %v1840 = vsel %vm679, %v1837, 0.0
        %1841 = vadd.xlane.f32.xlu0 %v1840
        %v1842 = vpop.xlane.xlu0 %1841
        %v1843 = vsel %vm679, %v1839, 0.0
        %1844 = vadd.xlane.f32.xlu0 %v1843
        %v1845 = vpop.xlane.xlu0 %1844
        %v1846 = vrcp.pop %v1842
        %v1847 = vrcp.pop %v1845
        %v1848 = vmul.f32 %v1837, %v1846
        %v1849 = vmul.f32 %v1839, %v1847
        %1852 = vrot.lane.b32.xlu0 %v1687, 112
        %v1853 = vpop.permute.xlu0 %1852
        %1854 = vrot.lane.b32.xlu0 %v1690, 112
        %v1855 = vpop.permute.xlu0 %1854
        %v1859 = vsel %vm679, %v1848, 0
        %v1862 = vsel %vm679, %v1849, 0
        %1864 = vmatpush.msra.mxu0 0.0
        %1865 = vmatpush.msra.mxu0 0.0
        %1866 = vmatpush.msra.mxu0 0.0
        %1867 = vmatpush.msra.mxu0 0.0
        %1868 = vmatpush.msra.mxu0 0.0
        %1869 = vmatpush.msra.mxu0 0.0
        %1870 = vmatpush.msra.mxu0 0.0
        %1871 = vmatpush.msra.mxu0 0.0
        %1872 = vmatpush.msra.mxu0 0.0
        %1873 = vmatpush.msra.mxu0 0.0
        %1874 = vmatpush.msra.mxu0 0.0
        %1875 = vmatpush.msra.mxu0 0.0
        %1876 = vmatpush.msra.mxu0 0.0
        %1877 = vmatpush.msra.mxu0 0.0
        %1878 = vmatpush.msra.mxu0 %v1855
        %1879 = vmatpush.msra.mxu0 %v1853
        %1880 = vmatmul.f32.gmra.mxu0 %v1859
        %v1881 = vpop.f32.mrf.mxu0
        %v1882 = vadd.f32 0.0, %v1881
        %1883 = vmatmul.f32.gmra.mxu0 %v1862
        %v1884 = vpop.f32.mrf.mxu0
        %v1885 = vadd.f32 0.0, %v1884
        %1886 = vdwg.mxu0
        %v1888 = vsel %vm679, %v1882, 0
        %v1891 = vsel %vm679, %v1885, 0
        %1893 = vmatpush.msra.mxu0 0.0
        %1894 = vmatpush.msra.mxu0 0.0
        %1895 = vmatpush.msra.mxu0 0.0
        %1896 = vmatpush.msra.mxu0 0.0
        %1897 = vmatpush.msra.mxu0 0.0
        %1898 = vmatpush.msra.mxu0 0.0
        %1899 = vmatpush.msra.mxu0 0.0
        %1900 = vmatpush.msra.mxu0 0.0
        %1901 = vmatpush.msra.mxu0 0.0
        %1902 = vmatpush.msra.mxu0 0.0
        %1903 = vmatpush.msra.mxu0 0.0
        %1904 = vmatpush.msra.mxu0 0.0
        %1905 = vmatpush.msra.mxu0 0.0
        %1906 = vmatpush.msra.mxu0 0.0
        %1907 = vmatpush.msra.mxu0 %v1696
        %1908 = vmatpush.msra.mxu0 %v1695
        %1909 = vmatmul.f32.gmra.mxu0 %v1888
        %v1910 = vpop.f32.mrf.mxu0
        %v1911 = vadd.f32 0.0, %v1910
        %1912 = vmatmul.f32.gmra.mxu0 %v1891
        %v1913 = vpop.f32.mrf.mxu0
        %v1914 = vadd.f32 0.0, %v1913
        %1915 = vdwg.mxu0
        %v1917 = vsel %vm679, %v1784, 0
        %v1920 = vsel %vm679, %v1787, 0
        %1922 = vmatpush.msra.mxu0 0.0
        %1923 = vmatpush.msra.mxu0 0.0
        %1924 = vmatpush.msra.mxu0 0.0
        %1925 = vmatpush.msra.mxu0 0.0
        %1926 = vmatpush.msra.mxu0 0.0
        %1927 = vmatpush.msra.mxu0 0.0
        %1928 = vmatpush.msra.mxu0 0.0
        %1929 = vmatpush.msra.mxu0 0.0
        %1930 = vmatpush.msra.mxu0 0.0
        %1931 = vmatpush.msra.mxu0 0.0
        %1932 = vmatpush.msra.mxu0 0.0
        %1933 = vmatpush.msra.mxu0 0.0
        %1934 = vmatpush.msra.mxu0 0.0
        %1935 = vmatpush.msra.mxu0 0.0
        %1936 = vmatpush.msra.mxu0 %v1694
        %1937 = vmatpush.msra.mxu0 %v1693
        %1938 = vmatmul.f32.gmra.mxu0 %v1917
        %v1939 = vpop.f32.mrf.mxu0
        %v1940 = vadd.f32 %v1911, %v1939
        %1941 = vmatmul.f32.gmra.mxu0 %v1920
        %v1942 = vpop.f32.mrf.mxu0
        %v1943 = vadd.f32 %v1914, %v1942
        %1944 = vdwg.mxu0
        %1945 = vrot.lane.b32.xlu0 %v1664, 96
        %v1946 = vpop.permute.xlu0 %1945
        %1947 = vrot.lane.b32.xlu0 %v1667, 96
        %v1948 = vpop.permute.xlu0 %1947
        %1949 = vrot.lane.b32.xlu0 %v1664, 32
        %v1950 = vpop.permute.xlu0 %1949
        %1951 = vrot.lane.b32.xlu0 %v1667, 32
        %v1952 = vpop.permute.xlu0 %1951
        %v1953 = vsel %vm679, %v1946, 0
        %v1955 = vsel %vm679, %v1948, 0
        %v1957 = vsel %vm679, %v1950, 0
        %v1959 = vsel %vm679, %v1952, 0
        %1961 = vmatpush.xpose.msra.mxu0 0.0
        %1962 = vmatpush.xpose.msra.mxu0 0.0
        %1963 = vmatpush.xpose.msra.mxu0 0.0
        %1964 = vmatpush.xpose.msra.mxu0 0.0
        %1965 = vmatpush.xpose.msra.mxu0 0.0
        %1966 = vmatpush.xpose.msra.mxu0 0.0
        %1967 = vmatpush.xpose.msra.mxu0 0.0
        %1968 = vmatpush.xpose.msra.mxu0 0.0
        %1969 = vmatpush.xpose.msra.mxu0 0.0
        %1970 = vmatpush.xpose.msra.mxu0 0.0
        %1971 = vmatpush.xpose.msra.mxu0 0.0
        %1972 = vmatpush.xpose.msra.mxu0 0.0
        %1973 = vmatpush.xpose.msra.mxu0 0.0
        %1974 = vmatpush.xpose.msra.mxu0 0.0
        %1975 = vmatpush.xpose.msra.mxu0 %v1959
        %1976 = vmatpush.xpose.msra.mxu0 %v1957
        %1977 = vmatmul.f32.gmra.mxu0 %v1953
        %v1978 = vpop.f32.mrf.mxu0
        %v1979 = vadd.f32 %v525, %v1978
        %1980 = vmatmul.f32.gmra.mxu0 %v1955
        %v1981 = vpop.f32.mrf.mxu0
        %v1982 = vadd.f32 %v526, %v1981
        %1983 = vdwg.mxu0
        %v1984 = vsel %vm679, %v1979, -inf
        %1985 = vmax.xlane.f32.xlu0 %v1984
        %v1986 = vpop.xlane.xlu0 %1985
        %v1987 = vsel %vm679, %v1982, -inf
        %1988 = vmax.xlane.f32.xlu0 %v1987
        %v1989 = vpop.xlane.xlu0 %1988
        %v1990 = vsub.f32 %v1979, %v1986
        %v1991 = vsub.f32 %v1982, %v1989
        %v1992 = vmul.f32 %v1990, 1.442695
        %v1993 = vpow.pop %v1992
        %v1994 = vmul.f32 %v1991, 1.442695
        %v1995 = vpow.pop %v1994
        %v1996 = vsel %vm679, %v1993, 0.0
        %1997 = vadd.xlane.f32.xlu0 %v1996
        %v1998 = vpop.xlane.xlu0 %1997
        %v1999 = vsel %vm679, %v1995, 0.0
        %2000 = vadd.xlane.f32.xlu0 %v1999
        %v2001 = vpop.xlane.xlu0 %2000
        %v2002 = vrcp.pop %v1998
        %v2003 = vrcp.pop %v2001
        %v2004 = vmul.f32 %v1993, %v2002
        %v2005 = vmul.f32 %v1995, %v2003
        %2006 = vrot.lane.b32.xlu0 %v1687, 96
        %v2007 = vpop.permute.xlu0 %2006
        %2008 = vrot.lane.b32.xlu0 %v1690, 96
        %v2009 = vpop.permute.xlu0 %2008
        %v2013 = vsel %vm679, %v2004, 0
        %v2016 = vsel %vm679, %v2005, 0
        %2018 = vmatpush.msra.mxu0 0.0
        %2019 = vmatpush.msra.mxu0 0.0
        %2020 = vmatpush.msra.mxu0 0.0
        %2021 = vmatpush.msra.mxu0 0.0
        %2022 = vmatpush.msra.mxu0 0.0
        %2023 = vmatpush.msra.mxu0 0.0
        %2024 = vmatpush.msra.mxu0 0.0
        %2025 = vmatpush.msra.mxu0 0.0
        %2026 = vmatpush.msra.mxu0 0.0
        %2027 = vmatpush.msra.mxu0 0.0
        %2028 = vmatpush.msra.mxu0 0.0
        %2029 = vmatpush.msra.mxu0 0.0
        %2030 = vmatpush.msra.mxu0 0.0
        %2031 = vmatpush.msra.mxu0 0.0
        %2032 = vmatpush.msra.mxu0 %v2009
        %2033 = vmatpush.msra.mxu0 %v2007
        %2034 = vmatmul.f32.gmra.mxu0 %v2013
        %v2035 = vpop.f32.mrf.mxu0
        %v2036 = vadd.f32 0.0, %v2035
        %2037 = vmatmul.f32.gmra.mxu0 %v2016
        %v2038 = vpop.f32.mrf.mxu0
        %v2039 = vadd.f32 0.0, %v2038
        %2040 = vdwg.mxu0
        %v2042 = vsel %vm679, %v2036, 0
        %v2045 = vsel %vm679, %v2039, 0
        %2047 = vmatpush.msra.mxu0 0.0
        %2048 = vmatpush.msra.mxu0 0.0
        %2049 = vmatpush.msra.mxu0 0.0
        %2050 = vmatpush.msra.mxu0 0.0
        %2051 = vmatpush.msra.mxu0 0.0
        %2052 = vmatpush.msra.mxu0 0.0
        %2053 = vmatpush.msra.mxu0 0.0
        %2054 = vmatpush.msra.mxu0 0.0
        %2055 = vmatpush.msra.mxu0 0.0
        %2056 = vmatpush.msra.mxu0 0.0
        %2057 = vmatpush.msra.mxu0 0.0
        %2058 = vmatpush.msra.mxu0 0.0
        %2059 = vmatpush.msra.mxu0 0.0
        %2060 = vmatpush.msra.mxu0 0.0
        %2061 = vmatpush.msra.mxu0 %v1698
        %2062 = vmatpush.msra.mxu0 %v1697
        %2063 = vmatmul.f32.gmra.mxu0 %v2042
        %v2064 = vpop.f32.mrf.mxu0
        %v2065 = vadd.f32 0.0, %v2064
        %2066 = vmatmul.f32.gmra.mxu0 %v2045
        %v2067 = vpop.f32.mrf.mxu0
        %v2068 = vadd.f32 0.0, %v2067
        %2069 = vdwg.mxu0
        %v2070 = vadd.f32 %v1940, %v2065
        %v2071 = vadd.f32 %v1943, %v2068
        %2072 = vrot.lane.b32.xlu0 %v1664, 80
        %v2073 = vpop.permute.xlu0 %2072
        %2074 = vrot.lane.b32.xlu0 %v1667, 80
        %v2075 = vpop.permute.xlu0 %2074
        %2076 = vrot.lane.b32.xlu0 %v1664, 16
        %v2077 = vpop.permute.xlu0 %2076
        %2078 = vrot.lane.b32.xlu0 %v1667, 16
        %v2079 = vpop.permute.xlu0 %2078
        %v2080 = vsel %vm679, %v2073, 0
        %v2082 = vsel %vm679, %v2075, 0
        %v2084 = vsel %vm679, %v2077, 0
        %v2086 = vsel %vm679, %v2079, 0
        %2088 = vmatpush.xpose.msra.mxu0 0.0
        %2089 = vmatpush.xpose.msra.mxu0 0.0
        %2090 = vmatpush.xpose.msra.mxu0 0.0
        %2091 = vmatpush.xpose.msra.mxu0 0.0
        %2092 = vmatpush.xpose.msra.mxu0 0.0
        %2093 = vmatpush.xpose.msra.mxu0 0.0
        %2094 = vmatpush.xpose.msra.mxu0 0.0
        %2095 = vmatpush.xpose.msra.mxu0 0.0
        %2096 = vmatpush.xpose.msra.mxu0 0.0
        %2097 = vmatpush.xpose.msra.mxu0 0.0
        %2098 = vmatpush.xpose.msra.mxu0 0.0
        %2099 = vmatpush.xpose.msra.mxu0 0.0
        %2100 = vmatpush.xpose.msra.mxu0 0.0
        %2101 = vmatpush.xpose.msra.mxu0 0.0
        %2102 = vmatpush.xpose.msra.mxu0 %v2086
        %2103 = vmatpush.xpose.msra.mxu0 %v2084
        %2104 = vmatmul.f32.gmra.mxu0 %v2080
        %v2105 = vpop.f32.mrf.mxu0
        %v2106 = vadd.f32 %v525, %v2105
        %2107 = vmatmul.f32.gmra.mxu0 %v2082
        %v2108 = vpop.f32.mrf.mxu0
        %v2109 = vadd.f32 %v526, %v2108
        %2110 = vdwg.mxu0
        %v2111 = vsel %vm679, %v2106, -inf
        %2112 = vmax.xlane.f32.xlu0 %v2111
        %v2113 = vpop.xlane.xlu0 %2112
        %v2114 = vsel %vm679, %v2109, -inf
        %2115 = vmax.xlane.f32.xlu0 %v2114
        %v2116 = vpop.xlane.xlu0 %2115
        %v2117 = vsub.f32 %v2106, %v2113
        %v2118 = vsub.f32 %v2109, %v2116
        %v2119 = vmul.f32 %v2117, 1.442695
        %v2120 = vpow.pop %v2119
        %v2121 = vmul.f32 %v2118, 1.442695
        %v2122 = vpow.pop %v2121
        %v2123 = vsel %vm679, %v2120, 0.0
        %2124 = vadd.xlane.f32.xlu0 %v2123
        %v2125 = vpop.xlane.xlu0 %2124
        %v2126 = vsel %vm679, %v2122, 0.0
        %2127 = vadd.xlane.f32.xlu0 %v2126
        %v2128 = vpop.xlane.xlu0 %2127
        %v2129 = vrcp.pop %v2125
        %v2130 = vrcp.pop %v2128
        %v2131 = vmul.f32 %v2120, %v2129
        %v2132 = vmul.f32 %v2122, %v2130
        %2133 = vrot.lane.b32.xlu0 %v1687, 80
        %v2134 = vpop.permute.xlu0 %2133
        %2135 = vrot.lane.b32.xlu0 %v1690, 80
        %v2136 = vpop.permute.xlu0 %2135
        %v2140 = vsel %vm679, %v2131, 0
        %v2143 = vsel %vm679, %v2132, 0
        %2145 = vmatpush.msra.mxu0 0.0
        %2146 = vmatpush.msra.mxu0 0.0
        %2147 = vmatpush.msra.mxu0 0.0
        %2148 = vmatpush.msra.mxu0 0.0
        %2149 = vmatpush.msra.mxu0 0.0
        %2150 = vmatpush.msra.mxu0 0.0
        %2151 = vmatpush.msra.mxu0 0.0
        %2152 = vmatpush.msra.mxu0 0.0
        %2153 = vmatpush.msra.mxu0 0.0
        %2154 = vmatpush.msra.mxu0 0.0
        %2155 = vmatpush.msra.mxu0 0.0
        %2156 = vmatpush.msra.mxu0 0.0
        %2157 = vmatpush.msra.mxu0 0.0
        %2158 = vmatpush.msra.mxu0 0.0
        %2159 = vmatpush.msra.mxu0 %v2136
        %2160 = vmatpush.msra.mxu0 %v2134
        %2161 = vmatmul.f32.gmra.mxu0 %v2140
        %v2162 = vpop.f32.mrf.mxu0
        %v2163 = vadd.f32 0.0, %v2162
        %2164 = vmatmul.f32.gmra.mxu0 %v2143
        %v2165 = vpop.f32.mrf.mxu0
        %v2166 = vadd.f32 0.0, %v2165
        %2167 = vdwg.mxu0
        %v2169 = vsel %vm679, %v2163, 0
        %v2172 = vsel %vm679, %v2166, 0
        %2174 = vmatpush.msra.mxu0 0.0
        %2175 = vmatpush.msra.mxu0 0.0
        %2176 = vmatpush.msra.mxu0 0.0
        %2177 = vmatpush.msra.mxu0 0.0
        %2178 = vmatpush.msra.mxu0 0.0
        %2179 = vmatpush.msra.mxu0 0.0
        %2180 = vmatpush.msra.mxu0 0.0
        %2181 = vmatpush.msra.mxu0 0.0
        %2182 = vmatpush.msra.mxu0 0.0
        %2183 = vmatpush.msra.mxu0 0.0
        %2184 = vmatpush.msra.mxu0 0.0
        %2185 = vmatpush.msra.mxu0 0.0
        %2186 = vmatpush.msra.mxu0 0.0
        %2187 = vmatpush.msra.mxu0 0.0
        %2188 = vmatpush.msra.mxu0 %v1700
        %2189 = vmatpush.msra.mxu0 %v1699
        %2190 = vmatmul.f32.gmra.mxu0 %v2169
        %v2191 = vpop.f32.mrf.mxu0
        %v2192 = vadd.f32 0.0, %v2191
        %2193 = vmatmul.f32.gmra.mxu0 %v2172
        %v2194 = vpop.f32.mrf.mxu0
        %v2195 = vadd.f32 0.0, %v2194
        %2196 = vdwg.mxu0
        %v2197 = vadd.f32 %v2070, %v2192
        %v2198 = vadd.f32 %v2071, %v2195
        %v2199 = vadd.f32 %v1554, %v2197
        %v2200 = vadd.f32 %v1555, %v2198
        %s2201 = scalar_lea.vmem %s7, 1
        %v2202 = vld [vmem:[%s2201] sm:$0x1]
        %v2204 = vperm.slane %v2202, 0
        %v2206 = vadd.f32 %v2199, %v2204
        %v2207 = vadd.f32 %v2200, %v2204
        %s2208 = scalar_lea.vmem %s8, 1
        %v2209 = vld [vmem:[%s2208] sm:$0x1]
        %s2210 = scalar_lea.vmem %s9, 1
        %v2211 = vld [vmem:[%s2210] sm:$0x1]
        %v2212 = vsel %vm529, %v2206, 0.0
        %2213 = vadd.xlane.f32.xlu0 %v2212
        %v2214 = vpop.xlane.xlu0 %2213
        %v2215 = vsel %vm529, %v2207, 0.0
        %2216 = vadd.xlane.f32.xlu0 %v2215
        %v2217 = vpop.xlane.xlu0 %2216
        %v2218 = vmul.f32 %v2214, %v542
        %v2219 = vmul.f32 %v2217, %v542
        %v2220 = vsub.f32 %v2206, %v2218
        %v2221 = vsub.f32 %v2207, %v2219
        %v2222 = vmul.f32 %v2220, %v2220
        %v2223 = vmul.f32 %v2221, %v2221
        %v2224 = vsel %vm529, %v2222, 0.0
        %2225 = vadd.xlane.f32.xlu0 %v2224
        %v2226 = vpop.xlane.xlu0 %2225
        %v2227 = vsel %vm529, %v2223, 0.0
        %2228 = vadd.xlane.f32.xlu0 %v2227
        %v2229 = vpop.xlane.xlu0 %2228
        %v2230 = vmul.f32 %v2226, %v542
        %v2231 = vmul.f32 %v2229, %v542
        %v2232 = vadd.f32 %v2230, 1e-05
        %v2233 = vadd.f32 %v2231, 1e-05
        %v2234 = vrsqrt.pop %v2232
        %v2235 = vmul.f32 %v2234, %v2232
        %v2236 = vmul.f32 %v2235, %v2234
        %v2237 = vmul.f32 0.5, %v2236
        %v2238 = vsub.f32 1.5, %v2237
        %v2239 = vmul.f32 %v2234, %v2238
        %vm2240 = vweird.f32 %v2232
        %vm2241 = vweird.f32 %v2234
        %vm2242 = vmor %vm2240, %vm2241
        %v2243 = vsel %vm2242, %v2234, %v2239
        %v2244 = vrsqrt.pop %v2233
        %v2245 = vmul.f32 %v2244, %v2233
        %v2246 = vmul.f32 %v2245, %v2244
        %v2247 = vmul.f32 0.5, %v2246
        %v2248 = vsub.f32 1.5, %v2247
        %v2249 = vmul.f32 %v2244, %v2248
        %vm2250 = vweird.f32 %v2233
        %vm2251 = vweird.f32 %v2244
        %vm2252 = vmor %vm2250, %vm2251
        %v2253 = vsel %vm2252, %v2244, %v2249
        %v2254 = vmul.f32 %v2220, %v2243
        %v2255 = vmul.f32 %v2221, %v2253
        %v2257 = vperm.slane %v2209, 0
        %v2259 = vmul.f32 %v2254, %v2257
        %v2260 = vmul.f32 %v2255, %v2257
        %v2262 = vperm.slane %v2211, 0
        %v2264 = vadd.f32 %v2259, %v2262
        %v2265 = vadd.f32 %v2260, %v2262
        %s2266 = scalar_lea.vmem %s10, 128
        %v2267 = vld [vmem:[%s2266] sm:$0xff]
        %v2268 = vld [vmem:[%s2266 + $0x8] sm:$0xff]
        %v2269 = vld [vmem:[%s2266 + $0x10] sm:$0xff]
        %v2270 = vld [vmem:[%s2266 + $0x18] sm:$0xff]
        %v2271 = vld [vmem:[%s2266 + $0x20] sm:$0xff]
        %v2272 = vld [vmem:[%s2266 + $0x28] sm:$0xff]
        %v2273 = vld [vmem:[%s2266 + $0x30] sm:$0xff]
        %v2274 = vld [vmem:[%s2266 + $0x38] sm:$0xff]
        %v2275 = vld [vmem:[%s2266 + $0x40] sm:$0xff]
        %v2276 = vld [vmem:[%s2266 + $0x48] sm:$0xff]
        %v2277 = vld [vmem:[%s2266 + $0x50] sm:$0xff]
        %v2278 = vld [vmem:[%s2266 + $0x58] sm:$0xff]
        %v2279 = vld [vmem:[%s2266 + $0x60] sm:$0xff]
        %v2280 = vld [vmem:[%s2266 + $0x68] sm:$0xff]
        %v2281 = vld [vmem:[%s2266 + $0x70] sm:$0xff]
        %v2282 = vld [vmem:[%s2266 + $0x78] sm:$0xff]
        %s2283 = scalar_lea.vmem %s11, 2
        %v2284 = vld [vmem:[%s2283] sm:$0x3]
        %v2286 = vperm.slane %v2284, 0
        %v2287 = vperm.slane %v2284, 1
        %v2291 = vsel %vm529, %v2264, 0
        %v2294 = vsel %vm529, %v2265, 0
        %2296 = vmatpush.msra.mxu0 0.0
        %2297 = vmatpush.msra.mxu0 0.0
        %2298 = vmatpush.msra.mxu0 0.0
        %2299 = vmatpush.msra.mxu0 0.0
        %2300 = vmatpush.msra.mxu0 0.0
        %2301 = vmatpush.msra.mxu0 0.0
        %2302 = vmatpush.msra.mxu0 0.0
        %2303 = vmatpush.msra.mxu0 0.0
        %2304 = vmatpush.msra.mxu0 %v2281
        %2305 = vmatpush.msra.mxu0 %v2279
        %2306 = vmatpush.msra.mxu0 %v2277
        %2307 = vmatpush.msra.mxu0 %v2275
        %2308 = vmatpush.msra.mxu0 %v2273
        %2309 = vmatpush.msra.mxu0 %v2271
        %2310 = vmatpush.msra.mxu0 %v2269
        %2311 = vmatpush.msra.mxu0 %v2267
        %2312 = vmatmul.f32.gmra.mxu0 %v2291
        %v2313 = vpop.f32.mrf.mxu0
        %v2314 = vadd.f32 %v2286, %v2313
        %2315 = vmatmul.f32.gmra.mxu0 %v2294
        %v2316 = vpop.f32.mrf.mxu0
        %v2317 = vadd.f32 %v2286, %v2316
        %2318 = vdwg.mxu0
        %2319 = vmatpush.msra.mxu0 0.0
        %2320 = vmatpush.msra.mxu0 0.0
        %2321 = vmatpush.msra.mxu0 0.0
        %2322 = vmatpush.msra.mxu0 0.0
        %2323 = vmatpush.msra.mxu0 0.0
        %2324 = vmatpush.msra.mxu0 0.0
        %2325 = vmatpush.msra.mxu0 0.0
        %2326 = vmatpush.msra.mxu0 0.0
        %2327 = vmatpush.msra.mxu0 %v2282
        %2328 = vmatpush.msra.mxu0 %v2280
        %2329 = vmatpush.msra.mxu0 %v2278
        %2330 = vmatpush.msra.mxu0 %v2276
        %2331 = vmatpush.msra.mxu0 %v2274
        %2332 = vmatpush.msra.mxu0 %v2272
        %2333 = vmatpush.msra.mxu0 %v2270
        %2334 = vmatpush.msra.mxu0 %v2268
        %2335 = vmatmul.f32.gmra.mxu0 %v2291
        %v2336 = vpop.f32.mrf.mxu0
        %v2337 = vadd.f32 %v2287, %v2336
        %2338 = vmatmul.f32.gmra.mxu0 %v2294
        %v2339 = vpop.f32.mrf.mxu0
        %v2340 = vadd.f32 %v2287, %v2339
        %2341 = vdwg.mxu0
        %v2342 = vmul.f32 %v2314, 0.5
        %v2343 = vmul.f32 %v2337, 0.5
        %v2344 = vmul.f32 %v2317, 0.5
        %v2345 = vmul.f32 %v2340, 0.5
        %v2346 = vmul.f32 %v2314, 0.70710677
        %v2347 = vmul.f32 %v2337, 0.70710677
        %v2348 = vmul.f32 %v2317, 0.70710677
        %v2349 = vmul.f32 %v2340, 0.70710677
        %v2350 = vand.u32 2147483647, %v2346
        %v2351 = vand.u32 2147483647, %v2347
        %v2352 = vand.u32 2147483647, %v2348
        %v2353 = vand.u32 2147483647, %v2349
        %v2354 = vmul.f32 %v2350, 0.3275911
        %v2355 = vmul.f32 %v2351, 0.3275911
        %v2356 = vmul.f32 %v2352, 0.3275911
        %v2357 = vmul.f32 %v2353, 0.3275911
        %v2358 = vadd.f32 %v2354, 1.0
        %v2359 = vadd.f32 %v2355, 1.0
        %v2360 = vadd.f32 %v2356, 1.0
        %v2361 = vadd.f32 %v2357, 1.0
        %v2362 = vrcp.pop %v2358
        %v2363 = vmul.f32 %v2358, %v2362
        %v2364 = vsub.f32 1.0, %v2363
        %v2365 = vmul.f32 %v2362, %v2364
        %v2366 = vadd.f32 %v2362, %v2365
        %vm2367 = vweird.f32 %v2358
        %vm2368 = vweird.f32 %v2362
        %vm2369 = vmor %vm2367, %vm2368
        %v2370 = vsel %vm2369, %v2362, %v2366
        %v2371 = vand.u32 2147483647, %v2358
        %vm2372 = vcmp.eq.f32.partialorder %v2371, 8.507059e+37
        %v2373 = vand.u32 %v2358, 2147483648
        %v2374 = vor.u32 1.1754944e-38, %v2373
        %v2375 = vsel %vm2372, %v2374, %v2370
        %v2376 = vmul.f32 1.0, %v2375
        %v2377 = vrcp.pop %v2359
        %v2378 = vmul.f32 %v2359, %v2377
        %v2379 = vsub.f32 1.0, %v2378
        %v2380 = vmul.f32 %v2377, %v2379
        %v2381 = vadd.f32 %v2377, %v2380
        %vm2382 = vweird.f32 %v2359
        %vm2383 = vweird.f32 %v2377
        %vm2384 = vmor %vm2382, %vm2383
        %v2385 = vsel %vm2384, %v2377, %v2381
        %v2386 = vand.u32 2147483647, %v2359
        %vm2387 = vcmp.eq.f32.partialorder %v2386, 8.507059e+37
        %v2388 = vand.u32 %v2359, 2147483648
        %v2389 = vor.u32 1.1754944e-38, %v2388
        %v2390 = vsel %vm2387, %v2389, %v2385
        %v2391 = vmul.f32 1.0, %v2390
        %v2392 = vrcp.pop %v2360
        %v2393 = vmul.f32 %v2360, %v2392
        %v2394 = vsub.f32 1.0, %v2393
        %v2395 = vmul.f32 %v2392, %v2394
        %v2396 = vadd.f32 %v2392, %v2395
        %vm2397 = vweird.f32 %v2360
        %vm2398 = vweird.f32 %v2392
        %vm2399 = vmor %vm2397, %vm2398
        %v2400 = vsel %vm2399, %v2392, %v2396
        %v2401 = vand.u32 2147483647, %v2360
        %vm2402 = vcmp.eq.f32.partialorder %v2401, 8.507059e+37
        %v2403 = vand.u32 %v2360, 2147483648
        %v2404 = vor.u32 1.1754944e-38, %v2403
        %v2405 = vsel %vm2402, %v2404, %v2400
        %v2406 = vmul.f32 1.0, %v2405
        %v2407 = vrcp.pop %v2361
        %v2408 = vmul.f32 %v2361, %v2407
        %v2409 = vsub.f32 1.0, %v2408
        %v2410 = vmul.f32 %v2407, %v2409
        %v2411 = vadd.f32 %v2407, %v2410
        %vm2412 = vweird.f32 %v2361
        %vm2413 = vweird.f32 %v2407
        %vm2414 = vmor %vm2412, %vm2413
        %v2415 = vsel %vm2414, %v2407, %v2411
        %v2416 = vand.u32 2147483647, %v2361
        %vm2417 = vcmp.eq.f32.partialorder %v2416, 8.507059e+37
        %v2418 = vand.u32 %v2361, 2147483648
        %v2419 = vor.u32 1.1754944e-38, %v2418
        %v2420 = vsel %vm2417, %v2419, %v2415
        %v2421 = vmul.f32 1.0, %v2420
        %v2422 = vmul.f32 %v2376, 1.0614054
        %v2423 = vmul.f32 %v2391, 1.0614054
        %v2424 = vmul.f32 %v2406, 1.0614054
        %v2425 = vmul.f32 %v2421, 1.0614054
        %v2426 = vadd.f32 %v2422, -1.4531521
        %v2427 = vadd.f32 %v2423, -1.4531521
        %v2428 = vadd.f32 %v2424, -1.4531521
        %v2429 = vadd.f32 %v2425, -1.4531521
        %v2430 = vmul.f32 %v2426, %v2376
        %v2431 = vmul.f32 %v2427, %v2391
        %v2432 = vmul.f32 %v2428, %v2406
        %v2433 = vmul.f32 %v2429, %v2421
        %v2434 = vadd.f32 %v2430, 1.4214138
        %v2435 = vadd.f32 %v2431, 1.4214138
        %v2436 = vadd.f32 %v2432, 1.4214138
        %v2437 = vadd.f32 %v2433, 1.4214138
        %v2438 = vmul.f32 %v2434, %v2376
        %v2439 = vmul.f32 %v2435, %v2391
        %v2440 = vmul.f32 %v2436, %v2406
        %v2441 = vmul.f32 %v2437, %v2421
        %v2442 = vadd.f32 %v2438, -0.28449672
        %v2443 = vadd.f32 %v2439, -0.28449672
        %v2444 = vadd.f32 %v2440, -0.28449672
        %v2445 = vadd.f32 %v2441, -0.28449672
        %v2446 = vmul.f32 %v2442, %v2376
        %v2447 = vmul.f32 %v2443, %v2391
        %v2448 = vmul.f32 %v2444, %v2406
        %v2449 = vmul.f32 %v2445, %v2421
        %v2450 = vadd.f32 %v2446, 0.2548296
        %v2451 = vadd.f32 %v2447, 0.2548296
        %v2452 = vadd.f32 %v2448, 0.2548296
        %v2453 = vadd.f32 %v2449, 0.2548296
        %v2454 = vmul.f32 %v2450, %v2376
        %v2455 = vmul.f32 %v2451, %v2391
        %v2456 = vmul.f32 %v2452, %v2406
        %v2457 = vmul.f32 %v2453, %v2421
        %v2458 = vsub.f32 0.0, %v2350
        %v2459 = vsub.f32 0.0, %v2351
        %v2460 = vsub.f32 0.0, %v2352
        %v2461 = vsub.f32 0.0, %v2353
        %v2462 = vmul.f32 %v2458, %v2350
        %v2463 = vmul.f32 %v2459, %v2351
        %v2464 = vmul.f32 %v2460, %v2352
        %v2465 = vmul.f32 %v2461, %v2353
        %v2466 = vmul.f32 %v2462, 1.442695
        %v2467 = vpow.pop %v2466
        %v2468 = vmul.f32 %v2463, 1.442695
        %v2469 = vpow.pop %v2468
        %v2470 = vmul.f32 %v2464, 1.442695
        %v2471 = vpow.pop %v2470
        %v2472 = vmul.f32 %v2465, 1.442695
        %v2473 = vpow.pop %v2472
        %v2474 = vmul.f32 %v2454, %v2467
        %v2475 = vmul.f32 %v2455, %v2469
        %v2476 = vmul.f32 %v2456, %v2471
        %v2477 = vmul.f32 %v2457, %v2473
        %v2478 = vsub.f32 1.0, %v2474
        %v2479 = vsub.f32 1.0, %v2475
        %v2480 = vsub.f32 1.0, %v2476
        %v2481 = vsub.f32 1.0, %v2477
        %vm2482 = vcmp.ge.f32.partialorder %v2346, 0.0
        %vm2483 = vcmp.ge.f32.partialorder %v2347, 0.0
        %vm2484 = vcmp.ge.f32.partialorder %v2348, 0.0
        %vm2485 = vcmp.ge.f32.partialorder %v2349, 0.0
        %v2486 = vsub.f32 0.0, %v2478
        %v2487 = vsub.f32 0.0, %v2479
        %v2488 = vsub.f32 0.0, %v2480
        %v2489 = vsub.f32 0.0, %v2481
        %v2490 = vsel %vm2482, %v2478, %v2486
        %v2491 = vsel %vm2483, %v2479, %v2487
        %v2492 = vsel %vm2484, %v2480, %v2488
        %v2493 = vsel %vm2485, %v2481, %v2489
        %v2494 = vadd.f32 %v2490, 1.0
        %v2495 = vadd.f32 %v2491, 1.0
        %v2496 = vadd.f32 %v2492, 1.0
        %v2497 = vadd.f32 %v2493, 1.0
        %v2498 = vmul.f32 %v2342, %v2494
        %v2499 = vmul.f32 %v2343, %v2495
        %v2500 = vmul.f32 %v2344, %v2496
        %v2501 = vmul.f32 %v2345, %v2497
        %s2502 = scalar_lea.vmem %s12, 256
        %v2503 = vld [vmem:[%s2502] sm:$0xff]
        %v2504 = vld [vmem:[%s2502 + $0x8] sm:$0xff]
        %v2505 = vld [vmem:[%s2502 + $0x10] sm:$0xff]
        %v2506 = vld [vmem:[%s2502 + $0x18] sm:$0xff]
        %v2507 = vld [vmem:[%s2502 + $0x20] sm:$0xff]
        %v2508 = vld [vmem:[%s2502 + $0x28] sm:$0xff]
        %v2509 = vld [vmem:[%s2502 + $0x30] sm:$0xff]
        %v2510 = vld [vmem:[%s2502 + $0x38] sm:$0xff]
        %v2511 = vld [vmem:[%s2502 + $0x40] sm:$0xff]
        %v2512 = vld [vmem:[%s2502 + $0x48] sm:$0xff]
        %v2513 = vld [vmem:[%s2502 + $0x50] sm:$0xff]
        %v2514 = vld [vmem:[%s2502 + $0x58] sm:$0xff]
        %v2515 = vld [vmem:[%s2502 + $0x60] sm:$0xff]
        %v2516 = vld [vmem:[%s2502 + $0x68] sm:$0xff]
        %v2517 = vld [vmem:[%s2502 + $0x70] sm:$0xff]
        %v2518 = vld [vmem:[%s2502 + $0x78] sm:$0xff]
        %v2519 = vld [vmem:[%s2502 + $0x80] sm:$0xff]
        %v2520 = vld [vmem:[%s2502 + $0x88] sm:$0xff]
        %v2521 = vld [vmem:[%s2502 + $0x90] sm:$0xff]
        %v2522 = vld [vmem:[%s2502 + $0x98] sm:$0xff]
        %v2523 = vld [vmem:[%s2502 + $0xa0] sm:$0xff]
        %v2524 = vld [vmem:[%s2502 + $0xa8] sm:$0xff]
        %v2525 = vld [vmem:[%s2502 + $0xb0] sm:$0xff]
        %v2526 = vld [vmem:[%s2502 + $0xb8] sm:$0xff]
        %v2527 = vld [vmem:[%s2502 + $0xc0] sm:$0xff]
        %v2528 = vld [vmem:[%s2502 + $0xc8] sm:$0xff]
        %v2529 = vld [vmem:[%s2502 + $0xd0] sm:$0xff]
        %v2530 = vld [vmem:[%s2502 + $0xd8] sm:$0xff]
        %v2531 = vld [vmem:[%s2502 + $0xe0] sm:$0xff]
        %v2532 = vld [vmem:[%s2502 + $0xe8] sm:$0xff]
        %v2533 = vld [vmem:[%s2502 + $0xf0] sm:$0xff]
        %v2534 = vld [vmem:[%s2502 + $0xf8] sm:$0xff]
        %2535 = vmatpush.msra.mxu0 %v2518
        %2536 = vmatpush.msra.mxu0 %v2517
        %2537 = vmatpush.msra.mxu0 %v2516
        %2538 = vmatpush.msra.mxu0 %v2515
        %2539 = vmatpush.msra.mxu0 %v2514
        %2540 = vmatpush.msra.mxu0 %v2513
        %2541 = vmatpush.msra.mxu0 %v2512
        %2542 = vmatpush.msra.mxu0 %v2511
        %2543 = vmatpush.msra.mxu0 %v2510
        %2544 = vmatpush.msra.mxu0 %v2509
        %2545 = vmatpush.msra.mxu0 %v2508
        %2546 = vmatpush.msra.mxu0 %v2507
        %2547 = vmatpush.msra.mxu0 %v2506
        %2548 = vmatpush.msra.mxu0 %v2505
        %2549 = vmatpush.msra.mxu0 %v2504
        %2550 = vmatpush.msra.mxu0 %v2503
        %2551 = vmatmul.f32.gmra.mxu0 %v2498
        %v2552 = vpop.f32.mrf.mxu0
        %v2553 = vadd.f32 0.0, %v2552
        %2554 = vmatmul.f32.gmra.mxu0 %v2500
        %v2555 = vpop.f32.mrf.mxu0
        %v2556 = vadd.f32 0.0, %v2555
        %2557 = vdwg.mxu0
        %2558 = vmatpush.msra.mxu0 %v2534
        %2559 = vmatpush.msra.mxu0 %v2533
        %2560 = vmatpush.msra.mxu0 %v2532
        %2561 = vmatpush.msra.mxu0 %v2531
        %2562 = vmatpush.msra.mxu0 %v2530
        %2563 = vmatpush.msra.mxu0 %v2529
        %2564 = vmatpush.msra.mxu0 %v2528
        %2565 = vmatpush.msra.mxu0 %v2527
        %2566 = vmatpush.msra.mxu0 %v2526
        %2567 = vmatpush.msra.mxu0 %v2525
        %2568 = vmatpush.msra.mxu0 %v2524
        %2569 = vmatpush.msra.mxu0 %v2523
        %2570 = vmatpush.msra.mxu0 %v2522
        %2571 = vmatpush.msra.mxu0 %v2521
        %2572 = vmatpush.msra.mxu0 %v2520
        %2573 = vmatpush.msra.mxu0 %v2519
        %2574 = vmatmul.f32.gmra.mxu0 %v2499
        %v2575 = vpop.f32.mrf.mxu0
        %v2576 = vadd.f32 %v2553, %v2575
        %2577 = vmatmul.f32.gmra.mxu0 %v2501
        %v2578 = vpop.f32.mrf.mxu0
        %v2579 = vadd.f32 %v2556, %v2578
        %2580 = vdwg.mxu0
        %v2581 = vadd.f32 %v2206, %v2576
        %v2582 = vadd.f32 %v2207, %v2579
        %s2583 = scalar_lea.vmem [#allocation6], 1
        %v2584 = vld [vmem:[%s2583] sm:$0x1]
        %v2586 = vperm.slane %v2584, 0
        %v2588 = vadd.f32 %v2581, %v2586
        %v2589 = vadd.f32 %v2582, %v2586
        %2592 = vrot.lane.b32.xlu0 %v2588, 64
        %v2593 = vpop.permute.xlu0 %2592
        %2594 = vrot.lane.b32.xlu0 %v2589, 64
        %v2595 = vpop.permute.xlu0 %2594
        %vm2598 = vcmask 1048064
        %2599 = vst.msk [vmem:[%s521] sm:$0xff] %vm2598, %v2593
        %2600 = vst.msk [vmem:[%s521 + $0x18] sm:$0xff] %vm2598, %v2595
        %s2601 = scalar_lea.vmem %s2, 2
        %v2602 = vld [vmem:[%s2601] sm:$0x1]
        %s2603 = scalar_lea.vmem [#allocation4], 2
        %v2604 = vld [vmem:[%s2603] sm:$0x1]
        %v2605 = vsel %vm529, %v2588, 0.0
        %2606 = vadd.xlane.f32.xlu0 %v2605
        %v2607 = vpop.xlane.xlu0 %2606
        %v2608 = vsel %vm529, %v2589, 0.0
        %2609 = vadd.xlane.f32.xlu0 %v2608
        %v2610 = vpop.xlane.xlu0 %2609
        %v2611 = vmul.f32 %v2607, %v542
        %v2612 = vmul.f32 %v2610, %v542
        %v2613 = vsub.f32 %v2588, %v2611
        %v2614 = vsub.f32 %v2589, %v2612
        %v2615 = vmul.f32 %v2613, %v2613
        %v2616 = vmul.f32 %v2614, %v2614
        %v2617 = vsel %vm529, %v2615, 0.0
        %2618 = vadd.xlane.f32.xlu0 %v2617
        %v2619 = vpop.xlane.xlu0 %2618
        %v2620 = vsel %vm529, %v2616, 0.0
        %2621 = vadd.xlane.f32.xlu0 %v2620
        %v2622 = vpop.xlane.xlu0 %2621
        %v2623 = vmul.f32 %v2619, %v542
        %v2624 = vmul.f32 %v2622, %v542
        %v2625 = vadd.f32 %v2623, 1e-05
        %v2626 = vadd.f32 %v2624, 1e-05
        %v2627 = vrsqrt.pop %v2625
        %v2628 = vmul.f32 %v2627, %v2625
        %v2629 = vmul.f32 %v2628, %v2627
        %v2630 = vmul.f32 0.5, %v2629
        %v2631 = vsub.f32 1.5, %v2630
        %v2632 = vmul.f32 %v2627, %v2631
        %vm2633 = vweird.f32 %v2625
        %vm2634 = vweird.f32 %v2627
        %vm2635 = vmor %vm2633, %vm2634
        %v2636 = vsel %vm2635, %v2627, %v2632
        %v2637 = vrsqrt.pop %v2626
        %v2638 = vmul.f32 %v2637, %v2626
        %v2639 = vmul.f32 %v2638, %v2637
        %v2640 = vmul.f32 0.5, %v2639
        %v2641 = vsub.f32 1.5, %v2640
        %v2642 = vmul.f32 %v2637, %v2641
        %vm2643 = vweird.f32 %v2626
        %vm2644 = vweird.f32 %v2637
        %vm2645 = vmor %vm2643, %vm2644
        %v2646 = vsel %vm2645, %v2637, %v2642
        %v2647 = vmul.f32 %v2613, %v2636
        %v2648 = vmul.f32 %v2614, %v2646
        %v2650 = vperm.slane %v2602, 0
        %v2652 = vmul.f32 %v2647, %v2650
        %v2653 = vmul.f32 %v2648, %v2650
        %v2655 = vperm.slane %v2604, 0
        %v2657 = vadd.f32 %v2652, %v2655
        %v2658 = vadd.f32 %v2653, %v2655
        %s2659 = scalar_lea.vmem %s4, 256
        %v2660 = vld [vmem:[%s2659] sm:$0xff]
        %v2661 = vld [vmem:[%s2659 + $0x8] sm:$0xff]
        %v2662 = vld [vmem:[%s2659 + $0x10] sm:$0xff]
        %v2663 = vld [vmem:[%s2659 + $0x18] sm:$0xff]
        %v2664 = vld [vmem:[%s2659 + $0x20] sm:$0xff]
        %v2665 = vld [vmem:[%s2659 + $0x28] sm:$0xff]
        %v2666 = vld [vmem:[%s2659 + $0x30] sm:$0xff]
        %v2667 = vld [vmem:[%s2659 + $0x38] sm:$0xff]
        %v2668 = vld [vmem:[%s2659 + $0x40] sm:$0xff]
        %v2669 = vld [vmem:[%s2659 + $0x48] sm:$0xff]
        %v2670 = vld [vmem:[%s2659 + $0x50] sm:$0xff]
        %v2671 = vld [vmem:[%s2659 + $0x58] sm:$0xff]
        %v2672 = vld [vmem:[%s2659 + $0x60] sm:$0xff]
        %v2673 = vld [vmem:[%s2659 + $0x68] sm:$0xff]
        %v2674 = vld [vmem:[%s2659 + $0x70] sm:$0xff]
        %v2675 = vld [vmem:[%s2659 + $0x78] sm:$0xff]
        %s2676 = scalar_lea.vmem %s5, 4
        %v2677 = vld [vmem:[%s2676] sm:$0x3]
        %v2679 = vperm.slane %v2677, 0
        %v2680 = vperm.slane %v2677, 1
        %v2684 = vsel %vm529, %v2657, 0
        %v2687 = vsel %vm529, %v2658, 0
        %2689 = vmatpush.msra.mxu0 0.0
        %2690 = vmatpush.msra.mxu0 0.0
        %2691 = vmatpush.msra.mxu0 0.0
        %2692 = vmatpush.msra.mxu0 0.0
        %2693 = vmatpush.msra.mxu0 0.0
        %2694 = vmatpush.msra.mxu0 0.0
        %2695 = vmatpush.msra.mxu0 0.0
        %2696 = vmatpush.msra.mxu0 0.0
        %2697 = vmatpush.msra.mxu0 %v2674
        %2698 = vmatpush.msra.mxu0 %v2672
        %2699 = vmatpush.msra.mxu0 %v2670
        %2700 = vmatpush.msra.mxu0 %v2668
        %2701 = vmatpush.msra.mxu0 %v2666
        %2702 = vmatpush.msra.mxu0 %v2664
        %2703 = vmatpush.msra.mxu0 %v2662
        %2704 = vmatpush.msra.mxu0 %v2660
        %2705 = vmatmul.f32.gmra.mxu0 %v2684
        %v2706 = vpop.f32.mrf.mxu0
        %v2707 = vadd.f32 %v2679, %v2706
        %2708 = vmatmul.f32.gmra.mxu0 %v2687
        %v2709 = vpop.f32.mrf.mxu0
        %v2710 = vadd.f32 %v2679, %v2709
        %2711 = vdwg.mxu0
        %2712 = vmatpush.msra.mxu0 0.0
        %2713 = vmatpush.msra.mxu0 0.0
        %2714 = vmatpush.msra.mxu0 0.0
        %2715 = vmatpush.msra.mxu0 0.0
        %2716 = vmatpush.msra.mxu0 0.0
        %2717 = vmatpush.msra.mxu0 0.0
        %2718 = vmatpush.msra.mxu0 0.0
        %2719 = vmatpush.msra.mxu0 0.0
        %2720 = vmatpush.msra.mxu0 %v2675
        %2721 = vmatpush.msra.mxu0 %v2673
        %2722 = vmatpush.msra.mxu0 %v2671
        %2723 = vmatpush.msra.mxu0 %v2669
        %2724 = vmatpush.msra.mxu0 %v2667
        %2725 = vmatpush.msra.mxu0 %v2665
        %2726 = vmatpush.msra.mxu0 %v2663
        %2727 = vmatpush.msra.mxu0 %v2661
        %2728 = vmatmul.f32.gmra.mxu0 %v2684
        %v2729 = vpop.f32.mrf.mxu0
        %v2730 = vadd.f32 %v2680, %v2729
        %2731 = vmatmul.f32.gmra.mxu0 %v2687
        %v2732 = vpop.f32.mrf.mxu0
        %v2733 = vadd.f32 %v2680, %v2732
        %2734 = vdwg.mxu0
        %s2735 = scalar_lea.vmem %s6, 128
        %v2736 = vld [vmem:[%s2735] sm:$0xff]
        %v2737 = vld [vmem:[%s2735 + $0x8] sm:$0xff]
        %v2738 = vld [vmem:[%s2735 + $0x10] sm:$0xff]
        %v2739 = vld [vmem:[%s2735 + $0x18] sm:$0xff]
        %v2740 = vld [vmem:[%s2735 + $0x20] sm:$0xff]
        %v2741 = vld [vmem:[%s2735 + $0x28] sm:$0xff]
        %v2742 = vld [vmem:[%s2735 + $0x30] sm:$0xff]
        %v2743 = vld [vmem:[%s2735 + $0x38] sm:$0xff]
        %2746 = vrot.lane.b32.xlu0 %v2707, 64
        %v2747 = vpop.permute.xlu0 %2746
        %2748 = vrot.lane.b32.xlu0 %v2710, 64
        %v2749 = vpop.permute.xlu0 %2748
        %v2750 = vsel %vm679, %v2707, 0
        %v2752 = vsel %vm679, %v2710, 0
        %v2754 = vsel %vm679, %v2747, 0
        %v2756 = vsel %vm679, %v2749, 0
        %2758 = vmatpush.xpose.msra.mxu0 0.0
        %2759 = vmatpush.xpose.msra.mxu0 0.0
        %2760 = vmatpush.xpose.msra.mxu0 0.0
        %2761 = vmatpush.xpose.msra.mxu0 0.0
        %2762 = vmatpush.xpose.msra.mxu0 0.0
        %2763 = vmatpush.xpose.msra.mxu0 0.0
        %2764 = vmatpush.xpose.msra.mxu0 0.0
        %2765 = vmatpush.xpose.msra.mxu0 0.0
        %2766 = vmatpush.xpose.msra.mxu0 0.0
        %2767 = vmatpush.xpose.msra.mxu0 0.0
        %2768 = vmatpush.xpose.msra.mxu0 0.0
        %2769 = vmatpush.xpose.msra.mxu0 0.0
        %2770 = vmatpush.xpose.msra.mxu0 0.0
        %2771 = vmatpush.xpose.msra.mxu0 0.0
        %2772 = vmatpush.xpose.msra.mxu0 %v2756
        %2773 = vmatpush.xpose.msra.mxu0 %v2754
        %2774 = vmatmul.f32.gmra.mxu0 %v2750
        %v2775 = vpop.f32.mrf.mxu0
        %v2776 = vadd.f32 %v525, %v2775
        %2777 = vmatmul.f32.gmra.mxu0 %v2752
        %v2778 = vpop.f32.mrf.mxu0
        %v2779 = vadd.f32 %v526, %v2778
        %2780 = vdwg.mxu0
        %v2781 = vsel %vm679, %v2776, -inf
        %2782 = vmax.xlane.f32.xlu0 %v2781
        %v2783 = vpop.xlane.xlu0 %2782
        %v2784 = vsel %vm679, %v2779, -inf
        %2785 = vmax.xlane.f32.xlu0 %v2784
        %v2786 = vpop.xlane.xlu0 %2785
        %v2787 = vsub.f32 %v2776, %v2783
        %v2788 = vsub.f32 %v2779, %v2786
        %v2789 = vmul.f32 %v2787, 1.442695
        %v2790 = vpow.pop %v2789
        %v2791 = vmul.f32 %v2788, 1.442695
        %v2792 = vpow.pop %v2791
        %v2793 = vsel %vm679, %v2790, 0.0
        %2794 = vadd.xlane.f32.xlu0 %v2793
        %v2795 = vpop.xlane.xlu0 %2794
        %v2796 = vsel %vm679, %v2792, 0.0
        %2797 = vadd.xlane.f32.xlu0 %v2796
        %v2798 = vpop.xlane.xlu0 %2797
        %v2799 = vrcp.pop %v2795
        %v2800 = vrcp.pop %v2798
        %v2801 = vmul.f32 %v2790, %v2799
        %v2802 = vmul.f32 %v2792, %v2800
        %v2804 = vsel %vm679, %v2801, 0
        %v2807 = vsel %vm679, %v2802, 0
        %2809 = vmatpush.msra.mxu0 0.0
        %2810 = vmatpush.msra.mxu0 0.0
        %2811 = vmatpush.msra.mxu0 0.0
        %2812 = vmatpush.msra.mxu0 0.0
        %2813 = vmatpush.msra.mxu0 0.0
        %2814 = vmatpush.msra.mxu0 0.0
        %2815 = vmatpush.msra.mxu0 0.0
        %2816 = vmatpush.msra.mxu0 0.0
        %2817 = vmatpush.msra.mxu0 0.0
        %2818 = vmatpush.msra.mxu0 0.0
        %2819 = vmatpush.msra.mxu0 0.0
        %2820 = vmatpush.msra.mxu0 0.0
        %2821 = vmatpush.msra.mxu0 0.0
        %2822 = vmatpush.msra.mxu0 0.0
        %2823 = vmatpush.msra.mxu0 %v2733
        %2824 = vmatpush.msra.mxu0 %v2730
        %2825 = vmatmul.f32.gmra.mxu0 %v2804
        %v2826 = vpop.f32.mrf.mxu0
        %v2827 = vadd.f32 0.0, %v2826
        %2828 = vmatmul.f32.gmra.mxu0 %v2807
        %v2829 = vpop.f32.mrf.mxu0
        %v2830 = vadd.f32 0.0, %v2829
        %2831 = vdwg.mxu0
        %2832 = vrot.lane.b32.xlu0 %v2707, 112
        %v2833 = vpop.permute.xlu0 %2832
        %2834 = vrot.lane.b32.xlu0 %v2710, 112
        %v2835 = vpop.permute.xlu0 %2834
        %2836 = vrot.lane.b32.xlu0 %v2707, 48
        %v2837 = vpop.permute.xlu0 %2836
        %2838 = vrot.lane.b32.xlu0 %v2710, 48
        %v2839 = vpop.permute.xlu0 %2838
        %v2840 = vsel %vm679, %v2833, 0
        %v2842 = vsel %vm679, %v2835, 0
        %v2844 = vsel %vm679, %v2837, 0
        %v2846 = vsel %vm679, %v2839, 0
        %2848 = vmatpush.xpose.msra.mxu0 0.0
        %2849 = vmatpush.xpose.msra.mxu0 0.0
        %2850 = vmatpush.xpose.msra.mxu0 0.0
        %2851 = vmatpush.xpose.msra.mxu0 0.0
        %2852 = vmatpush.xpose.msra.mxu0 0.0
        %2853 = vmatpush.xpose.msra.mxu0 0.0
        %2854 = vmatpush.xpose.msra.mxu0 0.0
        %2855 = vmatpush.xpose.msra.mxu0 0.0
        %2856 = vmatpush.xpose.msra.mxu0 0.0
        %2857 = vmatpush.xpose.msra.mxu0 0.0
        %2858 = vmatpush.xpose.msra.mxu0 0.0
        %2859 = vmatpush.xpose.msra.mxu0 0.0
        %2860 = vmatpush.xpose.msra.mxu0 0.0
        %2861 = vmatpush.xpose.msra.mxu0 0.0
        %2862 = vmatpush.xpose.msra.mxu0 %v2846
        %2863 = vmatpush.xpose.msra.mxu0 %v2844
        %2864 = vmatmul.f32.gmra.mxu0 %v2840
        %v2865 = vpop.f32.mrf.mxu0
        %v2866 = vadd.f32 %v525, %v2865
        %2867 = vmatmul.f32.gmra.mxu0 %v2842
        %v2868 = vpop.f32.mrf.mxu0
        %v2869 = vadd.f32 %v526, %v2868
        %2870 = vdwg.mxu0
        %v2871 = vsel %vm679, %v2866, -inf
        %2872 = vmax.xlane.f32.xlu0 %v2871
        %v2873 = vpop.xlane.xlu0 %2872
        %v2874 = vsel %vm679, %v2869, -inf
        %2875 = vmax.xlane.f32.xlu0 %v2874
        %v2876 = vpop.xlane.xlu0 %2875
        %v2877 = vsub.f32 %v2866, %v2873
        %v2878 = vsub.f32 %v2869, %v2876
        %v2879 = vmul.f32 %v2877, 1.442695
        %v2880 = vpow.pop %v2879
        %v2881 = vmul.f32 %v2878, 1.442695
        %v2882 = vpow.pop %v2881
        %v2883 = vsel %vm679, %v2880, 0.0
        %2884 = vadd.xlane.f32.xlu0 %v2883
        %v2885 = vpop.xlane.xlu0 %2884
        %v2886 = vsel %vm679, %v2882, 0.0
        %2887 = vadd.xlane.f32.xlu0 %v2886
        %v2888 = vpop.xlane.xlu0 %2887
        %v2889 = vrcp.pop %v2885
        %v2890 = vrcp.pop %v2888
        %v2891 = vmul.f32 %v2880, %v2889
        %v2892 = vmul.f32 %v2882, %v2890
        %2895 = vrot.lane.b32.xlu0 %v2730, 112
        %v2896 = vpop.permute.xlu0 %2895
        %2897 = vrot.lane.b32.xlu0 %v2733, 112
        %v2898 = vpop.permute.xlu0 %2897
        %v2902 = vsel %vm679, %v2891, 0
        %v2905 = vsel %vm679, %v2892, 0
        %2907 = vmatpush.msra.mxu0 0.0
        %2908 = vmatpush.msra.mxu0 0.0
        %2909 = vmatpush.msra.mxu0 0.0
        %2910 = vmatpush.msra.mxu0 0.0
        %2911 = vmatpush.msra.mxu0 0.0
        %2912 = vmatpush.msra.mxu0 0.0
        %2913 = vmatpush.msra.mxu0 0.0
        %2914 = vmatpush.msra.mxu0 0.0
        %2915 = vmatpush.msra.mxu0 0.0
        %2916 = vmatpush.msra.mxu0 0.0
        %2917 = vmatpush.msra.mxu0 0.0
        %2918 = vmatpush.msra.mxu0 0.0
        %2919 = vmatpush.msra.mxu0 0.0
        %2920 = vmatpush.msra.mxu0 0.0
        %2921 = vmatpush.msra.mxu0 %v2898
        %2922 = vmatpush.msra.mxu0 %v2896
        %2923 = vmatmul.f32.gmra.mxu0 %v2902
        %v2924 = vpop.f32.mrf.mxu0
        %v2925 = vadd.f32 0.0, %v2924
        %2926 = vmatmul.f32.gmra.mxu0 %v2905
        %v2927 = vpop.f32.mrf.mxu0
        %v2928 = vadd.f32 0.0, %v2927
        %2929 = vdwg.mxu0
        %v2931 = vsel %vm679, %v2925, 0
        %v2934 = vsel %vm679, %v2928, 0
        %2936 = vmatpush.msra.mxu0 0.0
        %2937 = vmatpush.msra.mxu0 0.0
        %2938 = vmatpush.msra.mxu0 0.0
        %2939 = vmatpush.msra.mxu0 0.0
        %2940 = vmatpush.msra.mxu0 0.0
        %2941 = vmatpush.msra.mxu0 0.0
        %2942 = vmatpush.msra.mxu0 0.0
        %2943 = vmatpush.msra.mxu0 0.0
        %2944 = vmatpush.msra.mxu0 0.0
        %2945 = vmatpush.msra.mxu0 0.0
        %2946 = vmatpush.msra.mxu0 0.0
        %2947 = vmatpush.msra.mxu0 0.0
        %2948 = vmatpush.msra.mxu0 0.0
        %2949 = vmatpush.msra.mxu0 0.0
        %2950 = vmatpush.msra.mxu0 %v2739
        %2951 = vmatpush.msra.mxu0 %v2738
        %2952 = vmatmul.f32.gmra.mxu0 %v2931
        %v2953 = vpop.f32.mrf.mxu0
        %v2954 = vadd.f32 0.0, %v2953
        %2955 = vmatmul.f32.gmra.mxu0 %v2934
        %v2956 = vpop.f32.mrf.mxu0
        %v2957 = vadd.f32 0.0, %v2956
        %2958 = vdwg.mxu0
        %v2960 = vsel %vm679, %v2827, 0
        %v2963 = vsel %vm679, %v2830, 0
        %2965 = vmatpush.msra.mxu0 0.0
        %2966 = vmatpush.msra.mxu0 0.0
        %2967 = vmatpush.msra.mxu0 0.0
        %2968 = vmatpush.msra.mxu0 0.0
        %2969 = vmatpush.msra.mxu0 0.0
        %2970 = vmatpush.msra.mxu0 0.0
        %2971 = vmatpush.msra.mxu0 0.0
        %2972 = vmatpush.msra.mxu0 0.0
        %2973 = vmatpush.msra.mxu0 0.0
        %2974 = vmatpush.msra.mxu0 0.0
        %2975 = vmatpush.msra.mxu0 0.0
        %2976 = vmatpush.msra.mxu0 0.0
        %2977 = vmatpush.msra.mxu0 0.0
        %2978 = vmatpush.msra.mxu0 0.0
        %2979 = vmatpush.msra.mxu0 %v2737
        %2980 = vmatpush.msra.mxu0 %v2736
        %2981 = vmatmul.f32.gmra.mxu0 %v2960
        %v2982 = vpop.f32.mrf.mxu0
        %v2983 = vadd.f32 %v2954, %v2982
        %2984 = vmatmul.f32.gmra.mxu0 %v2963
        %v2985 = vpop.f32.mrf.mxu0
        %v2986 = vadd.f32 %v2957, %v2985
        %2987 = vdwg.mxu0
        %2988 = vrot.lane.b32.xlu0 %v2707, 96
        %v2989 = vpop.permute.xlu0 %2988
        %2990 = vrot.lane.b32.xlu0 %v2710, 96
        %v2991 = vpop.permute.xlu0 %2990
        %2992 = vrot.lane.b32.xlu0 %v2707, 32
        %v2993 = vpop.permute.xlu0 %2992
        %2994 = vrot.lane.b32.xlu0 %v2710, 32
        %v2995 = vpop.permute.xlu0 %2994
        %v2996 = vsel %vm679, %v2989, 0
        %v2998 = vsel %vm679, %v2991, 0
        %v3000 = vsel %vm679, %v2993, 0
        %v3002 = vsel %vm679, %v2995, 0
        %3004 = vmatpush.xpose.msra.mxu0 0.0
        %3005 = vmatpush.xpose.msra.mxu0 0.0
        %3006 = vmatpush.xpose.msra.mxu0 0.0
        %3007 = vmatpush.xpose.msra.mxu0 0.0
        %3008 = vmatpush.xpose.msra.mxu0 0.0
        %3009 = vmatpush.xpose.msra.mxu0 0.0
        %3010 = vmatpush.xpose.msra.mxu0 0.0
        %3011 = vmatpush.xpose.msra.mxu0 0.0
        %3012 = vmatpush.xpose.msra.mxu0 0.0
        %3013 = vmatpush.xpose.msra.mxu0 0.0
        %3014 = vmatpush.xpose.msra.mxu0 0.0
        %3015 = vmatpush.xpose.msra.mxu0 0.0
        %3016 = vmatpush.xpose.msra.mxu0 0.0
        %3017 = vmatpush.xpose.msra.mxu0 0.0
        %3018 = vmatpush.xpose.msra.mxu0 %v3002
        %3019 = vmatpush.xpose.msra.mxu0 %v3000
        %3020 = vmatmul.f32.gmra.mxu0 %v2996
        %v3021 = vpop.f32.mrf.mxu0
        %v3022 = vadd.f32 %v525, %v3021
        %3023 = vmatmul.f32.gmra.mxu0 %v2998
        %v3024 = vpop.f32.mrf.mxu0
        %v3025 = vadd.f32 %v526, %v3024
        %3026 = vdwg.mxu0
        %v3027 = vsel %vm679, %v3022, -inf
        %3028 = vmax.xlane.f32.xlu0 %v3027
        %v3029 = vpop.xlane.xlu0 %3028
        %v3030 = vsel %vm679, %v3025, -inf
        %3031 = vmax.xlane.f32.xlu0 %v3030
        %v3032 = vpop.xlane.xlu0 %3031
        %v3033 = vsub.f32 %v3022, %v3029
        %v3034 = vsub.f32 %v3025, %v3032
        %v3035 = vmul.f32 %v3033, 1.442695
        %v3036 = vpow.pop %v3035
        %v3037 = vmul.f32 %v3034, 1.442695
        %v3038 = vpow.pop %v3037
        %v3039 = vsel %vm679, %v3036, 0.0
        %3040 = vadd.xlane.f32.xlu0 %v3039
        %v3041 = vpop.xlane.xlu0 %3040
        %v3042 = vsel %vm679, %v3038, 0.0
        %3043 = vadd.xlane.f32.xlu0 %v3042
        %v3044 = vpop.xlane.xlu0 %3043
        %v3045 = vrcp.pop %v3041
        %v3046 = vrcp.pop %v3044
        %v3047 = vmul.f32 %v3036, %v3045
        %v3048 = vmul.f32 %v3038, %v3046
        %3049 = vrot.lane.b32.xlu0 %v2730, 96
        %v3050 = vpop.permute.xlu0 %3049
        %3051 = vrot.lane.b32.xlu0 %v2733, 96
        %v3052 = vpop.permute.xlu0 %3051
        %v3056 = vsel %vm679, %v3047, 0
        %v3059 = vsel %vm679, %v3048, 0
        %3061 = vmatpush.msra.mxu0 0.0
        %3062 = vmatpush.msra.mxu0 0.0
        %3063 = vmatpush.msra.mxu0 0.0
        %3064 = vmatpush.msra.mxu0 0.0
        %3065 = vmatpush.msra.mxu0 0.0
        %3066 = vmatpush.msra.mxu0 0.0
        %3067 = vmatpush.msra.mxu0 0.0
        %3068 = vmatpush.msra.mxu0 0.0
        %3069 = vmatpush.msra.mxu0 0.0
        %3070 = vmatpush.msra.mxu0 0.0
        %3071 = vmatpush.msra.mxu0 0.0
        %3072 = vmatpush.msra.mxu0 0.0
        %3073 = vmatpush.msra.mxu0 0.0
        %3074 = vmatpush.msra.mxu0 0.0
        %3075 = vmatpush.msra.mxu0 %v3052
        %3076 = vmatpush.msra.mxu0 %v3050
        %3077 = vmatmul.f32.gmra.mxu0 %v3056
        %v3078 = vpop.f32.mrf.mxu0
        %v3079 = vadd.f32 0.0, %v3078
        %3080 = vmatmul.f32.gmra.mxu0 %v3059
        %v3081 = vpop.f32.mrf.mxu0
        %v3082 = vadd.f32 0.0, %v3081
        %3083 = vdwg.mxu0
        %v3085 = vsel %vm679, %v3079, 0
        %v3088 = vsel %vm679, %v3082, 0
        %3090 = vmatpush.msra.mxu0 0.0
        %3091 = vmatpush.msra.mxu0 0.0
        %3092 = vmatpush.msra.mxu0 0.0
        %3093 = vmatpush.msra.mxu0 0.0
        %3094 = vmatpush.msra.mxu0 0.0
        %3095 = vmatpush.msra.mxu0 0.0
        %3096 = vmatpush.msra.mxu0 0.0
        %3097 = vmatpush.msra.mxu0 0.0
        %3098 = vmatpush.msra.mxu0 0.0
        %3099 = vmatpush.msra.mxu0 0.0
        %3100 = vmatpush.msra.mxu0 0.0
        %3101 = vmatpush.msra.mxu0 0.0
        %3102 = vmatpush.msra.mxu0 0.0
        %3103 = vmatpush.msra.mxu0 0.0
        %3104 = vmatpush.msra.mxu0 %v2741
        %3105 = vmatpush.msra.mxu0 %v2740
        %3106 = vmatmul.f32.gmra.mxu0 %v3085
        %v3107 = vpop.f32.mrf.mxu0
        %v3108 = vadd.f32 0.0, %v3107
        %3109 = vmatmul.f32.gmra.mxu0 %v3088
        %v3110 = vpop.f32.mrf.mxu0
        %v3111 = vadd.f32 0.0, %v3110
        %3112 = vdwg.mxu0
        %v3113 = vadd.f32 %v2983, %v3108
        %v3114 = vadd.f32 %v2986, %v3111
        %3115 = vrot.lane.b32.xlu0 %v2707, 80
        %v3116 = vpop.permute.xlu0 %3115
        %3117 = vrot.lane.b32.xlu0 %v2710, 80
        %v3118 = vpop.permute.xlu0 %3117
        %3119 = vrot.lane.b32.xlu0 %v2707, 16
        %v3120 = vpop.permute.xlu0 %3119
        %3121 = vrot.lane.b32.xlu0 %v2710, 16
        %v3122 = vpop.permute.xlu0 %3121
        %v3123 = vsel %vm679, %v3116, 0
        %v3125 = vsel %vm679, %v3118, 0
        %v3127 = vsel %vm679, %v3120, 0
        %v3129 = vsel %vm679, %v3122, 0
        %3131 = vmatpush.xpose.msra.mxu0 0.0
        %3132 = vmatpush.xpose.msra.mxu0 0.0
        %3133 = vmatpush.xpose.msra.mxu0 0.0
        %3134 = vmatpush.xpose.msra.mxu0 0.0
        %3135 = vmatpush.xpose.msra.mxu0 0.0
        %3136 = vmatpush.xpose.msra.mxu0 0.0
        %3137 = vmatpush.xpose.msra.mxu0 0.0
        %3138 = vmatpush.xpose.msra.mxu0 0.0
        %3139 = vmatpush.xpose.msra.mxu0 0.0
        %3140 = vmatpush.xpose.msra.mxu0 0.0
        %3141 = vmatpush.xpose.msra.mxu0 0.0
        %3142 = vmatpush.xpose.msra.mxu0 0.0
        %3143 = vmatpush.xpose.msra.mxu0 0.0
        %3144 = vmatpush.xpose.msra.mxu0 0.0
        %3145 = vmatpush.xpose.msra.mxu0 %v3129
        %3146 = vmatpush.xpose.msra.mxu0 %v3127
        %3147 = vmatmul.f32.gmra.mxu0 %v3123
        %v3148 = vpop.f32.mrf.mxu0
        %v3149 = vadd.f32 %v525, %v3148
        %3150 = vmatmul.f32.gmra.mxu0 %v3125
        %v3151 = vpop.f32.mrf.mxu0
        %v3152 = vadd.f32 %v526, %v3151
        %3153 = vdwg.mxu0
        %v3154 = vsel %vm679, %v3149, -inf
        %3155 = vmax.xlane.f32.xlu0 %v3154
        %v3156 = vpop.xlane.xlu0 %3155
        %v3157 = vsel %vm679, %v3152, -inf
        %3158 = vmax.xlane.f32.xlu0 %v3157
        %v3159 = vpop.xlane.xlu0 %3158
        %v3160 = vsub.f32 %v3149, %v3156
        %v3161 = vsub.f32 %v3152, %v3159
        %v3162 = vmul.f32 %v3160, 1.442695
        %v3163 = vpow.pop %v3162
        %v3164 = vmul.f32 %v3161, 1.442695
        %v3165 = vpow.pop %v3164
        %v3166 = vsel %vm679, %v3163, 0.0
        %3167 = vadd.xlane.f32.xlu0 %v3166
        %v3168 = vpop.xlane.xlu0 %3167
        %v3169 = vsel %vm679, %v3165, 0.0
        %3170 = vadd.xlane.f32.xlu0 %v3169
        %v3171 = vpop.xlane.xlu0 %3170
        %v3172 = vrcp.pop %v3168
        %v3173 = vrcp.pop %v3171
        %v3174 = vmul.f32 %v3163, %v3172
        %v3175 = vmul.f32 %v3165, %v3173
        %3176 = vrot.lane.b32.xlu0 %v2730, 80
        %v3177 = vpop.permute.xlu0 %3176
        %3178 = vrot.lane.b32.xlu0 %v2733, 80
        %v3179 = vpop.permute.xlu0 %3178
        %v3183 = vsel %vm679, %v3174, 0
        %v3186 = vsel %vm679, %v3175, 0
        %3188 = vmatpush.msra.mxu0 0.0
        %3189 = vmatpush.msra.mxu0 0.0
        %3190 = vmatpush.msra.mxu0 0.0
        %3191 = vmatpush.msra.mxu0 0.0
        %3192 = vmatpush.msra.mxu0 0.0
        %3193 = vmatpush.msra.mxu0 0.0
        %3194 = vmatpush.msra.mxu0 0.0
        %3195 = vmatpush.msra.mxu0 0.0
        %3196 = vmatpush.msra.mxu0 0.0
        %3197 = vmatpush.msra.mxu0 0.0
        %3198 = vmatpush.msra.mxu0 0.0
        %3199 = vmatpush.msra.mxu0 0.0
        %3200 = vmatpush.msra.mxu0 0.0
        %3201 = vmatpush.msra.mxu0 0.0
        %3202 = vmatpush.msra.mxu0 %v3179
        %3203 = vmatpush.msra.mxu0 %v3177
        %3204 = vmatmul.f32.gmra.mxu0 %v3183
        %v3205 = vpop.f32.mrf.mxu0
        %v3206 = vadd.f32 0.0, %v3205
        %3207 = vmatmul.f32.gmra.mxu0 %v3186
        %v3208 = vpop.f32.mrf.mxu0
        %v3209 = vadd.f32 0.0, %v3208
        %3210 = vdwg.mxu0
        %v3212 = vsel %vm679, %v3206, 0
        %v3215 = vsel %vm679, %v3209, 0
        %3217 = vmatpush.msra.mxu0 0.0
        %3218 = vmatpush.msra.mxu0 0.0
        %3219 = vmatpush.msra.mxu0 0.0
        %3220 = vmatpush.msra.mxu0 0.0
        %3221 = vmatpush.msra.mxu0 0.0
        %3222 = vmatpush.msra.mxu0 0.0
        %3223 = vmatpush.msra.mxu0 0.0
        %3224 = vmatpush.msra.mxu0 0.0
        %3225 = vmatpush.msra.mxu0 0.0
        %3226 = vmatpush.msra.mxu0 0.0
        %3227 = vmatpush.msra.mxu0 0.0
        %3228 = vmatpush.msra.mxu0 0.0
        %3229 = vmatpush.msra.mxu0 0.0
        %3230 = vmatpush.msra.mxu0 0.0
        %3231 = vmatpush.msra.mxu0 %v2743
        %3232 = vmatpush.msra.mxu0 %v2742
        %3233 = vmatmul.f32.gmra.mxu0 %v3212
        %v3234 = vpop.f32.mrf.mxu0
        %v3235 = vadd.f32 0.0, %v3234
        %3236 = vmatmul.f32.gmra.mxu0 %v3215
        %v3237 = vpop.f32.mrf.mxu0
        %v3238 = vadd.f32 0.0, %v3237
        %3239 = vdwg.mxu0
        %v3240 = vadd.f32 %v3113, %v3235
        %v3241 = vadd.f32 %v3114, %v3238
        %v3242 = vadd.f32 %v2588, %v3240
        %v3243 = vadd.f32 %v2589, %v3241
        %s3244 = scalar_lea.vmem %s7, 2
        %v3245 = vld [vmem:[%s3244] sm:$0x1]
        %v3247 = vperm.slane %v3245, 0
        %v3249 = vadd.f32 %v3242, %v3247
        %v3250 = vadd.f32 %v3243, %v3247
        %s3251 = scalar_lea.vmem %s8, 2
        %v3252 = vld [vmem:[%s3251] sm:$0x1]
        %s3253 = scalar_lea.vmem %s9, 2
        %v3254 = vld [vmem:[%s3253] sm:$0x1]
        %v3255 = vsel %vm529, %v3249, 0.0
        %3256 = vadd.xlane.f32.xlu0 %v3255
        %v3257 = vpop.xlane.xlu0 %3256
        %v3258 = vsel %vm529, %v3250, 0.0
        %3259 = vadd.xlane.f32.xlu0 %v3258
        %v3260 = vpop.xlane.xlu0 %3259
        %v3261 = vmul.f32 %v3257, %v542
        %v3262 = vmul.f32 %v3260, %v542
        %v3263 = vsub.f32 %v3249, %v3261
        %v3264 = vsub.f32 %v3250, %v3262
        %v3265 = vmul.f32 %v3263, %v3263
        %v3266 = vmul.f32 %v3264, %v3264
        %v3267 = vsel %vm529, %v3265, 0.0
        %3268 = vadd.xlane.f32.xlu0 %v3267
        %v3269 = vpop.xlane.xlu0 %3268
        %v3270 = vsel %vm529, %v3266, 0.0
        %3271 = vadd.xlane.f32.xlu0 %v3270
        %v3272 = vpop.xlane.xlu0 %3271
        %v3273 = vmul.f32 %v3269, %v542
        %v3274 = vmul.f32 %v3272, %v542
        %v3275 = vadd.f32 %v3273, 1e-05
        %v3276 = vadd.f32 %v3274, 1e-05
        %v3277 = vrsqrt.pop %v3275
        %v3278 = vmul.f32 %v3277, %v3275
        %v3279 = vmul.f32 %v3278, %v3277
        %v3280 = vmul.f32 0.5, %v3279
        %v3281 = vsub.f32 1.5, %v3280
        %v3282 = vmul.f32 %v3277, %v3281
        %vm3283 = vweird.f32 %v3275
        %vm3284 = vweird.f32 %v3277
        %vm3285 = vmor %vm3283, %vm3284
        %v3286 = vsel %vm3285, %v3277, %v3282
        %v3287 = vrsqrt.pop %v3276
        %v3288 = vmul.f32 %v3287, %v3276
        %v3289 = vmul.f32 %v3288, %v3287
        %v3290 = vmul.f32 0.5, %v3289
        %v3291 = vsub.f32 1.5, %v3290
        %v3292 = vmul.f32 %v3287, %v3291
        %vm3293 = vweird.f32 %v3276
        %vm3294 = vweird.f32 %v3287
        %vm3295 = vmor %vm3293, %vm3294
        %v3296 = vsel %vm3295, %v3287, %v3292
        %v3297 = vmul.f32 %v3263, %v3286
        %v3298 = vmul.f32 %v3264, %v3296
        %v3300 = vperm.slane %v3252, 0
        %v3302 = vmul.f32 %v3297, %v3300
        %v3303 = vmul.f32 %v3298, %v3300
        %v3305 = vperm.slane %v3254, 0
        %v3307 = vadd.f32 %v3302, %v3305
        %v3308 = vadd.f32 %v3303, %v3305
        %s3309 = scalar_lea.vmem %s10, 256
        %v3310 = vld [vmem:[%s3309] sm:$0xff]
        %v3311 = vld [vmem:[%s3309 + $0x8] sm:$0xff]
        %v3312 = vld [vmem:[%s3309 + $0x10] sm:$0xff]
        %v3313 = vld [vmem:[%s3309 + $0x18] sm:$0xff]
        %v3314 = vld [vmem:[%s3309 + $0x20] sm:$0xff]
        %v3315 = vld [vmem:[%s3309 + $0x28] sm:$0xff]
        %v3316 = vld [vmem:[%s3309 + $0x30] sm:$0xff]
        %v3317 = vld [vmem:[%s3309 + $0x38] sm:$0xff]
        %v3318 = vld [vmem:[%s3309 + $0x40] sm:$0xff]
        %v3319 = vld [vmem:[%s3309 + $0x48] sm:$0xff]
        %v3320 = vld [vmem:[%s3309 + $0x50] sm:$0xff]
        %v3321 = vld [vmem:[%s3309 + $0x58] sm:$0xff]
        %v3322 = vld [vmem:[%s3309 + $0x60] sm:$0xff]
        %v3323 = vld [vmem:[%s3309 + $0x68] sm:$0xff]
        %v3324 = vld [vmem:[%s3309 + $0x70] sm:$0xff]
        %v3325 = vld [vmem:[%s3309 + $0x78] sm:$0xff]
        %s3326 = scalar_lea.vmem %s11, 4
        %v3327 = vld [vmem:[%s3326] sm:$0x3]
        %v3329 = vperm.slane %v3327, 0
        %v3330 = vperm.slane %v3327, 1
        %v3334 = vsel %vm529, %v3307, 0
        %v3337 = vsel %vm529, %v3308, 0
        %3339 = vmatpush.msra.mxu0 0.0
        %3340 = vmatpush.msra.mxu0 0.0
        %3341 = vmatpush.msra.mxu0 0.0
        %3342 = vmatpush.msra.mxu0 0.0
        %3343 = vmatpush.msra.mxu0 0.0
        %3344 = vmatpush.msra.mxu0 0.0
        %3345 = vmatpush.msra.mxu0 0.0
        %3346 = vmatpush.msra.mxu0 0.0
        %3347 = vmatpush.msra.mxu0 %v3324
        %3348 = vmatpush.msra.mxu0 %v3322
        %3349 = vmatpush.msra.mxu0 %v3320
        %3350 = vmatpush.msra.mxu0 %v3318
        %3351 = vmatpush.msra.mxu0 %v3316
        %3352 = vmatpush.msra.mxu0 %v3314
        %3353 = vmatpush.msra.mxu0 %v3312
        %3354 = vmatpush.msra.mxu0 %v3310
        %3355 = vmatmul.f32.gmra.mxu0 %v3334
        %v3356 = vpop.f32.mrf.mxu0
        %v3357 = vadd.f32 %v3329, %v3356
        %3358 = vmatmul.f32.gmra.mxu0 %v3337
        %v3359 = vpop.f32.mrf.mxu0
        %v3360 = vadd.f32 %v3329, %v3359
        %3361 = vdwg.mxu0
        %3362 = vmatpush.msra.mxu0 0.0
        %3363 = vmatpush.msra.mxu0 0.0
        %3364 = vmatpush.msra.mxu0 0.0
        %3365 = vmatpush.msra.mxu0 0.0
        %3366 = vmatpush.msra.mxu0 0.0
        %3367 = vmatpush.msra.mxu0 0.0
        %3368 = vmatpush.msra.mxu0 0.0
        %3369 = vmatpush.msra.mxu0 0.0
        %3370 = vmatpush.msra.mxu0 %v3325
        %3371 = vmatpush.msra.mxu0 %v3323
        %3372 = vmatpush.msra.mxu0 %v3321
        %3373 = vmatpush.msra.mxu0 %v3319
        %3374 = vmatpush.msra.mxu0 %v3317
        %3375 = vmatpush.msra.mxu0 %v3315
        %3376 = vmatpush.msra.mxu0 %v3313
        %3377 = vmatpush.msra.mxu0 %v3311
        %3378 = vmatmul.f32.gmra.mxu0 %v3334
        %v3379 = vpop.f32.mrf.mxu0
        %v3380 = vadd.f32 %v3330, %v3379
        %3381 = vmatmul.f32.gmra.mxu0 %v3337
        %v3382 = vpop.f32.mrf.mxu0
        %v3383 = vadd.f32 %v3330, %v3382
        %3384 = vdwg.mxu0
        %v3385 = vmul.f32 %v3357, 0.5
        %v3386 = vmul.f32 %v3380, 0.5
        %v3387 = vmul.f32 %v3360, 0.5
        %v3388 = vmul.f32 %v3383, 0.5
        %v3389 = vmul.f32 %v3357, 0.70710677
        %v3390 = vmul.f32 %v3380, 0.70710677
        %v3391 = vmul.f32 %v3360, 0.70710677
        %v3392 = vmul.f32 %v3383, 0.70710677
        %v3393 = vand.u32 2147483647, %v3389
        %v3394 = vand.u32 2147483647, %v3390
        %v3395 = vand.u32 2147483647, %v3391
        %v3396 = vand.u32 2147483647, %v3392
        %v3397 = vmul.f32 %v3393, 0.3275911
        %v3398 = vmul.f32 %v3394, 0.3275911
        %v3399 = vmul.f32 %v3395, 0.3275911
        %v3400 = vmul.f32 %v3396, 0.3275911
        %v3401 = vadd.f32 %v3397, 1.0
        %v3402 = vadd.f32 %v3398, 1.0
        %v3403 = vadd.f32 %v3399, 1.0
        %v3404 = vadd.f32 %v3400, 1.0
        %v3405 = vrcp.pop %v3401
        %v3406 = vmul.f32 %v3401, %v3405
        %v3407 = vsub.f32 1.0, %v3406
        %v3408 = vmul.f32 %v3405, %v3407
        %v3409 = vadd.f32 %v3405, %v3408
        %vm3410 = vweird.f32 %v3401
        %vm3411 = vweird.f32 %v3405
        %vm3412 = vmor %vm3410, %vm3411
        %v3413 = vsel %vm3412, %v3405, %v3409
        %v3414 = vand.u32 2147483647, %v3401
        %vm3415 = vcmp.eq.f32.partialorder %v3414, 8.507059e+37
        %v3416 = vand.u32 %v3401, 2147483648
        %v3417 = vor.u32 1.1754944e-38, %v3416
        %v3418 = vsel %vm3415, %v3417, %v3413
        %v3419 = vmul.f32 1.0, %v3418
        %v3420 = vrcp.pop %v3402
        %v3421 = vmul.f32 %v3402, %v3420
        %v3422 = vsub.f32 1.0, %v3421
        %v3423 = vmul.f32 %v3420, %v3422
        %v3424 = vadd.f32 %v3420, %v3423
        %vm3425 = vweird.f32 %v3402
        %vm3426 = vweird.f32 %v3420
        %vm3427 = vmor %vm3425, %vm3426
        %v3428 = vsel %vm3427, %v3420, %v3424
        %v3429 = vand.u32 2147483647, %v3402
        %vm3430 = vcmp.eq.f32.partialorder %v3429, 8.507059e+37
        %v3431 = vand.u32 %v3402, 2147483648
        %v3432 = vor.u32 1.1754944e-38, %v3431
        %v3433 = vsel %vm3430, %v3432, %v3428
        %v3434 = vmul.f32 1.0, %v3433
        %v3435 = vrcp.pop %v3403
        %v3436 = vmul.f32 %v3403, %v3435
        %v3437 = vsub.f32 1.0, %v3436
        %v3438 = vmul.f32 %v3435, %v3437
        %v3439 = vadd.f32 %v3435, %v3438
        %vm3440 = vweird.f32 %v3403
        %vm3441 = vweird.f32 %v3435
        %vm3442 = vmor %vm3440, %vm3441
        %v3443 = vsel %vm3442, %v3435, %v3439
        %v3444 = vand.u32 2147483647, %v3403
        %vm3445 = vcmp.eq.f32.partialorder %v3444, 8.507059e+37
        %v3446 = vand.u32 %v3403, 2147483648
        %v3447 = vor.u32 1.1754944e-38, %v3446
        %v3448 = vsel %vm3445, %v3447, %v3443
        %v3449 = vmul.f32 1.0, %v3448
        %v3450 = vrcp.pop %v3404
        %v3451 = vmul.f32 %v3404, %v3450
        %v3452 = vsub.f32 1.0, %v3451
        %v3453 = vmul.f32 %v3450, %v3452
        %v3454 = vadd.f32 %v3450, %v3453
        %vm3455 = vweird.f32 %v3404
        %vm3456 = vweird.f32 %v3450
        %vm3457 = vmor %vm3455, %vm3456
        %v3458 = vsel %vm3457, %v3450, %v3454
        %v3459 = vand.u32 2147483647, %v3404
        %vm3460 = vcmp.eq.f32.partialorder %v3459, 8.507059e+37
        %v3461 = vand.u32 %v3404, 2147483648
        %v3462 = vor.u32 1.1754944e-38, %v3461
        %v3463 = vsel %vm3460, %v3462, %v3458
        %v3464 = vmul.f32 1.0, %v3463
        %v3465 = vmul.f32 %v3419, 1.0614054
        %v3466 = vmul.f32 %v3434, 1.0614054
        %v3467 = vmul.f32 %v3449, 1.0614054
        %v3468 = vmul.f32 %v3464, 1.0614054
        %v3469 = vadd.f32 %v3465, -1.4531521
        %v3470 = vadd.f32 %v3466, -1.4531521
        %v3471 = vadd.f32 %v3467, -1.4531521
        %v3472 = vadd.f32 %v3468, -1.4531521
        %v3473 = vmul.f32 %v3469, %v3419
        %v3474 = vmul.f32 %v3470, %v3434
        %v3475 = vmul.f32 %v3471, %v3449
        %v3476 = vmul.f32 %v3472, %v3464
        %v3477 = vadd.f32 %v3473, 1.4214138
        %v3478 = vadd.f32 %v3474, 1.4214138
        %v3479 = vadd.f32 %v3475, 1.4214138
        %v3480 = vadd.f32 %v3476, 1.4214138
        %v3481 = vmul.f32 %v3477, %v3419
        %v3482 = vmul.f32 %v3478, %v3434
        %v3483 = vmul.f32 %v3479, %v3449
        %v3484 = vmul.f32 %v3480, %v3464
        %v3485 = vadd.f32 %v3481, -0.28449672
        %v3486 = vadd.f32 %v3482, -0.28449672
        %v3487 = vadd.f32 %v3483, -0.28449672
        %v3488 = vadd.f32 %v3484, -0.28449672
        %v3489 = vmul.f32 %v3485, %v3419
        %v3490 = vmul.f32 %v3486, %v3434
        %v3491 = vmul.f32 %v3487, %v3449
        %v3492 = vmul.f32 %v3488, %v3464
        %v3493 = vadd.f32 %v3489, 0.2548296
        %v3494 = vadd.f32 %v3490, 0.2548296
        %v3495 = vadd.f32 %v3491, 0.2548296
        %v3496 = vadd.f32 %v3492, 0.2548296
        %v3497 = vmul.f32 %v3493, %v3419
        %v3498 = vmul.f32 %v3494, %v3434
        %v3499 = vmul.f32 %v3495, %v3449
        %v3500 = vmul.f32 %v3496, %v3464
        %v3501 = vsub.f32 0.0, %v3393
        %v3502 = vsub.f32 0.0, %v3394
        %v3503 = vsub.f32 0.0, %v3395
        %v3504 = vsub.f32 0.0, %v3396
        %v3505 = vmul.f32 %v3501, %v3393
        %v3506 = vmul.f32 %v3502, %v3394
        %v3507 = vmul.f32 %v3503, %v3395
        %v3508 = vmul.f32 %v3504, %v3396
        %v3509 = vmul.f32 %v3505, 1.442695
        %v3510 = vpow.pop %v3509
        %v3511 = vmul.f32 %v3506, 1.442695
        %v3512 = vpow.pop %v3511
        %v3513 = vmul.f32 %v3507, 1.442695
        %v3514 = vpow.pop %v3513
        %v3515 = vmul.f32 %v3508, 1.442695
        %v3516 = vpow.pop %v3515
        %v3517 = vmul.f32 %v3497, %v3510
        %v3518 = vmul.f32 %v3498, %v3512
        %v3519 = vmul.f32 %v3499, %v3514
        %v3520 = vmul.f32 %v3500, %v3516
        %v3521 = vsub.f32 1.0, %v3517
        %v3522 = vsub.f32 1.0, %v3518
        %v3523 = vsub.f32 1.0, %v3519
        %v3524 = vsub.f32 1.0, %v3520
        %vm3525 = vcmp.ge.f32.partialorder %v3389, 0.0
        %vm3526 = vcmp.ge.f32.partialorder %v3390, 0.0
        %vm3527 = vcmp.ge.f32.partialorder %v3391, 0.0
        %vm3528 = vcmp.ge.f32.partialorder %v3392, 0.0
        %v3529 = vsub.f32 0.0, %v3521
        %v3530 = vsub.f32 0.0, %v3522
        %v3531 = vsub.f32 0.0, %v3523
        %v3532 = vsub.f32 0.0, %v3524
        %v3533 = vsel %vm3525, %v3521, %v3529
        %v3534 = vsel %vm3526, %v3522, %v3530
        %v3535 = vsel %vm3527, %v3523, %v3531
        %v3536 = vsel %vm3528, %v3524, %v3532
        %v3537 = vadd.f32 %v3533, 1.0
        %v3538 = vadd.f32 %v3534, 1.0
        %v3539 = vadd.f32 %v3535, 1.0
        %v3540 = vadd.f32 %v3536, 1.0
        %v3541 = vmul.f32 %v3385, %v3537
        %v3542 = vmul.f32 %v3386, %v3538
        %v3543 = vmul.f32 %v3387, %v3539
        %v3544 = vmul.f32 %v3388, %v3540
        %s3545 = scalar_lea.vmem %s12, 512
        %v3546 = vld [vmem:[%s3545] sm:$0xff]
        %v3547 = vld [vmem:[%s3545 + $0x8] sm:$0xff]
        %v3548 = vld [vmem:[%s3545 + $0x10] sm:$0xff]
        %v3549 = vld [vmem:[%s3545 + $0x18] sm:$0xff]
        %v3550 = vld [vmem:[%s3545 + $0x20] sm:$0xff]
        %v3551 = vld [vmem:[%s3545 + $0x28] sm:$0xff]
        %v3552 = vld [vmem:[%s3545 + $0x30] sm:$0xff]
        %v3553 = vld [vmem:[%s3545 + $0x38] sm:$0xff]
        %v3554 = vld [vmem:[%s3545 + $0x40] sm:$0xff]
        %v3555 = vld [vmem:[%s3545 + $0x48] sm:$0xff]
        %v3556 = vld [vmem:[%s3545 + $0x50] sm:$0xff]
        %v3557 = vld [vmem:[%s3545 + $0x58] sm:$0xff]
        %v3558 = vld [vmem:[%s3545 + $0x60] sm:$0xff]
        %v3559 = vld [vmem:[%s3545 + $0x68] sm:$0xff]
        %v3560 = vld [vmem:[%s3545 + $0x70] sm:$0xff]
        %v3561 = vld [vmem:[%s3545 + $0x78] sm:$0xff]
        %v3562 = vld [vmem:[%s3545 + $0x80] sm:$0xff]
        %v3563 = vld [vmem:[%s3545 + $0x88] sm:$0xff]
        %v3564 = vld [vmem:[%s3545 + $0x90] sm:$0xff]
        %v3565 = vld [vmem:[%s3545 + $0x98] sm:$0xff]
        %v3566 = vld [vmem:[%s3545 + $0xa0] sm:$0xff]
        %v3567 = vld [vmem:[%s3545 + $0xa8] sm:$0xff]
        %v3568 = vld [vmem:[%s3545 + $0xb0] sm:$0xff]
        %v3569 = vld [vmem:[%s3545 + $0xb8] sm:$0xff]
        %v3570 = vld [vmem:[%s3545 + $0xc0] sm:$0xff]
        %v3571 = vld [vmem:[%s3545 + $0xc8] sm:$0xff]
        %v3572 = vld [vmem:[%s3545 + $0xd0] sm:$0xff]
        %v3573 = vld [vmem:[%s3545 + $0xd8] sm:$0xff]
        %v3574 = vld [vmem:[%s3545 + $0xe0] sm:$0xff]
        %v3575 = vld [vmem:[%s3545 + $0xe8] sm:$0xff]
        %v3576 = vld [vmem:[%s3545 + $0xf0] sm:$0xff]
        %v3577 = vld [vmem:[%s3545 + $0xf8] sm:$0xff]
        %3578 = vmatpush.msra.mxu0 %v3561
        %3579 = vmatpush.msra.mxu0 %v3560
        %3580 = vmatpush.msra.mxu0 %v3559
        %3581 = vmatpush.msra.mxu0 %v3558
        %3582 = vmatpush.msra.mxu0 %v3557
        %3583 = vmatpush.msra.mxu0 %v3556
        %3584 = vmatpush.msra.mxu0 %v3555
        %3585 = vmatpush.msra.mxu0 %v3554
        %3586 = vmatpush.msra.mxu0 %v3553
        %3587 = vmatpush.msra.mxu0 %v3552
        %3588 = vmatpush.msra.mxu0 %v3551
        %3589 = vmatpush.msra.mxu0 %v3550
        %3590 = vmatpush.msra.mxu0 %v3549
        %3591 = vmatpush.msra.mxu0 %v3548
        %3592 = vmatpush.msra.mxu0 %v3547
        %3593 = vmatpush.msra.mxu0 %v3546
        %3594 = vmatmul.f32.gmra.mxu0 %v3541
        %v3595 = vpop.f32.mrf.mxu0
        %v3596 = vadd.f32 0.0, %v3595
        %3597 = vmatmul.f32.gmra.mxu0 %v3543
        %v3598 = vpop.f32.mrf.mxu0
        %v3599 = vadd.f32 0.0, %v3598
        %3600 = vdwg.mxu0
        %3601 = vmatpush.msra.mxu0 %v3577
        %3602 = vmatpush.msra.mxu0 %v3576
        %3603 = vmatpush.msra.mxu0 %v3575
        %3604 = vmatpush.msra.mxu0 %v3574
        %3605 = vmatpush.msra.mxu0 %v3573
        %3606 = vmatpush.msra.mxu0 %v3572
        %3607 = vmatpush.msra.mxu0 %v3571
        %3608 = vmatpush.msra.mxu0 %v3570
        %3609 = vmatpush.msra.mxu0 %v3569
        %3610 = vmatpush.msra.mxu0 %v3568
        %3611 = vmatpush.msra.mxu0 %v3567
        %3612 = vmatpush.msra.mxu0 %v3566
        %3613 = vmatpush.msra.mxu0 %v3565
        %3614 = vmatpush.msra.mxu0 %v3564
        %3615 = vmatpush.msra.mxu0 %v3563
        %3616 = vmatpush.msra.mxu0 %v3562
        %3617 = vmatmul.f32.gmra.mxu0 %v3542
        %v3618 = vpop.f32.mrf.mxu0
        %v3619 = vadd.f32 %v3596, %v3618
        %3620 = vmatmul.f32.gmra.mxu0 %v3544
        %v3621 = vpop.f32.mrf.mxu0
        %v3622 = vadd.f32 %v3599, %v3621
        %3623 = vdwg.mxu0
        %v3624 = vadd.f32 %v3249, %v3619
        %v3625 = vadd.f32 %v3250, %v3622
        %s3626 = scalar_lea.vmem [#allocation6], 2
        %v3627 = vld [vmem:[%s3626] sm:$0x1]
        %v3629 = vperm.slane %v3627, 0
        %v3631 = vadd.f32 %v3624, %v3629
        %v3632 = vadd.f32 %v3625, %v3629
        %3633 = vst.msk [vmem:[%s521 + $0x8] sm:$0xff] %vm529, %v3631
        %3634 = vst.msk [vmem:[%s521 + $0x20] sm:$0xff] %vm529, %v3632
        %s3635 = scalar_lea.vmem %s2, 3
        %v3636 = vld [vmem:[%s3635] sm:$0x1]
        %s3637 = scalar_lea.vmem [#allocation4], 3
        %v3638 = vld [vmem:[%s3637] sm:$0x1]
        %v3639 = vsel %vm529, %v3631, 0.0
        %3640 = vadd.xlane.f32.xlu0 %v3639
        %v3641 = vpop.xlane.xlu0 %3640
        %v3642 = vsel %vm529, %v3632, 0.0
        %3643 = vadd.xlane.f32.xlu0 %v3642
        %v3644 = vpop.xlane.xlu0 %3643
        %v3645 = vmul.f32 %v3641, %v542
        %v3646 = vmul.f32 %v3644, %v542
        %v3647 = vsub.f32 %v3631, %v3645
        %v3648 = vsub.f32 %v3632, %v3646
        %v3649 = vmul.f32 %v3647, %v3647
        %v3650 = vmul.f32 %v3648, %v3648
        %v3651 = vsel %vm529, %v3649, 0.0
        %3652 = vadd.xlane.f32.xlu0 %v3651
        %v3653 = vpop.xlane.xlu0 %3652
        %v3654 = vsel %vm529, %v3650, 0.0
        %3655 = vadd.xlane.f32.xlu0 %v3654
        %v3656 = vpop.xlane.xlu0 %3655
        %v3657 = vmul.f32 %v3653, %v542
        %v3658 = vmul.f32 %v3656, %v542
        %v3659 = vadd.f32 %v3657, 1e-05
        %v3660 = vadd.f32 %v3658, 1e-05
        %v3661 = vrsqrt.pop %v3659
        %v3662 = vmul.f32 %v3661, %v3659
        %v3663 = vmul.f32 %v3662, %v3661
        %v3664 = vmul.f32 0.5, %v3663
        %v3665 = vsub.f32 1.5, %v3664
        %v3666 = vmul.f32 %v3661, %v3665
        %vm3667 = vweird.f32 %v3659
        %vm3668 = vweird.f32 %v3661
        %vm3669 = vmor %vm3667, %vm3668
        %v3670 = vsel %vm3669, %v3661, %v3666
        %v3671 = vrsqrt.pop %v3660
        %v3672 = vmul.f32 %v3671, %v3660
        %v3673 = vmul.f32 %v3672, %v3671
        %v3674 = vmul.f32 0.5, %v3673
        %v3675 = vsub.f32 1.5, %v3674
        %v3676 = vmul.f32 %v3671, %v3675
        %vm3677 = vweird.f32 %v3660
        %vm3678 = vweird.f32 %v3671
        %vm3679 = vmor %vm3677, %vm3678
        %v3680 = vsel %vm3679, %v3671, %v3676
        %v3681 = vmul.f32 %v3647, %v3670
        %v3682 = vmul.f32 %v3648, %v3680
        %v3684 = vperm.slane %v3636, 0
        %v3686 = vmul.f32 %v3681, %v3684
        %v3687 = vmul.f32 %v3682, %v3684
        %v3689 = vperm.slane %v3638, 0
        %v3691 = vadd.f32 %v3686, %v3689
        %v3692 = vadd.f32 %v3687, %v3689
        %s3693 = scalar_lea.vmem %s4, 384
        %v3694 = vld [vmem:[%s3693] sm:$0xff]
        %v3695 = vld [vmem:[%s3693 + $0x8] sm:$0xff]
        %v3696 = vld [vmem:[%s3693 + $0x10] sm:$0xff]
        %v3697 = vld [vmem:[%s3693 + $0x18] sm:$0xff]
        %v3698 = vld [vmem:[%s3693 + $0x20] sm:$0xff]
        %v3699 = vld [vmem:[%s3693 + $0x28] sm:$0xff]
        %v3700 = vld [vmem:[%s3693 + $0x30] sm:$0xff]
        %v3701 = vld [vmem:[%s3693 + $0x38] sm:$0xff]
        %v3702 = vld [vmem:[%s3693 + $0x40] sm:$0xff]
        %v3703 = vld [vmem:[%s3693 + $0x48] sm:$0xff]
        %v3704 = vld [vmem:[%s3693 + $0x50] sm:$0xff]
        %v3705 = vld [vmem:[%s3693 + $0x58] sm:$0xff]
        %v3706 = vld [vmem:[%s3693 + $0x60] sm:$0xff]
        %v3707 = vld [vmem:[%s3693 + $0x68] sm:$0xff]
        %v3708 = vld [vmem:[%s3693 + $0x70] sm:$0xff]
        %v3709 = vld [vmem:[%s3693 + $0x78] sm:$0xff]
        %s3710 = scalar_lea.vmem %s5, 6
        %v3711 = vld [vmem:[%s3710] sm:$0x3]
        %v3713 = vperm.slane %v3711, 0
        %v3714 = vperm.slane %v3711, 1
        %v3718 = vsel %vm529, %v3691, 0
        %v3721 = vsel %vm529, %v3692, 0
        %3723 = vmatpush.msra.mxu0 0.0
        %3724 = vmatpush.msra.mxu0 0.0
        %3725 = vmatpush.msra.mxu0 0.0
        %3726 = vmatpush.msra.mxu0 0.0
        %3727 = vmatpush.msra.mxu0 0.0
        %3728 = vmatpush.msra.mxu0 0.0
        %3729 = vmatpush.msra.mxu0 0.0
        %3730 = vmatpush.msra.mxu0 0.0
        %3731 = vmatpush.msra.mxu0 %v3708
        %3732 = vmatpush.msra.mxu0 %v3706
        %3733 = vmatpush.msra.mxu0 %v3704
        %3734 = vmatpush.msra.mxu0 %v3702
        %3735 = vmatpush.msra.mxu0 %v3700
        %3736 = vmatpush.msra.mxu0 %v3698
        %3737 = vmatpush.msra.mxu0 %v3696
        %3738 = vmatpush.msra.mxu0 %v3694
        %3739 = vmatmul.f32.gmra.mxu0 %v3718
        %v3740 = vpop.f32.mrf.mxu0
        %v3741 = vadd.f32 %v3713, %v3740
        %3742 = vmatmul.f32.gmra.mxu0 %v3721
        %v3743 = vpop.f32.mrf.mxu0
        %v3744 = vadd.f32 %v3713, %v3743
        %3745 = vdwg.mxu0
        %3746 = vmatpush.msra.mxu0 0.0
        %3747 = vmatpush.msra.mxu0 0.0
        %3748 = vmatpush.msra.mxu0 0.0
        %3749 = vmatpush.msra.mxu0 0.0
        %3750 = vmatpush.msra.mxu0 0.0
        %3751 = vmatpush.msra.mxu0 0.0
        %3752 = vmatpush.msra.mxu0 0.0
        %3753 = vmatpush.msra.mxu0 0.0
        %3754 = vmatpush.msra.mxu0 %v3709
        %3755 = vmatpush.msra.mxu0 %v3707
        %3756 = vmatpush.msra.mxu0 %v3705
        %3757 = vmatpush.msra.mxu0 %v3703
        %3758 = vmatpush.msra.mxu0 %v3701
        %3759 = vmatpush.msra.mxu0 %v3699
        %3760 = vmatpush.msra.mxu0 %v3697
        %3761 = vmatpush.msra.mxu0 %v3695
        %3762 = vmatmul.f32.gmra.mxu0 %v3718
        %v3763 = vpop.f32.mrf.mxu0
        %v3764 = vadd.f32 %v3714, %v3763
        %3765 = vmatmul.f32.gmra.mxu0 %v3721
        %v3766 = vpop.f32.mrf.mxu0
        %v3767 = vadd.f32 %v3714, %v3766
        %3768 = vdwg.mxu0
        %s3769 = scalar_lea.vmem %s6, 192
        %v3770 = vld [vmem:[%s3769] sm:$0xff]
        %v3771 = vld [vmem:[%s3769 + $0x8] sm:$0xff]
        %v3772 = vld [vmem:[%s3769 + $0x10] sm:$0xff]
        %v3773 = vld [vmem:[%s3769 + $0x18] sm:$0xff]
        %v3774 = vld [vmem:[%s3769 + $0x20] sm:$0xff]
        %v3775 = vld [vmem:[%s3769 + $0x28] sm:$0xff]
        %v3776 = vld [vmem:[%s3769 + $0x30] sm:$0xff]
        %v3777 = vld [vmem:[%s3769 + $0x38] sm:$0xff]
        %3780 = vrot.lane.b32.xlu0 %v3741, 64
        %v3781 = vpop.permute.xlu0 %3780
        %3782 = vrot.lane.b32.xlu0 %v3744, 64
        %v3783 = vpop.permute.xlu0 %3782
        %v3784 = vsel %vm679, %v3741, 0
        %v3786 = vsel %vm679, %v3744, 0
        %v3788 = vsel %vm679, %v3781, 0
        %v3790 = vsel %vm679, %v3783, 0
        %3792 = vmatpush.xpose.msra.mxu0 0.0
        %3793 = vmatpush.xpose.msra.mxu0 0.0
        %3794 = vmatpush.xpose.msra.mxu0 0.0
        %3795 = vmatpush.xpose.msra.mxu0 0.0
        %3796 = vmatpush.xpose.msra.mxu0 0.0
        %3797 = vmatpush.xpose.msra.mxu0 0.0
        %3798 = vmatpush.xpose.msra.mxu0 0.0
        %3799 = vmatpush.xpose.msra.mxu0 0.0
        %3800 = vmatpush.xpose.msra.mxu0 0.0
        %3801 = vmatpush.xpose.msra.mxu0 0.0
        %3802 = vmatpush.xpose.msra.mxu0 0.0
        %3803 = vmatpush.xpose.msra.mxu0 0.0
        %3804 = vmatpush.xpose.msra.mxu0 0.0
        %3805 = vmatpush.xpose.msra.mxu0 0.0
        %3806 = vmatpush.xpose.msra.mxu0 %v3790
        %3807 = vmatpush.xpose.msra.mxu0 %v3788
        %3808 = vmatmul.f32.gmra.mxu0 %v3784
        %v3809 = vpop.f32.mrf.mxu0
        %v3810 = vadd.f32 %v525, %v3809
        %3811 = vmatmul.f32.gmra.mxu0 %v3786
        %v3812 = vpop.f32.mrf.mxu0
        %v3813 = vadd.f32 %v526, %v3812
        %3814 = vdwg.mxu0
        %v3815 = vsel %vm679, %v3810, -inf
        %3816 = vmax.xlane.f32.xlu0 %v3815
        %v3817 = vpop.xlane.xlu0 %3816
        %v3818 = vsel %vm679, %v3813, -inf
        %3819 = vmax.xlane.f32.xlu0 %v3818
        %v3820 = vpop.xlane.xlu0 %3819
        %v3821 = vsub.f32 %v3810, %v3817
        %v3822 = vsub.f32 %v3813, %v3820
        %v3823 = vmul.f32 %v3821, 1.442695
        %v3824 = vpow.pop %v3823
        %v3825 = vmul.f32 %v3822, 1.442695
        %v3826 = vpow.pop %v3825
        %v3827 = vsel %vm679, %v3824, 0.0
        %3828 = vadd.xlane.f32.xlu0 %v3827
        %v3829 = vpop.xlane.xlu0 %3828
        %v3830 = vsel %vm679, %v3826, 0.0
        %3831 = vadd.xlane.f32.xlu0 %v3830
        %v3832 = vpop.xlane.xlu0 %3831
        %v3833 = vrcp.pop %v3829
        %v3834 = vrcp.pop %v3832
        %v3835 = vmul.f32 %v3824, %v3833
        %v3836 = vmul.f32 %v3826, %v3834
        %v3838 = vsel %vm679, %v3835, 0
        %v3841 = vsel %vm679, %v3836, 0
        %3843 = vmatpush.msra.mxu0 0.0
        %3844 = vmatpush.msra.mxu0 0.0
        %3845 = vmatpush.msra.mxu0 0.0
        %3846 = vmatpush.msra.mxu0 0.0
        %3847 = vmatpush.msra.mxu0 0.0
        %3848 = vmatpush.msra.mxu0 0.0
        %3849 = vmatpush.msra.mxu0 0.0
        %3850 = vmatpush.msra.mxu0 0.0
        %3851 = vmatpush.msra.mxu0 0.0
        %3852 = vmatpush.msra.mxu0 0.0
        %3853 = vmatpush.msra.mxu0 0.0
        %3854 = vmatpush.msra.mxu0 0.0
        %3855 = vmatpush.msra.mxu0 0.0
        %3856 = vmatpush.msra.mxu0 0.0
        %3857 = vmatpush.msra.mxu0 %v3767
        %3858 = vmatpush.msra.mxu0 %v3764
        %3859 = vmatmul.f32.gmra.mxu0 %v3838
        %v3860 = vpop.f32.mrf.mxu0
        %v3861 = vadd.f32 0.0, %v3860
        %3862 = vmatmul.f32.gmra.mxu0 %v3841
        %v3863 = vpop.f32.mrf.mxu0
        %v3864 = vadd.f32 0.0, %v3863
        %3865 = vdwg.mxu0
        %3866 = vrot.lane.b32.xlu0 %v3741, 112
        %v3867 = vpop.permute.xlu0 %3866
        %3868 = vrot.lane.b32.xlu0 %v3744, 112
        %v3869 = vpop.permute.xlu0 %3868
        %3870 = vrot.lane.b32.xlu0 %v3741, 48
        %v3871 = vpop.permute.xlu0 %3870
        %3872 = vrot.lane.b32.xlu0 %v3744, 48
        %v3873 = vpop.permute.xlu0 %3872
        %v3874 = vsel %vm679, %v3867, 0
        %v3876 = vsel %vm679, %v3869, 0
        %v3878 = vsel %vm679, %v3871, 0
        %v3880 = vsel %vm679, %v3873, 0
        %3882 = vmatpush.xpose.msra.mxu0 0.0
        %3883 = vmatpush.xpose.msra.mxu0 0.0
        %3884 = vmatpush.xpose.msra.mxu0 0.0
        %3885 = vmatpush.xpose.msra.mxu0 0.0
        %3886 = vmatpush.xpose.msra.mxu0 0.0
        %3887 = vmatpush.xpose.msra.mxu0 0.0
        %3888 = vmatpush.xpose.msra.mxu0 0.0
        %3889 = vmatpush.xpose.msra.mxu0 0.0
        %3890 = vmatpush.xpose.msra.mxu0 0.0
        %3891 = vmatpush.xpose.msra.mxu0 0.0
        %3892 = vmatpush.xpose.msra.mxu0 0.0
        %3893 = vmatpush.xpose.msra.mxu0 0.0
        %3894 = vmatpush.xpose.msra.mxu0 0.0
        %3895 = vmatpush.xpose.msra.mxu0 0.0
        %3896 = vmatpush.xpose.msra.mxu0 %v3880
        %3897 = vmatpush.xpose.msra.mxu0 %v3878
        %3898 = vmatmul.f32.gmra.mxu0 %v3874
        %v3899 = vpop.f32.mrf.mxu0
        %v3900 = vadd.f32 %v525, %v3899
        %3901 = vmatmul.f32.gmra.mxu0 %v3876
        %v3902 = vpop.f32.mrf.mxu0
        %v3903 = vadd.f32 %v526, %v3902
        %3904 = vdwg.mxu0
        %v3905 = vsel %vm679, %v3900, -inf
        %3906 = vmax.xlane.f32.xlu0 %v3905
        %v3907 = vpop.xlane.xlu0 %3906
        %v3908 = vsel %vm679, %v3903, -inf
        %3909 = vmax.xlane.f32.xlu0 %v3908
        %v3910 = vpop.xlane.xlu0 %3909
        %v3911 = vsub.f32 %v3900, %v3907
        %v3912 = vsub.f32 %v3903, %v3910
        %v3913 = vmul.f32 %v3911, 1.442695
        %v3914 = vpow.pop %v3913
        %v3915 = vmul.f32 %v3912, 1.442695
        %v3916 = vpow.pop %v3915
        %v3917 = vsel %vm679, %v3914, 0.0
        %3918 = vadd.xlane.f32.xlu0 %v3917
        %v3919 = vpop.xlane.xlu0 %3918
        %v3920 = vsel %vm679, %v3916, 0.0
        %3921 = vadd.xlane.f32.xlu0 %v3920
        %v3922 = vpop.xlane.xlu0 %3921
        %v3923 = vrcp.pop %v3919
        %v3924 = vrcp.pop %v3922
        %v3925 = vmul.f32 %v3914, %v3923
        %v3926 = vmul.f32 %v3916, %v3924
        %3929 = vrot.lane.b32.xlu0 %v3764, 112
        %v3930 = vpop.permute.xlu0 %3929
        %3931 = vrot.lane.b32.xlu0 %v3767, 112
        %v3932 = vpop.permute.xlu0 %3931
        %v3936 = vsel %vm679, %v3925, 0
        %v3939 = vsel %vm679, %v3926, 0
        %3941 = vmatpush.msra.mxu0 0.0
        %3942 = vmatpush.msra.mxu0 0.0
        %3943 = vmatpush.msra.mxu0 0.0
        %3944 = vmatpush.msra.mxu0 0.0
        %3945 = vmatpush.msra.mxu0 0.0
        %3946 = vmatpush.msra.mxu0 0.0
        %3947 = vmatpush.msra.mxu0 0.0
        %3948 = vmatpush.msra.mxu0 0.0
        %3949 = vmatpush.msra.mxu0 0.0
        %3950 = vmatpush.msra.mxu0 0.0
        %3951 = vmatpush.msra.mxu0 0.0
        %3952 = vmatpush.msra.mxu0 0.0
        %3953 = vmatpush.msra.mxu0 0.0
        %3954 = vmatpush.msra.mxu0 0.0
        %3955 = vmatpush.msra.mxu0 %v3932
        %3956 = vmatpush.msra.mxu0 %v3930
        %3957 = vmatmul.f32.gmra.mxu0 %v3936
        %v3958 = vpop.f32.mrf.mxu0
        %v3959 = vadd.f32 0.0, %v3958
        %3960 = vmatmul.f32.gmra.mxu0 %v3939
        %v3961 = vpop.f32.mrf.mxu0
        %v3962 = vadd.f32 0.0, %v3961
        %3963 = vdwg.mxu0
        %v3965 = vsel %vm679, %v3959, 0
        %v3968 = vsel %vm679, %v3962, 0
        %3970 = vmatpush.msra.mxu0 0.0
        %3971 = vmatpush.msra.mxu0 0.0
        %3972 = vmatpush.msra.mxu0 0.0
        %3973 = vmatpush.msra.mxu0 0.0
        %3974 = vmatpush.msra.mxu0 0.0
        %3975 = vmatpush.msra.mxu0 0.0
        %3976 = vmatpush.msra.mxu0 0.0
        %3977 = vmatpush.msra.mxu0 0.0
        %3978 = vmatpush.msra.mxu0 0.0
        %3979 = vmatpush.msra.mxu0 0.0
        %3980 = vmatpush.msra.mxu0 0.0
        %3981 = vmatpush.msra.mxu0 0.0
        %3982 = vmatpush.msra.mxu0 0.0
        %3983 = vmatpush.msra.mxu0 0.0
        %3984 = vmatpush.msra.mxu0 %v3773
        %3985 = vmatpush.msra.mxu0 %v3772
        %3986 = vmatmul.f32.gmra.mxu0 %v3965
        %v3987 = vpop.f32.mrf.mxu0
        %v3988 = vadd.f32 0.0, %v3987
        %3989 = vmatmul.f32.gmra.mxu0 %v3968
        %v3990 = vpop.f32.mrf.mxu0
        %v3991 = vadd.f32 0.0, %v3990
        %3992 = vdwg.mxu0
        %v3994 = vsel %vm679, %v3861, 0
        %v3997 = vsel %vm679, %v3864, 0
        %3999 = vmatpush.msra.mxu0 0.0
        %4000 = vmatpush.msra.mxu0 0.0
        %4001 = vmatpush.msra.mxu0 0.0
        %4002 = vmatpush.msra.mxu0 0.0
        %4003 = vmatpush.msra.mxu0 0.0
        %4004 = vmatpush.msra.mxu0 0.0
        %4005 = vmatpush.msra.mxu0 0.0
        %4006 = vmatpush.msra.mxu0 0.0
        %4007 = vmatpush.msra.mxu0 0.0
        %4008 = vmatpush.msra.mxu0 0.0
        %4009 = vmatpush.msra.mxu0 0.0
        %4010 = vmatpush.msra.mxu0 0.0
        %4011 = vmatpush.msra.mxu0 0.0
        %4012 = vmatpush.msra.mxu0 0.0
        %4013 = vmatpush.msra.mxu0 %v3771
        %4014 = vmatpush.msra.mxu0 %v3770
        %4015 = vmatmul.f32.gmra.mxu0 %v3994
        %v4016 = vpop.f32.mrf.mxu0
        %v4017 = vadd.f32 %v3988, %v4016
        %4018 = vmatmul.f32.gmra.mxu0 %v3997
        %v4019 = vpop.f32.mrf.mxu0
        %v4020 = vadd.f32 %v3991, %v4019
        %4021 = vdwg.mxu0
        %4022 = vrot.lane.b32.xlu0 %v3741, 96
        %v4023 = vpop.permute.xlu0 %4022
        %4024 = vrot.lane.b32.xlu0 %v3744, 96
        %v4025 = vpop.permute.xlu0 %4024
        %4026 = vrot.lane.b32.xlu0 %v3741, 32
        %v4027 = vpop.permute.xlu0 %4026
        %4028 = vrot.lane.b32.xlu0 %v3744, 32
        %v4029 = vpop.permute.xlu0 %4028
        %v4030 = vsel %vm679, %v4023, 0
        %v4032 = vsel %vm679, %v4025, 0
        %v4034 = vsel %vm679, %v4027, 0
        %v4036 = vsel %vm679, %v4029, 0
        %4038 = vmatpush.xpose.msra.mxu0 0.0
        %4039 = vmatpush.xpose.msra.mxu0 0.0
        %4040 = vmatpush.xpose.msra.mxu0 0.0
        %4041 = vmatpush.xpose.msra.mxu0 0.0
        %4042 = vmatpush.xpose.msra.mxu0 0.0
        %4043 = vmatpush.xpose.msra.mxu0 0.0
        %4044 = vmatpush.xpose.msra.mxu0 0.0
        %4045 = vmatpush.xpose.msra.mxu0 0.0
        %4046 = vmatpush.xpose.msra.mxu0 0.0
        %4047 = vmatpush.xpose.msra.mxu0 0.0
        %4048 = vmatpush.xpose.msra.mxu0 0.0
        %4049 = vmatpush.xpose.msra.mxu0 0.0
        %4050 = vmatpush.xpose.msra.mxu0 0.0
        %4051 = vmatpush.xpose.msra.mxu0 0.0
        %4052 = vmatpush.xpose.msra.mxu0 %v4036
        %4053 = vmatpush.xpose.msra.mxu0 %v4034
        %4054 = vmatmul.f32.gmra.mxu0 %v4030
        %v4055 = vpop.f32.mrf.mxu0
        %v4056 = vadd.f32 %v525, %v4055
        %4057 = vmatmul.f32.gmra.mxu0 %v4032
        %v4058 = vpop.f32.mrf.mxu0
        %v4059 = vadd.f32 %v526, %v4058
        %4060 = vdwg.mxu0
        %v4061 = vsel %vm679, %v4056, -inf
        %4062 = vmax.xlane.f32.xlu0 %v4061
        %v4063 = vpop.xlane.xlu0 %4062
        %v4064 = vsel %vm679, %v4059, -inf
        %4065 = vmax.xlane.f32.xlu0 %v4064
        %v4066 = vpop.xlane.xlu0 %4065
        %v4067 = vsub.f32 %v4056, %v4063
        %v4068 = vsub.f32 %v4059, %v4066
        %v4069 = vmul.f32 %v4067, 1.442695
        %v4070 = vpow.pop %v4069
        %v4071 = vmul.f32 %v4068, 1.442695
        %v4072 = vpow.pop %v4071
        %v4073 = vsel %vm679, %v4070, 0.0
        %4074 = vadd.xlane.f32.xlu0 %v4073
        %v4075 = vpop.xlane.xlu0 %4074
        %v4076 = vsel %vm679, %v4072, 0.0
        %4077 = vadd.xlane.f32.xlu0 %v4076
        %v4078 = vpop.xlane.xlu0 %4077
        %v4079 = vrcp.pop %v4075
        %v4080 = vrcp.pop %v4078
        %v4081 = vmul.f32 %v4070, %v4079
        %v4082 = vmul.f32 %v4072, %v4080
        %4083 = vrot.lane.b32.xlu0 %v3764, 96
        %v4084 = vpop.permute.xlu0 %4083
        %4085 = vrot.lane.b32.xlu0 %v3767, 96
        %v4086 = vpop.permute.xlu0 %4085
        %v4090 = vsel %vm679, %v4081, 0
        %v4093 = vsel %vm679, %v4082, 0
        %4095 = vmatpush.msra.mxu0 0.0
        %4096 = vmatpush.msra.mxu0 0.0
        %4097 = vmatpush.msra.mxu0 0.0
        %4098 = vmatpush.msra.mxu0 0.0
        %4099 = vmatpush.msra.mxu0 0.0
        %4100 = vmatpush.msra.mxu0 0.0
        %4101 = vmatpush.msra.mxu0 0.0
        %4102 = vmatpush.msra.mxu0 0.0
        %4103 = vmatpush.msra.mxu0 0.0
        %4104 = vmatpush.msra.mxu0 0.0
        %4105 = vmatpush.msra.mxu0 0.0
        %4106 = vmatpush.msra.mxu0 0.0
        %4107 = vmatpush.msra.mxu0 0.0
        %4108 = vmatpush.msra.mxu0 0.0
        %4109 = vmatpush.msra.mxu0 %v4086
        %4110 = vmatpush.msra.mxu0 %v4084
        %4111 = vmatmul.f32.gmra.mxu0 %v4090
        %v4112 = vpop.f32.mrf.mxu0
        %v4113 = vadd.f32 0.0, %v4112
        %4114 = vmatmul.f32.gmra.mxu0 %v4093
        %v4115 = vpop.f32.mrf.mxu0
        %v4116 = vadd.f32 0.0, %v4115
        %4117 = vdwg.mxu0
        %v4119 = vsel %vm679, %v4113, 0
        %v4122 = vsel %vm679, %v4116, 0
        %4124 = vmatpush.msra.mxu0 0.0
        %4125 = vmatpush.msra.mxu0 0.0
        %4126 = vmatpush.msra.mxu0 0.0
        %4127 = vmatpush.msra.mxu0 0.0
        %4128 = vmatpush.msra.mxu0 0.0
        %4129 = vmatpush.msra.mxu0 0.0
        %4130 = vmatpush.msra.mxu0 0.0
        %4131 = vmatpush.msra.mxu0 0.0
        %4132 = vmatpush.msra.mxu0 0.0
        %4133 = vmatpush.msra.mxu0 0.0
        %4134 = vmatpush.msra.mxu0 0.0
        %4135 = vmatpush.msra.mxu0 0.0
        %4136 = vmatpush.msra.mxu0 0.0
        %4137 = vmatpush.msra.mxu0 0.0
        %4138 = vmatpush.msra.mxu0 %v3775
        %4139 = vmatpush.msra.mxu0 %v3774
        %4140 = vmatmul.f32.gmra.mxu0 %v4119
        %v4141 = vpop.f32.mrf.mxu0
        %v4142 = vadd.f32 0.0, %v4141
        %4143 = vmatmul.f32.gmra.mxu0 %v4122
        %v4144 = vpop.f32.mrf.mxu0
        %v4145 = vadd.f32 0.0, %v4144
        %4146 = vdwg.mxu0
        %v4147 = vadd.f32 %v4017, %v4142
        %v4148 = vadd.f32 %v4020, %v4145
        %4149 = vrot.lane.b32.xlu0 %v3741, 80
        %v4150 = vpop.permute.xlu0 %4149
        %4151 = vrot.lane.b32.xlu0 %v3744, 80
        %v4152 = vpop.permute.xlu0 %4151
        %4153 = vrot.lane.b32.xlu0 %v3741, 16
        %v4154 = vpop.permute.xlu0 %4153
        %4155 = vrot.lane.b32.xlu0 %v3744, 16
        %v4156 = vpop.permute.xlu0 %4155
        %v4157 = vsel %vm679, %v4150, 0
        %v4159 = vsel %vm679, %v4152, 0
        %v4161 = vsel %vm679, %v4154, 0
        %v4163 = vsel %vm679, %v4156, 0
        %4165 = vmatpush.xpose.msra.mxu0 0.0
        %4166 = vmatpush.xpose.msra.mxu0 0.0
        %4167 = vmatpush.xpose.msra.mxu0 0.0
        %4168 = vmatpush.xpose.msra.mxu0 0.0
        %4169 = vmatpush.xpose.msra.mxu0 0.0
        %4170 = vmatpush.xpose.msra.mxu0 0.0
        %4171 = vmatpush.xpose.msra.mxu0 0.0
        %4172 = vmatpush.xpose.msra.mxu0 0.0
        %4173 = vmatpush.xpose.msra.mxu0 0.0
        %4174 = vmatpush.xpose.msra.mxu0 0.0
        %4175 = vmatpush.xpose.msra.mxu0 0.0
        %4176 = vmatpush.xpose.msra.mxu0 0.0
        %4177 = vmatpush.xpose.msra.mxu0 0.0
        %4178 = vmatpush.xpose.msra.mxu0 0.0
        %4179 = vmatpush.xpose.msra.mxu0 %v4163
        %4180 = vmatpush.xpose.msra.mxu0 %v4161
        %4181 = vmatmul.f32.gmra.mxu0 %v4157
        %v4182 = vpop.f32.mrf.mxu0
        %v4183 = vadd.f32 %v525, %v4182
        %4184 = vmatmul.f32.gmra.mxu0 %v4159
        %v4185 = vpop.f32.mrf.mxu0
        %v4186 = vadd.f32 %v526, %v4185
        %4187 = vdwg.mxu0
        %v4188 = vsel %vm679, %v4183, -inf
        %4189 = vmax.xlane.f32.xlu0 %v4188
        %v4190 = vpop.xlane.xlu0 %4189
        %v4191 = vsel %vm679, %v4186, -inf
        %4192 = vmax.xlane.f32.xlu0 %v4191
        %v4193 = vpop.xlane.xlu0 %4192
        %v4194 = vsub.f32 %v4183, %v4190
        %v4195 = vsub.f32 %v4186, %v4193
        %v4196 = vmul.f32 %v4194, 1.442695
        %v4197 = vpow.pop %v4196
        %v4198 = vmul.f32 %v4195, 1.442695
        %v4199 = vpow.pop %v4198
        %v4200 = vsel %vm679, %v4197, 0.0
        %4201 = vadd.xlane.f32.xlu0 %v4200
        %v4202 = vpop.xlane.xlu0 %4201
        %v4203 = vsel %vm679, %v4199, 0.0
        %4204 = vadd.xlane.f32.xlu0 %v4203
        %v4205 = vpop.xlane.xlu0 %4204
        %v4206 = vrcp.pop %v4202
        %v4207 = vrcp.pop %v4205
        %v4208 = vmul.f32 %v4197, %v4206
        %v4209 = vmul.f32 %v4199, %v4207
        %4210 = vrot.lane.b32.xlu0 %v3764, 80
        %v4211 = vpop.permute.xlu0 %4210
        %4212 = vrot.lane.b32.xlu0 %v3767, 80
        %v4213 = vpop.permute.xlu0 %4212
        %v4217 = vsel %vm679, %v4208, 0
        %v4220 = vsel %vm679, %v4209, 0
        %4222 = vmatpush.msra.mxu0 0.0
        %4223 = vmatpush.msra.mxu0 0.0
        %4224 = vmatpush.msra.mxu0 0.0
        %4225 = vmatpush.msra.mxu0 0.0
        %4226 = vmatpush.msra.mxu0 0.0
        %4227 = vmatpush.msra.mxu0 0.0
        %4228 = vmatpush.msra.mxu0 0.0
        %4229 = vmatpush.msra.mxu0 0.0
        %4230 = vmatpush.msra.mxu0 0.0
        %4231 = vmatpush.msra.mxu0 0.0
        %4232 = vmatpush.msra.mxu0 0.0
        %4233 = vmatpush.msra.mxu0 0.0
        %4234 = vmatpush.msra.mxu0 0.0
        %4235 = vmatpush.msra.mxu0 0.0
        %4236 = vmatpush.msra.mxu0 %v4213
        %4237 = vmatpush.msra.mxu0 %v4211
        %4238 = vmatmul.f32.gmra.mxu0 %v4217
        %v4239 = vpop.f32.mrf.mxu0
        %v4240 = vadd.f32 0.0, %v4239
        %4241 = vmatmul.f32.gmra.mxu0 %v4220
        %v4242 = vpop.f32.mrf.mxu0
        %v4243 = vadd.f32 0.0, %v4242
        %4244 = vdwg.mxu0
        %v4246 = vsel %vm679, %v4240, 0
        %v4249 = vsel %vm679, %v4243, 0
        %4251 = vmatpush.msra.mxu0 0.0
        %4252 = vmatpush.msra.mxu0 0.0
        %4253 = vmatpush.msra.mxu0 0.0
        %4254 = vmatpush.msra.mxu0 0.0
        %4255 = vmatpush.msra.mxu0 0.0
        %4256 = vmatpush.msra.mxu0 0.0
        %4257 = vmatpush.msra.mxu0 0.0
        %4258 = vmatpush.msra.mxu0 0.0
        %4259 = vmatpush.msra.mxu0 0.0
        %4260 = vmatpush.msra.mxu0 0.0
        %4261 = vmatpush.msra.mxu0 0.0
        %4262 = vmatpush.msra.mxu0 0.0
        %4263 = vmatpush.msra.mxu0 0.0
        %4264 = vmatpush.msra.mxu0 0.0
        %4265 = vmatpush.msra.mxu0 %v3777
        %4266 = vmatpush.msra.mxu0 %v3776
        %4267 = vmatmul.f32.gmra.mxu0 %v4246
        %v4268 = vpop.f32.mrf.mxu0
        %v4269 = vadd.f32 0.0, %v4268
        %4270 = vmatmul.f32.gmra.mxu0 %v4249
        %v4271 = vpop.f32.mrf.mxu0
        %v4272 = vadd.f32 0.0, %v4271
        %4273 = vdwg.mxu0
        %v4274 = vadd.f32 %v4147, %v4269
        %v4275 = vadd.f32 %v4148, %v4272
        %v4276 = vadd.f32 %v3631, %v4274
        %v4277 = vadd.f32 %v3632, %v4275
        %s4278 = scalar_lea.vmem %s7, 3
        %v4279 = vld [vmem:[%s4278] sm:$0x1]
        %v4281 = vperm.slane %v4279, 0
        %v4283 = vadd.f32 %v4276, %v4281
        %v4284 = vadd.f32 %v4277, %v4281
        %s4285 = scalar_lea.vmem %s8, 3
        %v4286 = vld [vmem:[%s4285] sm:$0x1]
        %s4287 = scalar_lea.vmem %s9, 3
        %v4288 = vld [vmem:[%s4287] sm:$0x1]
        %v4289 = vsel %vm529, %v4283, 0.0
        %4290 = vadd.xlane.f32.xlu0 %v4289
        %v4291 = vpop.xlane.xlu0 %4290
        %v4292 = vsel %vm529, %v4284, 0.0
        %4293 = vadd.xlane.f32.xlu0 %v4292
        %v4294 = vpop.xlane.xlu0 %4293
        %v4295 = vmul.f32 %v4291, %v542
        %v4296 = vmul.f32 %v4294, %v542
        %v4297 = vsub.f32 %v4283, %v4295
        %v4298 = vsub.f32 %v4284, %v4296
        %v4299 = vmul.f32 %v4297, %v4297
        %v4300 = vmul.f32 %v4298, %v4298
        %v4301 = vsel %vm529, %v4299, 0.0
        %4302 = vadd.xlane.f32.xlu0 %v4301
        %v4303 = vpop.xlane.xlu0 %4302
        %v4304 = vsel %vm529, %v4300, 0.0
        %4305 = vadd.xlane.f32.xlu0 %v4304
        %v4306 = vpop.xlane.xlu0 %4305
        %v4307 = vmul.f32 %v4303, %v542
        %v4308 = vmul.f32 %v4306, %v542
        %v4309 = vadd.f32 %v4307, 1e-05
        %v4310 = vadd.f32 %v4308, 1e-05
        %v4311 = vrsqrt.pop %v4309
        %v4312 = vmul.f32 %v4311, %v4309
        %v4313 = vmul.f32 %v4312, %v4311
        %v4314 = vmul.f32 0.5, %v4313
        %v4315 = vsub.f32 1.5, %v4314
        %v4316 = vmul.f32 %v4311, %v4315
        %vm4317 = vweird.f32 %v4309
        %vm4318 = vweird.f32 %v4311
        %vm4319 = vmor %vm4317, %vm4318
        %v4320 = vsel %vm4319, %v4311, %v4316
        %v4321 = vrsqrt.pop %v4310
        %v4322 = vmul.f32 %v4321, %v4310
        %v4323 = vmul.f32 %v4322, %v4321
        %v4324 = vmul.f32 0.5, %v4323
        %v4325 = vsub.f32 1.5, %v4324
        %v4326 = vmul.f32 %v4321, %v4325
        %vm4327 = vweird.f32 %v4310
        %vm4328 = vweird.f32 %v4321
        %vm4329 = vmor %vm4327, %vm4328
        %v4330 = vsel %vm4329, %v4321, %v4326
        %v4331 = vmul.f32 %v4297, %v4320
        %v4332 = vmul.f32 %v4298, %v4330
        %v4334 = vperm.slane %v4286, 0
        %v4336 = vmul.f32 %v4331, %v4334
        %v4337 = vmul.f32 %v4332, %v4334
        %v4339 = vperm.slane %v4288, 0
        %v4341 = vadd.f32 %v4336, %v4339
        %v4342 = vadd.f32 %v4337, %v4339
        %s4343 = scalar_lea.vmem %s10, 384
        %v4344 = vld [vmem:[%s4343] sm:$0xff]
        %v4345 = vld [vmem:[%s4343 + $0x8] sm:$0xff]
        %v4346 = vld [vmem:[%s4343 + $0x10] sm:$0xff]
        %v4347 = vld [vmem:[%s4343 + $0x18] sm:$0xff]
        %v4348 = vld [vmem:[%s4343 + $0x20] sm:$0xff]
        %v4349 = vld [vmem:[%s4343 + $0x28] sm:$0xff]
        %v4350 = vld [vmem:[%s4343 + $0x30] sm:$0xff]
        %v4351 = vld [vmem:[%s4343 + $0x38] sm:$0xff]
        %v4352 = vld [vmem:[%s4343 + $0x40] sm:$0xff]
        %v4353 = vld [vmem:[%s4343 + $0x48] sm:$0xff]
        %v4354 = vld [vmem:[%s4343 + $0x50] sm:$0xff]
        %v4355 = vld [vmem:[%s4343 + $0x58] sm:$0xff]
        %v4356 = vld [vmem:[%s4343 + $0x60] sm:$0xff]
        %v4357 = vld [vmem:[%s4343 + $0x68] sm:$0xff]
        %v4358 = vld [vmem:[%s4343 + $0x70] sm:$0xff]
        %v4359 = vld [vmem:[%s4343 + $0x78] sm:$0xff]
        %s4360 = scalar_lea.vmem %s11, 6
        %v4361 = vld [vmem:[%s4360] sm:$0x3]
        %v4363 = vperm.slane %v4361, 0
        %v4364 = vperm.slane %v4361, 1
        %v4368 = vsel %vm529, %v4341, 0
        %v4371 = vsel %vm529, %v4342, 0
        %4373 = vmatpush.msra.mxu0 0.0
        %4374 = vmatpush.msra.mxu0 0.0
        %4375 = vmatpush.msra.mxu0 0.0
        %4376 = vmatpush.msra.mxu0 0.0
        %4377 = vmatpush.msra.mxu0 0.0
        %4378 = vmatpush.msra.mxu0 0.0
        %4379 = vmatpush.msra.mxu0 0.0
        %4380 = vmatpush.msra.mxu0 0.0
        %4381 = vmatpush.msra.mxu0 %v4358
        %4382 = vmatpush.msra.mxu0 %v4356
        %4383 = vmatpush.msra.mxu0 %v4354
        %4384 = vmatpush.msra.mxu0 %v4352
        %4385 = vmatpush.msra.mxu0 %v4350
        %4386 = vmatpush.msra.mxu0 %v4348
        %4387 = vmatpush.msra.mxu0 %v4346
        %4388 = vmatpush.msra.mxu0 %v4344
        %4389 = vmatmul.f32.gmra.mxu0 %v4368
        %v4390 = vpop.f32.mrf.mxu0
        %v4391 = vadd.f32 %v4363, %v4390
        %4392 = vmatmul.f32.gmra.mxu0 %v4371
        %v4393 = vpop.f32.mrf.mxu0
        %v4394 = vadd.f32 %v4363, %v4393
        %4395 = vdwg.mxu0
        %4396 = vmatpush.msra.mxu0 0.0
        %4397 = vmatpush.msra.mxu0 0.0
        %4398 = vmatpush.msra.mxu0 0.0
        %4399 = vmatpush.msra.mxu0 0.0
        %4400 = vmatpush.msra.mxu0 0.0
        %4401 = vmatpush.msra.mxu0 0.0
        %4402 = vmatpush.msra.mxu0 0.0
        %4403 = vmatpush.msra.mxu0 0.0
        %4404 = vmatpush.msra.mxu0 %v4359
        %4405 = vmatpush.msra.mxu0 %v4357
        %4406 = vmatpush.msra.mxu0 %v4355
        %4407 = vmatpush.msra.mxu0 %v4353
        %4408 = vmatpush.msra.mxu0 %v4351
        %4409 = vmatpush.msra.mxu0 %v4349
        %4410 = vmatpush.msra.mxu0 %v4347
        %4411 = vmatpush.msra.mxu0 %v4345
        %4412 = vmatmul.f32.gmra.mxu0 %v4368
        %v4413 = vpop.f32.mrf.mxu0
        %v4414 = vadd.f32 %v4364, %v4413
        %4415 = vmatmul.f32.gmra.mxu0 %v4371
        %v4416 = vpop.f32.mrf.mxu0
        %v4417 = vadd.f32 %v4364, %v4416
        %4418 = vdwg.mxu0
        %v4419 = vmul.f32 %v4391, 0.5
        %v4420 = vmul.f32 %v4414, 0.5
        %v4421 = vmul.f32 %v4394, 0.5
        %v4422 = vmul.f32 %v4417, 0.5
        %v4423 = vmul.f32 %v4391, 0.70710677
        %v4424 = vmul.f32 %v4414, 0.70710677
        %v4425 = vmul.f32 %v4394, 0.70710677
        %v4426 = vmul.f32 %v4417, 0.70710677
        %v4427 = vand.u32 2147483647, %v4423
        %v4428 = vand.u32 2147483647, %v4424
        %v4429 = vand.u32 2147483647, %v4425
        %v4430 = vand.u32 2147483647, %v4426
        %v4431 = vmul.f32 %v4427, 0.3275911
        %v4432 = vmul.f32 %v4428, 0.3275911
        %v4433 = vmul.f32 %v4429, 0.3275911
        %v4434 = vmul.f32 %v4430, 0.3275911
        %v4435 = vadd.f32 %v4431, 1.0
        %v4436 = vadd.f32 %v4432, 1.0
        %v4437 = vadd.f32 %v4433, 1.0
        %v4438 = vadd.f32 %v4434, 1.0
        %v4439 = vrcp.pop %v4435
        %v4440 = vmul.f32 %v4435, %v4439
        %v4441 = vsub.f32 1.0, %v4440
        %v4442 = vmul.f32 %v4439, %v4441
        %v4443 = vadd.f32 %v4439, %v4442
        %vm4444 = vweird.f32 %v4435
        %vm4445 = vweird.f32 %v4439
        %vm4446 = vmor %vm4444, %vm4445
        %v4447 = vsel %vm4446, %v4439, %v4443
        %v4448 = vand.u32 2147483647, %v4435
        %vm4449 = vcmp.eq.f32.partialorder %v4448, 8.507059e+37
        %v4450 = vand.u32 %v4435, 2147483648
        %v4451 = vor.u32 1.1754944e-38, %v4450
        %v4452 = vsel %vm4449, %v4451, %v4447
        %v4453 = vmul.f32 1.0, %v4452
        %v4454 = vrcp.pop %v4436
        %v4455 = vmul.f32 %v4436, %v4454
        %v4456 = vsub.f32 1.0, %v4455
        %v4457 = vmul.f32 %v4454, %v4456
        %v4458 = vadd.f32 %v4454, %v4457
        %vm4459 = vweird.f32 %v4436
        %vm4460 = vweird.f32 %v4454
        %vm4461 = vmor %vm4459, %vm4460
        %v4462 = vsel %vm4461, %v4454, %v4458
        %v4463 = vand.u32 2147483647, %v4436
        %vm4464 = vcmp.eq.f32.partialorder %v4463, 8.507059e+37
        %v4465 = vand.u32 %v4436, 2147483648
        %v4466 = vor.u32 1.1754944e-38, %v4465
        %v4467 = vsel %vm4464, %v4466, %v4462
        %v4468 = vmul.f32 1.0, %v4467
        %v4469 = vrcp.pop %v4437
        %v4470 = vmul.f32 %v4437, %v4469
        %v4471 = vsub.f32 1.0, %v4470
        %v4472 = vmul.f32 %v4469, %v4471
        %v4473 = vadd.f32 %v4469, %v4472
        %vm4474 = vweird.f32 %v4437
        %vm4475 = vweird.f32 %v4469
        %vm4476 = vmor %vm4474, %vm4475
        %v4477 = vsel %vm4476, %v4469, %v4473
        %v4478 = vand.u32 2147483647, %v4437
        %vm4479 = vcmp.eq.f32.partialorder %v4478, 8.507059e+37
        %v4480 = vand.u32 %v4437, 2147483648
        %v4481 = vor.u32 1.1754944e-38, %v4480
        %v4482 = vsel %vm4479, %v4481, %v4477
        %v4483 = vmul.f32 1.0, %v4482
        %v4484 = vrcp.pop %v4438
        %v4485 = vmul.f32 %v4438, %v4484
        %v4486 = vsub.f32 1.0, %v4485
        %v4487 = vmul.f32 %v4484, %v4486
        %v4488 = vadd.f32 %v4484, %v4487
        %vm4489 = vweird.f32 %v4438
        %vm4490 = vweird.f32 %v4484
        %vm4491 = vmor %vm4489, %vm4490
        %v4492 = vsel %vm4491, %v4484, %v4488
        %v4493 = vand.u32 2147483647, %v4438
        %vm4494 = vcmp.eq.f32.partialorder %v4493, 8.507059e+37
        %v4495 = vand.u32 %v4438, 2147483648
        %v4496 = vor.u32 1.1754944e-38, %v4495
        %v4497 = vsel %vm4494, %v4496, %v4492
        %v4498 = vmul.f32 1.0, %v4497
        %v4499 = vmul.f32 %v4453, 1.0614054
        %v4500 = vmul.f32 %v4468, 1.0614054
        %v4501 = vmul.f32 %v4483, 1.0614054
        %v4502 = vmul.f32 %v4498, 1.0614054
        %v4503 = vadd.f32 %v4499, -1.4531521
        %v4504 = vadd.f32 %v4500, -1.4531521
        %v4505 = vadd.f32 %v4501, -1.4531521
        %v4506 = vadd.f32 %v4502, -1.4531521
        %v4507 = vmul.f32 %v4503, %v4453
        %v4508 = vmul.f32 %v4504, %v4468
        %v4509 = vmul.f32 %v4505, %v4483
        %v4510 = vmul.f32 %v4506, %v4498
        %v4511 = vadd.f32 %v4507, 1.4214138
        %v4512 = vadd.f32 %v4508, 1.4214138
        %v4513 = vadd.f32 %v4509, 1.4214138
        %v4514 = vadd.f32 %v4510, 1.4214138
        %v4515 = vmul.f32 %v4511, %v4453
        %v4516 = vmul.f32 %v4512, %v4468
        %v4517 = vmul.f32 %v4513, %v4483
        %v4518 = vmul.f32 %v4514, %v4498
        %v4519 = vadd.f32 %v4515, -0.28449672
        %v4520 = vadd.f32 %v4516, -0.28449672
        %v4521 = vadd.f32 %v4517, -0.28449672
        %v4522 = vadd.f32 %v4518, -0.28449672
        %v4523 = vmul.f32 %v4519, %v4453
        %v4524 = vmul.f32 %v4520, %v4468
        %v4525 = vmul.f32 %v4521, %v4483
        %v4526 = vmul.f32 %v4522, %v4498
        %v4527 = vadd.f32 %v4523, 0.2548296
        %v4528 = vadd.f32 %v4524, 0.2548296
        %v4529 = vadd.f32 %v4525, 0.2548296
        %v4530 = vadd.f32 %v4526, 0.2548296
        %v4531 = vmul.f32 %v4527, %v4453
        %v4532 = vmul.f32 %v4528, %v4468
        %v4533 = vmul.f32 %v4529, %v4483
        %v4534 = vmul.f32 %v4530, %v4498
        %v4535 = vsub.f32 0.0, %v4427
        %v4536 = vsub.f32 0.0, %v4428
        %v4537 = vsub.f32 0.0, %v4429
        %v4538 = vsub.f32 0.0, %v4430
        %v4539 = vmul.f32 %v4535, %v4427
        %v4540 = vmul.f32 %v4536, %v4428
        %v4541 = vmul.f32 %v4537, %v4429
        %v4542 = vmul.f32 %v4538, %v4430
        %v4543 = vmul.f32 %v4539, 1.442695
        %v4544 = vpow.pop %v4543
        %v4545 = vmul.f32 %v4540, 1.442695
        %v4546 = vpow.pop %v4545
        %v4547 = vmul.f32 %v4541, 1.442695
        %v4548 = vpow.pop %v4547
        %v4549 = vmul.f32 %v4542, 1.442695
        %v4550 = vpow.pop %v4549
        %v4551 = vmul.f32 %v4531, %v4544
        %v4552 = vmul.f32 %v4532, %v4546
        %v4553 = vmul.f32 %v4533, %v4548
        %v4554 = vmul.f32 %v4534, %v4550
        %v4555 = vsub.f32 1.0, %v4551
        %v4556 = vsub.f32 1.0, %v4552
        %v4557 = vsub.f32 1.0, %v4553
        %v4558 = vsub.f32 1.0, %v4554
        %vm4559 = vcmp.ge.f32.partialorder %v4423, 0.0
        %vm4560 = vcmp.ge.f32.partialorder %v4424, 0.0
        %vm4561 = vcmp.ge.f32.partialorder %v4425, 0.0
        %vm4562 = vcmp.ge.f32.partialorder %v4426, 0.0
        %v4563 = vsub.f32 0.0, %v4555
        %v4564 = vsub.f32 0.0, %v4556
        %v4565 = vsub.f32 0.0, %v4557
        %v4566 = vsub.f32 0.0, %v4558
        %v4567 = vsel %vm4559, %v4555, %v4563
        %v4568 = vsel %vm4560, %v4556, %v4564
        %v4569 = vsel %vm4561, %v4557, %v4565
        %v4570 = vsel %vm4562, %v4558, %v4566
        %v4571 = vadd.f32 %v4567, 1.0
        %v4572 = vadd.f32 %v4568, 1.0
        %v4573 = vadd.f32 %v4569, 1.0
        %v4574 = vadd.f32 %v4570, 1.0
        %v4575 = vmul.f32 %v4419, %v4571
        %v4576 = vmul.f32 %v4420, %v4572
        %v4577 = vmul.f32 %v4421, %v4573
        %v4578 = vmul.f32 %v4422, %v4574
        %s4579 = scalar_lea.vmem %s12, 768
        %v4580 = vld [vmem:[%s4579] sm:$0xff]
        %v4581 = vld [vmem:[%s4579 + $0x8] sm:$0xff]
        %v4582 = vld [vmem:[%s4579 + $0x10] sm:$0xff]
        %v4583 = vld [vmem:[%s4579 + $0x18] sm:$0xff]
        %v4584 = vld [vmem:[%s4579 + $0x20] sm:$0xff]
        %v4585 = vld [vmem:[%s4579 + $0x28] sm:$0xff]
        %v4586 = vld [vmem:[%s4579 + $0x30] sm:$0xff]
        %v4587 = vld [vmem:[%s4579 + $0x38] sm:$0xff]
        %v4588 = vld [vmem:[%s4579 + $0x40] sm:$0xff]
        %v4589 = vld [vmem:[%s4579 + $0x48] sm:$0xff]
        %v4590 = vld [vmem:[%s4579 + $0x50] sm:$0xff]
        %v4591 = vld [vmem:[%s4579 + $0x58] sm:$0xff]
        %v4592 = vld [vmem:[%s4579 + $0x60] sm:$0xff]
        %v4593 = vld [vmem:[%s4579 + $0x68] sm:$0xff]
        %v4594 = vld [vmem:[%s4579 + $0x70] sm:$0xff]
        %v4595 = vld [vmem:[%s4579 + $0x78] sm:$0xff]
        %v4596 = vld [vmem:[%s4579 + $0x80] sm:$0xff]
        %v4597 = vld [vmem:[%s4579 + $0x88] sm:$0xff]
        %v4598 = vld [vmem:[%s4579 + $0x90] sm:$0xff]
        %v4599 = vld [vmem:[%s4579 + $0x98] sm:$0xff]
        %v4600 = vld [vmem:[%s4579 + $0xa0] sm:$0xff]
        %v4601 = vld [vmem:[%s4579 + $0xa8] sm:$0xff]
        %v4602 = vld [vmem:[%s4579 + $0xb0] sm:$0xff]
        %v4603 = vld [vmem:[%s4579 + $0xb8] sm:$0xff]
        %v4604 = vld [vmem:[%s4579 + $0xc0] sm:$0xff]
        %v4605 = vld [vmem:[%s4579 + $0xc8] sm:$0xff]
        %v4606 = vld [vmem:[%s4579 + $0xd0] sm:$0xff]
        %v4607 = vld [vmem:[%s4579 + $0xd8] sm:$0xff]
        %v4608 = vld [vmem:[%s4579 + $0xe0] sm:$0xff]
        %v4609 = vld [vmem:[%s4579 + $0xe8] sm:$0xff]
        %v4610 = vld [vmem:[%s4579 + $0xf0] sm:$0xff]
        %v4611 = vld [vmem:[%s4579 + $0xf8] sm:$0xff]
        %4612 = vmatpush.msra.mxu0 %v4595
        %4613 = vmatpush.msra.mxu0 %v4594
        %4614 = vmatpush.msra.mxu0 %v4593
        %4615 = vmatpush.msra.mxu0 %v4592
        %4616 = vmatpush.msra.mxu0 %v4591
        %4617 = vmatpush.msra.mxu0 %v4590
        %4618 = vmatpush.msra.mxu0 %v4589
        %4619 = vmatpush.msra.mxu0 %v4588
        %4620 = vmatpush.msra.mxu0 %v4587
        %4621 = vmatpush.msra.mxu0 %v4586
        %4622 = vmatpush.msra.mxu0 %v4585
        %4623 = vmatpush.msra.mxu0 %v4584
        %4624 = vmatpush.msra.mxu0 %v4583
        %4625 = vmatpush.msra.mxu0 %v4582
        %4626 = vmatpush.msra.mxu0 %v4581
        %4627 = vmatpush.msra.mxu0 %v4580
        %4628 = vmatmul.f32.gmra.mxu0 %v4575
        %v4629 = vpop.f32.mrf.mxu0
        %v4630 = vadd.f32 0.0, %v4629
        %4631 = vmatmul.f32.gmra.mxu0 %v4577
        %v4632 = vpop.f32.mrf.mxu0
        %v4633 = vadd.f32 0.0, %v4632
        %4634 = vdwg.mxu0
        %4635 = vmatpush.msra.mxu0 %v4611
        %4636 = vmatpush.msra.mxu0 %v4610
        %4637 = vmatpush.msra.mxu0 %v4609
        %4638 = vmatpush.msra.mxu0 %v4608
        %4639 = vmatpush.msra.mxu0 %v4607
        %4640 = vmatpush.msra.mxu0 %v4606
        %4641 = vmatpush.msra.mxu0 %v4605
        %4642 = vmatpush.msra.mxu0 %v4604
        %4643 = vmatpush.msra.mxu0 %v4603
        %4644 = vmatpush.msra.mxu0 %v4602
        %4645 = vmatpush.msra.mxu0 %v4601
        %4646 = vmatpush.msra.mxu0 %v4600
        %4647 = vmatpush.msra.mxu0 %v4599
        %4648 = vmatpush.msra.mxu0 %v4598
        %4649 = vmatpush.msra.mxu0 %v4597
        %4650 = vmatpush.msra.mxu0 %v4596
        %4651 = vmatmul.f32.gmra.mxu0 %v4576
        %v4652 = vpop.f32.mrf.mxu0
        %v4653 = vadd.f32 %v4630, %v4652
        %4654 = vmatmul.f32.gmra.mxu0 %v4578
        %v4655 = vpop.f32.mrf.mxu0
        %v4656 = vadd.f32 %v4633, %v4655
        %4657 = vdwg.mxu0
        %v4658 = vadd.f32 %v4283, %v4653
        %v4659 = vadd.f32 %v4284, %v4656
        %s4660 = scalar_lea.vmem [#allocation6], 3
        %v4661 = vld [vmem:[%s4660] sm:$0x1]
        %v4663 = vperm.slane %v4661, 0
        %v4665 = vadd.f32 %v4658, %v4663
        %v4666 = vadd.f32 %v4659, %v4663
        %4669 = vrot.lane.b32.xlu0 %v4665, 64
        %v4670 = vpop.permute.xlu0 %4669
        %4671 = vrot.lane.b32.xlu0 %v4666, 64
        %v4672 = vpop.permute.xlu0 %4671
        %4675 = vst.msk [vmem:[%s521 + $0x8] sm:$0xff] %vm2598, %v4670
        %4676 = vst.msk [vmem:[%s521 + $0x20] sm:$0xff] %vm2598, %v4672
        %s4677 = scalar_lea.vmem %s2, 4
        %v4678 = vld [vmem:[%s4677] sm:$0x1]
        %s4679 = scalar_lea.vmem [#allocation4], 4
        %v4680 = vld [vmem:[%s4679] sm:$0x1]
        %v4681 = vsel %vm529, %v4665, 0.0
        %4682 = vadd.xlane.f32.xlu0 %v4681
        %v4683 = vpop.xlane.xlu0 %4682
        %v4684 = vsel %vm529, %v4666, 0.0
        %4685 = vadd.xlane.f32.xlu0 %v4684
        %v4686 = vpop.xlane.xlu0 %4685
        %v4687 = vmul.f32 %v4683, %v542
        %v4688 = vmul.f32 %v4686, %v542
        %v4689 = vsub.f32 %v4665, %v4687
        %v4690 = vsub.f32 %v4666, %v4688
        %v4691 = vmul.f32 %v4689, %v4689
        %v4692 = vmul.f32 %v4690, %v4690
        %v4693 = vsel %vm529, %v4691, 0.0
        %4694 = vadd.xlane.f32.xlu0 %v4693
        %v4695 = vpop.xlane.xlu0 %4694
        %v4696 = vsel %vm529, %v4692, 0.0
        %4697 = vadd.xlane.f32.xlu0 %v4696
        %v4698 = vpop.xlane.xlu0 %4697
        %v4699 = vmul.f32 %v4695, %v542
        %v4700 = vmul.f32 %v4698, %v542
        %v4701 = vadd.f32 %v4699, 1e-05
        %v4702 = vadd.f32 %v4700, 1e-05
        %v4703 = vrsqrt.pop %v4701
        %v4704 = vmul.f32 %v4703, %v4701
        %v4705 = vmul.f32 %v4704, %v4703
        %v4706 = vmul.f32 0.5, %v4705
        %v4707 = vsub.f32 1.5, %v4706
        %v4708 = vmul.f32 %v4703, %v4707
        %vm4709 = vweird.f32 %v4701
        %vm4710 = vweird.f32 %v4703
        %vm4711 = vmor %vm4709, %vm4710
        %v4712 = vsel %vm4711, %v4703, %v4708
        %v4713 = vrsqrt.pop %v4702
        %v4714 = vmul.f32 %v4713, %v4702
        %v4715 = vmul.f32 %v4714, %v4713
        %v4716 = vmul.f32 0.5, %v4715
        %v4717 = vsub.f32 1.5, %v4716
        %v4718 = vmul.f32 %v4713, %v4717
        %vm4719 = vweird.f32 %v4702
        %vm4720 = vweird.f32 %v4713
        %vm4721 = vmor %vm4719, %vm4720
        %v4722 = vsel %vm4721, %v4713, %v4718
        %v4723 = vmul.f32 %v4689, %v4712
        %v4724 = vmul.f32 %v4690, %v4722
        %v4726 = vperm.slane %v4678, 0
        %v4728 = vmul.f32 %v4723, %v4726
        %v4729 = vmul.f32 %v4724, %v4726
        %v4731 = vperm.slane %v4680, 0
        %v4733 = vadd.f32 %v4728, %v4731
        %v4734 = vadd.f32 %v4729, %v4731
        %s4735 = scalar_lea.vmem %s4, 512
        %v4736 = vld [vmem:[%s4735] sm:$0xff]
        %v4737 = vld [vmem:[%s4735 + $0x8] sm:$0xff]
        %v4738 = vld [vmem:[%s4735 + $0x10] sm:$0xff]
        %v4739 = vld [vmem:[%s4735 + $0x18] sm:$0xff]
        %v4740 = vld [vmem:[%s4735 + $0x20] sm:$0xff]
        %v4741 = vld [vmem:[%s4735 + $0x28] sm:$0xff]
        %v4742 = vld [vmem:[%s4735 + $0x30] sm:$0xff]
        %v4743 = vld [vmem:[%s4735 + $0x38] sm:$0xff]
        %v4744 = vld [vmem:[%s4735 + $0x40] sm:$0xff]
        %v4745 = vld [vmem:[%s4735 + $0x48] sm:$0xff]
        %v4746 = vld [vmem:[%s4735 + $0x50] sm:$0xff]
        %v4747 = vld [vmem:[%s4735 + $0x58] sm:$0xff]
        %v4748 = vld [vmem:[%s4735 + $0x60] sm:$0xff]
        %v4749 = vld [vmem:[%s4735 + $0x68] sm:$0xff]
        %v4750 = vld [vmem:[%s4735 + $0x70] sm:$0xff]
        %v4751 = vld [vmem:[%s4735 + $0x78] sm:$0xff]
        %s4752 = scalar_lea.vmem %s5, 8
        %v4753 = vld [vmem:[%s4752] sm:$0x3]
        %v4755 = vperm.slane %v4753, 0
        %v4756 = vperm.slane %v4753, 1
        %v4760 = vsel %vm529, %v4733, 0
        %v4763 = vsel %vm529, %v4734, 0
        %4765 = vmatpush.msra.mxu0 0.0
        %4766 = vmatpush.msra.mxu0 0.0
        %4767 = vmatpush.msra.mxu0 0.0
        %4768 = vmatpush.msra.mxu0 0.0
        %4769 = vmatpush.msra.mxu0 0.0
        %4770 = vmatpush.msra.mxu0 0.0
        %4771 = vmatpush.msra.mxu0 0.0
        %4772 = vmatpush.msra.mxu0 0.0
        %4773 = vmatpush.msra.mxu0 %v4750
        %4774 = vmatpush.msra.mxu0 %v4748
        %4775 = vmatpush.msra.mxu0 %v4746
        %4776 = vmatpush.msra.mxu0 %v4744
        %4777 = vmatpush.msra.mxu0 %v4742
        %4778 = vmatpush.msra.mxu0 %v4740
        %4779 = vmatpush.msra.mxu0 %v4738
        %4780 = vmatpush.msra.mxu0 %v4736
        %4781 = vmatmul.f32.gmra.mxu0 %v4760
        %v4782 = vpop.f32.mrf.mxu0
        %v4783 = vadd.f32 %v4755, %v4782
        %4784 = vmatmul.f32.gmra.mxu0 %v4763
        %v4785 = vpop.f32.mrf.mxu0
        %v4786 = vadd.f32 %v4755, %v4785
        %4787 = vdwg.mxu0
        %4788 = vmatpush.msra.mxu0 0.0
        %4789 = vmatpush.msra.mxu0 0.0
        %4790 = vmatpush.msra.mxu0 0.0
        %4791 = vmatpush.msra.mxu0 0.0
        %4792 = vmatpush.msra.mxu0 0.0
        %4793 = vmatpush.msra.mxu0 0.0
        %4794 = vmatpush.msra.mxu0 0.0
        %4795 = vmatpush.msra.mxu0 0.0
        %4796 = vmatpush.msra.mxu0 %v4751
        %4797 = vmatpush.msra.mxu0 %v4749
        %4798 = vmatpush.msra.mxu0 %v4747
        %4799 = vmatpush.msra.mxu0 %v4745
        %4800 = vmatpush.msra.mxu0 %v4743
        %4801 = vmatpush.msra.mxu0 %v4741
        %4802 = vmatpush.msra.mxu0 %v4739
        %4803 = vmatpush.msra.mxu0 %v4737
        %4804 = vmatmul.f32.gmra.mxu0 %v4760
        %v4805 = vpop.f32.mrf.mxu0
        %v4806 = vadd.f32 %v4756, %v4805
        %4807 = vmatmul.f32.gmra.mxu0 %v4763
        %v4808 = vpop.f32.mrf.mxu0
        %v4809 = vadd.f32 %v4756, %v4808
        %4810 = vdwg.mxu0
        %s4811 = scalar_lea.vmem %s6, 256
        %v4812 = vld [vmem:[%s4811] sm:$0xff]
        %v4813 = vld [vmem:[%s4811 + $0x8] sm:$0xff]
        %v4814 = vld [vmem:[%s4811 + $0x10] sm:$0xff]
        %v4815 = vld [vmem:[%s4811 + $0x18] sm:$0xff]
        %v4816 = vld [vmem:[%s4811 + $0x20] sm:$0xff]
        %v4817 = vld [vmem:[%s4811 + $0x28] sm:$0xff]
        %v4818 = vld [vmem:[%s4811 + $0x30] sm:$0xff]
        %v4819 = vld [vmem:[%s4811 + $0x38] sm:$0xff]
        %4822 = vrot.lane.b32.xlu0 %v4783, 64
        %v4823 = vpop.permute.xlu0 %4822
        %4824 = vrot.lane.b32.xlu0 %v4786, 64
        %v4825 = vpop.permute.xlu0 %4824
        %v4826 = vsel %vm679, %v4783, 0
        %v4828 = vsel %vm679, %v4786, 0
        %v4830 = vsel %vm679, %v4823, 0
        %v4832 = vsel %vm679, %v4825, 0
        %4834 = vmatpush.xpose.msra.mxu0 0.0
        %4835 = vmatpush.xpose.msra.mxu0 0.0
        %4836 = vmatpush.xpose.msra.mxu0 0.0
        %4837 = vmatpush.xpose.msra.mxu0 0.0
        %4838 = vmatpush.xpose.msra.mxu0 0.0
        %4839 = vmatpush.xpose.msra.mxu0 0.0
        %4840 = vmatpush.xpose.msra.mxu0 0.0
        %4841 = vmatpush.xpose.msra.mxu0 0.0
        %4842 = vmatpush.xpose.msra.mxu0 0.0
        %4843 = vmatpush.xpose.msra.mxu0 0.0
        %4844 = vmatpush.xpose.msra.mxu0 0.0
        %4845 = vmatpush.xpose.msra.mxu0 0.0
        %4846 = vmatpush.xpose.msra.mxu0 0.0
        %4847 = vmatpush.xpose.msra.mxu0 0.0
        %4848 = vmatpush.xpose.msra.mxu0 %v4832
        %4849 = vmatpush.xpose.msra.mxu0 %v4830
        %4850 = vmatmul.f32.gmra.mxu0 %v4826
        %v4851 = vpop.f32.mrf.mxu0
        %v4852 = vadd.f32 %v525, %v4851
        %4853 = vmatmul.f32.gmra.mxu0 %v4828
        %v4854 = vpop.f32.mrf.mxu0
        %v4855 = vadd.f32 %v526, %v4854
        %4856 = vdwg.mxu0
        %v4857 = vsel %vm679, %v4852, -inf
        %4858 = vmax.xlane.f32.xlu0 %v4857
        %v4859 = vpop.xlane.xlu0 %4858
        %v4860 = vsel %vm679, %v4855, -inf
        %4861 = vmax.xlane.f32.xlu0 %v4860
        %v4862 = vpop.xlane.xlu0 %4861
        %v4863 = vsub.f32 %v4852, %v4859
        %v4864 = vsub.f32 %v4855, %v4862
        %v4865 = vmul.f32 %v4863, 1.442695
        %v4866 = vpow.pop %v4865
        %v4867 = vmul.f32 %v4864, 1.442695
        %v4868 = vpow.pop %v4867
        %v4869 = vsel %vm679, %v4866, 0.0
        %4870 = vadd.xlane.f32.xlu0 %v4869
        %v4871 = vpop.xlane.xlu0 %4870
        %v4872 = vsel %vm679, %v4868, 0.0
        %4873 = vadd.xlane.f32.xlu0 %v4872
        %v4874 = vpop.xlane.xlu0 %4873
        %v4875 = vrcp.pop %v4871
        %v4876 = vrcp.pop %v4874
        %v4877 = vmul.f32 %v4866, %v4875
        %v4878 = vmul.f32 %v4868, %v4876
        %v4880 = vsel %vm679, %v4877, 0
        %v4883 = vsel %vm679, %v4878, 0
        %4885 = vmatpush.msra.mxu0 0.0
        %4886 = vmatpush.msra.mxu0 0.0
        %4887 = vmatpush.msra.mxu0 0.0
        %4888 = vmatpush.msra.mxu0 0.0
        %4889 = vmatpush.msra.mxu0 0.0
        %4890 = vmatpush.msra.mxu0 0.0
        %4891 = vmatpush.msra.mxu0 0.0
        %4892 = vmatpush.msra.mxu0 0.0
        %4893 = vmatpush.msra.mxu0 0.0
        %4894 = vmatpush.msra.mxu0 0.0
        %4895 = vmatpush.msra.mxu0 0.0
        %4896 = vmatpush.msra.mxu0 0.0
        %4897 = vmatpush.msra.mxu0 0.0
        %4898 = vmatpush.msra.mxu0 0.0
        %4899 = vmatpush.msra.mxu0 %v4809
        %4900 = vmatpush.msra.mxu0 %v4806
        %4901 = vmatmul.f32.gmra.mxu0 %v4880
        %v4902 = vpop.f32.mrf.mxu0
        %v4903 = vadd.f32 0.0, %v4902
        %4904 = vmatmul.f32.gmra.mxu0 %v4883
        %v4905 = vpop.f32.mrf.mxu0
        %v4906 = vadd.f32 0.0, %v4905
        %4907 = vdwg.mxu0
        %4908 = vrot.lane.b32.xlu0 %v4783, 112
        %v4909 = vpop.permute.xlu0 %4908
        %4910 = vrot.lane.b32.xlu0 %v4786, 112
        %v4911 = vpop.permute.xlu0 %4910
        %4912 = vrot.lane.b32.xlu0 %v4783, 48
        %v4913 = vpop.permute.xlu0 %4912
        %4914 = vrot.lane.b32.xlu0 %v4786, 48
        %v4915 = vpop.permute.xlu0 %4914
        %v4916 = vsel %vm679, %v4909, 0
        %v4918 = vsel %vm679, %v4911, 0
        %v4920 = vsel %vm679, %v4913, 0
        %v4922 = vsel %vm679, %v4915, 0
        %4924 = vmatpush.xpose.msra.mxu0 0.0
        %4925 = vmatpush.xpose.msra.mxu0 0.0
        %4926 = vmatpush.xpose.msra.mxu0 0.0
        %4927 = vmatpush.xpose.msra.mxu0 0.0
        %4928 = vmatpush.xpose.msra.mxu0 0.0
        %4929 = vmatpush.xpose.msra.mxu0 0.0
        %4930 = vmatpush.xpose.msra.mxu0 0.0
        %4931 = vmatpush.xpose.msra.mxu0 0.0
        %4932 = vmatpush.xpose.msra.mxu0 0.0
        %4933 = vmatpush.xpose.msra.mxu0 0.0
        %4934 = vmatpush.xpose.msra.mxu0 0.0
        %4935 = vmatpush.xpose.msra.mxu0 0.0
        %4936 = vmatpush.xpose.msra.mxu0 0.0
        %4937 = vmatpush.xpose.msra.mxu0 0.0
        %4938 = vmatpush.xpose.msra.mxu0 %v4922
        %4939 = vmatpush.xpose.msra.mxu0 %v4920
        %4940 = vmatmul.f32.gmra.mxu0 %v4916
        %v4941 = vpop.f32.mrf.mxu0
        %v4942 = vadd.f32 %v525, %v4941
        %4943 = vmatmul.f32.gmra.mxu0 %v4918
        %v4944 = vpop.f32.mrf.mxu0
        %v4945 = vadd.f32 %v526, %v4944
        %4946 = vdwg.mxu0
        %v4947 = vsel %vm679, %v4942, -inf
        %4948 = vmax.xlane.f32.xlu0 %v4947
        %v4949 = vpop.xlane.xlu0 %4948
        %v4950 = vsel %vm679, %v4945, -inf
        %4951 = vmax.xlane.f32.xlu0 %v4950
        %v4952 = vpop.xlane.xlu0 %4951
        %v4953 = vsub.f32 %v4942, %v4949
        %v4954 = vsub.f32 %v4945, %v4952
        %v4955 = vmul.f32 %v4953, 1.442695
        %v4956 = vpow.pop %v4955
        %v4957 = vmul.f32 %v4954, 1.442695
        %v4958 = vpow.pop %v4957
        %v4959 = vsel %vm679, %v4956, 0.0
        %4960 = vadd.xlane.f32.xlu0 %v4959
        %v4961 = vpop.xlane.xlu0 %4960
        %v4962 = vsel %vm679, %v4958, 0.0
        %4963 = vadd.xlane.f32.xlu0 %v4962
        %v4964 = vpop.xlane.xlu0 %4963
        %v4965 = vrcp.pop %v4961
        %v4966 = vrcp.pop %v4964
        %v4967 = vmul.f32 %v4956, %v4965
        %v4968 = vmul.f32 %v4958, %v4966
        %4971 = vrot.lane.b32.xlu0 %v4806, 112
        %v4972 = vpop.permute.xlu0 %4971
        %4973 = vrot.lane.b32.xlu0 %v4809, 112
        %v4974 = vpop.permute.xlu0 %4973
        %v4978 = vsel %vm679, %v4967, 0
        %v4981 = vsel %vm679, %v4968, 0
        %4983 = vmatpush.msra.mxu0 0.0
        %4984 = vmatpush.msra.mxu0 0.0
        %4985 = vmatpush.msra.mxu0 0.0
        %4986 = vmatpush.msra.mxu0 0.0
        %4987 = vmatpush.msra.mxu0 0.0
        %4988 = vmatpush.msra.mxu0 0.0
        %4989 = vmatpush.msra.mxu0 0.0
        %4990 = vmatpush.msra.mxu0 0.0
        %4991 = vmatpush.msra.mxu0 0.0
        %4992 = vmatpush.msra.mxu0 0.0
        %4993 = vmatpush.msra.mxu0 0.0
        %4994 = vmatpush.msra.mxu0 0.0
        %4995 = vmatpush.msra.mxu0 0.0
        %4996 = vmatpush.msra.mxu0 0.0
        %4997 = vmatpush.msra.mxu0 %v4974
        %4998 = vmatpush.msra.mxu0 %v4972
        %4999 = vmatmul.f32.gmra.mxu0 %v4978
        %v5000 = vpop.f32.mrf.mxu0
        %v5001 = vadd.f32 0.0, %v5000
        %5002 = vmatmul.f32.gmra.mxu0 %v4981
        %v5003 = vpop.f32.mrf.mxu0
        %v5004 = vadd.f32 0.0, %v5003
        %5005 = vdwg.mxu0
        %v5007 = vsel %vm679, %v5001, 0
        %v5010 = vsel %vm679, %v5004, 0
        %5012 = vmatpush.msra.mxu0 0.0
        %5013 = vmatpush.msra.mxu0 0.0
        %5014 = vmatpush.msra.mxu0 0.0
        %5015 = vmatpush.msra.mxu0 0.0
        %5016 = vmatpush.msra.mxu0 0.0
        %5017 = vmatpush.msra.mxu0 0.0
        %5018 = vmatpush.msra.mxu0 0.0
        %5019 = vmatpush.msra.mxu0 0.0
        %5020 = vmatpush.msra.mxu0 0.0
        %5021 = vmatpush.msra.mxu0 0.0
        %5022 = vmatpush.msra.mxu0 0.0
        %5023 = vmatpush.msra.mxu0 0.0
        %5024 = vmatpush.msra.mxu0 0.0
        %5025 = vmatpush.msra.mxu0 0.0
        %5026 = vmatpush.msra.mxu0 %v4815
        %5027 = vmatpush.msra.mxu0 %v4814
        %5028 = vmatmul.f32.gmra.mxu0 %v5007
        %v5029 = vpop.f32.mrf.mxu0
        %v5030 = vadd.f32 0.0, %v5029
        %5031 = vmatmul.f32.gmra.mxu0 %v5010
        %v5032 = vpop.f32.mrf.mxu0
        %v5033 = vadd.f32 0.0, %v5032
        %5034 = vdwg.mxu0
        %v5036 = vsel %vm679, %v4903, 0
        %v5039 = vsel %vm679, %v4906, 0
        %5041 = vmatpush.msra.mxu0 0.0
        %5042 = vmatpush.msra.mxu0 0.0
        %5043 = vmatpush.msra.mxu0 0.0
        %5044 = vmatpush.msra.mxu0 0.0
        %5045 = vmatpush.msra.mxu0 0.0
        %5046 = vmatpush.msra.mxu0 0.0
        %5047 = vmatpush.msra.mxu0 0.0
        %5048 = vmatpush.msra.mxu0 0.0
        %5049 = vmatpush.msra.mxu0 0.0
        %5050 = vmatpush.msra.mxu0 0.0
        %5051 = vmatpush.msra.mxu0 0.0
        %5052 = vmatpush.msra.mxu0 0.0
        %5053 = vmatpush.msra.mxu0 0.0
        %5054 = vmatpush.msra.mxu0 0.0
        %5055 = vmatpush.msra.mxu0 %v4813
        %5056 = vmatpush.msra.mxu0 %v4812
        %5057 = vmatmul.f32.gmra.mxu0 %v5036
        %v5058 = vpop.f32.mrf.mxu0
        %v5059 = vadd.f32 %v5030, %v5058
        %5060 = vmatmul.f32.gmra.mxu0 %v5039
        %v5061 = vpop.f32.mrf.mxu0
        %v5062 = vadd.f32 %v5033, %v5061
        %5063 = vdwg.mxu0
        %5064 = vrot.lane.b32.xlu0 %v4783, 96
        %v5065 = vpop.permute.xlu0 %5064
        %5066 = vrot.lane.b32.xlu0 %v4786, 96
        %v5067 = vpop.permute.xlu0 %5066
        %5068 = vrot.lane.b32.xlu0 %v4783, 32
        %v5069 = vpop.permute.xlu0 %5068
        %5070 = vrot.lane.b32.xlu0 %v4786, 32
        %v5071 = vpop.permute.xlu0 %5070
        %v5072 = vsel %vm679, %v5065, 0
        %v5074 = vsel %vm679, %v5067, 0
        %v5076 = vsel %vm679, %v5069, 0
        %v5078 = vsel %vm679, %v5071, 0
        %5080 = vmatpush.xpose.msra.mxu0 0.0
        %5081 = vmatpush.xpose.msra.mxu0 0.0
        %5082 = vmatpush.xpose.msra.mxu0 0.0
        %5083 = vmatpush.xpose.msra.mxu0 0.0
        %5084 = vmatpush.xpose.msra.mxu0 0.0
        %5085 = vmatpush.xpose.msra.mxu0 0.0
        %5086 = vmatpush.xpose.msra.mxu0 0.0
        %5087 = vmatpush.xpose.msra.mxu0 0.0
        %5088 = vmatpush.xpose.msra.mxu0 0.0
        %5089 = vmatpush.xpose.msra.mxu0 0.0
        %5090 = vmatpush.xpose.msra.mxu0 0.0
        %5091 = vmatpush.xpose.msra.mxu0 0.0
        %5092 = vmatpush.xpose.msra.mxu0 0.0
        %5093 = vmatpush.xpose.msra.mxu0 0.0
        %5094 = vmatpush.xpose.msra.mxu0 %v5078
        %5095 = vmatpush.xpose.msra.mxu0 %v5076
        %5096 = vmatmul.f32.gmra.mxu0 %v5072
        %v5097 = vpop.f32.mrf.mxu0
        %v5098 = vadd.f32 %v525, %v5097
        %5099 = vmatmul.f32.gmra.mxu0 %v5074
        %v5100 = vpop.f32.mrf.mxu0
        %v5101 = vadd.f32 %v526, %v5100
        %5102 = vdwg.mxu0
        %v5103 = vsel %vm679, %v5098, -inf
        %5104 = vmax.xlane.f32.xlu0 %v5103
        %v5105 = vpop.xlane.xlu0 %5104
        %v5106 = vsel %vm679, %v5101, -inf
        %5107 = vmax.xlane.f32.xlu0 %v5106
        %v5108 = vpop.xlane.xlu0 %5107
        %v5109 = vsub.f32 %v5098, %v5105
        %v5110 = vsub.f32 %v5101, %v5108
        %v5111 = vmul.f32 %v5109, 1.442695
        %v5112 = vpow.pop %v5111
        %v5113 = vmul.f32 %v5110, 1.442695
        %v5114 = vpow.pop %v5113
        %v5115 = vsel %vm679, %v5112, 0.0
        %5116 = vadd.xlane.f32.xlu0 %v5115
        %v5117 = vpop.xlane.xlu0 %5116
        %v5118 = vsel %vm679, %v5114, 0.0
        %5119 = vadd.xlane.f32.xlu0 %v5118
        %v5120 = vpop.xlane.xlu0 %5119
        %v5121 = vrcp.pop %v5117
        %v5122 = vrcp.pop %v5120
        %v5123 = vmul.f32 %v5112, %v5121
        %v5124 = vmul.f32 %v5114, %v5122
        %5125 = vrot.lane.b32.xlu0 %v4806, 96
        %v5126 = vpop.permute.xlu0 %5125
        %5127 = vrot.lane.b32.xlu0 %v4809, 96
        %v5128 = vpop.permute.xlu0 %5127
        %v5132 = vsel %vm679, %v5123, 0
        %v5135 = vsel %vm679, %v5124, 0
        %5137 = vmatpush.msra.mxu0 0.0
        %5138 = vmatpush.msra.mxu0 0.0
        %5139 = vmatpush.msra.mxu0 0.0
        %5140 = vmatpush.msra.mxu0 0.0
        %5141 = vmatpush.msra.mxu0 0.0
        %5142 = vmatpush.msra.mxu0 0.0
        %5143 = vmatpush.msra.mxu0 0.0
        %5144 = vmatpush.msra.mxu0 0.0
        %5145 = vmatpush.msra.mxu0 0.0
        %5146 = vmatpush.msra.mxu0 0.0
        %5147 = vmatpush.msra.mxu0 0.0
        %5148 = vmatpush.msra.mxu0 0.0
        %5149 = vmatpush.msra.mxu0 0.0
        %5150 = vmatpush.msra.mxu0 0.0
        %5151 = vmatpush.msra.mxu0 %v5128
        %5152 = vmatpush.msra.mxu0 %v5126
        %5153 = vmatmul.f32.gmra.mxu0 %v5132
        %v5154 = vpop.f32.mrf.mxu0
        %v5155 = vadd.f32 0.0, %v5154
        %5156 = vmatmul.f32.gmra.mxu0 %v5135
        %v5157 = vpop.f32.mrf.mxu0
        %v5158 = vadd.f32 0.0, %v5157
        %5159 = vdwg.mxu0
        %v5161 = vsel %vm679, %v5155, 0
        %v5164 = vsel %vm679, %v5158, 0
        %5166 = vmatpush.msra.mxu0 0.0
        %5167 = vmatpush.msra.mxu0 0.0
        %5168 = vmatpush.msra.mxu0 0.0
        %5169 = vmatpush.msra.mxu0 0.0
        %5170 = vmatpush.msra.mxu0 0.0
        %5171 = vmatpush.msra.mxu0 0.0
        %5172 = vmatpush.msra.mxu0 0.0
        %5173 = vmatpush.msra.mxu0 0.0
        %5174 = vmatpush.msra.mxu0 0.0
        %5175 = vmatpush.msra.mxu0 0.0
        %5176 = vmatpush.msra.mxu0 0.0
        %5177 = vmatpush.msra.mxu0 0.0
        %5178 = vmatpush.msra.mxu0 0.0
        %5179 = vmatpush.msra.mxu0 0.0
        %5180 = vmatpush.msra.mxu0 %v4817
        %5181 = vmatpush.msra.mxu0 %v4816
        %5182 = vmatmul.f32.gmra.mxu0 %v5161
        %v5183 = vpop.f32.mrf.mxu0
        %v5184 = vadd.f32 0.0, %v5183
        %5185 = vmatmul.f32.gmra.mxu0 %v5164
        %v5186 = vpop.f32.mrf.mxu0
        %v5187 = vadd.f32 0.0, %v5186
        %5188 = vdwg.mxu0
        %v5189 = vadd.f32 %v5059, %v5184
        %v5190 = vadd.f32 %v5062, %v5187
        %5191 = vrot.lane.b32.xlu0 %v4783, 80
        %v5192 = vpop.permute.xlu0 %5191
        %5193 = vrot.lane.b32.xlu0 %v4786, 80
        %v5194 = vpop.permute.xlu0 %5193
        %5195 = vrot.lane.b32.xlu0 %v4783, 16
        %v5196 = vpop.permute.xlu0 %5195
        %5197 = vrot.lane.b32.xlu0 %v4786, 16
        %v5198 = vpop.permute.xlu0 %5197
        %v5199 = vsel %vm679, %v5192, 0
        %v5201 = vsel %vm679, %v5194, 0
        %v5203 = vsel %vm679, %v5196, 0
        %v5205 = vsel %vm679, %v5198, 0
        %5207 = vmatpush.xpose.msra.mxu0 0.0
        %5208 = vmatpush.xpose.msra.mxu0 0.0
        %5209 = vmatpush.xpose.msra.mxu0 0.0
        %5210 = vmatpush.xpose.msra.mxu0 0.0
        %5211 = vmatpush.xpose.msra.mxu0 0.0
        %5212 = vmatpush.xpose.msra.mxu0 0.0
        %5213 = vmatpush.xpose.msra.mxu0 0.0
        %5214 = vmatpush.xpose.msra.mxu0 0.0
        %5215 = vmatpush.xpose.msra.mxu0 0.0
        %5216 = vmatpush.xpose.msra.mxu0 0.0
        %5217 = vmatpush.xpose.msra.mxu0 0.0
        %5218 = vmatpush.xpose.msra.mxu0 0.0
        %5219 = vmatpush.xpose.msra.mxu0 0.0
        %5220 = vmatpush.xpose.msra.mxu0 0.0
        %5221 = vmatpush.xpose.msra.mxu0 %v5205
        %5222 = vmatpush.xpose.msra.mxu0 %v5203
        %5223 = vmatmul.f32.gmra.mxu0 %v5199
        %v5224 = vpop.f32.mrf.mxu0
        %v5225 = vadd.f32 %v525, %v5224
        %5226 = vmatmul.f32.gmra.mxu0 %v5201
        %v5227 = vpop.f32.mrf.mxu0
        %v5228 = vadd.f32 %v526, %v5227
        %5229 = vdwg.mxu0
        %v5230 = vsel %vm679, %v5225, -inf
        %5231 = vmax.xlane.f32.xlu0 %v5230
        %v5232 = vpop.xlane.xlu0 %5231
        %v5233 = vsel %vm679, %v5228, -inf
        %5234 = vmax.xlane.f32.xlu0 %v5233
        %v5235 = vpop.xlane.xlu0 %5234
        %v5236 = vsub.f32 %v5225, %v5232
        %v5237 = vsub.f32 %v5228, %v5235
        %v5238 = vmul.f32 %v5236, 1.442695
        %v5239 = vpow.pop %v5238
        %v5240 = vmul.f32 %v5237, 1.442695
        %v5241 = vpow.pop %v5240
        %v5242 = vsel %vm679, %v5239, 0.0
        %5243 = vadd.xlane.f32.xlu0 %v5242
        %v5244 = vpop.xlane.xlu0 %5243
        %v5245 = vsel %vm679, %v5241, 0.0
        %5246 = vadd.xlane.f32.xlu0 %v5245
        %v5247 = vpop.xlane.xlu0 %5246
        %v5248 = vrcp.pop %v5244
        %v5249 = vrcp.pop %v5247
        %v5250 = vmul.f32 %v5239, %v5248
        %v5251 = vmul.f32 %v5241, %v5249
        %5252 = vrot.lane.b32.xlu0 %v4806, 80
        %v5253 = vpop.permute.xlu0 %5252
        %5254 = vrot.lane.b32.xlu0 %v4809, 80
        %v5255 = vpop.permute.xlu0 %5254
        %v5259 = vsel %vm679, %v5250, 0
        %v5262 = vsel %vm679, %v5251, 0
        %5264 = vmatpush.msra.mxu0 0.0
        %5265 = vmatpush.msra.mxu0 0.0
        %5266 = vmatpush.msra.mxu0 0.0
        %5267 = vmatpush.msra.mxu0 0.0
        %5268 = vmatpush.msra.mxu0 0.0
        %5269 = vmatpush.msra.mxu0 0.0
        %5270 = vmatpush.msra.mxu0 0.0
        %5271 = vmatpush.msra.mxu0 0.0
        %5272 = vmatpush.msra.mxu0 0.0
        %5273 = vmatpush.msra.mxu0 0.0
        %5274 = vmatpush.msra.mxu0 0.0
        %5275 = vmatpush.msra.mxu0 0.0
        %5276 = vmatpush.msra.mxu0 0.0
        %5277 = vmatpush.msra.mxu0 0.0
        %5278 = vmatpush.msra.mxu0 %v5255
        %5279 = vmatpush.msra.mxu0 %v5253
        %5280 = vmatmul.f32.gmra.mxu0 %v5259
        %v5281 = vpop.f32.mrf.mxu0
        %v5282 = vadd.f32 0.0, %v5281
        %5283 = vmatmul.f32.gmra.mxu0 %v5262
        %v5284 = vpop.f32.mrf.mxu0
        %v5285 = vadd.f32 0.0, %v5284
        %5286 = vdwg.mxu0
        %v5288 = vsel %vm679, %v5282, 0
        %v5291 = vsel %vm679, %v5285, 0
        %5293 = vmatpush.msra.mxu0 0.0
        %5294 = vmatpush.msra.mxu0 0.0
        %5295 = vmatpush.msra.mxu0 0.0
        %5296 = vmatpush.msra.mxu0 0.0
        %5297 = vmatpush.msra.mxu0 0.0
        %5298 = vmatpush.msra.mxu0 0.0
        %5299 = vmatpush.msra.mxu0 0.0
        %5300 = vmatpush.msra.mxu0 0.0
        %5301 = vmatpush.msra.mxu0 0.0
        %5302 = vmatpush.msra.mxu0 0.0
        %5303 = vmatpush.msra.mxu0 0.0
        %5304 = vmatpush.msra.mxu0 0.0
        %5305 = vmatpush.msra.mxu0 0.0
        %5306 = vmatpush.msra.mxu0 0.0
        %5307 = vmatpush.msra.mxu0 %v4819
        %5308 = vmatpush.msra.mxu0 %v4818
        %5309 = vmatmul.f32.gmra.mxu0 %v5288
        %v5310 = vpop.f32.mrf.mxu0
        %v5311 = vadd.f32 0.0, %v5310
        %5312 = vmatmul.f32.gmra.mxu0 %v5291
        %v5313 = vpop.f32.mrf.mxu0
        %v5314 = vadd.f32 0.0, %v5313
        %5315 = vdwg.mxu0
        %v5316 = vadd.f32 %v5189, %v5311
        %v5317 = vadd.f32 %v5190, %v5314
        %v5318 = vadd.f32 %v4665, %v5316
        %v5319 = vadd.f32 %v4666, %v5317
        %s5320 = scalar_lea.vmem %s7, 4
        %v5321 = vld [vmem:[%s5320] sm:$0x1]
        %v5323 = vperm.slane %v5321, 0
        %v5325 = vadd.f32 %v5318, %v5323
        %v5326 = vadd.f32 %v5319, %v5323
        %s5327 = scalar_lea.vmem %s8, 4
        %v5328 = vld [vmem:[%s5327] sm:$0x1]
        %s5329 = scalar_lea.vmem %s9, 4
        %v5330 = vld [vmem:[%s5329] sm:$0x1]
        %v5331 = vsel %vm529, %v5325, 0.0
        %5332 = vadd.xlane.f32.xlu0 %v5331
        %v5333 = vpop.xlane.xlu0 %5332
        %v5334 = vsel %vm529, %v5326, 0.0
        %5335 = vadd.xlane.f32.xlu0 %v5334
        %v5336 = vpop.xlane.xlu0 %5335
        %v5337 = vmul.f32 %v5333, %v542
        %v5338 = vmul.f32 %v5336, %v542
        %v5339 = vsub.f32 %v5325, %v5337
        %v5340 = vsub.f32 %v5326, %v5338
        %v5341 = vmul.f32 %v5339, %v5339
        %v5342 = vmul.f32 %v5340, %v5340
        %v5343 = vsel %vm529, %v5341, 0.0
        %5344 = vadd.xlane.f32.xlu0 %v5343
        %v5345 = vpop.xlane.xlu0 %5344
        %v5346 = vsel %vm529, %v5342, 0.0
        %5347 = vadd.xlane.f32.xlu0 %v5346
        %v5348 = vpop.xlane.xlu0 %5347
        %v5349 = vmul.f32 %v5345, %v542
        %v5350 = vmul.f32 %v5348, %v542
        %v5351 = vadd.f32 %v5349, 1e-05
        %v5352 = vadd.f32 %v5350, 1e-05
        %v5353 = vrsqrt.pop %v5351
        %v5354 = vmul.f32 %v5353, %v5351
        %v5355 = vmul.f32 %v5354, %v5353
        %v5356 = vmul.f32 0.5, %v5355
        %v5357 = vsub.f32 1.5, %v5356
        %v5358 = vmul.f32 %v5353, %v5357
        %vm5359 = vweird.f32 %v5351
        %vm5360 = vweird.f32 %v5353
        %vm5361 = vmor %vm5359, %vm5360
        %v5362 = vsel %vm5361, %v5353, %v5358
        %v5363 = vrsqrt.pop %v5352
        %v5364 = vmul.f32 %v5363, %v5352
        %v5365 = vmul.f32 %v5364, %v5363
        %v5366 = vmul.f32 0.5, %v5365
        %v5367 = vsub.f32 1.5, %v5366
        %v5368 = vmul.f32 %v5363, %v5367
        %vm5369 = vweird.f32 %v5352
        %vm5370 = vweird.f32 %v5363
        %vm5371 = vmor %vm5369, %vm5370
        %v5372 = vsel %vm5371, %v5363, %v5368
        %v5373 = vmul.f32 %v5339, %v5362
        %v5374 = vmul.f32 %v5340, %v5372
        %v5376 = vperm.slane %v5328, 0
        %v5378 = vmul.f32 %v5373, %v5376
        %v5379 = vmul.f32 %v5374, %v5376
        %v5381 = vperm.slane %v5330, 0
        %v5383 = vadd.f32 %v5378, %v5381
        %v5384 = vadd.f32 %v5379, %v5381
        %s5385 = scalar_lea.vmem %s10, 512
        %v5386 = vld [vmem:[%s5385] sm:$0xff]
        %v5387 = vld [vmem:[%s5385 + $0x8] sm:$0xff]
        %v5388 = vld [vmem:[%s5385 + $0x10] sm:$0xff]
        %v5389 = vld [vmem:[%s5385 + $0x18] sm:$0xff]
        %v5390 = vld [vmem:[%s5385 + $0x20] sm:$0xff]
        %v5391 = vld [vmem:[%s5385 + $0x28] sm:$0xff]
        %v5392 = vld [vmem:[%s5385 + $0x30] sm:$0xff]
        %v5393 = vld [vmem:[%s5385 + $0x38] sm:$0xff]
        %v5394 = vld [vmem:[%s5385 + $0x40] sm:$0xff]
        %v5395 = vld [vmem:[%s5385 + $0x48] sm:$0xff]
        %v5396 = vld [vmem:[%s5385 + $0x50] sm:$0xff]
        %v5397 = vld [vmem:[%s5385 + $0x58] sm:$0xff]
        %v5398 = vld [vmem:[%s5385 + $0x60] sm:$0xff]
        %v5399 = vld [vmem:[%s5385 + $0x68] sm:$0xff]
        %v5400 = vld [vmem:[%s5385 + $0x70] sm:$0xff]
        %v5401 = vld [vmem:[%s5385 + $0x78] sm:$0xff]
        %s5402 = scalar_lea.vmem %s11, 8
        %v5403 = vld [vmem:[%s5402] sm:$0x3]
        %v5405 = vperm.slane %v5403, 0
        %v5406 = vperm.slane %v5403, 1
        %v5410 = vsel %vm529, %v5383, 0
        %v5413 = vsel %vm529, %v5384, 0
        %5415 = vmatpush.msra.mxu0 0.0
        %5416 = vmatpush.msra.mxu0 0.0
        %5417 = vmatpush.msra.mxu0 0.0
        %5418 = vmatpush.msra.mxu0 0.0
        %5419 = vmatpush.msra.mxu0 0.0
        %5420 = vmatpush.msra.mxu0 0.0
        %5421 = vmatpush.msra.mxu0 0.0
        %5422 = vmatpush.msra.mxu0 0.0
        %5423 = vmatpush.msra.mxu0 %v5400
        %5424 = vmatpush.msra.mxu0 %v5398
        %5425 = vmatpush.msra.mxu0 %v5396
        %5426 = vmatpush.msra.mxu0 %v5394
        %5427 = vmatpush.msra.mxu0 %v5392
        %5428 = vmatpush.msra.mxu0 %v5390
        %5429 = vmatpush.msra.mxu0 %v5388
        %5430 = vmatpush.msra.mxu0 %v5386
        %5431 = vmatmul.f32.gmra.mxu0 %v5410
        %v5432 = vpop.f32.mrf.mxu0
        %v5433 = vadd.f32 %v5405, %v5432
        %5434 = vmatmul.f32.gmra.mxu0 %v5413
        %v5435 = vpop.f32.mrf.mxu0
        %v5436 = vadd.f32 %v5405, %v5435
        %5437 = vdwg.mxu0
        %5438 = vmatpush.msra.mxu0 0.0
        %5439 = vmatpush.msra.mxu0 0.0
        %5440 = vmatpush.msra.mxu0 0.0
        %5441 = vmatpush.msra.mxu0 0.0
        %5442 = vmatpush.msra.mxu0 0.0
        %5443 = vmatpush.msra.mxu0 0.0
        %5444 = vmatpush.msra.mxu0 0.0
        %5445 = vmatpush.msra.mxu0 0.0
        %5446 = vmatpush.msra.mxu0 %v5401
        %5447 = vmatpush.msra.mxu0 %v5399
        %5448 = vmatpush.msra.mxu0 %v5397
        %5449 = vmatpush.msra.mxu0 %v5395
        %5450 = vmatpush.msra.mxu0 %v5393
        %5451 = vmatpush.msra.mxu0 %v5391
        %5452 = vmatpush.msra.mxu0 %v5389
        %5453 = vmatpush.msra.mxu0 %v5387
        %5454 = vmatmul.f32.gmra.mxu0 %v5410
        %v5455 = vpop.f32.mrf.mxu0
        %v5456 = vadd.f32 %v5406, %v5455
        %5457 = vmatmul.f32.gmra.mxu0 %v5413
        %v5458 = vpop.f32.mrf.mxu0
        %v5459 = vadd.f32 %v5406, %v5458
        %5460 = vdwg.mxu0
        %v5461 = vmul.f32 %v5433, 0.5
        %v5462 = vmul.f32 %v5456, 0.5
        %v5463 = vmul.f32 %v5436, 0.5
        %v5464 = vmul.f32 %v5459, 0.5
        %v5465 = vmul.f32 %v5433, 0.70710677
        %v5466 = vmul.f32 %v5456, 0.70710677
        %v5467 = vmul.f32 %v5436, 0.70710677
        %v5468 = vmul.f32 %v5459, 0.70710677
        %v5469 = vand.u32 2147483647, %v5465
        %v5470 = vand.u32 2147483647, %v5466
        %v5471 = vand.u32 2147483647, %v5467
        %v5472 = vand.u32 2147483647, %v5468
        %v5473 = vmul.f32 %v5469, 0.3275911
        %v5474 = vmul.f32 %v5470, 0.3275911
        %v5475 = vmul.f32 %v5471, 0.3275911
        %v5476 = vmul.f32 %v5472, 0.3275911
        %v5477 = vadd.f32 %v5473, 1.0
        %v5478 = vadd.f32 %v5474, 1.0
        %v5479 = vadd.f32 %v5475, 1.0
        %v5480 = vadd.f32 %v5476, 1.0
        %v5481 = vrcp.pop %v5477
        %v5482 = vmul.f32 %v5477, %v5481
        %v5483 = vsub.f32 1.0, %v5482
        %v5484 = vmul.f32 %v5481, %v5483
        %v5485 = vadd.f32 %v5481, %v5484
        %vm5486 = vweird.f32 %v5477
        %vm5487 = vweird.f32 %v5481
        %vm5488 = vmor %vm5486, %vm5487
        %v5489 = vsel %vm5488, %v5481, %v5485
        %v5490 = vand.u32 2147483647, %v5477
        %vm5491 = vcmp.eq.f32.partialorder %v5490, 8.507059e+37
        %v5492 = vand.u32 %v5477, 2147483648
        %v5493 = vor.u32 1.1754944e-38, %v5492
        %v5494 = vsel %vm5491, %v5493, %v5489
        %v5495 = vmul.f32 1.0, %v5494
        %v5496 = vrcp.pop %v5478
        %v5497 = vmul.f32 %v5478, %v5496
        %v5498 = vsub.f32 1.0, %v5497
        %v5499 = vmul.f32 %v5496, %v5498
        %v5500 = vadd.f32 %v5496, %v5499
        %vm5501 = vweird.f32 %v5478
        %vm5502 = vweird.f32 %v5496
        %vm5503 = vmor %vm5501, %vm5502
        %v5504 = vsel %vm5503, %v5496, %v5500
        %v5505 = vand.u32 2147483647, %v5478
        %vm5506 = vcmp.eq.f32.partialorder %v5505, 8.507059e+37
        %v5507 = vand.u32 %v5478, 2147483648
        %v5508 = vor.u32 1.1754944e-38, %v5507
        %v5509 = vsel %vm5506, %v5508, %v5504
        %v5510 = vmul.f32 1.0, %v5509
        %v5511 = vrcp.pop %v5479
        %v5512 = vmul.f32 %v5479, %v5511
        %v5513 = vsub.f32 1.0, %v5512
        %v5514 = vmul.f32 %v5511, %v5513
        %v5515 = vadd.f32 %v5511, %v5514
        %vm5516 = vweird.f32 %v5479
        %vm5517 = vweird.f32 %v5511
        %vm5518 = vmor %vm5516, %vm5517
        %v5519 = vsel %vm5518, %v5511, %v5515
        %v5520 = vand.u32 2147483647, %v5479
        %vm5521 = vcmp.eq.f32.partialorder %v5520, 8.507059e+37
        %v5522 = vand.u32 %v5479, 2147483648
        %v5523 = vor.u32 1.1754944e-38, %v5522
        %v5524 = vsel %vm5521, %v5523, %v5519
        %v5525 = vmul.f32 1.0, %v5524
        %v5526 = vrcp.pop %v5480
        %v5527 = vmul.f32 %v5480, %v5526
        %v5528 = vsub.f32 1.0, %v5527
        %v5529 = vmul.f32 %v5526, %v5528
        %v5530 = vadd.f32 %v5526, %v5529
        %vm5531 = vweird.f32 %v5480
        %vm5532 = vweird.f32 %v5526
        %vm5533 = vmor %vm5531, %vm5532
        %v5534 = vsel %vm5533, %v5526, %v5530
        %v5535 = vand.u32 2147483647, %v5480
        %vm5536 = vcmp.eq.f32.partialorder %v5535, 8.507059e+37
        %v5537 = vand.u32 %v5480, 2147483648
        %v5538 = vor.u32 1.1754944e-38, %v5537
        %v5539 = vsel %vm5536, %v5538, %v5534
        %v5540 = vmul.f32 1.0, %v5539
        %v5541 = vmul.f32 %v5495, 1.0614054
        %v5542 = vmul.f32 %v5510, 1.0614054
        %v5543 = vmul.f32 %v5525, 1.0614054
        %v5544 = vmul.f32 %v5540, 1.0614054
        %v5545 = vadd.f32 %v5541, -1.4531521
        %v5546 = vadd.f32 %v5542, -1.4531521
        %v5547 = vadd.f32 %v5543, -1.4531521
        %v5548 = vadd.f32 %v5544, -1.4531521
        %v5549 = vmul.f32 %v5545, %v5495
        %v5550 = vmul.f32 %v5546, %v5510
        %v5551 = vmul.f32 %v5547, %v5525
        %v5552 = vmul.f32 %v5548, %v5540
        %v5553 = vadd.f32 %v5549, 1.4214138
        %v5554 = vadd.f32 %v5550, 1.4214138
        %v5555 = vadd.f32 %v5551, 1.4214138
        %v5556 = vadd.f32 %v5552, 1.4214138
        %v5557 = vmul.f32 %v5553, %v5495
        %v5558 = vmul.f32 %v5554, %v5510
        %v5559 = vmul.f32 %v5555, %v5525
        %v5560 = vmul.f32 %v5556, %v5540
        %v5561 = vadd.f32 %v5557, -0.28449672
        %v5562 = vadd.f32 %v5558, -0.28449672
        %v5563 = vadd.f32 %v5559, -0.28449672
        %v5564 = vadd.f32 %v5560, -0.28449672
        %v5565 = vmul.f32 %v5561, %v5495
        %v5566 = vmul.f32 %v5562, %v5510
        %v5567 = vmul.f32 %v5563, %v5525
        %v5568 = vmul.f32 %v5564, %v5540
        %v5569 = vadd.f32 %v5565, 0.2548296
        %v5570 = vadd.f32 %v5566, 0.2548296
        %v5571 = vadd.f32 %v5567, 0.2548296
        %v5572 = vadd.f32 %v5568, 0.2548296
        %v5573 = vmul.f32 %v5569, %v5495
        %v5574 = vmul.f32 %v5570, %v5510
        %v5575 = vmul.f32 %v5571, %v5525
        %v5576 = vmul.f32 %v5572, %v5540
        %v5577 = vsub.f32 0.0, %v5469
        %v5578 = vsub.f32 0.0, %v5470
        %v5579 = vsub.f32 0.0, %v5471
        %v5580 = vsub.f32 0.0, %v5472
        %v5581 = vmul.f32 %v5577, %v5469
        %v5582 = vmul.f32 %v5578, %v5470
        %v5583 = vmul.f32 %v5579, %v5471
        %v5584 = vmul.f32 %v5580, %v5472
        %v5585 = vmul.f32 %v5581, 1.442695
        %v5586 = vpow.pop %v5585
        %v5587 = vmul.f32 %v5582, 1.442695
        %v5588 = vpow.pop %v5587
        %v5589 = vmul.f32 %v5583, 1.442695
        %v5590 = vpow.pop %v5589
        %v5591 = vmul.f32 %v5584, 1.442695
        %v5592 = vpow.pop %v5591
        %v5593 = vmul.f32 %v5573, %v5586
        %v5594 = vmul.f32 %v5574, %v5588
        %v5595 = vmul.f32 %v5575, %v5590
        %v5596 = vmul.f32 %v5576, %v5592
        %v5597 = vsub.f32 1.0, %v5593
        %v5598 = vsub.f32 1.0, %v5594
        %v5599 = vsub.f32 1.0, %v5595
        %v5600 = vsub.f32 1.0, %v5596
        %vm5601 = vcmp.ge.f32.partialorder %v5465, 0.0
        %vm5602 = vcmp.ge.f32.partialorder %v5466, 0.0
        %vm5603 = vcmp.ge.f32.partialorder %v5467, 0.0
        %vm5604 = vcmp.ge.f32.partialorder %v5468, 0.0
        %v5605 = vsub.f32 0.0, %v5597
        %v5606 = vsub.f32 0.0, %v5598
        %v5607 = vsub.f32 0.0, %v5599
        %v5608 = vsub.f32 0.0, %v5600
        %v5609 = vsel %vm5601, %v5597, %v5605
        %v5610 = vsel %vm5602, %v5598, %v5606
        %v5611 = vsel %vm5603, %v5599, %v5607
        %v5612 = vsel %vm5604, %v5600, %v5608
        %v5613 = vadd.f32 %v5609, 1.0
        %v5614 = vadd.f32 %v5610, 1.0
        %v5615 = vadd.f32 %v5611, 1.0
        %v5616 = vadd.f32 %v5612, 1.0
        %v5617 = vmul.f32 %v5461, %v5613
        %v5618 = vmul.f32 %v5462, %v5614
        %v5619 = vmul.f32 %v5463, %v5615
        %v5620 = vmul.f32 %v5464, %v5616
        %s5621 = scalar_lea.vmem %s12, 1024
        %v5622 = vld [vmem:[%s5621] sm:$0xff]
        %v5623 = vld [vmem:[%s5621 + $0x8] sm:$0xff]
        %v5624 = vld [vmem:[%s5621 + $0x10] sm:$0xff]
        %v5625 = vld [vmem:[%s5621 + $0x18] sm:$0xff]
        %v5626 = vld [vmem:[%s5621 + $0x20] sm:$0xff]
        %v5627 = vld [vmem:[%s5621 + $0x28] sm:$0xff]
        %v5628 = vld [vmem:[%s5621 + $0x30] sm:$0xff]
        %v5629 = vld [vmem:[%s5621 + $0x38] sm:$0xff]
        %v5630 = vld [vmem:[%s5621 + $0x40] sm:$0xff]
        %v5631 = vld [vmem:[%s5621 + $0x48] sm:$0xff]
        %v5632 = vld [vmem:[%s5621 + $0x50] sm:$0xff]
        %v5633 = vld [vmem:[%s5621 + $0x58] sm:$0xff]
        %v5634 = vld [vmem:[%s5621 + $0x60] sm:$0xff]
        %v5635 = vld [vmem:[%s5621 + $0x68] sm:$0xff]
        %v5636 = vld [vmem:[%s5621 + $0x70] sm:$0xff]
        %v5637 = vld [vmem:[%s5621 + $0x78] sm:$0xff]
        %v5638 = vld [vmem:[%s5621 + $0x80] sm:$0xff]
        %v5639 = vld [vmem:[%s5621 + $0x88] sm:$0xff]
        %v5640 = vld [vmem:[%s5621 + $0x90] sm:$0xff]
        %v5641 = vld [vmem:[%s5621 + $0x98] sm:$0xff]
        %v5642 = vld [vmem:[%s5621 + $0xa0] sm:$0xff]
        %v5643 = vld [vmem:[%s5621 + $0xa8] sm:$0xff]
        %v5644 = vld [vmem:[%s5621 + $0xb0] sm:$0xff]
        %v5645 = vld [vmem:[%s5621 + $0xb8] sm:$0xff]
        %v5646 = vld [vmem:[%s5621 + $0xc0] sm:$0xff]
        %v5647 = vld [vmem:[%s5621 + $0xc8] sm:$0xff]
        %v5648 = vld [vmem:[%s5621 + $0xd0] sm:$0xff]
        %v5649 = vld [vmem:[%s5621 + $0xd8] sm:$0xff]
        %v5650 = vld [vmem:[%s5621 + $0xe0] sm:$0xff]
        %v5651 = vld [vmem:[%s5621 + $0xe8] sm:$0xff]
        %v5652 = vld [vmem:[%s5621 + $0xf0] sm:$0xff]
        %v5653 = vld [vmem:[%s5621 + $0xf8] sm:$0xff]
        %5654 = vmatpush.msra.mxu0 %v5637
        %5655 = vmatpush.msra.mxu0 %v5636
        %5656 = vmatpush.msra.mxu0 %v5635
        %5657 = vmatpush.msra.mxu0 %v5634
        %5658 = vmatpush.msra.mxu0 %v5633
        %5659 = vmatpush.msra.mxu0 %v5632
        %5660 = vmatpush.msra.mxu0 %v5631
        %5661 = vmatpush.msra.mxu0 %v5630
        %5662 = vmatpush.msra.mxu0 %v5629
        %5663 = vmatpush.msra.mxu0 %v5628
        %5664 = vmatpush.msra.mxu0 %v5627
        %5665 = vmatpush.msra.mxu0 %v5626
        %5666 = vmatpush.msra.mxu0 %v5625
        %5667 = vmatpush.msra.mxu0 %v5624
        %5668 = vmatpush.msra.mxu0 %v5623
        %5669 = vmatpush.msra.mxu0 %v5622
        %5670 = vmatmul.f32.gmra.mxu0 %v5617
        %v5671 = vpop.f32.mrf.mxu0
        %v5672 = vadd.f32 0.0, %v5671
        %5673 = vmatmul.f32.gmra.mxu0 %v5619
        %v5674 = vpop.f32.mrf.mxu0
        %v5675 = vadd.f32 0.0, %v5674
        %5676 = vdwg.mxu0
        %5677 = vmatpush.msra.mxu0 %v5653
        %5678 = vmatpush.msra.mxu0 %v5652
        %5679 = vmatpush.msra.mxu0 %v5651
        %5680 = vmatpush.msra.mxu0 %v5650
        %5681 = vmatpush.msra.mxu0 %v5649
        %5682 = vmatpush.msra.mxu0 %v5648
        %5683 = vmatpush.msra.mxu0 %v5647
        %5684 = vmatpush.msra.mxu0 %v5646
        %5685 = vmatpush.msra.mxu0 %v5645
        %5686 = vmatpush.msra.mxu0 %v5644
        %5687 = vmatpush.msra.mxu0 %v5643
        %5688 = vmatpush.msra.mxu0 %v5642
        %5689 = vmatpush.msra.mxu0 %v5641
        %5690 = vmatpush.msra.mxu0 %v5640
        %5691 = vmatpush.msra.mxu0 %v5639
        %5692 = vmatpush.msra.mxu0 %v5638
        %5693 = vmatmul.f32.gmra.mxu0 %v5618
        %v5694 = vpop.f32.mrf.mxu0
        %v5695 = vadd.f32 %v5672, %v5694
        %5696 = vmatmul.f32.gmra.mxu0 %v5620
        %v5697 = vpop.f32.mrf.mxu0
        %v5698 = vadd.f32 %v5675, %v5697
        %5699 = vdwg.mxu0
        %v5700 = vadd.f32 %v5325, %v5695
        %v5701 = vadd.f32 %v5326, %v5698
        %s5702 = scalar_lea.vmem [#allocation6], 4
        %v5703 = vld [vmem:[%s5702] sm:$0x1]
        %v5705 = vperm.slane %v5703, 0
        %v5707 = vadd.f32 %v5700, %v5705
        %v5708 = vadd.f32 %v5701, %v5705
        %5709 = vst.msk [vmem:[%s521 + $0x10] sm:$0xff] %vm529, %v5707
        %5710 = vst.msk [vmem:[%s521 + $0x28] sm:$0xff] %vm529, %v5708
        %s5711 = scalar_lea.vmem %s2, 5
        %v5712 = vld [vmem:[%s5711] sm:$0x1]
        %s5713 = scalar_lea.vmem [#allocation4], 5
        %v5714 = vld [vmem:[%s5713] sm:$0x1]
        %v5715 = vsel %vm529, %v5707, 0.0
        %5716 = vadd.xlane.f32.xlu0 %v5715
        %v5717 = vpop.xlane.xlu0 %5716
        %v5718 = vsel %vm529, %v5708, 0.0
        %5719 = vadd.xlane.f32.xlu0 %v5718
        %v5720 = vpop.xlane.xlu0 %5719
        %v5721 = vmul.f32 %v5717, %v542
        %v5722 = vmul.f32 %v5720, %v542
        %v5723 = vsub.f32 %v5707, %v5721
        %v5724 = vsub.f32 %v5708, %v5722
        %v5725 = vmul.f32 %v5723, %v5723
        %v5726 = vmul.f32 %v5724, %v5724
        %v5727 = vsel %vm529, %v5725, 0.0
        %5728 = vadd.xlane.f32.xlu0 %v5727
        %v5729 = vpop.xlane.xlu0 %5728
        %v5730 = vsel %vm529, %v5726, 0.0
        %5731 = vadd.xlane.f32.xlu0 %v5730
        %v5732 = vpop.xlane.xlu0 %5731
        %v5733 = vmul.f32 %v5729, %v542
        %v5734 = vmul.f32 %v5732, %v542
        %v5735 = vadd.f32 %v5733, 1e-05
        %v5736 = vadd.f32 %v5734, 1e-05
        %v5737 = vrsqrt.pop %v5735
        %v5738 = vmul.f32 %v5737, %v5735
        %v5739 = vmul.f32 %v5738, %v5737
        %v5740 = vmul.f32 0.5, %v5739
        %v5741 = vsub.f32 1.5, %v5740
        %v5742 = vmul.f32 %v5737, %v5741
        %vm5743 = vweird.f32 %v5735
        %vm5744 = vweird.f32 %v5737
        %vm5745 = vmor %vm5743, %vm5744
        %v5746 = vsel %vm5745, %v5737, %v5742
        %v5747 = vrsqrt.pop %v5736
        %v5748 = vmul.f32 %v5747, %v5736
        %v5749 = vmul.f32 %v5748, %v5747
        %v5750 = vmul.f32 0.5, %v5749
        %v5751 = vsub.f32 1.5, %v5750
        %v5752 = vmul.f32 %v5747, %v5751
        %vm5753 = vweird.f32 %v5736
        %vm5754 = vweird.f32 %v5747
        %vm5755 = vmor %vm5753, %vm5754
        %v5756 = vsel %vm5755, %v5747, %v5752
        %v5757 = vmul.f32 %v5723, %v5746
        %v5758 = vmul.f32 %v5724, %v5756
        %v5760 = vperm.slane %v5712, 0
        %v5762 = vmul.f32 %v5757, %v5760
        %v5763 = vmul.f32 %v5758, %v5760
        %v5765 = vperm.slane %v5714, 0
        %v5767 = vadd.f32 %v5762, %v5765
        %v5768 = vadd.f32 %v5763, %v5765
        %s5769 = scalar_lea.vmem %s4, 640
        %v5770 = vld [vmem:[%s5769] sm:$0xff]
        %v5771 = vld [vmem:[%s5769 + $0x8] sm:$0xff]
        %v5772 = vld [vmem:[%s5769 + $0x10] sm:$0xff]
        %v5773 = vld [vmem:[%s5769 + $0x18] sm:$0xff]
        %v5774 = vld [vmem:[%s5769 + $0x20] sm:$0xff]
        %v5775 = vld [vmem:[%s5769 + $0x28] sm:$0xff]
        %v5776 = vld [vmem:[%s5769 + $0x30] sm:$0xff]
        %v5777 = vld [vmem:[%s5769 + $0x38] sm:$0xff]
        %v5778 = vld [vmem:[%s5769 + $0x40] sm:$0xff]
        %v5779 = vld [vmem:[%s5769 + $0x48] sm:$0xff]
        %v5780 = vld [vmem:[%s5769 + $0x50] sm:$0xff]
        %v5781 = vld [vmem:[%s5769 + $0x58] sm:$0xff]
        %v5782 = vld [vmem:[%s5769 + $0x60] sm:$0xff]
        %v5783 = vld [vmem:[%s5769 + $0x68] sm:$0xff]
        %v5784 = vld [vmem:[%s5769 + $0x70] sm:$0xff]
        %v5785 = vld [vmem:[%s5769 + $0x78] sm:$0xff]
        %s5786 = scalar_lea.vmem %s5, 10
        %v5787 = vld [vmem:[%s5786] sm:$0x3]
        %v5789 = vperm.slane %v5787, 0
        %v5790 = vperm.slane %v5787, 1
        %v5794 = vsel %vm529, %v5767, 0
        %v5797 = vsel %vm529, %v5768, 0
        %5799 = vmatpush.msra.mxu0 0.0
        %5800 = vmatpush.msra.mxu0 0.0
        %5801 = vmatpush.msra.mxu0 0.0
        %5802 = vmatpush.msra.mxu0 0.0
        %5803 = vmatpush.msra.mxu0 0.0
        %5804 = vmatpush.msra.mxu0 0.0
        %5805 = vmatpush.msra.mxu0 0.0
        %5806 = vmatpush.msra.mxu0 0.0
        %5807 = vmatpush.msra.mxu0 %v5784
        %5808 = vmatpush.msra.mxu0 %v5782
        %5809 = vmatpush.msra.mxu0 %v5780
        %5810 = vmatpush.msra.mxu0 %v5778
        %5811 = vmatpush.msra.mxu0 %v5776
        %5812 = vmatpush.msra.mxu0 %v5774
        %5813 = vmatpush.msra.mxu0 %v5772
        %5814 = vmatpush.msra.mxu0 %v5770
        %5815 = vmatmul.f32.gmra.mxu0 %v5794
        %v5816 = vpop.f32.mrf.mxu0
        %v5817 = vadd.f32 %v5789, %v5816
        %5818 = vmatmul.f32.gmra.mxu0 %v5797
        %v5819 = vpop.f32.mrf.mxu0
        %v5820 = vadd.f32 %v5789, %v5819
        %5821 = vdwg.mxu0
        %5822 = vmatpush.msra.mxu0 0.0
        %5823 = vmatpush.msra.mxu0 0.0
        %5824 = vmatpush.msra.mxu0 0.0
        %5825 = vmatpush.msra.mxu0 0.0
        %5826 = vmatpush.msra.mxu0 0.0
        %5827 = vmatpush.msra.mxu0 0.0
        %5828 = vmatpush.msra.mxu0 0.0
        %5829 = vmatpush.msra.mxu0 0.0
        %5830 = vmatpush.msra.mxu0 %v5785
        %5831 = vmatpush.msra.mxu0 %v5783
        %5832 = vmatpush.msra.mxu0 %v5781
        %5833 = vmatpush.msra.mxu0 %v5779
        %5834 = vmatpush.msra.mxu0 %v5777
        %5835 = vmatpush.msra.mxu0 %v5775
        %5836 = vmatpush.msra.mxu0 %v5773
        %5837 = vmatpush.msra.mxu0 %v5771
        %5838 = vmatmul.f32.gmra.mxu0 %v5794
        %v5839 = vpop.f32.mrf.mxu0
        %v5840 = vadd.f32 %v5790, %v5839
        %5841 = vmatmul.f32.gmra.mxu0 %v5797
        %v5842 = vpop.f32.mrf.mxu0
        %v5843 = vadd.f32 %v5790, %v5842
        %5844 = vdwg.mxu0
        %s5845 = scalar_lea.vmem %s6, 320
        %v5846 = vld [vmem:[%s5845] sm:$0xff]
        %v5847 = vld [vmem:[%s5845 + $0x8] sm:$0xff]
        %v5848 = vld [vmem:[%s5845 + $0x10] sm:$0xff]
        %v5849 = vld [vmem:[%s5845 + $0x18] sm:$0xff]
        %v5850 = vld [vmem:[%s5845 + $0x20] sm:$0xff]
        %v5851 = vld [vmem:[%s5845 + $0x28] sm:$0xff]
        %v5852 = vld [vmem:[%s5845 + $0x30] sm:$0xff]
        %v5853 = vld [vmem:[%s5845 + $0x38] sm:$0xff]
        %5856 = vrot.lane.b32.xlu0 %v5817, 64
        %v5857 = vpop.permute.xlu0 %5856
        %5858 = vrot.lane.b32.xlu0 %v5820, 64
        %v5859 = vpop.permute.xlu0 %5858
        %v5860 = vsel %vm679, %v5817, 0
        %v5862 = vsel %vm679, %v5820, 0
        %v5864 = vsel %vm679, %v5857, 0
        %v5866 = vsel %vm679, %v5859, 0
        %5868 = vmatpush.xpose.msra.mxu0 0.0
        %5869 = vmatpush.xpose.msra.mxu0 0.0
        %5870 = vmatpush.xpose.msra.mxu0 0.0
        %5871 = vmatpush.xpose.msra.mxu0 0.0
        %5872 = vmatpush.xpose.msra.mxu0 0.0
        %5873 = vmatpush.xpose.msra.mxu0 0.0
        %5874 = vmatpush.xpose.msra.mxu0 0.0
        %5875 = vmatpush.xpose.msra.mxu0 0.0
        %5876 = vmatpush.xpose.msra.mxu0 0.0
        %5877 = vmatpush.xpose.msra.mxu0 0.0
        %5878 = vmatpush.xpose.msra.mxu0 0.0
        %5879 = vmatpush.xpose.msra.mxu0 0.0
        %5880 = vmatpush.xpose.msra.mxu0 0.0
        %5881 = vmatpush.xpose.msra.mxu0 0.0
        %5882 = vmatpush.xpose.msra.mxu0 %v5866
        %5883 = vmatpush.xpose.msra.mxu0 %v5864
        %5884 = vmatmul.f32.gmra.mxu0 %v5860
        %v5885 = vpop.f32.mrf.mxu0
        %v5886 = vadd.f32 %v525, %v5885
        %5887 = vmatmul.f32.gmra.mxu0 %v5862
        %v5888 = vpop.f32.mrf.mxu0
        %v5889 = vadd.f32 %v526, %v5888
        %5890 = vdwg.mxu0
        %v5891 = vsel %vm679, %v5886, -inf
        %5892 = vmax.xlane.f32.xlu0 %v5891
        %v5893 = vpop.xlane.xlu0 %5892
        %v5894 = vsel %vm679, %v5889, -inf
        %5895 = vmax.xlane.f32.xlu0 %v5894
        %v5896 = vpop.xlane.xlu0 %5895
        %v5897 = vsub.f32 %v5886, %v5893
        %v5898 = vsub.f32 %v5889, %v5896
        %v5899 = vmul.f32 %v5897, 1.442695
        %v5900 = vpow.pop %v5899
        %v5901 = vmul.f32 %v5898, 1.442695
        %v5902 = vpow.pop %v5901
        %v5903 = vsel %vm679, %v5900, 0.0
        %5904 = vadd.xlane.f32.xlu0 %v5903
        %v5905 = vpop.xlane.xlu0 %5904
        %v5906 = vsel %vm679, %v5902, 0.0
        %5907 = vadd.xlane.f32.xlu0 %v5906
        %v5908 = vpop.xlane.xlu0 %5907
        %v5909 = vrcp.pop %v5905
        %v5910 = vrcp.pop %v5908
        %v5911 = vmul.f32 %v5900, %v5909
        %v5912 = vmul.f32 %v5902, %v5910
        %v5914 = vsel %vm679, %v5911, 0
        %v5917 = vsel %vm679, %v5912, 0
        %5919 = vmatpush.msra.mxu0 0.0
        %5920 = vmatpush.msra.mxu0 0.0
        %5921 = vmatpush.msra.mxu0 0.0
        %5922 = vmatpush.msra.mxu0 0.0
        %5923 = vmatpush.msra.mxu0 0.0
        %5924 = vmatpush.msra.mxu0 0.0
        %5925 = vmatpush.msra.mxu0 0.0
        %5926 = vmatpush.msra.mxu0 0.0
        %5927 = vmatpush.msra.mxu0 0.0
        %5928 = vmatpush.msra.mxu0 0.0
        %5929 = vmatpush.msra.mxu0 0.0
        %5930 = vmatpush.msra.mxu0 0.0
        %5931 = vmatpush.msra.mxu0 0.0
        %5932 = vmatpush.msra.mxu0 0.0
        %5933 = vmatpush.msra.mxu0 %v5843
        %5934 = vmatpush.msra.mxu0 %v5840
        %5935 = vmatmul.f32.gmra.mxu0 %v5914
        %v5936 = vpop.f32.mrf.mxu0
        %v5937 = vadd.f32 0.0, %v5936
        %5938 = vmatmul.f32.gmra.mxu0 %v5917
        %v5939 = vpop.f32.mrf.mxu0
        %v5940 = vadd.f32 0.0, %v5939
        %5941 = vdwg.mxu0
        %5942 = vrot.lane.b32.xlu0 %v5817, 112
        %v5943 = vpop.permute.xlu0 %5942
        %5944 = vrot.lane.b32.xlu0 %v5820, 112
        %v5945 = vpop.permute.xlu0 %5944
        %5946 = vrot.lane.b32.xlu0 %v5817, 48
        %v5947 = vpop.permute.xlu0 %5946
        %5948 = vrot.lane.b32.xlu0 %v5820, 48
        %v5949 = vpop.permute.xlu0 %5948
        %v5950 = vsel %vm679, %v5943, 0
        %v5952 = vsel %vm679, %v5945, 0
        %v5954 = vsel %vm679, %v5947, 0
        %v5956 = vsel %vm679, %v5949, 0
        %5958 = vmatpush.xpose.msra.mxu0 0.0
        %5959 = vmatpush.xpose.msra.mxu0 0.0
        %5960 = vmatpush.xpose.msra.mxu0 0.0
        %5961 = vmatpush.xpose.msra.mxu0 0.0
        %5962 = vmatpush.xpose.msra.mxu0 0.0
        %5963 = vmatpush.xpose.msra.mxu0 0.0
        %5964 = vmatpush.xpose.msra.mxu0 0.0
        %5965 = vmatpush.xpose.msra.mxu0 0.0
        %5966 = vmatpush.xpose.msra.mxu0 0.0
        %5967 = vmatpush.xpose.msra.mxu0 0.0
        %5968 = vmatpush.xpose.msra.mxu0 0.0
        %5969 = vmatpush.xpose.msra.mxu0 0.0
        %5970 = vmatpush.xpose.msra.mxu0 0.0
        %5971 = vmatpush.xpose.msra.mxu0 0.0
        %5972 = vmatpush.xpose.msra.mxu0 %v5956
        %5973 = vmatpush.xpose.msra.mxu0 %v5954
        %5974 = vmatmul.f32.gmra.mxu0 %v5950
        %v5975 = vpop.f32.mrf.mxu0
        %v5976 = vadd.f32 %v525, %v5975
        %5977 = vmatmul.f32.gmra.mxu0 %v5952
        %v5978 = vpop.f32.mrf.mxu0
        %v5979 = vadd.f32 %v526, %v5978
        %5980 = vdwg.mxu0
        %v5981 = vsel %vm679, %v5976, -inf
        %5982 = vmax.xlane.f32.xlu0 %v5981
        %v5983 = vpop.xlane.xlu0 %5982
        %v5984 = vsel %vm679, %v5979, -inf
        %5985 = vmax.xlane.f32.xlu0 %v5984
        %v5986 = vpop.xlane.xlu0 %5985
        %v5987 = vsub.f32 %v5976, %v5983
        %v5988 = vsub.f32 %v5979, %v5986
        %v5989 = vmul.f32 %v5987, 1.442695
        %v5990 = vpow.pop %v5989
        %v5991 = vmul.f32 %v5988, 1.442695
        %v5992 = vpow.pop %v5991
        %v5993 = vsel %vm679, %v5990, 0.0
        %5994 = vadd.xlane.f32.xlu0 %v5993
        %v5995 = vpop.xlane.xlu0 %5994
        %v5996 = vsel %vm679, %v5992, 0.0
        %5997 = vadd.xlane.f32.xlu0 %v5996
        %v5998 = vpop.xlane.xlu0 %5997
        %v5999 = vrcp.pop %v5995
        %v6000 = vrcp.pop %v5998
        %v6001 = vmul.f32 %v5990, %v5999
        %v6002 = vmul.f32 %v5992, %v6000
        %6005 = vrot.lane.b32.xlu0 %v5840, 112
        %v6006 = vpop.permute.xlu0 %6005
        %6007 = vrot.lane.b32.xlu0 %v5843, 112
        %v6008 = vpop.permute.xlu0 %6007
        %v6012 = vsel %vm679, %v6001, 0
        %v6015 = vsel %vm679, %v6002, 0
        %6017 = vmatpush.msra.mxu0 0.0
        %6018 = vmatpush.msra.mxu0 0.0
        %6019 = vmatpush.msra.mxu0 0.0
        %6020 = vmatpush.msra.mxu0 0.0
        %6021 = vmatpush.msra.mxu0 0.0
        %6022 = vmatpush.msra.mxu0 0.0
        %6023 = vmatpush.msra.mxu0 0.0
        %6024 = vmatpush.msra.mxu0 0.0
        %6025 = vmatpush.msra.mxu0 0.0
        %6026 = vmatpush.msra.mxu0 0.0
        %6027 = vmatpush.msra.mxu0 0.0
        %6028 = vmatpush.msra.mxu0 0.0
        %6029 = vmatpush.msra.mxu0 0.0
        %6030 = vmatpush.msra.mxu0 0.0
        %6031 = vmatpush.msra.mxu0 %v6008
        %6032 = vmatpush.msra.mxu0 %v6006
        %6033 = vmatmul.f32.gmra.mxu0 %v6012
        %v6034 = vpop.f32.mrf.mxu0
        %v6035 = vadd.f32 0.0, %v6034
        %6036 = vmatmul.f32.gmra.mxu0 %v6015
        %v6037 = vpop.f32.mrf.mxu0
        %v6038 = vadd.f32 0.0, %v6037
        %6039 = vdwg.mxu0
        %v6041 = vsel %vm679, %v6035, 0
        %v6044 = vsel %vm679, %v6038, 0
        %6046 = vmatpush.msra.mxu0 0.0
        %6047 = vmatpush.msra.mxu0 0.0
        %6048 = vmatpush.msra.mxu0 0.0
        %6049 = vmatpush.msra.mxu0 0.0
        %6050 = vmatpush.msra.mxu0 0.0
        %6051 = vmatpush.msra.mxu0 0.0
        %6052 = vmatpush.msra.mxu0 0.0
        %6053 = vmatpush.msra.mxu0 0.0
        %6054 = vmatpush.msra.mxu0 0.0
        %6055 = vmatpush.msra.mxu0 0.0
        %6056 = vmatpush.msra.mxu0 0.0
        %6057 = vmatpush.msra.mxu0 0.0
        %6058 = vmatpush.msra.mxu0 0.0
        %6059 = vmatpush.msra.mxu0 0.0
        %6060 = vmatpush.msra.mxu0 %v5849
        %6061 = vmatpush.msra.mxu0 %v5848
        %6062 = vmatmul.f32.gmra.mxu0 %v6041
        %v6063 = vpop.f32.mrf.mxu0
        %v6064 = vadd.f32 0.0, %v6063
        %6065 = vmatmul.f32.gmra.mxu0 %v6044
        %v6066 = vpop.f32.mrf.mxu0
        %v6067 = vadd.f32 0.0, %v6066
        %6068 = vdwg.mxu0
        %v6070 = vsel %vm679, %v5937, 0
        %v6073 = vsel %vm679, %v5940, 0
        %6075 = vmatpush.msra.mxu0 0.0
        %6076 = vmatpush.msra.mxu0 0.0
        %6077 = vmatpush.msra.mxu0 0.0
        %6078 = vmatpush.msra.mxu0 0.0
        %6079 = vmatpush.msra.mxu0 0.0
        %6080 = vmatpush.msra.mxu0 0.0
        %6081 = vmatpush.msra.mxu0 0.0
        %6082 = vmatpush.msra.mxu0 0.0
        %6083 = vmatpush.msra.mxu0 0.0
        %6084 = vmatpush.msra.mxu0 0.0
        %6085 = vmatpush.msra.mxu0 0.0
        %6086 = vmatpush.msra.mxu0 0.0
        %6087 = vmatpush.msra.mxu0 0.0
        %6088 = vmatpush.msra.mxu0 0.0
        %6089 = vmatpush.msra.mxu0 %v5847
        %6090 = vmatpush.msra.mxu0 %v5846
        %6091 = vmatmul.f32.gmra.mxu0 %v6070
        %v6092 = vpop.f32.mrf.mxu0
        %v6093 = vadd.f32 %v6064, %v6092
        %6094 = vmatmul.f32.gmra.mxu0 %v6073
        %v6095 = vpop.f32.mrf.mxu0
        %v6096 = vadd.f32 %v6067, %v6095
        %6097 = vdwg.mxu0
        %6098 = vrot.lane.b32.xlu0 %v5817, 96
        %v6099 = vpop.permute.xlu0 %6098
        %6100 = vrot.lane.b32.xlu0 %v5820, 96
        %v6101 = vpop.permute.xlu0 %6100
        %6102 = vrot.lane.b32.xlu0 %v5817, 32
        %v6103 = vpop.permute.xlu0 %6102
        %6104 = vrot.lane.b32.xlu0 %v5820, 32
        %v6105 = vpop.permute.xlu0 %6104
        %v6106 = vsel %vm679, %v6099, 0
        %v6108 = vsel %vm679, %v6101, 0
        %v6110 = vsel %vm679, %v6103, 0
        %v6112 = vsel %vm679, %v6105, 0
        %6114 = vmatpush.xpose.msra.mxu0 0.0
        %6115 = vmatpush.xpose.msra.mxu0 0.0
        %6116 = vmatpush.xpose.msra.mxu0 0.0
        %6117 = vmatpush.xpose.msra.mxu0 0.0
        %6118 = vmatpush.xpose.msra.mxu0 0.0
        %6119 = vmatpush.xpose.msra.mxu0 0.0
        %6120 = vmatpush.xpose.msra.mxu0 0.0
        %6121 = vmatpush.xpose.msra.mxu0 0.0
        %6122 = vmatpush.xpose.msra.mxu0 0.0
        %6123 = vmatpush.xpose.msra.mxu0 0.0
        %6124 = vmatpush.xpose.msra.mxu0 0.0
        %6125 = vmatpush.xpose.msra.mxu0 0.0
        %6126 = vmatpush.xpose.msra.mxu0 0.0
        %6127 = vmatpush.xpose.msra.mxu0 0.0
        %6128 = vmatpush.xpose.msra.mxu0 %v6112
        %6129 = vmatpush.xpose.msra.mxu0 %v6110
        %6130 = vmatmul.f32.gmra.mxu0 %v6106
        %v6131 = vpop.f32.mrf.mxu0
        %v6132 = vadd.f32 %v525, %v6131
        %6133 = vmatmul.f32.gmra.mxu0 %v6108
        %v6134 = vpop.f32.mrf.mxu0
        %v6135 = vadd.f32 %v526, %v6134
        %6136 = vdwg.mxu0
        %v6137 = vsel %vm679, %v6132, -inf
        %6138 = vmax.xlane.f32.xlu0 %v6137
        %v6139 = vpop.xlane.xlu0 %6138
        %v6140 = vsel %vm679, %v6135, -inf
        %6141 = vmax.xlane.f32.xlu0 %v6140
        %v6142 = vpop.xlane.xlu0 %6141
        %v6143 = vsub.f32 %v6132, %v6139
        %v6144 = vsub.f32 %v6135, %v6142
        %v6145 = vmul.f32 %v6143, 1.442695
        %v6146 = vpow.pop %v6145
        %v6147 = vmul.f32 %v6144, 1.442695
        %v6148 = vpow.pop %v6147
        %v6149 = vsel %vm679, %v6146, 0.0
        %6150 = vadd.xlane.f32.xlu0 %v6149
        %v6151 = vpop.xlane.xlu0 %6150
        %v6152 = vsel %vm679, %v6148, 0.0
        %6153 = vadd.xlane.f32.xlu0 %v6152
        %v6154 = vpop.xlane.xlu0 %6153
        %v6155 = vrcp.pop %v6151
        %v6156 = vrcp.pop %v6154
        %v6157 = vmul.f32 %v6146, %v6155
        %v6158 = vmul.f32 %v6148, %v6156
        %6159 = vrot.lane.b32.xlu0 %v5840, 96
        %v6160 = vpop.permute.xlu0 %6159
        %6161 = vrot.lane.b32.xlu0 %v5843, 96
        %v6162 = vpop.permute.xlu0 %6161
        %v6166 = vsel %vm679, %v6157, 0
        %v6169 = vsel %vm679, %v6158, 0
        %6171 = vmatpush.msra.mxu0 0.0
        %6172 = vmatpush.msra.mxu0 0.0
        %6173 = vmatpush.msra.mxu0 0.0
        %6174 = vmatpush.msra.mxu0 0.0
        %6175 = vmatpush.msra.mxu0 0.0
        %6176 = vmatpush.msra.mxu0 0.0
        %6177 = vmatpush.msra.mxu0 0.0
        %6178 = vmatpush.msra.mxu0 0.0
        %6179 = vmatpush.msra.mxu0 0.0
        %6180 = vmatpush.msra.mxu0 0.0
        %6181 = vmatpush.msra.mxu0 0.0
        %6182 = vmatpush.msra.mxu0 0.0
        %6183 = vmatpush.msra.mxu0 0.0
        %6184 = vmatpush.msra.mxu0 0.0
        %6185 = vmatpush.msra.mxu0 %v6162
        %6186 = vmatpush.msra.mxu0 %v6160
        %6187 = vmatmul.f32.gmra.mxu0 %v6166
        %v6188 = vpop.f32.mrf.mxu0
        %v6189 = vadd.f32 0.0, %v6188
        %6190 = vmatmul.f32.gmra.mxu0 %v6169
        %v6191 = vpop.f32.mrf.mxu0
        %v6192 = vadd.f32 0.0, %v6191
        %6193 = vdwg.mxu0
        %v6195 = vsel %vm679, %v6189, 0
        %v6198 = vsel %vm679, %v6192, 0
        %6200 = vmatpush.msra.mxu0 0.0
        %6201 = vmatpush.msra.mxu0 0.0
        %6202 = vmatpush.msra.mxu0 0.0
        %6203 = vmatpush.msra.mxu0 0.0
        %6204 = vmatpush.msra.mxu0 0.0
        %6205 = vmatpush.msra.mxu0 0.0
        %6206 = vmatpush.msra.mxu0 0.0
        %6207 = vmatpush.msra.mxu0 0.0
        %6208 = vmatpush.msra.mxu0 0.0
        %6209 = vmatpush.msra.mxu0 0.0
        %6210 = vmatpush.msra.mxu0 0.0
        %6211 = vmatpush.msra.mxu0 0.0
        %6212 = vmatpush.msra.mxu0 0.0
        %6213 = vmatpush.msra.mxu0 0.0
        %6214 = vmatpush.msra.mxu0 %v5851
        %6215 = vmatpush.msra.mxu0 %v5850
        %6216 = vmatmul.f32.gmra.mxu0 %v6195
        %v6217 = vpop.f32.mrf.mxu0
        %v6218 = vadd.f32 0.0, %v6217
        %6219 = vmatmul.f32.gmra.mxu0 %v6198
        %v6220 = vpop.f32.mrf.mxu0
        %v6221 = vadd.f32 0.0, %v6220
        %6222 = vdwg.mxu0
        %v6223 = vadd.f32 %v6093, %v6218
        %v6224 = vadd.f32 %v6096, %v6221
        %6225 = vrot.lane.b32.xlu0 %v5817, 80
        %v6226 = vpop.permute.xlu0 %6225
        %6227 = vrot.lane.b32.xlu0 %v5820, 80
        %v6228 = vpop.permute.xlu0 %6227
        %6229 = vrot.lane.b32.xlu0 %v5817, 16
        %v6230 = vpop.permute.xlu0 %6229
        %6231 = vrot.lane.b32.xlu0 %v5820, 16
        %v6232 = vpop.permute.xlu0 %6231
        %v6233 = vsel %vm679, %v6226, 0
        %v6235 = vsel %vm679, %v6228, 0
        %v6237 = vsel %vm679, %v6230, 0
        %v6239 = vsel %vm679, %v6232, 0
        %6241 = vmatpush.xpose.msra.mxu0 0.0
        %6242 = vmatpush.xpose.msra.mxu0 0.0
        %6243 = vmatpush.xpose.msra.mxu0 0.0
        %6244 = vmatpush.xpose.msra.mxu0 0.0
        %6245 = vmatpush.xpose.msra.mxu0 0.0
        %6246 = vmatpush.xpose.msra.mxu0 0.0
        %6247 = vmatpush.xpose.msra.mxu0 0.0
        %6248 = vmatpush.xpose.msra.mxu0 0.0
        %6249 = vmatpush.xpose.msra.mxu0 0.0
        %6250 = vmatpush.xpose.msra.mxu0 0.0
        %6251 = vmatpush.xpose.msra.mxu0 0.0
        %6252 = vmatpush.xpose.msra.mxu0 0.0
        %6253 = vmatpush.xpose.msra.mxu0 0.0
        %6254 = vmatpush.xpose.msra.mxu0 0.0
        %6255 = vmatpush.xpose.msra.mxu0 %v6239
        %6256 = vmatpush.xpose.msra.mxu0 %v6237
        %6257 = vmatmul.f32.gmra.mxu0 %v6233
        %v6258 = vpop.f32.mrf.mxu0
        %v6259 = vadd.f32 %v525, %v6258
        %6260 = vmatmul.f32.gmra.mxu0 %v6235
        %v6261 = vpop.f32.mrf.mxu0
        %v6262 = vadd.f32 %v526, %v6261
        %6263 = vdwg.mxu0
        %v6264 = vsel %vm679, %v6259, -inf
        %6265 = vmax.xlane.f32.xlu0 %v6264
        %v6266 = vpop.xlane.xlu0 %6265
        %v6267 = vsel %vm679, %v6262, -inf
        %6268 = vmax.xlane.f32.xlu0 %v6267
        %v6269 = vpop.xlane.xlu0 %6268
        %v6270 = vsub.f32 %v6259, %v6266
        %v6271 = vsub.f32 %v6262, %v6269
        %v6272 = vmul.f32 %v6270, 1.442695
        %v6273 = vpow.pop %v6272
        %v6274 = vmul.f32 %v6271, 1.442695
        %v6275 = vpow.pop %v6274
        %v6276 = vsel %vm679, %v6273, 0.0
        %6277 = vadd.xlane.f32.xlu0 %v6276
        %v6278 = vpop.xlane.xlu0 %6277
        %v6279 = vsel %vm679, %v6275, 0.0
        %6280 = vadd.xlane.f32.xlu0 %v6279
        %v6281 = vpop.xlane.xlu0 %6280
        %v6282 = vrcp.pop %v6278
        %v6283 = vrcp.pop %v6281
        %v6284 = vmul.f32 %v6273, %v6282
        %v6285 = vmul.f32 %v6275, %v6283
        %6286 = vrot.lane.b32.xlu0 %v5840, 80
        %v6287 = vpop.permute.xlu0 %6286
        %6288 = vrot.lane.b32.xlu0 %v5843, 80
        %v6289 = vpop.permute.xlu0 %6288
        %v6293 = vsel %vm679, %v6284, 0
        %v6296 = vsel %vm679, %v6285, 0
        %6298 = vmatpush.msra.mxu0 0.0
        %6299 = vmatpush.msra.mxu0 0.0
        %6300 = vmatpush.msra.mxu0 0.0
        %6301 = vmatpush.msra.mxu0 0.0
        %6302 = vmatpush.msra.mxu0 0.0
        %6303 = vmatpush.msra.mxu0 0.0
        %6304 = vmatpush.msra.mxu0 0.0
        %6305 = vmatpush.msra.mxu0 0.0
        %6306 = vmatpush.msra.mxu0 0.0
        %6307 = vmatpush.msra.mxu0 0.0
        %6308 = vmatpush.msra.mxu0 0.0
        %6309 = vmatpush.msra.mxu0 0.0
        %6310 = vmatpush.msra.mxu0 0.0
        %6311 = vmatpush.msra.mxu0 0.0
        %6312 = vmatpush.msra.mxu0 %v6289
        %6313 = vmatpush.msra.mxu0 %v6287
        %6314 = vmatmul.f32.gmra.mxu0 %v6293
        %v6315 = vpop.f32.mrf.mxu0
        %v6316 = vadd.f32 0.0, %v6315
        %6317 = vmatmul.f32.gmra.mxu0 %v6296
        %v6318 = vpop.f32.mrf.mxu0
        %v6319 = vadd.f32 0.0, %v6318
        %6320 = vdwg.mxu0
        %v6322 = vsel %vm679, %v6316, 0
        %v6325 = vsel %vm679, %v6319, 0
        %6327 = vmatpush.msra.mxu0 0.0
        %6328 = vmatpush.msra.mxu0 0.0
        %6329 = vmatpush.msra.mxu0 0.0
        %6330 = vmatpush.msra.mxu0 0.0
        %6331 = vmatpush.msra.mxu0 0.0
        %6332 = vmatpush.msra.mxu0 0.0
        %6333 = vmatpush.msra.mxu0 0.0
        %6334 = vmatpush.msra.mxu0 0.0
        %6335 = vmatpush.msra.mxu0 0.0
        %6336 = vmatpush.msra.mxu0 0.0
        %6337 = vmatpush.msra.mxu0 0.0
        %6338 = vmatpush.msra.mxu0 0.0
        %6339 = vmatpush.msra.mxu0 0.0
        %6340 = vmatpush.msra.mxu0 0.0
        %6341 = vmatpush.msra.mxu0 %v5853
        %6342 = vmatpush.msra.mxu0 %v5852
        %6343 = vmatmul.f32.gmra.mxu0 %v6322
        %v6344 = vpop.f32.mrf.mxu0
        %v6345 = vadd.f32 0.0, %v6344
        %6346 = vmatmul.f32.gmra.mxu0 %v6325
        %v6347 = vpop.f32.mrf.mxu0
        %v6348 = vadd.f32 0.0, %v6347
        %6349 = vdwg.mxu0
        %v6350 = vadd.f32 %v6223, %v6345
        %v6351 = vadd.f32 %v6224, %v6348
        %v6352 = vadd.f32 %v5707, %v6350
        %v6353 = vadd.f32 %v5708, %v6351
        %s6354 = scalar_lea.vmem %s7, 5
        %v6355 = vld [vmem:[%s6354] sm:$0x1]
        %v6357 = vperm.slane %v6355, 0
        %v6359 = vadd.f32 %v6352, %v6357
        %v6360 = vadd.f32 %v6353, %v6357
        %s6361 = scalar_lea.vmem %s8, 5
        %v6362 = vld [vmem:[%s6361] sm:$0x1]
        %s6363 = scalar_lea.vmem %s9, 5
        %v6364 = vld [vmem:[%s6363] sm:$0x1]
        %v6365 = vsel %vm529, %v6359, 0.0
        %6366 = vadd.xlane.f32.xlu0 %v6365
        %v6367 = vpop.xlane.xlu0 %6366
        %v6368 = vsel %vm529, %v6360, 0.0
        %6369 = vadd.xlane.f32.xlu0 %v6368
        %v6370 = vpop.xlane.xlu0 %6369
        %v6371 = vmul.f32 %v6367, %v542
        %v6372 = vmul.f32 %v6370, %v542
        %v6373 = vsub.f32 %v6359, %v6371
        %v6374 = vsub.f32 %v6360, %v6372
        %v6375 = vmul.f32 %v6373, %v6373
        %v6376 = vmul.f32 %v6374, %v6374
        %v6377 = vsel %vm529, %v6375, 0.0
        %6378 = vadd.xlane.f32.xlu0 %v6377
        %v6379 = vpop.xlane.xlu0 %6378
        %v6380 = vsel %vm529, %v6376, 0.0
        %6381 = vadd.xlane.f32.xlu0 %v6380
        %v6382 = vpop.xlane.xlu0 %6381
        %v6383 = vmul.f32 %v6379, %v542
        %v6384 = vmul.f32 %v6382, %v542
        %v6385 = vadd.f32 %v6383, 1e-05
        %v6386 = vadd.f32 %v6384, 1e-05
        %v6387 = vrsqrt.pop %v6385
        %v6388 = vmul.f32 %v6387, %v6385
        %v6389 = vmul.f32 %v6388, %v6387
        %v6390 = vmul.f32 0.5, %v6389
        %v6391 = vsub.f32 1.5, %v6390
        %v6392 = vmul.f32 %v6387, %v6391
        %vm6393 = vweird.f32 %v6385
        %vm6394 = vweird.f32 %v6387
        %vm6395 = vmor %vm6393, %vm6394
        %v6396 = vsel %vm6395, %v6387, %v6392
        %v6397 = vrsqrt.pop %v6386
        %v6398 = vmul.f32 %v6397, %v6386
        %v6399 = vmul.f32 %v6398, %v6397
        %v6400 = vmul.f32 0.5, %v6399
        %v6401 = vsub.f32 1.5, %v6400
        %v6402 = vmul.f32 %v6397, %v6401
        %vm6403 = vweird.f32 %v6386
        %vm6404 = vweird.f32 %v6397
        %vm6405 = vmor %vm6403, %vm6404
        %v6406 = vsel %vm6405, %v6397, %v6402
        %v6407 = vmul.f32 %v6373, %v6396
        %v6408 = vmul.f32 %v6374, %v6406
        %v6410 = vperm.slane %v6362, 0
        %v6412 = vmul.f32 %v6407, %v6410
        %v6413 = vmul.f32 %v6408, %v6410
        %v6415 = vperm.slane %v6364, 0
        %v6417 = vadd.f32 %v6412, %v6415
        %v6418 = vadd.f32 %v6413, %v6415
        %s6419 = scalar_lea.vmem %s10, 640
        %v6420 = vld [vmem:[%s6419] sm:$0xff]
        %v6421 = vld [vmem:[%s6419 + $0x8] sm:$0xff]
        %v6422 = vld [vmem:[%s6419 + $0x10] sm:$0xff]
        %v6423 = vld [vmem:[%s6419 + $0x18] sm:$0xff]
        %v6424 = vld [vmem:[%s6419 + $0x20] sm:$0xff]
        %v6425 = vld [vmem:[%s6419 + $0x28] sm:$0xff]
        %v6426 = vld [vmem:[%s6419 + $0x30] sm:$0xff]
        %v6427 = vld [vmem:[%s6419 + $0x38] sm:$0xff]
        %v6428 = vld [vmem:[%s6419 + $0x40] sm:$0xff]
        %v6429 = vld [vmem:[%s6419 + $0x48] sm:$0xff]
        %v6430 = vld [vmem:[%s6419 + $0x50] sm:$0xff]
        %v6431 = vld [vmem:[%s6419 + $0x58] sm:$0xff]
        %v6432 = vld [vmem:[%s6419 + $0x60] sm:$0xff]
        %v6433 = vld [vmem:[%s6419 + $0x68] sm:$0xff]
        %v6434 = vld [vmem:[%s6419 + $0x70] sm:$0xff]
        %v6435 = vld [vmem:[%s6419 + $0x78] sm:$0xff]
        %s6436 = scalar_lea.vmem %s11, 10
        %v6437 = vld [vmem:[%s6436] sm:$0x3]
        %v6439 = vperm.slane %v6437, 0
        %v6440 = vperm.slane %v6437, 1
        %v6444 = vsel %vm529, %v6417, 0
        %v6447 = vsel %vm529, %v6418, 0
        %6449 = vmatpush.msra.mxu0 0.0
        %6450 = vmatpush.msra.mxu0 0.0
        %6451 = vmatpush.msra.mxu0 0.0
        %6452 = vmatpush.msra.mxu0 0.0
        %6453 = vmatpush.msra.mxu0 0.0
        %6454 = vmatpush.msra.mxu0 0.0
        %6455 = vmatpush.msra.mxu0 0.0
        %6456 = vmatpush.msra.mxu0 0.0
        %6457 = vmatpush.msra.mxu0 %v6434
        %6458 = vmatpush.msra.mxu0 %v6432
        %6459 = vmatpush.msra.mxu0 %v6430
        %6460 = vmatpush.msra.mxu0 %v6428
        %6461 = vmatpush.msra.mxu0 %v6426
        %6462 = vmatpush.msra.mxu0 %v6424
        %6463 = vmatpush.msra.mxu0 %v6422
        %6464 = vmatpush.msra.mxu0 %v6420
        %6465 = vmatmul.f32.gmra.mxu0 %v6444
        %v6466 = vpop.f32.mrf.mxu0
        %v6467 = vadd.f32 %v6439, %v6466
        %6468 = vmatmul.f32.gmra.mxu0 %v6447
        %v6469 = vpop.f32.mrf.mxu0
        %v6470 = vadd.f32 %v6439, %v6469
        %6471 = vdwg.mxu0
        %6472 = vmatpush.msra.mxu0 0.0
        %6473 = vmatpush.msra.mxu0 0.0
        %6474 = vmatpush.msra.mxu0 0.0
        %6475 = vmatpush.msra.mxu0 0.0
        %6476 = vmatpush.msra.mxu0 0.0
        %6477 = vmatpush.msra.mxu0 0.0
        %6478 = vmatpush.msra.mxu0 0.0
        %6479 = vmatpush.msra.mxu0 0.0
        %6480 = vmatpush.msra.mxu0 %v6435
        %6481 = vmatpush.msra.mxu0 %v6433
        %6482 = vmatpush.msra.mxu0 %v6431
        %6483 = vmatpush.msra.mxu0 %v6429
        %6484 = vmatpush.msra.mxu0 %v6427
        %6485 = vmatpush.msra.mxu0 %v6425
        %6486 = vmatpush.msra.mxu0 %v6423
        %6487 = vmatpush.msra.mxu0 %v6421
        %6488 = vmatmul.f32.gmra.mxu0 %v6444
        %v6489 = vpop.f32.mrf.mxu0
        %v6490 = vadd.f32 %v6440, %v6489
        %6491 = vmatmul.f32.gmra.mxu0 %v6447
        %v6492 = vpop.f32.mrf.mxu0
        %v6493 = vadd.f32 %v6440, %v6492
        %6494 = vdwg.mxu0
        %v6495 = vmul.f32 %v6467, 0.5
        %v6496 = vmul.f32 %v6490, 0.5
        %v6497 = vmul.f32 %v6470, 0.5
        %v6498 = vmul.f32 %v6493, 0.5
        %v6499 = vmul.f32 %v6467, 0.70710677
        %v6500 = vmul.f32 %v6490, 0.70710677
        %v6501 = vmul.f32 %v6470, 0.70710677
        %v6502 = vmul.f32 %v6493, 0.70710677
        %v6503 = vand.u32 2147483647, %v6499
        %v6504 = vand.u32 2147483647, %v6500
        %v6505 = vand.u32 2147483647, %v6501
        %v6506 = vand.u32 2147483647, %v6502
        %v6507 = vmul.f32 %v6503, 0.3275911
        %v6508 = vmul.f32 %v6504, 0.3275911
        %v6509 = vmul.f32 %v6505, 0.3275911
        %v6510 = vmul.f32 %v6506, 0.3275911
        %v6511 = vadd.f32 %v6507, 1.0
        %v6512 = vadd.f32 %v6508, 1.0
        %v6513 = vadd.f32 %v6509, 1.0
        %v6514 = vadd.f32 %v6510, 1.0
        %v6515 = vrcp.pop %v6511
        %v6516 = vmul.f32 %v6511, %v6515
        %v6517 = vsub.f32 1.0, %v6516
        %v6518 = vmul.f32 %v6515, %v6517
        %v6519 = vadd.f32 %v6515, %v6518
        %vm6520 = vweird.f32 %v6511
        %vm6521 = vweird.f32 %v6515
        %vm6522 = vmor %vm6520, %vm6521
        %v6523 = vsel %vm6522, %v6515, %v6519
        %v6524 = vand.u32 2147483647, %v6511
        %vm6525 = vcmp.eq.f32.partialorder %v6524, 8.507059e+37
        %v6526 = vand.u32 %v6511, 2147483648
        %v6527 = vor.u32 1.1754944e-38, %v6526
        %v6528 = vsel %vm6525, %v6527, %v6523
        %v6529 = vmul.f32 1.0, %v6528
        %v6530 = vrcp.pop %v6512
        %v6531 = vmul.f32 %v6512, %v6530
        %v6532 = vsub.f32 1.0, %v6531
        %v6533 = vmul.f32 %v6530, %v6532
        %v6534 = vadd.f32 %v6530, %v6533
        %vm6535 = vweird.f32 %v6512
        %vm6536 = vweird.f32 %v6530
        %vm6537 = vmor %vm6535, %vm6536
        %v6538 = vsel %vm6537, %v6530, %v6534
        %v6539 = vand.u32 2147483647, %v6512
        %vm6540 = vcmp.eq.f32.partialorder %v6539, 8.507059e+37
        %v6541 = vand.u32 %v6512, 2147483648
        %v6542 = vor.u32 1.1754944e-38, %v6541
        %v6543 = vsel %vm6540, %v6542, %v6538
        %v6544 = vmul.f32 1.0, %v6543
        %v6545 = vrcp.pop %v6513
        %v6546 = vmul.f32 %v6513, %v6545
        %v6547 = vsub.f32 1.0, %v6546
        %v6548 = vmul.f32 %v6545, %v6547
        %v6549 = vadd.f32 %v6545, %v6548
        %vm6550 = vweird.f32 %v6513
        %vm6551 = vweird.f32 %v6545
        %vm6552 = vmor %vm6550, %vm6551
        %v6553 = vsel %vm6552, %v6545, %v6549
        %v6554 = vand.u32 2147483647, %v6513
        %vm6555 = vcmp.eq.f32.partialorder %v6554, 8.507059e+37
        %v6556 = vand.u32 %v6513, 2147483648
        %v6557 = vor.u32 1.1754944e-38, %v6556
        %v6558 = vsel %vm6555, %v6557, %v6553
        %v6559 = vmul.f32 1.0, %v6558
        %v6560 = vrcp.pop %v6514
        %v6561 = vmul.f32 %v6514, %v6560
        %v6562 = vsub.f32 1.0, %v6561
        %v6563 = vmul.f32 %v6560, %v6562
        %v6564 = vadd.f32 %v6560, %v6563
        %vm6565 = vweird.f32 %v6514
        %vm6566 = vweird.f32 %v6560
        %vm6567 = vmor %vm6565, %vm6566
        %v6568 = vsel %vm6567, %v6560, %v6564
        %v6569 = vand.u32 2147483647, %v6514
        %vm6570 = vcmp.eq.f32.partialorder %v6569, 8.507059e+37
        %v6571 = vand.u32 %v6514, 2147483648
        %v6572 = vor.u32 1.1754944e-38, %v6571
        %v6573 = vsel %vm6570, %v6572, %v6568
        %v6574 = vmul.f32 1.0, %v6573
        %v6575 = vmul.f32 %v6529, 1.0614054
        %v6576 = vmul.f32 %v6544, 1.0614054
        %v6577 = vmul.f32 %v6559, 1.0614054
        %v6578 = vmul.f32 %v6574, 1.0614054
        %v6579 = vadd.f32 %v6575, -1.4531521
        %v6580 = vadd.f32 %v6576, -1.4531521
        %v6581 = vadd.f32 %v6577, -1.4531521
        %v6582 = vadd.f32 %v6578, -1.4531521
        %v6583 = vmul.f32 %v6579, %v6529
        %v6584 = vmul.f32 %v6580, %v6544
        %v6585 = vmul.f32 %v6581, %v6559
        %v6586 = vmul.f32 %v6582, %v6574
        %v6587 = vadd.f32 %v6583, 1.4214138
        %v6588 = vadd.f32 %v6584, 1.4214138
        %v6589 = vadd.f32 %v6585, 1.4214138
        %v6590 = vadd.f32 %v6586, 1.4214138
        %v6591 = vmul.f32 %v6587, %v6529
        %v6592 = vmul.f32 %v6588, %v6544
        %v6593 = vmul.f32 %v6589, %v6559
        %v6594 = vmul.f32 %v6590, %v6574
        %v6595 = vadd.f32 %v6591, -0.28449672
        %v6596 = vadd.f32 %v6592, -0.28449672
        %v6597 = vadd.f32 %v6593, -0.28449672
        %v6598 = vadd.f32 %v6594, -0.28449672
        %v6599 = vmul.f32 %v6595, %v6529
        %v6600 = vmul.f32 %v6596, %v6544
        %v6601 = vmul.f32 %v6597, %v6559
        %v6602 = vmul.f32 %v6598, %v6574
        %v6603 = vadd.f32 %v6599, 0.2548296
        %v6604 = vadd.f32 %v6600, 0.2548296
        %v6605 = vadd.f32 %v6601, 0.2548296
        %v6606 = vadd.f32 %v6602, 0.2548296
        %v6607 = vmul.f32 %v6603, %v6529
        %v6608 = vmul.f32 %v6604, %v6544
        %v6609 = vmul.f32 %v6605, %v6559
        %v6610 = vmul.f32 %v6606, %v6574
        %v6611 = vsub.f32 0.0, %v6503
        %v6612 = vsub.f32 0.0, %v6504
        %v6613 = vsub.f32 0.0, %v6505
        %v6614 = vsub.f32 0.0, %v6506
        %v6615 = vmul.f32 %v6611, %v6503
        %v6616 = vmul.f32 %v6612, %v6504
        %v6617 = vmul.f32 %v6613, %v6505
        %v6618 = vmul.f32 %v6614, %v6506
        %v6619 = vmul.f32 %v6615, 1.442695
        %v6620 = vpow.pop %v6619
        %v6621 = vmul.f32 %v6616, 1.442695
        %v6622 = vpow.pop %v6621
        %v6623 = vmul.f32 %v6617, 1.442695
        %v6624 = vpow.pop %v6623
        %v6625 = vmul.f32 %v6618, 1.442695
        %v6626 = vpow.pop %v6625
        %v6627 = vmul.f32 %v6607, %v6620
        %v6628 = vmul.f32 %v6608, %v6622
        %v6629 = vmul.f32 %v6609, %v6624
        %v6630 = vmul.f32 %v6610, %v6626
        %v6631 = vsub.f32 1.0, %v6627
        %v6632 = vsub.f32 1.0, %v6628
        %v6633 = vsub.f32 1.0, %v6629
        %v6634 = vsub.f32 1.0, %v6630
        %vm6635 = vcmp.ge.f32.partialorder %v6499, 0.0
        %vm6636 = vcmp.ge.f32.partialorder %v6500, 0.0
        %vm6637 = vcmp.ge.f32.partialorder %v6501, 0.0
        %vm6638 = vcmp.ge.f32.partialorder %v6502, 0.0
        %v6639 = vsub.f32 0.0, %v6631
        %v6640 = vsub.f32 0.0, %v6632
        %v6641 = vsub.f32 0.0, %v6633
        %v6642 = vsub.f32 0.0, %v6634
        %v6643 = vsel %vm6635, %v6631, %v6639
        %v6644 = vsel %vm6636, %v6632, %v6640
        %v6645 = vsel %vm6637, %v6633, %v6641
        %v6646 = vsel %vm6638, %v6634, %v6642
        %v6647 = vadd.f32 %v6643, 1.0
        %v6648 = vadd.f32 %v6644, 1.0
        %v6649 = vadd.f32 %v6645, 1.0
        %v6650 = vadd.f32 %v6646, 1.0
        %v6651 = vmul.f32 %v6495, %v6647
        %v6652 = vmul.f32 %v6496, %v6648
        %v6653 = vmul.f32 %v6497, %v6649
        %v6654 = vmul.f32 %v6498, %v6650
        %s6655 = scalar_lea.vmem %s12, 1280
        %v6656 = vld [vmem:[%s6655] sm:$0xff]
        %v6657 = vld [vmem:[%s6655 + $0x8] sm:$0xff]
        %v6658 = vld [vmem:[%s6655 + $0x10] sm:$0xff]
        %v6659 = vld [vmem:[%s6655 + $0x18] sm:$0xff]
        %v6660 = vld [vmem:[%s6655 + $0x20] sm:$0xff]
        %v6661 = vld [vmem:[%s6655 + $0x28] sm:$0xff]
        %v6662 = vld [vmem:[%s6655 + $0x30] sm:$0xff]
        %v6663 = vld [vmem:[%s6655 + $0x38] sm:$0xff]
        %v6664 = vld [vmem:[%s6655 + $0x40] sm:$0xff]
        %v6665 = vld [vmem:[%s6655 + $0x48] sm:$0xff]
        %v6666 = vld [vmem:[%s6655 + $0x50] sm:$0xff]
        %v6667 = vld [vmem:[%s6655 + $0x58] sm:$0xff]
        %v6668 = vld [vmem:[%s6655 + $0x60] sm:$0xff]
        %v6669 = vld [vmem:[%s6655 + $0x68] sm:$0xff]
        %v6670 = vld [vmem:[%s6655 + $0x70] sm:$0xff]
        %v6671 = vld [vmem:[%s6655 + $0x78] sm:$0xff]
        %v6672 = vld [vmem:[%s6655 + $0x80] sm:$0xff]
        %v6673 = vld [vmem:[%s6655 + $0x88] sm:$0xff]
        %v6674 = vld [vmem:[%s6655 + $0x90] sm:$0xff]
        %v6675 = vld [vmem:[%s6655 + $0x98] sm:$0xff]
        %v6676 = vld [vmem:[%s6655 + $0xa0] sm:$0xff]
        %v6677 = vld [vmem:[%s6655 + $0xa8] sm:$0xff]
        %v6678 = vld [vmem:[%s6655 + $0xb0] sm:$0xff]
        %v6679 = vld [vmem:[%s6655 + $0xb8] sm:$0xff]
        %v6680 = vld [vmem:[%s6655 + $0xc0] sm:$0xff]
        %v6681 = vld [vmem:[%s6655 + $0xc8] sm:$0xff]
        %v6682 = vld [vmem:[%s6655 + $0xd0] sm:$0xff]
        %v6683 = vld [vmem:[%s6655 + $0xd8] sm:$0xff]
        %v6684 = vld [vmem:[%s6655 + $0xe0] sm:$0xff]
        %v6685 = vld [vmem:[%s6655 + $0xe8] sm:$0xff]
        %v6686 = vld [vmem:[%s6655 + $0xf0] sm:$0xff]
        %v6687 = vld [vmem:[%s6655 + $0xf8] sm:$0xff]
        %6688 = vmatpush.msra.mxu0 %v6671
        %6689 = vmatpush.msra.mxu0 %v6670
        %6690 = vmatpush.msra.mxu0 %v6669
        %6691 = vmatpush.msra.mxu0 %v6668
        %6692 = vmatpush.msra.mxu0 %v6667
        %6693 = vmatpush.msra.mxu0 %v6666
        %6694 = vmatpush.msra.mxu0 %v6665
        %6695 = vmatpush.msra.mxu0 %v6664
        %6696 = vmatpush.msra.mxu0 %v6663
        %6697 = vmatpush.msra.mxu0 %v6662
        %6698 = vmatpush.msra.mxu0 %v6661
        %6699 = vmatpush.msra.mxu0 %v6660
        %6700 = vmatpush.msra.mxu0 %v6659
        %6701 = vmatpush.msra.mxu0 %v6658
        %6702 = vmatpush.msra.mxu0 %v6657
        %6703 = vmatpush.msra.mxu0 %v6656
        %6704 = vmatmul.f32.gmra.mxu0 %v6651
        %v6705 = vpop.f32.mrf.mxu0
        %v6706 = vadd.f32 0.0, %v6705
        %6707 = vmatmul.f32.gmra.mxu0 %v6653
        %v6708 = vpop.f32.mrf.mxu0
        %v6709 = vadd.f32 0.0, %v6708
        %6710 = vdwg.mxu0
        %6711 = vmatpush.msra.mxu0 %v6687
        %6712 = vmatpush.msra.mxu0 %v6686
        %6713 = vmatpush.msra.mxu0 %v6685
        %6714 = vmatpush.msra.mxu0 %v6684
        %6715 = vmatpush.msra.mxu0 %v6683
        %6716 = vmatpush.msra.mxu0 %v6682
        %6717 = vmatpush.msra.mxu0 %v6681
        %6718 = vmatpush.msra.mxu0 %v6680
        %6719 = vmatpush.msra.mxu0 %v6679
        %6720 = vmatpush.msra.mxu0 %v6678
        %6721 = vmatpush.msra.mxu0 %v6677
        %6722 = vmatpush.msra.mxu0 %v6676
        %6723 = vmatpush.msra.mxu0 %v6675
        %6724 = vmatpush.msra.mxu0 %v6674
        %6725 = vmatpush.msra.mxu0 %v6673
        %6726 = vmatpush.msra.mxu0 %v6672
        %6727 = vmatmul.f32.gmra.mxu0 %v6652
        %v6728 = vpop.f32.mrf.mxu0
        %v6729 = vadd.f32 %v6706, %v6728
        %6730 = vmatmul.f32.gmra.mxu0 %v6654
        %v6731 = vpop.f32.mrf.mxu0
        %v6732 = vadd.f32 %v6709, %v6731
        %6733 = vdwg.mxu0
        %v6734 = vadd.f32 %v6359, %v6729
        %v6735 = vadd.f32 %v6360, %v6732
        %s6736 = scalar_lea.vmem [#allocation6], 5
        %v6737 = vld [vmem:[%s6736] sm:$0x1]
        %v6739 = vperm.slane %v6737, 0
        %v6741 = vadd.f32 %v6734, %v6739
        %v6742 = vadd.f32 %v6735, %v6739
        %6745 = vrot.lane.b32.xlu0 %v6741, 64
        %v6746 = vpop.permute.xlu0 %6745
        %6747 = vrot.lane.b32.xlu0 %v6742, 64
        %v6748 = vpop.permute.xlu0 %6747
        %6751 = vst.msk [vmem:[%s521 + $0x10] sm:$0xff] %vm2598, %v6746
        %6752 = vst.msk [vmem:[%s521 + $0x28] sm:$0xff] %vm2598, %v6748
        %s6753 = smul.u32 2, %s27
        %p6754 = scmp.lt.s32.totalorder %s6753, 3
        %s6755 = scalar_select %p6754, %s6753, 3
        %s6756 = smul.addr %s6755, 3
        %s6757 = smul.addr %s6756, 8
        %s6758 = scalar_lea.vmem %s14, %s6757
        // Predicated region
        $region89: #{forward_encoder.3} parent=75 // pred_check
          %p6759 = pneg %p344
        $region90: #{forward_encoder.3} parent=75 // pred_check_branch
          %6761 = sbr.rel (%p6759) target = $region92
        $region91: #{forward_encoder.3} parent=75 // pred_region
          %s6762 = smul.u32 2, %s27
        $region92: #{forward_encoder.3} parent=75 // pred_fallthru
          _
      $region76: #{forward_encoder.3} parent=5 // pred_fallthru
        _
      %p6763 = scmp.le.s32.totalorder 2, %s22
      // Predicated region
      $region93: #{forward_encoder.3} parent=5 // pred_check
        %p6764 = pneg %p6763
      $region94: #{forward_encoder.3} parent=5 // pred_check_branch
        %6766 = sbr.rel (%p6764) target = $region96
      $region95: #{forward_encoder.3} parent=5 // pred_region
        %s6767 = ssub.s32 %s22, 2
        // Predicated region
        $region97: #{forward_encoder.3} parent=95 // pred_check
          %p6768 = pneg %p350
        $region98: #{forward_encoder.3} parent=95 // pred_check_branch
          %6770 = sbr.rel (%p6768) target = $region100
        $region99: #{forward_encoder.3} parent=95 // pred_region
          %s6771 = smul.u32 2, %s28
          %p6772 = scmp.lt.s32.totalorder %s6771, 3
          %s6773 = scalar_select %p6772, %s6771, 3
          %s6774 = smul.addr %s6773, 3
          %s6775 = smul.addr %s6774, 8
          %s6776 = scalar_lea.vmem %s14, %s6775
        $region100: #{forward_encoder.3} parent=95 // pred_fallthru
          _
      $region96: #{forward_encoder.3} parent=5 // pred_fallthru
        _
    $region6: #{forward_encoder.3} parent=1 // loop_footer
      %s26 = sadd.s32 1, %s22
    $region7: #{forward_encoder.3} parent=1 // loop_footer_branch
      %21 = sbr.rel target = $region3
    $region8: #{forward_encoder.3} parent=1 // loop_exit
      _
    %6777 = vsyncpa [#allocation3], 1
    %s6778 = scalar_lea.sflag [#allocation3], 1
    %6779 = vsyncpa %s6778, 1
    %6780 = vsyncpa [#allocation5], 1

</llo_original>
